<compile_context>
chip_gen: v6e
topology: v6e:2x2x1
jax: 0.10.0
libtpu: 0.0.40
codegen_flags: <defaults>
</compile_context>

<pallas_src>
import functools
from dataclasses import dataclass

import jax
import jax.numpy as jnp
from jax.experimental import pallas as pl
from jax.experimental.pallas import tpu as pltpu


LANE = 128


def _round_up(x, m):
    return (x + m - 1) // m * m


# ----------------------------------------------------------------------------
# Pallas kernels
# ----------------------------------------------------------------------------
def _gemm_bias_act_kernel(p_ref, w_ref, b_ref, o_ref, *, apply_relu):
    # p_ref: (TM, K) bf16 patches    w_ref: (K, Npad) bf16 (BN scale folded in)
    # b_ref: (1, Npad) f32 bias      o_ref: (TM, Npad) f32
    acc = jnp.dot(p_ref[...], w_ref[...], preferred_element_type=jnp.float32)
    acc = acc + b_ref[...]
    if apply_relu:
        acc = jnp.maximum(acc, 0.0)
    o_ref[...] = acc.astype(o_ref.dtype)


def _gemm_bias_res_relu_kernel(p_ref, w_ref, b_ref, r_ref, o_ref):
    # Fused epilogue for the last conv of a residual block:
    #   out = relu(conv + bias + residual)
    acc = jnp.dot(p_ref[...], w_ref[...], preferred_element_type=jnp.float32)
    acc = acc + b_ref[...] + r_ref[...]
    o_ref[...] = jnp.maximum(acc, 0.0).astype(o_ref.dtype)


def _gemm_bias_act(patches, w_packed, bias, residual2d=None, apply_relu=True):
    """patches: (M, K) bf16, w_packed: (K, Npad) bf16, bias: (1, Npad) f32,
    residual2d: optional (M, Npad) f32.  Returns (M, Npad) f32."""
    m, k = patches.shape
    k_w, n_pad = w_packed.shape
    assert k == k_w, (k, k_w)

    # Large M tiles (few grid steps) but >=2 parallel steps when M is big.
    tm = min(256, _round_up(m, LANE))
    m_pad = _round_up(m, tm)
    if m_pad != m:
        patches = jnp.pad(patches, ((0, m_pad - m), (0, 0)))
        if residual2d is not None:
            residual2d = jnp.pad(residual2d, ((0, m_pad - m), (0, 0)))

    in_specs = [
        pl.BlockSpec((tm, k), lambda i: (i, 0)),        # patches tile
        pl.BlockSpec((k, n_pad), lambda i: (0, 0)),     # resident weight
        pl.BlockSpec((1, n_pad), lambda i: (0, 0)),     # bias
    ]
    args = [patches, w_packed, bias]
    if residual2d is not None:
        in_specs.append(pl.BlockSpec((tm, n_pad), lambda i: (i, 0)))
        args.append(residual2d)
        kernel = _gemm_bias_res_relu_kernel
    else:
        kernel = functools.partial(_gemm_bias_act_kernel, apply_relu=apply_relu)

    out = pl.pallas_call(
        kernel,
        out_shape=jax.ShapeDtypeStruct((m_pad, n_pad), jnp.float32),
        grid=(m_pad // tm,),
        in_specs=in_specs,
        out_specs=pl.BlockSpec((tm, n_pad), lambda i: (i, 0)),
        compiler_params=pltpu.CompilerParams(
            dimension_semantics=("parallel",)),
    )(*args)
    if m_pad != m:
        out = out[:m]
    return out


# ----------------------------------------------------------------------------
# im2col glue (NHWC, channel-padded) + conv layer forward
# ----------------------------------------------------------------------------
def _extract_patches_nhwc(x, k, stride, pad):
    """x: (N, H, W, Cpad) -> (N*H_out*W_out, k*k*Cpad) with (dy, dx, c) order."""
    n, h, w, c = x.shape
    xp = jnp.pad(x, ((0, 0), (pad, pad), (pad, pad), (0, 0)))
    h_out = (h + 2 * pad - k) // stride + 1
    w_out = (w + 2 * pad - k) // stride + 1
    cols = []
    for dy in range(k):
        for dx in range(k):
            cols.append(xp[:, dy:dy + stride * h_out:stride,
                           dx:dx + stride * w_out:stride, :])
    patches = jnp.concatenate(cols, axis=-1)          # (N, H_out, W_out, k*k*C)
    return patches.reshape(n * h_out * w_out, k * k * c), h_out, w_out


def conv_bn_act(x_pad, layer, stride, apply_relu=True, residual2d=None):
    """Conv2d(bias=False, padding=k//2) + folded BatchNorm(eval) [+ ReLU]
    [+ fused residual add + ReLU].  x_pad: (N, H, W, C_in_pad) f32."""
    n = x_pad.shape[0]
    k = layer["k"]
    if k == 1:
        # 1x1 conv: no im2col, just a strided slice + GEMM.
        xs = x_pad[:, ::stride, ::stride, :]
        h_out, w_out = xs.shape[1], xs.shape[2]
        patches = xs.reshape(n * h_out * w_out, xs.shape[3])
    else:
        patches, h_out, w_out = _extract_patches_nhwc(x_pad, k, stride, k // 2)
    patches = patches.astype(jnp.bfloat16)            # bf16 MXU operands
    out2 = _gemm_bias_act(patches, layer["w"], layer["b"],
                          residual2d=residual2d, apply_relu=apply_relu)
    return out2.reshape(n, h_out, w_out, layer["w"].shape[1])


# ----------------------------------------------------------------------------
# Parameter construction (deterministic, synthetic) with pre-packed weights
# ----------------------------------------------------------------------------
def _init_conv_bn(key, c_in, c_out, k):
    k1, k2, k3 = jax.random.split(key, 3)
    w = 0.1 * jax.random.normal(k1, (c_out, c_in, k, k), jnp.float32)
    gamma = 1.0 + 0.1 * jax.random.normal(k2, (c_out,), jnp.float32)
    beta = 0.1 * jax.random.normal(k3, (c_out,), jnp.float32)
    running_mean = jnp.zeros((c_out,), jnp.float32)
    running_var = jnp.ones((c_out,), jnp.float32)
    eps = 1e-5
    scale = gamma / jnp.sqrt(running_var + eps)
    bias = beta - running_mean * scale

    c_in_pad = _round_up(c_in, LANE)
    c_out_pad = _round_up(c_out, LANE)
    # (C_out, C_in, kh, kw) -> (kh, kw, C_in, C_out); fold BN scale per column.
    wt = jnp.transpose(w, (2, 3, 1, 0)) * scale[None, None, None, :]
    wt = jnp.pad(wt, ((0, 0), (0, 0),
                      (0, c_in_pad - c_in), (0, c_out_pad - c_out)))
    w_packed = wt.reshape(k * k * c_in_pad, c_out_pad).astype(jnp.bfloat16)
    b_packed = jnp.zeros((1, c_out_pad), jnp.float32).at[0, :c_out].set(bias)
    return {"w": w_packed, "b": b_packed, "k": k, "c_in": c_in, "c_out": c_out}


@dataclass
class ResNetConfig:
    embedding_size: int = 4
    hidden_sizes: tuple = (8, 16)
    depths: tuple = (2, 2)
    layer_type: str = "basic"          # "basic" or "bottleneck"
    reduction: int = 4
    downsample_in_first_stage: bool = False
    downsample_after_stage: bool = False


def _init_basic_layer(key, c_in, c_out, stride):
    k1, k2, k3 = jax.random.split(key, 3)
    residual = None
    if c_in != c_out or stride != 1:
        residual = _init_conv_bn(k3, c_in, c_out, 1)
    return {"kind": "basic", "stride": stride, "c_out": c_out,
            "conv1": _init_conv_bn(k1, c_in, c_out, 3),
            "conv2": _init_conv_bn(k2, c_out, c_out, 3),
            "residual": residual}


def _init_bottleneck_layer(key, c_in, c_out, stride, reduction):
    k1, k2, k3, k4 = jax.random.split(key, 4)
    c_b = c_out // reduction
    residual = None
    if c_in != c_out or stride != 1:
        residual = _init_conv_bn(k4, c_in, c_out, 1)
    return {"kind": "bottleneck", "stride": stride, "c_out": c_out,
            "conv1": _init_conv_bn(k1, c_in, c_b, 1),
            "conv2": _init_conv_bn(k2, c_b, c_b, 3),
            "conv3": _init_conv_bn(k3, c_b, c_out, 1),
            "residual": residual}


def _init_stage(config, key, c_in, c_out, depth, stride):
    keys = jax.random.split(key, depth)
    layers = []
    for d in range(depth):
        lc_in = c_in if d == 0 else c_out
        ls = stride if d == 0 else 1
        if config.layer_type == "bottleneck":
            layers.append(_init_bottleneck_layer(keys[d], lc_in, c_out, ls,
                                                 config.reduction))
        else:
            layers.append(_init_basic_layer(keys[d], lc_in, c_out, ls))
    return {"kind": "stage", "layers": layers}


def init_resnet_encoder(config, key):
    modules = []
    key, sub = jax.random.split(key)
    modules.append(
        _init_stage(config, sub, config.embedding_size, config.hidden_sizes[0],
                    depth=config.depths[0],
                    stride=2 if config.downsample_in_first_stage else 1))
    in_out = list(zip(config.hidden_sizes, config.hidden_sizes[1:]))
    for (c_in, c_out), depth in zip(in_out, config.depths[1:]):
        key, sub = jax.random.split(key)
        modules.append(
            _init_stage(config, sub, c_in, c_out, depth=depth,
                        stride=2 if not config.downsample_after_stage else 1))
        if config.downsample_after_stage:
            key, sub = jax.random.split(key)
            modules.append({"kind": "convlayer", "stride": 2,
                            "conv": _init_conv_bn(sub, c_out, c_out, 3)})
    return modules


# ----------------------------------------------------------------------------
# Forward passes (NHWC, channel-padded internally)
# ----------------------------------------------------------------------------
def basic_layer_fwd(p, x):
    if p["residual"] is None:
        res = x
    else:
        res = conv_bn_act(x, p["residual"], p["stride"], apply_relu=False)
    res2d = res.reshape(-1, res.shape[-1])
    h = conv_bn_act(x, p["conv1"], p["stride"], apply_relu=True)
    # final conv: residual add + ReLU fused into the GEMM epilogue
    return conv_bn_act(h, p["conv2"], 1, apply_relu=False, residual2d=res2d)


def bottleneck_layer_fwd(p, x):
    if p["residual"] is None:
        res = x
    else:
        res = conv_bn_act(x, p["residual"], p["stride"], apply_relu=False)
    res2d = res.reshape(-1, res.shape[-1])
    h = conv_bn_act(x, p["conv1"], 1, apply_relu=True)
    h = conv_bn_act(h, p["conv2"], p["stride"], apply_relu=True)
    return conv_bn_act(h, p["conv3"], 1, apply_relu=False, residual2d=res2d)


def resnet_encoder_fwd(modules, x_nchw):
    n, c, h, w = x_nchw.shape
    c_pad = _round_up(c, LANE)
    hx = jnp.transpose(x_nchw, (0, 2, 3, 1))                 # NCHW -> NHWC
    hx = jnp.pad(hx, ((0, 0), (0, 0), (0, 0), (0, c_pad - c)))
    c_actual = c
    for m in modules:
        if m["kind"] == "stage":
            for layer in m["layers"]:
                if layer["kind"] == "basic":
                    hx = basic_layer_fwd(layer, hx)
                else:
                    hx = bottleneck_layer_fwd(layer, hx)
                c_actual = layer["c_out"]
        elif m["kind"] == "convlayer":
            hx = conv_bn_act(hx, m["conv"], m["stride"], apply_relu=True)
            c_actual = m["conv"]["c_out"]
    out = hx[..., :c_actual]                                 # drop channel pad
    return jnp.transpose(out, (0, 3, 1, 2))                  # NHWC -> NCHW


# ----------------------------------------------------------------------------
if __name__ == "__main__":
    config = ResNetConfig(
        embedding_size=4,
        hidden_sizes=(8, 16),
        depths=(2, 2),
        layer_type="basic",
        reduction=4,
        downsample_in_first_stage=False,
        downsample_after_stage=False,
    )

    key = jax.random.PRNGKey(0)
    key, pkey, xkey = jax.random.split(key, 3)
    params = init_resnet_encoder(config, pkey)

    # NCHW input, matching PyTorch: (batch=2, C=embedding_size=4, H=W=16)
    x = jax.random.normal(xkey, (2, 4, 16, 16), jnp.float32)

    fwd = jax.jit(lambda inp: resnet_encoder_fwd(params, inp))
    out = jax.block_until_ready(fwd(x))

    # Expected: stage0 keeps 16x16 (stride 1), stage1 halves to 8x8, 16 channels.
    assert out.shape == (2, 16, 8, 8), out.shape
    assert jnp.all(jnp.isfinite(out))
    print("KERNEL_OK")
</pallas_src>

<mosaic_0001>
module attributes {stable_mosaic.version = 11 : i64} {
  func.func @_gemm_bias_act_kernel(%arg0: i32, %arg1: memref<256x128xbf16, #tpu.memory_space<vmem>>, %arg2: memref<128x128xbf16, #tpu.memory_space<vmem>>, %arg3: memref<1x128xf32, #tpu.memory_space<vmem>>, %arg4: memref<256x128xf32, #tpu.memory_space<vmem>>) attributes {dimension_semantics = [#tpu.dimension_semantics<parallel>], iteration_bounds = array<i64: 2>, scalar_prefetch = 0 : i64, scratch_operands = 0 : i64, tpu.core_type = #tpu.core_type<tc>, window_params = [{transform_indices = @transform_0, window_bounds = array<i64: 256, 128>}, {pipeline_mode = #tpu.pipeline_mode<synchronous>, transform_indices = @transform_1, window_bounds = array<i64: 128, 128>}, {pipeline_mode = #tpu.pipeline_mode<synchronous>, transform_indices = @transform_2, window_bounds = array<i64: 1, 128>}, {transform_indices = @transform_3, window_bounds = array<i64: 256, 128>}]} {
    %c0 = arith.constant 0 : index
    %c0_0 = arith.constant 0 : index
    %0 = vector.load %arg1[%c0, %c0_0] : memref<256x128xbf16, #tpu.memory_space<vmem>>, vector<256x128xbf16>
    %c0_1 = arith.constant 0 : index
    %c0_2 = arith.constant 0 : index
    %1 = vector.load %arg2[%c0_1, %c0_2] : memref<128x128xbf16, #tpu.memory_space<vmem>>, vector<128x128xbf16>
    %cst = arith.constant dense<0.000000e+00> : vector<256x128xf32>
    %2 = tpu.matmul %0, %1, %cst {dimension_numbers = #tpu.dot_dimension_numbers<[1], [0], [0], [1], [0, 0, 1, 1], [], []>} : vector<256x128xbf16>, vector<128x128xbf16>, vector<256x128xf32> -> vector<256x128xf32>
    %c0_3 = arith.constant 0 : index
    %c0_4 = arith.constant 0 : index
    %3 = vector.load %arg3[%c0_3, %c0_4] : memref<1x128xf32, #tpu.memory_space<vmem>>, vector<1x128xf32>
    %4 = vector.broadcast %3 : vector<1x128xf32> to vector<256x128xf32>
    %5 = arith.addf %2, %4 : vector<256x128xf32>
    %c0_5 = arith.constant 0 : index
    %c0_6 = arith.constant 0 : index
    %6 = vector.load %arg4[%c0_5, %c0_6] : memref<256x128xf32, #tpu.memory_space<vmem>>, vector<256x128xf32>
    tpu.vector_store %arg4[%c0_5, %c0_6], %5 {strides = array<i32>} : memref<256x128xf32, #tpu.memory_space<vmem>>, vector<256x128xf32>,
    return
  }
  func.func @transform_0(%arg0: i32) -> (i32, i32) {
    %c0_i32 = arith.constant 0 : i32
    %c0_i32_0 = arith.constant 0 : i32
    return %arg0, %c0_i32 : i32, i32
  }
  func.func @transform_1(%arg0: i32) -> (i32, i32) {
    %c0_i32 = arith.constant 0 : i32
    %c0_i32_0 = arith.constant 0 : i32
    %c0_i32_1 = arith.constant 0 : i32
    return %c0_i32, %c0_i32_0 : i32, i32
  }
  func.func @transform_2(%arg0: i32) -> (i32, i32) {
    %c0_i32 = arith.constant 0 : i32
    %c0_i32_0 = arith.constant 0 : i32
    %c0_i32_1 = arith.constant 0 : i32
    return %c0_i32, %c0_i32_0 : i32, i32
  }
  func.func @transform_3(%arg0: i32) -> (i32, i32) {
    %c0_i32 = arith.constant 0 : i32
    %c0_i32_0 = arith.constant 0 : i32
    return %arg0, %c0_i32 : i32, i32
  }
}

module attributes {stable_mosaic.version = 11 : i64} {
  func.func @_gemm_bias_act_kernel(%arg0: i32, %arg1: memref<256x1152xbf16, #tpu.memory_space<vmem>>, %arg2: memref<1152x128xbf16, #tpu.memory_space<vmem>>, %arg3: memref<1x128xf32, #tpu.memory_space<vmem>>, %arg4: memref<256x128xf32, #tpu.memory_space<vmem>>) attributes {dimension_semantics = [#tpu.dimension_semantics<parallel>], iteration_bounds = array<i64: 2>, scalar_prefetch = 0 : i64, scratch_operands = 0 : i64, tpu.core_type = #tpu.core_type<tc>, window_params = [{transform_indices = @transform_0, window_bounds = array<i64: 256, 1152>}, {pipeline_mode = #tpu.pipeline_mode<synchronous>, transform_indices = @transform_1, window_bounds = array<i64: 1152, 128>}, {pipeline_mode = #tpu.pipeline_mode<synchronous>, transform_indices = @transform_2, window_bounds = array<i64: 1, 128>}, {transform_indices = @transform_3, window_bounds = array<i64: 256, 128>}]} {
    %c0 = arith.constant 0 : index
    %c0_0 = arith.constant 0 : index
    %0 = vector.load %arg1[%c0, %c0_0] : memref<256x1152xbf16, #tpu.memory_space<vmem>>, vector<256x1152xbf16>
    %c0_1 = arith.constant 0 : index
    %c0_2 = arith.constant 0 : index
    %1 = vector.load %arg2[%c0_1, %c0_2] : memref<1152x128xbf16, #tpu.memory_space<vmem>>, vector<1152x128xbf16>
    %cst = arith.constant dense<0.000000e+00> : vector<256x128xf32>
    %2 = tpu.matmul %0, %1, %cst {dimension_numbers = #tpu.dot_dimension_numbers<[1], [0], [0], [1], [0, 0, 1, 1], [], []>} : vector<256x1152xbf16>, vector<1152x128xbf16>, vector<256x128xf32> -> vector<256x128xf32>
    %c0_3 = arith.constant 0 : index
    %c0_4 = arith.constant 0 : index
    %3 = vector.load %arg3[%c0_3, %c0_4] : memref<1x128xf32, #tpu.memory_space<vmem>>, vector<1x128xf32>
    %4 = vector.broadcast %3 : vector<1x128xf32> to vector<256x128xf32>
    %5 = arith.addf %2, %4 : vector<256x128xf32>
    %cst_5 = arith.constant 0.000000e+00 : f32
    %6 = vector.broadcast %cst_5 : f32 to vector<256x128xf32>
    %7 = arith.maximumf %5, %6 : vector<256x128xf32>
    %c0_6 = arith.constant 0 : index
    %c0_7 = arith.constant 0 : index
    %8 = vector.load %arg4[%c0_6, %c0_7] : memref<256x128xf32, #tpu.memory_space<vmem>>, vector<256x128xf32>
    tpu.vector_store %arg4[%c0_6, %c0_7], %7 {strides = array<i32>} : memref<256x128xf32, #tpu.memory_space<vmem>>, vector<256x128xf32>,
    return
  }
  func.func @transform_0(%arg0: i32) -> (i32, i32) {
    %c0_i32 = arith.constant 0 : i32
    %c0_i32_0 = arith.constant 0 : i32
    return %arg0, %c0_i32 : i32, i32
  }
  func.func @transform_1(%arg0: i32) -> (i32, i32) {
    %c0_i32 = arith.constant 0 : i32
    %c0_i32_0 = arith.constant 0 : i32
    %c0_i32_1 = arith.constant 0 : i32
    return %c0_i32, %c0_i32_0 : i32, i32
  }
  func.func @transform_2(%arg0: i32) -> (i32, i32) {
    %c0_i32 = arith.constant 0 : i32
    %c0_i32_0 = arith.constant 0 : i32
    %c0_i32_1 = arith.constant 0 : i32
    return %c0_i32, %c0_i32_0 : i32, i32
  }
  func.func @transform_3(%arg0: i32) -> (i32, i32) {
    %c0_i32 = arith.constant 0 : i32
    %c0_i32_0 = arith.constant 0 : i32
    return %arg0, %c0_i32 : i32, i32
  }
}

module attributes {stable_mosaic.version = 11 : i64} {
  func.func @_gemm_bias_res_relu_kernel(%arg0: i32, %arg1: memref<256x1152xbf16, #tpu.memory_space<vmem>>, %arg2: memref<1152x128xbf16, #tpu.memory_space<vmem>>, %arg3: memref<1x128xf32, #tpu.memory_space<vmem>>, %arg4: memref<256x128xf32, #tpu.memory_space<vmem>>, %arg5: memref<256x128xf32, #tpu.memory_space<vmem>>) attributes {dimension_semantics = [#tpu.dimension_semantics<parallel>], iteration_bounds = array<i64: 2>, scalar_prefetch = 0 : i64, scratch_operands = 0 : i64, tpu.core_type = #tpu.core_type<tc>, window_params = [{transform_indices = @transform_0, window_bounds = array<i64: 256, 1152>}, {pipeline_mode = #tpu.pipeline_mode<synchronous>, transform_indices = @transform_1, window_bounds = array<i64: 1152, 128>}, {pipeline_mode = #tpu.pipeline_mode<synchronous>, transform_indices = @transform_2, window_bounds = array<i64: 1, 128>}, {transform_indices = @transform_3, window_bounds = array<i64: 256, 128>}, {transform_indices = @transform_4, window_bounds = array<i64: 256, 128>}]} {
    %c0 = arith.constant 0 : index
    %c0_0 = arith.constant 0 : index
    %0 = vector.load %arg1[%c0, %c0_0] : memref<256x1152xbf16, #tpu.memory_space<vmem>>, vector<256x1152xbf16>
    %c0_1 = arith.constant 0 : index
    %c0_2 = arith.constant 0 : index
    %1 = vector.load %arg2[%c0_1, %c0_2] : memref<1152x128xbf16, #tpu.memory_space<vmem>>, vector<1152x128xbf16>
    %cst = arith.constant dense<0.000000e+00> : vector<256x128xf32>
    %2 = tpu.matmul %0, %1, %cst {dimension_numbers = #tpu.dot_dimension_numbers<[1], [0], [0], [1], [0, 0, 1, 1], [], []>} : vector<256x1152xbf16>, vector<1152x128xbf16>, vector<256x128xf32> -> vector<256x128xf32>
    %c0_3 = arith.constant 0 : index
    %c0_4 = arith.constant 0 : index
    %3 = vector.load %arg3[%c0_3, %c0_4] : memref<1x128xf32, #tpu.memory_space<vmem>>, vector<1x128xf32>
    %4 = vector.broadcast %3 : vector<1x128xf32> to vector<256x128xf32>
    %5 = arith.addf %2, %4 : vector<256x128xf32>
    %c0_5 = arith.constant 0 : index
    %c0_6 = arith.constant 0 : index
    %6 = vector.load %arg4[%c0_5, %c0_6] : memref<256x128xf32, #tpu.memory_space<vmem>>, vector<256x128xf32>
    %7 = arith.addf %5, %6 : vector<256x128xf32>
    %cst_7 = arith.constant 0.000000e+00 : f32
    %8 = vector.broadcast %cst_7 : f32 to vector<256x128xf32>
    %9 = arith.maximumf %7, %8 : vector<256x128xf32>
    %c0_8 = arith.constant 0 : index
    %c0_9 = arith.constant 0 : index
    %10 = vector.load %arg5[%c0_8, %c0_9] : memref<256x128xf32, #tpu.memory_space<vmem>>, vector<256x128xf32>
    tpu.vector_store %arg5[%c0_8, %c0_9], %9 {strides = array<i32>} : memref<256x128xf32, #tpu.memory_space<vmem>>, vector<256x128xf32>,
    return
  }
  func.func @transform_0(%arg0: i32) -> (i32, i32) {
    %c0_i32 = arith.constant 0 : i32
    %c0_i32_0 = arith.constant 0 : i32
    return %arg0, %c0_i32 : i32, i32
  }
  func.func @transform_1(%arg0: i32) -> (i32, i32) {
    %c0_i32 = arith.constant 0 : i32
    %c0_i32_0 = arith.constant 0 : i32
    %c0_i32_1 = arith.constant 0 : i32
    return %c0_i32, %c0_i32_0 : i32, i32
  }
  func.func @transform_2(%arg0: i32) -> (i32, i32) {
    %c0_i32 = arith.constant 0 : i32
    %c0_i32_0 = arith.constant 0 : i32
    %c0_i32_1 = arith.constant 0 : i32
    return %c0_i32, %c0_i32_0 : i32, i32
  }
  func.func @transform_3(%arg0: i32) -> (i32, i32) {
    %c0_i32 = arith.constant 0 : i32
    %c0_i32_0 = arith.constant 0 : i32
    return %arg0, %c0_i32 : i32, i32
  }
  func.func @transform_4(%arg0: i32) -> (i32, i32) {
    %c0_i32 = arith.constant 0 : i32
    %c0_i32_0 = arith.constant 0 : i32
    return %arg0, %c0_i32 : i32, i32
  }
}

module attributes {stable_mosaic.version = 11 : i64} {
  func.func @_gemm_bias_act_kernel(%arg0: i32, %arg1: memref<128x128xbf16, #tpu.memory_space<vmem>>, %arg2: memref<128x128xbf16, #tpu.memory_space<vmem>>, %arg3: memref<1x128xf32, #tpu.memory_space<vmem>>, %arg4: memref<128x128xf32, #tpu.memory_space<vmem>>) attributes {dimension_semantics = [#tpu.dimension_semantics<parallel>], iteration_bounds = array<i64: 1>, scalar_prefetch = 0 : i64, scratch_operands = 0 : i64, tpu.core_type = #tpu.core_type<tc>, window_params = [{transform_indices = @transform_0, window_bounds = array<i64: 128, 128>}, {pipeline_mode = #tpu.pipeline_mode<synchronous>, transform_indices = @transform_1, window_bounds = array<i64: 128, 128>}, {pipeline_mode = #tpu.pipeline_mode<synchronous>, transform_indices = @transform_2, window_bounds = array<i64: 1, 128>}, {transform_indices = @transform_3, window_bounds = array<i64: 128, 128>}]} {
    %c0 = arith.constant 0 : index
    %c0_0 = arith.constant 0 : index
    %0 = vector.load %arg1[%c0, %c0_0] : memref<128x128xbf16, #tpu.memory_space<vmem>>, vector<128x128xbf16>
    %c0_1 = arith.constant 0 : index
    %c0_2 = arith.constant 0 : index
    %1 = vector.load %arg2[%c0_1, %c0_2] : memref<128x128xbf16, #tpu.memory_space<vmem>>, vector<128x128xbf16>
    %cst = arith.constant dense<0.000000e+00> : vector<128x128xf32>
    %2 = tpu.matmul %0, %1, %cst {dimension_numbers = #tpu.dot_dimension_numbers<[1], [0], [0], [1], [0, 0, 1, 1], [], []>} : vector<128x128xbf16>, vector<128x128xbf16>, vector<128x128xf32> -> vector<128x128xf32>
    %c0_3 = arith.constant 0 : index
    %c0_4 = arith.constant 0 : index
    %3 = vector.load %arg3[%c0_3, %c0_4] : memref<1x128xf32, #tpu.memory_space<vmem>>, vector<1x128xf32>
    %4 = vector.broadcast %3 : vector<1x128xf32> to vector<128x128xf32>
    %5 = arith.addf %2, %4 : vector<128x128xf32>
    %c0_5 = arith.constant 0 : index
    %c0_6 = arith.constant 0 : index
    %6 = vector.load %arg4[%c0_5, %c0_6] : memref<128x128xf32, #tpu.memory_space<vmem>>, vector<128x128xf32>
    tpu.vector_store %arg4[%c0_5, %c0_6], %5 {strides = array<i32>} : memref<128x128xf32, #tpu.memory_space<vmem>>, vector<128x128xf32>,
    return
  }
  func.func @transform_0(%arg0: i32) -> (i32, i32) {
    %c0_i32 = arith.constant 0 : i32
    %c0_i32_0 = arith.constant 0 : i32
    return %arg0, %c0_i32 : i32, i32
  }
  func.func @transform_1(%arg0: i32) -> (i32, i32) {
    %c0_i32 = arith.constant 0 : i32
    %c0_i32_0 = arith.constant 0 : i32
    %c0_i32_1 = arith.constant 0 : i32
    return %c0_i32, %c0_i32_0 : i32, i32
  }
  func.func @transform_2(%arg0: i32) -> (i32, i32) {
    %c0_i32 = arith.constant 0 : i32
    %c0_i32_0 = arith.constant 0 : i32
    %c0_i32_1 = arith.constant 0 : i32
    return %c0_i32, %c0_i32_0 : i32, i32
  }
  func.func @transform_3(%arg0: i32) -> (i32, i32) {
    %c0_i32 = arith.constant 0 : i32
    %c0_i32_0 = arith.constant 0 : i32
    return %arg0, %c0_i32 : i32, i32
  }
}

module attributes {stable_mosaic.version = 11 : i64} {
  func.func @_gemm_bias_act_kernel(%arg0: i32, %arg1: memref<128x1152xbf16, #tpu.memory_space<vmem>>, %arg2: memref<1152x128xbf16, #tpu.memory_space<vmem>>, %arg3: memref<1x128xf32, #tpu.memory_space<vmem>>, %arg4: memref<128x128xf32, #tpu.memory_space<vmem>>) attributes {dimension_semantics = [#tpu.dimension_semantics<parallel>], iteration_bounds = array<i64: 1>, scalar_prefetch = 0 : i64, scratch_operands = 0 : i64, tpu.core_type = #tpu.core_type<tc>, window_params = [{transform_indices = @transform_0, window_bounds = array<i64: 128, 1152>}, {pipeline_mode = #tpu.pipeline_mode<synchronous>, transform_indices = @transform_1, window_bounds = array<i64: 1152, 128>}, {pipeline_mode = #tpu.pipeline_mode<synchronous>, transform_indices = @transform_2, window_bounds = array<i64: 1, 128>}, {transform_indices = @transform_3, window_bounds = array<i64: 128, 128>}]} {
    %c0 = arith.constant 0 : index
    %c0_0 = arith.constant 0 : index
    %0 = vector.load %arg1[%c0, %c0_0] : memref<128x1152xbf16, #tpu.memory_space<vmem>>, vector<128x1152xbf16>
    %c0_1 = arith.constant 0 : index
    %c0_2 = arith.constant 0 : index
    %1 = vector.load %arg2[%c0_1, %c0_2] : memref<1152x128xbf16, #tpu.memory_space<vmem>>, vector<1152x128xbf16>
    %cst = arith.constant dense<0.000000e+00> : vector<128x128xf32>
    %2 = tpu.matmul %0, %1, %cst {dimension_numbers = #tpu.dot_dimension_numbers<[1], [0], [0], [1], [0, 0, 1, 1], [], []>} : vector<128x1152xbf16>, vector<1152x128xbf16>, vector<128x128xf32> -> vector<128x128xf32>
    %c0_3 = arith.constant 0 : index
    %c0_4 = arith.constant 0 : index
    %3 = vector.load %arg3[%c0_3, %c0_4] : memref<1x128xf32, #tpu.memory_space<vmem>>, vector<1x128xf32>
    %4 = vector.broadcast %3 : vector<1x128xf32> to vector<128x128xf32>
    %5 = arith.addf %2, %4 : vector<128x128xf32>
    %cst_5 = arith.constant 0.000000e+00 : f32
    %6 = vector.broadcast %cst_5 : f32 to vector<128x128xf32>
    %7 = arith.maximumf %5, %6 : vector<128x128xf32>
    %c0_6 = arith.constant 0 : index
    %c0_7 = arith.constant 0 : index
    %8 = vector.load %arg4[%c0_6, %c0_7] : memref<128x128xf32, #tpu.memory_space<vmem>>, vector<128x128xf32>
    tpu.vector_store %arg4[%c0_6, %c0_7], %7 {strides = array<i32>} : memref<128x128xf32, #tpu.memory_space<vmem>>, vector<128x128xf32>,
    return
  }
  func.func @transform_0(%arg0: i32) -> (i32, i32) {
    %c0_i32 = arith.constant 0 : i32
    %c0_i32_0 = arith.constant 0 : i32
    return %arg0, %c0_i32 : i32, i32
  }
  func.func @transform_1(%arg0: i32) -> (i32, i32) {
    %c0_i32 = arith.constant 0 : i32
    %c0_i32_0 = arith.constant 0 : i32
    %c0_i32_1 = arith.constant 0 : i32
    return %c0_i32, %c0_i32_0 : i32, i32
  }
  func.func @transform_2(%arg0: i32) -> (i32, i32) {
    %c0_i32 = arith.constant 0 : i32
    %c0_i32_0 = arith.constant 0 : i32
    %c0_i32_1 = arith.constant 0 : i32
    return %c0_i32, %c0_i32_0 : i32, i32
  }
  func.func @transform_3(%arg0: i32) -> (i32, i32) {
    %c0_i32 = arith.constant 0 : i32
    %c0_i32_0 = arith.constant 0 : i32
    return %arg0, %c0_i32 : i32, i32
  }
}

module attributes {stable_mosaic.version = 11 : i64} {
  func.func @_gemm_bias_res_relu_kernel(%arg0: i32, %arg1: memref<128x1152xbf16, #tpu.memory_space<vmem>>, %arg2: memref<1152x128xbf16, #tpu.memory_space<vmem>>, %arg3: memref<1x128xf32, #tpu.memory_space<vmem>>, %arg4: memref<128x128xf32, #tpu.memory_space<vmem>>, %arg5: memref<128x128xf32, #tpu.memory_space<vmem>>) attributes {dimension_semantics = [#tpu.dimension_semantics<parallel>], iteration_bounds = array<i64: 1>, scalar_prefetch = 0 : i64, scratch_operands = 0 : i64, tpu.core_type = #tpu.core_type<tc>, window_params = [{transform_indices = @transform_0, window_bounds = array<i64: 128, 1152>}, {pipeline_mode = #tpu.pipeline_mode<synchronous>, transform_indices = @transform_1, window_bounds = array<i64: 1152, 128>}, {pipeline_mode = #tpu.pipeline_mode<synchronous>, transform_indices = @transform_2, window_bounds = array<i64: 1, 128>}, {transform_indices = @transform_3, window_bounds = array<i64: 128, 128>}, {transform_indices = @transform_4, window_bounds = array<i64: 128, 128>}]} {
    %c0 = arith.constant 0 : index
    %c0_0 = arith.constant 0 : index
    %0 = vector.load %arg1[%c0, %c0_0] : memref<128x1152xbf16, #tpu.memory_space<vmem>>, vector<128x1152xbf16>
    %c0_1 = arith.constant 0 : index
    %c0_2 = arith.constant 0 : index
    %1 = vector.load %arg2[%c0_1, %c0_2] : memref<1152x128xbf16, #tpu.memory_space<vmem>>, vector<1152x128xbf16>
    %cst = arith.constant dense<0.000000e+00> : vector<128x128xf32>
    %2 = tpu.matmul %0, %1, %cst {dimension_numbers = #tpu.dot_dimension_numbers<[1], [0], [0], [1], [0, 0, 1, 1], [], []>} : vector<128x1152xbf16>, vector<1152x128xbf16>, vector<128x128xf32> -> vector<128x128xf32>
    %c0_3 = arith.constant 0 : index
    %c0_4 = arith.constant 0 : index
    %3 = vector.load %arg3[%c0_3, %c0_4] : memref<1x128xf32, #tpu.memory_space<vmem>>, vector<1x128xf32>
    %4 = vector.broadcast %3 : vector<1x128xf32> to vector<128x128xf32>
    %5 = arith.addf %2, %4 : vector<128x128xf32>
    %c0_5 = arith.constant 0 : index
    %c0_6 = arith.constant 0 : index
    %6 = vector.load %arg4[%c0_5, %c0_6] : memref<128x128xf32, #tpu.memory_space<vmem>>, vector<128x128xf32>
    %7 = arith.addf %5, %6 : vector<128x128xf32>
    %cst_7 = arith.constant 0.000000e+00 : f32
    %8 = vector.broadcast %cst_7 : f32 to vector<128x128xf32>
    %9 = arith.maximumf %7, %8 : vector<128x128xf32>
    %c0_8 = arith.constant 0 : index
    %c0_9 = arith.constant 0 : index
    %10 = vector.load %arg5[%c0_8, %c0_9] : memref<128x128xf32, #tpu.memory_space<vmem>>, vector<128x128xf32>
    tpu.vector_store %arg5[%c0_8, %c0_9], %9 {strides = array<i32>} : memref<128x128xf32, #tpu.memory_space<vmem>>, vector<128x128xf32>,
    return
  }
  func.func @transform_0(%arg0: i32) -> (i32, i32) {
    %c0_i32 = arith.constant 0 : i32
    %c0_i32_0 = arith.constant 0 : i32
    return %arg0, %c0_i32 : i32, i32
  }
  func.func @transform_1(%arg0: i32) -> (i32, i32) {
    %c0_i32 = arith.constant 0 : i32
    %c0_i32_0 = arith.constant 0 : i32
    %c0_i32_1 = arith.constant 0 : i32
    return %c0_i32, %c0_i32_0 : i32, i32
  }
  func.func @transform_2(%arg0: i32) -> (i32, i32) {
    %c0_i32 = arith.constant 0 : i32
    %c0_i32_0 = arith.constant 0 : i32
    %c0_i32_1 = arith.constant 0 : i32
    return %c0_i32, %c0_i32_0 : i32, i32
  }
  func.func @transform_3(%arg0: i32) -> (i32, i32) {
    %c0_i32 = arith.constant 0 : i32
    %c0_i32_0 = arith.constant 0 : i32
    return %arg0, %c0_i32 : i32, i32
  }
  func.func @transform_4(%arg0: i32) -> (i32, i32) {
    %c0_i32 = arith.constant 0 : i32
    %c0_i32_0 = arith.constant 0 : i32
    return %arg0, %c0_i32 : i32, i32
  }
}

</mosaic_0001>

<llo_original>
// kernel: _lambda_.10
$region0: #{_lambda_.10}
  #allocation0 [shape = 'u32[]', space=smem, size = 0x4, offset = 0x4, fixed_abs, tag = 'smem constant byte address 0x4 - core index']
  #allocation1 [shape = 'u32[144,128]{1,0:T(1,128)}', space=vmem, size = 0x12000, scoped, tag = 'internal scratch']
  %s0 = inlined_call_operand.vmem [shape: bf16[512,128], index: 0, kind: input, shape index: {}]
  %s1 = inlined_call_operand.hbm [shape: bf16[128,128], index: 1, kind: input, shape index: {}]
  %s2 = inlined_call_operand.hbm [shape: f32[1,128], index: 2, kind: input, shape index: {}]
  %s3 = inlined_call_operand.vmem [shape: f32[512,128], index: 3, kind: output, shape index: {}]
  %s4 = sld [smem:[#allocation0]]
  $region53: #{_lambda_.10} parent=0
    _
  %s6 = ssub.s32 1, %s4
  %s7 = scalar_select 0, %s6, %s4
  $region1: #{_lambda_.10} parent=0
    #allocation2 [shape = 'u8[32768]{0}', space=vmem, size = 0x8000, scoped, tag = 'input window, operand 1, single buffered']
    #allocation3 [shape = 's32[2]{0}', space=sflag, size = 0x8, scoped, tag = 'scoped memory for _lambda_.10']
    #allocation4 [shape = 'u8[512]{0}', space=vmem, size = 0x400, scoped, tag = 'input window, operand 2, single buffered']
    #allocation5 [shape = 's32[1]{0}', space=sflag, size = 0x4, scoped, tag = 'scoped memory for _lambda_.10']
    %8 = vsyncpa [#allocation3], 0
    %9 = vsyncpa [#allocation5], 0
    loop: start=0, step=1, limit=4
    $region2: #{_lambda_.10} parent=1 // loop_pre_header
      _
    $region3: #{_lambda_.10} parent=1 // loop_header
      %s11 = sphi 0, %s15
      %p12 = scmp.ge.s32.totalorder %s11, 4
      %s21 = sphi 0, %s23
      %s24 = sphi 0, %s21
      %s25 = sphi 0, %s24
      %s41 = sphi 0, %s25
      %s45 = sphi 0, %s45
      %s47 = sphi 0, %s45
      %s48 = sphi 0, %s47
      %s62 = sphi 0, %s48
      %s66 = sphi 0, %s66
      %s68 = sphi 0, %s66
      %s69 = sphi 0, %s68
      %s83 = sphi 0, %s69
      %s89 = sphi 0, %s91
      %s92 = sphi 0, %s89
      %s93 = sphi 0, %s92
      %s109 = sphi 0, %s93
    $region4: #{_lambda_.10} parent=1 // loop_header_branch
      %14 = sbr.rel (%p12) target = $region8
    $region5: #{_lambda_.10} parent=1 // loop_body
      %s16 = ssub.s32 %s11, 1
      %s17 = ssub.s32 %s11, 2
      %s18 = sadd.s32 %s11, 1
      %s19 = ssub.s32 %s11, %s18
      %p20 = scmp.eq.s32.totalorder %s19, 0
      %s22 = sadd.s32 %s21, 1
      %s23 = scalar_select %p20, %s21, %s22
      %p26 = pneg %p20
      %p27 = scmp.eq.s32.totalorder %s11, 1
      %p28 = por %p26, %p27
      %p29 = scmp.ne.s32.totalorder %s21, %s24
      %p30 = scmp.eq.s32.totalorder %s11, 0
      %p31 = por %p29, %p30
      %p32 = scmp.ne.s32.totalorder %s21, %s24
      %p33 = scmp.eq.s32.totalorder %s16, 1
      %p34 = por %p32, %p33
      %p35 = scmp.ne.s32.totalorder %s24, %s25
      %p36 = scmp.eq.s32.totalorder %s16, 0
      %p37 = por %p35, %p36
      %p38 = scmp.ne.s32.totalorder %s24, %s25
      %p39 = scmp.eq.s32.totalorder %s17, 1
      %p40 = por %p38, %p39
      %p42 = scmp.ne.s32.totalorder %s25, %s41
      %p43 = scmp.eq.s32.totalorder %s17, 0
      %p44 = por %p42, %p43
      %s46 = sadd.s32 %s45, 1
      %p49 = scmp.eq.s32.totalorder %s11, 1
      %p50 = scmp.ne.s32.totalorder %s45, %s47
      %p51 = scmp.eq.s32.totalorder %s11, 0
      %p52 = por %p50, %p51
      %p53 = scmp.ne.s32.totalorder %s45, %s47
      %p54 = scmp.eq.s32.totalorder %s16, 1
      %p55 = por %p53, %p54
      %p56 = scmp.ne.s32.totalorder %s47, %s48
      %p57 = scmp.eq.s32.totalorder %s16, 0
      %p58 = por %p56, %p57
      %p59 = scmp.ne.s32.totalorder %s47, %s48
      %p60 = scmp.eq.s32.totalorder %s17, 1
      %p61 = por %p59, %p60
      %p63 = scmp.ne.s32.totalorder %s48, %s62
      %p64 = scmp.eq.s32.totalorder %s17, 0
      %p65 = por %p63, %p64
      %s67 = sadd.s32 %s66, 1
      %p70 = scmp.eq.s32.totalorder %s11, 1
      %p71 = scmp.ne.s32.totalorder %s66, %s68
      %p72 = scmp.eq.s32.totalorder %s11, 0
      %p73 = por %p71, %p72
      %p74 = scmp.ne.s32.totalorder %s66, %s68
      %p75 = scmp.eq.s32.totalorder %s16, 1
      %p76 = por %p74, %p75
      %p77 = scmp.ne.s32.totalorder %s68, %s69
      %p78 = scmp.eq.s32.totalorder %s16, 0
      %p79 = por %p77, %p78
      %p80 = scmp.ne.s32.totalorder %s68, %s69
      %p81 = scmp.eq.s32.totalorder %s17, 1
      %p82 = por %p80, %p81
      %p84 = scmp.ne.s32.totalorder %s69, %s83
      %p85 = scmp.eq.s32.totalorder %s17, 0
      %p86 = por %p84, %p85
      %s87 = ssub.s32 %s11, %s18
      %p88 = scmp.eq.s32.totalorder %s87, 0
      %s90 = sadd.s32 %s89, 1
      %s91 = scalar_select %p88, %s89, %s90
      %p94 = pneg %p88
      %p95 = scmp.eq.s32.totalorder %s11, 1
      %p96 = por %p94, %p95
      %p97 = scmp.ne.s32.totalorder %s89, %s92
      %p98 = scmp.eq.s32.totalorder %s11, 0
      %p99 = por %p97, %p98
      %p100 = scmp.ne.s32.totalorder %s89, %s92
      %p101 = scmp.eq.s32.totalorder %s16, 1
      %p102 = por %p100, %p101
      %p103 = scmp.ne.s32.totalorder %s92, %s93
      %p104 = scmp.eq.s32.totalorder %s16, 0
      %p105 = por %p103, %p104
      %p106 = scmp.ne.s32.totalorder %s92, %s93
      %p107 = scmp.eq.s32.totalorder %s17, 1
      %p108 = por %p106, %p107
      %p110 = scmp.ne.s32.totalorder %s93, %s109
      %p111 = scmp.eq.s32.totalorder %s17, 0
      %p112 = por %p110, %p111
      %p113 = scmp.le.s32.totalorder 1, %s11
      %p114 = scmp.lt.s32.totalorder %s11, 3
      %p115 = pnand %p113, %p114
      %p116 = pneg %p115
      // Predicated region
      $region9: #{_lambda_.10} parent=5 // pred_check
        _
      $region10: #{_lambda_.10} parent=5 // pred_check_branch
        %118 = sbr.rel (%p115) target = $region12
      $region11: #{_lambda_.10} parent=5 // pred_region
        %s119 = ssub.s32 %s11, 1
        // Predicated region
        $region13: #{_lambda_.10} parent=11 // pred_check
          %p120 = pneg %p58
        $region14: #{_lambda_.10} parent=11 // pred_check_branch
          %122 = sbr.rel (%p120) target = $region16
        $region15: #{_lambda_.10} parent=11 // pred_region
          %s124 = ssub.s32 1024, 1024
          %125 = vsyncadd [#allocation3], %s124
          %s126 = sshll.u32 [#allocation2], 4
          %s127 = int_to_ptr.vmem [resolvable:$true] %s126
          %132 = dma.hbm_to_vmem [thread:$0]  %s1, 1024, %s127, [#allocation3], 64, 64, 4
        $region16: #{_lambda_.10} parent=11 // pred_fallthru
          _
        // Predicated region
        $region17: #{_lambda_.10} parent=11 // pred_check
          %p133 = pneg %p79
        $region18: #{_lambda_.10} parent=11 // pred_check_branch
          %135 = sbr.rel (%p133) target = $region20
        $region19: #{_lambda_.10} parent=11 // pred_region
          %s137 = ssub.s32 16, 16
          %138 = vsyncadd [#allocation5], %s137
          %s140 = sshll.u32 [#allocation4], 4
          %s141 = int_to_ptr.vmem [resolvable:$true] %s140
          %143 = dma.hbm_to_vmem [thread:$0]  %s2, 16, %s141, [#allocation5]
        $region20: #{_lambda_.10} parent=11 // pred_fallthru
          _
      $region12: #{_lambda_.10} parent=5 // pred_fallthru
        _
      %p144 = scmp.lt.s32.totalorder %s11, 2
      // Predicated region
      $region21: #{_lambda_.10} parent=5 // pred_check
        %p145 = pneg %p144
      $region22: #{_lambda_.10} parent=5 // pred_check_branch
        %147 = sbr.rel (%p145) target = $region24
      $region23: #{_lambda_.10} parent=5 // pred_region
        // Predicated region
        $region25: #{_lambda_.10} parent=23 // pred_check
          %p148 = pneg %p31
        $region26: #{_lambda_.10} parent=23 // pred_check_branch
          %150 = sbr.rel (%p148) target = $region28
        $region27: #{_lambda_.10} parent=23 // pred_region
          %s151 = smul.u32 32, %s11
          %p152 = scmp.lt.s32.totalorder %s151, 63
          %s153 = scalar_select %p152, %s151, 63
          %s154 = smul.addr %s153, 4
          %s155 = scalar_lea.vmem %s0, %s154
          %s156 = smul.u32 32, %s11
        $region28: #{_lambda_.10} parent=23 // pred_fallthru
          _
      $region24: #{_lambda_.10} parent=5 // pred_fallthru
        _
      %p157 = scmp.le.s32.totalorder 1, %s11
      %p158 = scmp.lt.s32.totalorder %s11, 3
      %p159 = pnand %p157, %p158
      %p160 = pneg %p159
      // Predicated region
      $region29: #{_lambda_.10} parent=5 // pred_check
        _
      $region30: #{_lambda_.10} parent=5 // pred_check_branch
        %162 = sbr.rel (%p159) target = $region32
      $region31: #{_lambda_.10} parent=5 // pred_region
        %s163 = ssub.s32 %s11, 1
        // Predicated region
        $region33: #{_lambda_.10} parent=31 // pred_check
          %p164 = pneg %p58
        $region34: #{_lambda_.10} parent=31 // pred_check_branch
          %166 = sbr.rel (%p164) target = $region36
        $region35: #{_lambda_.10} parent=31 // pred_region
          %167 = dma.done [#allocation3], 1024
        $region36: #{_lambda_.10} parent=31 // pred_fallthru
          _
        // Predicated region
        $region37: #{_lambda_.10} parent=31 // pred_check
          %p168 = pneg %p79
        $region38: #{_lambda_.10} parent=31 // pred_check_branch
          %170 = sbr.rel (%p168) target = $region40
        $region39: #{_lambda_.10} parent=31 // pred_region
          %171 = dma.done [#allocation5], 16
        $region40: #{_lambda_.10} parent=31 // pred_fallthru
          _
        %s172 = smul.u32 32, %s16
        %p173 = scmp.lt.s32.totalorder %s172, 63
        %s174 = scalar_select %p173, %s172, 63
        %s175 = smul.addr %s174, 4
        %s176 = scalar_lea.vmem %s0, %s175
        %p177 = pneg %p37
        %p178 = pneg %p34
        %p179 = pneg %p58
        %p180 = pneg %p55
        %p181 = pneg %p79
        %p182 = pneg %p76
        %p183 = pneg %p105
        %p184 = pneg %p102
        %s185 = smul.u32 32, %s16
        %p186 = scmp.lt.s32.totalorder %s185, 63
        %s187 = scalar_select %p186, %s185, 63
        %s188 = smul.addr %s187, 8
        %s189 = scalar_lea.vmem %s3, %s188
        %s190 = smul.u32 32, %s16
        %p191 = scmp.lt.s32.totalorder %s190, 63
        %s192 = scalar_select %p191, %s190, 63
        %s193 = smul.addr %s192, 4
        %s194 = scalar_lea.vmem %s0, %s193
        %s195 = smul.u32 32, %s16
        %s196 = smul.u32 32, %s16
        %p197 = scmp.lt.s32.totalorder %s196, 63
        %s198 = scalar_select %p197, %s196, 63
        %s199 = smul.addr %s198, 8
        %s200 = scalar_lea.vmem %s3, %s199
        %s201 = smul.u32 32, %s16
        %v203 = vld [vmem:[%s194] sm:$0xf]
        %v204 = vld [vmem:[%s194 + $0x4] sm:$0xf]
        %v205 = vld [vmem:[%s194 + $0x8] sm:$0xf]
        %v206 = vld [vmem:[%s194 + $0xc] sm:$0xf]
        %v207 = vld [vmem:[%s194 + $0x10] sm:$0xf]
        %v208 = vld [vmem:[%s194 + $0x14] sm:$0xf]
        %v209 = vld [vmem:[%s194 + $0x18] sm:$0xf]
        %v210 = vld [vmem:[%s194 + $0x1c] sm:$0xf]
        %v211 = vld [vmem:[%s194 + $0x20] sm:$0xf]
        %v212 = vld [vmem:[%s194 + $0x24] sm:$0xf]
        %v213 = vld [vmem:[%s194 + $0x28] sm:$0xf]
        %v214 = vld [vmem:[%s194 + $0x2c] sm:$0xf]
        %v215 = vld [vmem:[%s194 + $0x30] sm:$0xf]
        %v216 = vld [vmem:[%s194 + $0x34] sm:$0xf]
        %v217 = vld [vmem:[%s194 + $0x38] sm:$0xf]
        %v218 = vld [vmem:[%s194 + $0x3c] sm:$0xf]
        %v219 = vld [vmem:[%s194 + $0x40] sm:$0xf]
        %v220 = vld [vmem:[%s194 + $0x44] sm:$0xf]
        %v221 = vld [vmem:[%s194 + $0x48] sm:$0xf]
        %v222 = vld [vmem:[%s194 + $0x4c] sm:$0xf]
        %v223 = vld [vmem:[%s194 + $0x50] sm:$0xf]
        %v224 = vld [vmem:[%s194 + $0x54] sm:$0xf]
        %v225 = vld [vmem:[%s194 + $0x58] sm:$0xf]
        %v226 = vld [vmem:[%s194 + $0x5c] sm:$0xf]
        %v227 = vld [vmem:[%s194 + $0x60] sm:$0xf]
        %v228 = vld [vmem:[%s194 + $0x64] sm:$0xf]
        %v229 = vld [vmem:[%s194 + $0x68] sm:$0xf]
        %v230 = vld [vmem:[%s194 + $0x6c] sm:$0xf]
        %v231 = vld [vmem:[%s194 + $0x70] sm:$0xf]
        %v232 = vld [vmem:[%s194 + $0x74] sm:$0xf]
        %v233 = vld [vmem:[%s194 + $0x78] sm:$0xf]
        %v234 = vld [vmem:[%s194 + $0x7c] sm:$0xf]
        %v235 = vld [vmem:[#allocation2] sm:$0xf]
        %v236 = vld [vmem:[#allocation2 + $0x4] sm:$0xf]
        %v237 = vld [vmem:[#allocation2 + $0x8] sm:$0xf]
        %v238 = vld [vmem:[#allocation2 + $0xc] sm:$0xf]
        %v239 = vld [vmem:[#allocation2 + $0x10] sm:$0xf]
        %v240 = vld [vmem:[#allocation2 + $0x14] sm:$0xf]
        %v241 = vld [vmem:[#allocation2 + $0x18] sm:$0xf]
        %v242 = vld [vmem:[#allocation2 + $0x1c] sm:$0xf]
        %v243 = vld [vmem:[#allocation2 + $0x20] sm:$0xf]
        %v244 = vld [vmem:[#allocation2 + $0x24] sm:$0xf]
        %v245 = vld [vmem:[#allocation2 + $0x28] sm:$0xf]
        %v246 = vld [vmem:[#allocation2 + $0x2c] sm:$0xf]
        %v247 = vld [vmem:[#allocation2 + $0x30] sm:$0xf]
        %v248 = vld [vmem:[#allocation2 + $0x34] sm:$0xf]
        %v249 = vld [vmem:[#allocation2 + $0x38] sm:$0xf]
        %v250 = vld [vmem:[#allocation2 + $0x3c] sm:$0xf]
        %v251 = vld [vmem:[#allocation4] sm:$0x1]
        %v253 = vlaneseq
        %v254 = vshrl.u32 %v253, 7
        %v255 = vsub.s32 0, %v254
        %v256 = vrot.slane %v251, %v255
        %v290 = vunpack.c.l.b16 %v203
        %v291 = vunpack.c.l.b16 %v204
        %v292 = vunpack.c.l.b16 %v205
        %v293 = vunpack.c.l.b16 %v206
        %v294 = vunpack.c.l.b16 %v207
        %v295 = vunpack.c.l.b16 %v208
        %v296 = vunpack.c.l.b16 %v209
        %v297 = vunpack.c.l.b16 %v210
        %v298 = vunpack.c.l.b16 %v211
        %v299 = vunpack.c.l.b16 %v212
        %v300 = vunpack.c.l.b16 %v213
        %v301 = vunpack.c.l.b16 %v214
        %v302 = vunpack.c.l.b16 %v215
        %v303 = vunpack.c.l.b16 %v216
        %v304 = vunpack.c.l.b16 %v217
        %v305 = vunpack.c.l.b16 %v218
        %v306 = vunpack.c.l.b16 %v219
        %v307 = vunpack.c.l.b16 %v220
        %v308 = vunpack.c.l.b16 %v221
        %v309 = vunpack.c.l.b16 %v222
        %v310 = vunpack.c.l.b16 %v223
        %v311 = vunpack.c.l.b16 %v224
        %v312 = vunpack.c.l.b16 %v225
        %v313 = vunpack.c.l.b16 %v226
        %v314 = vunpack.c.l.b16 %v227
        %v315 = vunpack.c.l.b16 %v228
        %v316 = vunpack.c.l.b16 %v229
        %v317 = vunpack.c.l.b16 %v230
        %v318 = vunpack.c.l.b16 %v231
        %v319 = vunpack.c.l.b16 %v232
        %v320 = vunpack.c.l.b16 %v233
        %v321 = vunpack.c.l.b16 %v234
        %v322 = vpack.c.b16 %v291, %v290
        %v323 = vpack.c.b16 %v293, %v292
        %v324 = vpack.c.b16 %v295, %v294
        %v325 = vpack.c.b16 %v297, %v296
        %v326 = vpack.c.b16 %v299, %v298
        %v327 = vpack.c.b16 %v301, %v300
        %v328 = vpack.c.b16 %v303, %v302
        %v329 = vpack.c.b16 %v305, %v304
        %v330 = vpack.c.b16 %v307, %v306
        %v331 = vpack.c.b16 %v309, %v308
        %v332 = vpack.c.b16 %v311, %v310
        %v333 = vpack.c.b16 %v313, %v312
        %v334 = vpack.c.b16 %v315, %v314
        %v335 = vpack.c.b16 %v317, %v316
        %v336 = vpack.c.b16 %v319, %v318
        %v337 = vpack.c.b16 %v321, %v320
        %v370 = vunpack.c.l.b16 %v235
        %v371 = vunpack.c.l.b16 %v236
        %v372 = vunpack.c.l.b16 %v237
        %v373 = vunpack.c.l.b16 %v238
        %v374 = vunpack.c.l.b16 %v239
        %v375 = vunpack.c.l.b16 %v240
        %v376 = vunpack.c.l.b16 %v241
        %v377 = vunpack.c.l.b16 %v242
        %v378 = vunpack.c.l.b16 %v243
        %v379 = vunpack.c.l.b16 %v244
        %v380 = vunpack.c.l.b16 %v245
        %v381 = vunpack.c.l.b16 %v246
        %v382 = vunpack.c.l.b16 %v247
        %v383 = vunpack.c.l.b16 %v248
        %v384 = vunpack.c.l.b16 %v249
        %v385 = vunpack.c.l.b16 %v250
        %v386 = vpack.c.b16 %v371, %v370
        %v387 = vpack.c.b16 %v373, %v372
        %v388 = vpack.c.b16 %v375, %v374
        %v389 = vpack.c.b16 %v377, %v376
        %v390 = vpack.c.b16 %v379, %v378
        %v391 = vpack.c.b16 %v381, %v380
        %v392 = vpack.c.b16 %v383, %v382
        %v393 = vpack.c.b16 %v385, %v384
        %402 = vmatprep.subr.bf16.mxu0 0
        %403 = vmatpush1.bf16.msra.mxu0 %v393
        %404 = vmatprep.subr.bf16.mxu0 0
        %405 = vmatpush1.bf16.msra.mxu0 %v392
        %406 = vmatprep.subr.bf16.mxu0 0
        %407 = vmatpush1.bf16.msra.mxu0 %v391
        %408 = vmatprep.subr.bf16.mxu0 0
        %409 = vmatpush1.bf16.msra.mxu0 %v390
        %410 = vmatprep.subr.bf16.mxu0 0
        %411 = vmatpush1.bf16.msra.mxu0 %v389
        %412 = vmatprep.subr.bf16.mxu0 0
        %413 = vmatpush1.bf16.msra.mxu0 %v388
        %414 = vmatprep.subr.bf16.mxu0 0
        %415 = vmatpush1.bf16.msra.mxu0 %v387
        %416 = vmatprep.subr.bf16.mxu0 0
        %417 = vmatpush1.bf16.msra.mxu0 %v386
        %418 = vmatprep.subr.bf16.mxu0 0
        %419 = vmatpush2.bf16.msra.mxu0 0
        %420 = vmatprep.subr.bf16.mxu0 0
        %421 = vmatpush2.bf16.msra.mxu0 0
        %422 = vmatprep.subr.bf16.mxu0 0
        %423 = vmatpush2.bf16.msra.mxu0 0
        %424 = vmatprep.subr.bf16.mxu0 0
        %425 = vmatpush2.bf16.msra.mxu0 0
        %426 = vmatprep.subr.bf16.mxu0 0
        %427 = vmatpush2.bf16.msra.mxu0 0
        %428 = vmatprep.subr.bf16.mxu0 0
        %429 = vmatpush2.bf16.msra.mxu0 0
        %430 = vmatprep.subr.bf16.mxu0 0
        %431 = vmatpush2.bf16.msra.mxu0 0
        %432 = vmatprep.subr.bf16.mxu0 0
        %433 = vmatpush2.bf16.msra.mxu0 0
        %434 = vmatprep.mubr.bf16.mxu0 0
        %435 = vmatmul.mubr.bf16.gmra.mxu0 %v322
        %v436 = vpop.f32.mrf.mxu0
        %v437 = vadd.f32 %v256, %v436
        %v438 = vpop.f32.mrf.mxu0
        %v439 = vpop.f32.mrf.mxu0
        %v440 = vadd.f32 %v256, %v439
        %v441 = vpop.f32.mrf.mxu0
        %442 = vmatprep.mubr.bf16.mxu0 0
        %443 = vmatmul.mubr.bf16.gmra.mxu0 %v323
        %v444 = vpop.f32.mrf.mxu0
        %v445 = vadd.f32 %v256, %v444
        %v446 = vpop.f32.mrf.mxu0
        %v447 = vpop.f32.mrf.mxu0
        %v448 = vadd.f32 %v256, %v447
        %v449 = vpop.f32.mrf.mxu0
        %450 = vmatprep.mubr.bf16.mxu0 0
        %451 = vmatmul.mubr.bf16.gmra.mxu0 %v324
        %v452 = vpop.f32.mrf.mxu0
        %v453 = vadd.f32 %v256, %v452
        %v454 = vpop.f32.mrf.mxu0
        %v455 = vpop.f32.mrf.mxu0
        %v456 = vadd.f32 %v256, %v455
        %v457 = vpop.f32.mrf.mxu0
        %458 = vmatprep.mubr.bf16.mxu0 0
        %459 = vmatmul.mubr.bf16.gmra.mxu0 %v325
        %v460 = vpop.f32.mrf.mxu0
        %v461 = vadd.f32 %v256, %v460
        %v462 = vpop.f32.mrf.mxu0
        %v463 = vpop.f32.mrf.mxu0
        %v464 = vadd.f32 %v256, %v463
        %v465 = vpop.f32.mrf.mxu0
        %466 = vmatprep.mubr.bf16.mxu0 0
        %467 = vmatmul.mubr.bf16.gmra.mxu0 %v326
        %v468 = vpop.f32.mrf.mxu0
        %v469 = vadd.f32 %v256, %v468
        %v470 = vpop.f32.mrf.mxu0
        %v471 = vpop.f32.mrf.mxu0
        %v472 = vadd.f32 %v256, %v471
        %v473 = vpop.f32.mrf.mxu0
        %474 = vmatprep.mubr.bf16.mxu0 0
        %475 = vmatmul.mubr.bf16.gmra.mxu0 %v327
        %v476 = vpop.f32.mrf.mxu0
        %v477 = vadd.f32 %v256, %v476
        %v478 = vpop.f32.mrf.mxu0
        %v479 = vpop.f32.mrf.mxu0
        %v480 = vadd.f32 %v256, %v479
        %v481 = vpop.f32.mrf.mxu0
        %482 = vmatprep.mubr.bf16.mxu0 0
        %483 = vmatmul.mubr.bf16.gmra.mxu0 %v328
        %v484 = vpop.f32.mrf.mxu0
        %v485 = vadd.f32 %v256, %v484
        %v486 = vpop.f32.mrf.mxu0
        %v487 = vpop.f32.mrf.mxu0
        %v488 = vadd.f32 %v256, %v487
        %v489 = vpop.f32.mrf.mxu0
        %490 = vmatprep.mubr.bf16.mxu0 0
        %491 = vmatmul.mubr.bf16.gmra.mxu0 %v329
        %v492 = vpop.f32.mrf.mxu0
        %v493 = vadd.f32 %v256, %v492
        %v494 = vpop.f32.mrf.mxu0
        %v495 = vpop.f32.mrf.mxu0
        %v496 = vadd.f32 %v256, %v495
        %v497 = vpop.f32.mrf.mxu0
        %498 = vmatprep.mubr.bf16.mxu0 0
        %499 = vmatmul.mubr.bf16.gmra.mxu0 %v330
        %v500 = vpop.f32.mrf.mxu0
        %v501 = vadd.f32 %v256, %v500
        %v502 = vpop.f32.mrf.mxu0
        %v503 = vpop.f32.mrf.mxu0
        %v504 = vadd.f32 %v256, %v503
        %v505 = vpop.f32.mrf.mxu0
        %506 = vmatprep.mubr.bf16.mxu0 0
        %507 = vmatmul.mubr.bf16.gmra.mxu0 %v331
        %v508 = vpop.f32.mrf.mxu0
        %v509 = vadd.f32 %v256, %v508
        %v510 = vpop.f32.mrf.mxu0
        %v511 = vpop.f32.mrf.mxu0
        %v512 = vadd.f32 %v256, %v511
        %v513 = vpop.f32.mrf.mxu0
        %514 = vmatprep.mubr.bf16.mxu0 0
        %515 = vmatmul.mubr.bf16.gmra.mxu0 %v332
        %v516 = vpop.f32.mrf.mxu0
        %v517 = vadd.f32 %v256, %v516
        %v518 = vpop.f32.mrf.mxu0
        %v519 = vpop.f32.mrf.mxu0
        %v520 = vadd.f32 %v256, %v519
        %v521 = vpop.f32.mrf.mxu0
        %522 = vmatprep.mubr.bf16.mxu0 0
        %523 = vmatmul.mubr.bf16.gmra.mxu0 %v333
        %v524 = vpop.f32.mrf.mxu0
        %v525 = vadd.f32 %v256, %v524
        %v526 = vpop.f32.mrf.mxu0
        %v527 = vpop.f32.mrf.mxu0
        %v528 = vadd.f32 %v256, %v527
        %v529 = vpop.f32.mrf.mxu0
        %530 = vmatprep.mubr.bf16.mxu0 0
        %531 = vmatmul.mubr.bf16.gmra.mxu0 %v334
        %v532 = vpop.f32.mrf.mxu0
        %v533 = vadd.f32 %v256, %v532
        %v534 = vpop.f32.mrf.mxu0
        %v535 = vpop.f32.mrf.mxu0
        %v536 = vadd.f32 %v256, %v535
        %v537 = vpop.f32.mrf.mxu0
        %538 = vmatprep.mubr.bf16.mxu0 0
        %539 = vmatmul.mubr.bf16.gmra.mxu0 %v335
        %v540 = vpop.f32.mrf.mxu0
        %v541 = vadd.f32 %v256, %v540
        %v542 = vpop.f32.mrf.mxu0
        %v543 = vpop.f32.mrf.mxu0
        %v544 = vadd.f32 %v256, %v543
        %v545 = vpop.f32.mrf.mxu0
        %546 = vmatprep.mubr.bf16.mxu0 0
        %547 = vmatmul.mubr.bf16.gmra.mxu0 %v336
        %v548 = vpop.f32.mrf.mxu0
        %v549 = vadd.f32 %v256, %v548
        %v550 = vpop.f32.mrf.mxu0
        %v551 = vpop.f32.mrf.mxu0
        %v552 = vadd.f32 %v256, %v551
        %v553 = vpop.f32.mrf.mxu0
        %554 = vmatprep.mubr.bf16.mxu0 0
        %555 = vmatmul.mubr.bf16.gmra.mxu0 %v337
        %v556 = vpop.f32.mrf.mxu0
        %v557 = vadd.f32 %v256, %v556
        %v558 = vpop.f32.mrf.mxu0
        %v559 = vpop.f32.mrf.mxu0
        %v560 = vadd.f32 %v256, %v559
        %v561 = vpop.f32.mrf.mxu0
        %562 = vdwg.mxu0
        %563 = vst [vmem:[%s200] sm:$0xff] %v437
        %564 = vst [vmem:[%s200 + $0x8] sm:$0xff] %v440
        %565 = vst [vmem:[%s200 + $0x10] sm:$0xff] %v445
        %566 = vst [vmem:[%s200 + $0x18] sm:$0xff] %v448
        %567 = vst [vmem:[%s200 + $0x20] sm:$0xff] %v453
        %568 = vst [vmem:[%s200 + $0x28] sm:$0xff] %v456
        %569 = vst [vmem:[%s200 + $0x30] sm:$0xff] %v461
        %570 = vst [vmem:[%s200 + $0x38] sm:$0xff] %v464
        %571 = vst [vmem:[%s200 + $0x40] sm:$0xff] %v469
        %572 = vst [vmem:[%s200 + $0x48] sm:$0xff] %v472
        %573 = vst [vmem:[%s200 + $0x50] sm:$0xff] %v477
        %574 = vst [vmem:[%s200 + $0x58] sm:$0xff] %v480
        %575 = vst [vmem:[%s200 + $0x60] sm:$0xff] %v485
        %576 = vst [vmem:[%s200 + $0x68] sm:$0xff] %v488
        %577 = vst [vmem:[%s200 + $0x70] sm:$0xff] %v493
        %578 = vst [vmem:[%s200 + $0x78] sm:$0xff] %v496
        %579 = vst [vmem:[%s200 + $0x80] sm:$0xff] %v501
        %580 = vst [vmem:[%s200 + $0x88] sm:$0xff] %v504
        %581 = vst [vmem:[%s200 + $0x90] sm:$0xff] %v509
        %582 = vst [vmem:[%s200 + $0x98] sm:$0xff] %v512
        %583 = vst [vmem:[%s200 + $0xa0] sm:$0xff] %v517
        %584 = vst [vmem:[%s200 + $0xa8] sm:$0xff] %v520
        %585 = vst [vmem:[%s200 + $0xb0] sm:$0xff] %v525
        %586 = vst [vmem:[%s200 + $0xb8] sm:$0xff] %v528
        %587 = vst [vmem:[%s200 + $0xc0] sm:$0xff] %v533
        %588 = vst [vmem:[%s200 + $0xc8] sm:$0xff] %v536
        %589 = vst [vmem:[%s200 + $0xd0] sm:$0xff] %v541
        %590 = vst [vmem:[%s200 + $0xd8] sm:$0xff] %v544
        %591 = vst [vmem:[%s200 + $0xe0] sm:$0xff] %v549
        %592 = vst [vmem:[%s200 + $0xe8] sm:$0xff] %v552
        %593 = vst [vmem:[%s200 + $0xf0] sm:$0xff] %v557
        %594 = vst [vmem:[%s200 + $0xf8] sm:$0xff] %v560
        %s595 = smul.u32 32, %s16
        %p596 = scmp.lt.s32.totalorder %s595, 63
        %s597 = scalar_select %p596, %s595, 63
        %s598 = smul.addr %s597, 8
        %s599 = scalar_lea.vmem %s3, %s598
        // Predicated region
        $region41: #{_lambda_.10} parent=31 // pred_check
          %p600 = pneg %p102
        $region42: #{_lambda_.10} parent=31 // pred_check_branch
          %602 = sbr.rel (%p600) target = $region44
        $region43: #{_lambda_.10} parent=31 // pred_region
          %s603 = smul.u32 32, %s16
        $region44: #{_lambda_.10} parent=31 // pred_fallthru
          _
      $region32: #{_lambda_.10} parent=5 // pred_fallthru
        _
      %p604 = scmp.le.s32.totalorder 2, %s11
      // Predicated region
      $region45: #{_lambda_.10} parent=5 // pred_check
        %p605 = pneg %p604
      $region46: #{_lambda_.10} parent=5 // pred_check_branch
        %607 = sbr.rel (%p605) target = $region48
      $region47: #{_lambda_.10} parent=5 // pred_region
        %s608 = ssub.s32 %s11, 2
        // Predicated region
        $region49: #{_lambda_.10} parent=47 // pred_check
          %p609 = pneg %p108
        $region50: #{_lambda_.10} parent=47 // pred_check_branch
          %611 = sbr.rel (%p609) target = $region52
        $region51: #{_lambda_.10} parent=47 // pred_region
          %s612 = smul.u32 32, %s17
          %p613 = scmp.lt.s32.totalorder %s612, 63
          %s614 = scalar_select %p613, %s612, 63
          %s615 = smul.addr %s614, 8
          %s616 = scalar_lea.vmem %s3, %s615
        $region52: #{_lambda_.10} parent=47 // pred_fallthru
          _
      $region48: #{_lambda_.10} parent=5 // pred_fallthru
        _
    $region6: #{_lambda_.10} parent=1 // loop_footer
      %s15 = sadd.s32 1, %s11
    $region7: #{_lambda_.10} parent=1 // loop_footer_branch
      %10 = sbr.rel target = $region3
    $region8: #{_lambda_.10} parent=1 // loop_exit
      _
    %617 = vsyncpa [#allocation3], 1
    %s618 = scalar_lea.sflag [#allocation3], 1
    %619 = vsyncpa %s618, 1
    %620 = vsyncpa [#allocation5], 1

// kernel: _lambda_.11
$region0: #{_lambda_.11}
  #allocation0 [shape = 'u32[]', space=smem, size = 0x4, offset = 0x4, fixed_abs, tag = 'smem constant byte address 0x4 - core index']
  #allocation1 [shape = 'u32[144,128]{1,0:T(1,128)}', space=vmem, size = 0x12000, scoped, tag = 'internal scratch']
  %s0 = inlined_call_operand.vmem [shape: bf16[512,1152], index: 0, kind: input, shape index: {}]
  %s1 = inlined_call_operand.vmem [shape: bf16[1152,128], index: 1, kind: input, shape index: {}]
  %s2 = inlined_call_operand.vmem [shape: f32[1,128], index: 2, kind: input, shape index: {}]
  %s3 = inlined_call_operand.vmem [shape: f32[512,128], index: 3, kind: output, shape index: {}]
  %s4 = sld [smem:[#allocation0]]
  $region45: #{_lambda_.11} parent=0
    _
  %s6 = ssub.s32 1, %s4
  %s7 = scalar_select 0, %s6, %s4
  loop: start=0, step=1, limit=4
  $region2: #{_lambda_.11} parent=0 // loop_pre_header
    _
  $region3: #{_lambda_.11} parent=0 // loop_header
    %s9 = sphi 0, %s13
    %p10 = scmp.ge.s32.totalorder %s9, 4
    %s19 = sphi 0, %s21
    %s22 = sphi 0, %s19
    %s23 = sphi 0, %s22
    %s39 = sphi 0, %s23
    %s43 = sphi 0, %s43
    %s45 = sphi 0, %s43
    %s46 = sphi 0, %s45
    %s60 = sphi 0, %s46
    %s64 = sphi 0, %s64
    %s66 = sphi 0, %s64
    %s67 = sphi 0, %s66
    %s81 = sphi 0, %s67
    %s87 = sphi 0, %s89
    %s90 = sphi 0, %s87
    %s91 = sphi 0, %s90
    %s107 = sphi 0, %s91
  $region4: #{_lambda_.11} parent=0 // loop_header_branch
    %12 = sbr.rel (%p10) target = $region8
  $region5: #{_lambda_.11} parent=0 // loop_body
    %s14 = ssub.s32 %s9, 1
    %s15 = ssub.s32 %s9, 2
    %s16 = sadd.s32 %s9, 1
    %s17 = ssub.s32 %s9, %s16
    %p18 = scmp.eq.s32.totalorder %s17, 0
    %s20 = sadd.s32 %s19, 1
    %s21 = scalar_select %p18, %s19, %s20
    %p24 = pneg %p18
    %p25 = scmp.eq.s32.totalorder %s9, 1
    %p26 = por %p24, %p25
    %p27 = scmp.ne.s32.totalorder %s19, %s22
    %p28 = scmp.eq.s32.totalorder %s9, 0
    %p29 = por %p27, %p28
    %p30 = scmp.ne.s32.totalorder %s19, %s22
    %p31 = scmp.eq.s32.totalorder %s14, 1
    %p32 = por %p30, %p31
    %p33 = scmp.ne.s32.totalorder %s22, %s23
    %p34 = scmp.eq.s32.totalorder %s14, 0
    %p35 = por %p33, %p34
    %p36 = scmp.ne.s32.totalorder %s22, %s23
    %p37 = scmp.eq.s32.totalorder %s15, 1
    %p38 = por %p36, %p37
    %p40 = scmp.ne.s32.totalorder %s23, %s39
    %p41 = scmp.eq.s32.totalorder %s15, 0
    %p42 = por %p40, %p41
    %s44 = sadd.s32 %s43, 1
    %p47 = scmp.eq.s32.totalorder %s9, 1
    %p48 = scmp.ne.s32.totalorder %s43, %s45
    %p49 = scmp.eq.s32.totalorder %s9, 0
    %p50 = por %p48, %p49
    %p51 = scmp.ne.s32.totalorder %s43, %s45
    %p52 = scmp.eq.s32.totalorder %s14, 1
    %p53 = por %p51, %p52
    %p54 = scmp.ne.s32.totalorder %s45, %s46
    %p55 = scmp.eq.s32.totalorder %s14, 0
    %p56 = por %p54, %p55
    %p57 = scmp.ne.s32.totalorder %s45, %s46
    %p58 = scmp.eq.s32.totalorder %s15, 1
    %p59 = por %p57, %p58
    %p61 = scmp.ne.s32.totalorder %s46, %s60
    %p62 = scmp.eq.s32.totalorder %s15, 0
    %p63 = por %p61, %p62
    %s65 = sadd.s32 %s64, 1
    %p68 = scmp.eq.s32.totalorder %s9, 1
    %p69 = scmp.ne.s32.totalorder %s64, %s66
    %p70 = scmp.eq.s32.totalorder %s9, 0
    %p71 = por %p69, %p70
    %p72 = scmp.ne.s32.totalorder %s64, %s66
    %p73 = scmp.eq.s32.totalorder %s14, 1
    %p74 = por %p72, %p73
    %p75 = scmp.ne.s32.totalorder %s66, %s67
    %p76 = scmp.eq.s32.totalorder %s14, 0
    %p77 = por %p75, %p76
    %p78 = scmp.ne.s32.totalorder %s66, %s67
    %p79 = scmp.eq.s32.totalorder %s15, 1
    %p80 = por %p78, %p79
    %p82 = scmp.ne.s32.totalorder %s67, %s81
    %p83 = scmp.eq.s32.totalorder %s15, 0
    %p84 = por %p82, %p83
    %s85 = ssub.s32 %s9, %s16
    %p86 = scmp.eq.s32.totalorder %s85, 0
    %s88 = sadd.s32 %s87, 1
    %s89 = scalar_select %p86, %s87, %s88
    %p92 = pneg %p86
    %p93 = scmp.eq.s32.totalorder %s9, 1
    %p94 = por %p92, %p93
    %p95 = scmp.ne.s32.totalorder %s87, %s90
    %p96 = scmp.eq.s32.totalorder %s9, 0
    %p97 = por %p95, %p96
    %p98 = scmp.ne.s32.totalorder %s87, %s90
    %p99 = scmp.eq.s32.totalorder %s14, 1
    %p100 = por %p98, %p99
    %p101 = scmp.ne.s32.totalorder %s90, %s91
    %p102 = scmp.eq.s32.totalorder %s14, 0
    %p103 = por %p101, %p102
    %p104 = scmp.ne.s32.totalorder %s90, %s91
    %p105 = scmp.eq.s32.totalorder %s15, 1
    %p106 = por %p104, %p105
    %p108 = scmp.ne.s32.totalorder %s91, %s107
    %p109 = scmp.eq.s32.totalorder %s15, 0
    %p110 = por %p108, %p109
    %p111 = scmp.le.s32.totalorder 1, %s9
    %p112 = scmp.lt.s32.totalorder %s9, 3
    %p113 = pnand %p111, %p112
    %p114 = pneg %p113
    // Predicated region
    $region9: #{_lambda_.11} parent=5 // pred_check
      _
    $region10: #{_lambda_.11} parent=5 // pred_check_branch
      %116 = sbr.rel (%p113) target = $region12
    $region11: #{_lambda_.11} parent=5 // pred_region
      %s117 = ssub.s32 %s9, 1
      // Predicated region
      $region13: #{_lambda_.11} parent=11 // pred_check
        %p118 = pneg %p56
      $region14: #{_lambda_.11} parent=11 // pred_check_branch
        %120 = sbr.rel (%p118) target = $region16
      $region15: #{_lambda_.11} parent=11 // pred_region
        _
      $region16: #{_lambda_.11} parent=11 // pred_fallthru
        _
      // Predicated region
      $region17: #{_lambda_.11} parent=11 // pred_check
        %p121 = pneg %p77
      $region18: #{_lambda_.11} parent=11 // pred_check_branch
        %123 = sbr.rel (%p121) target = $region20
      $region19: #{_lambda_.11} parent=11 // pred_region
        _
      $region20: #{_lambda_.11} parent=11 // pred_fallthru
        _
    $region12: #{_lambda_.11} parent=5 // pred_fallthru
      _
    %p124 = scmp.lt.s32.totalorder %s9, 2
    // Predicated region
    $region21: #{_lambda_.11} parent=5 // pred_check
      %p125 = pneg %p124
    $region22: #{_lambda_.11} parent=5 // pred_check_branch
      %127 = sbr.rel (%p125) target = $region24
    $region23: #{_lambda_.11} parent=5 // pred_region
      // Predicated region
      $region25: #{_lambda_.11} parent=23 // pred_check
        %p128 = pneg %p29
      $region26: #{_lambda_.11} parent=23 // pred_check_branch
        %130 = sbr.rel (%p128) target = $region28
      $region27: #{_lambda_.11} parent=23 // pred_region
        %s131 = smul.u32 32, %s9
        %p132 = scmp.lt.s32.totalorder %s131, 63
        %s133 = scalar_select %p132, %s131, 63
        %s134 = smul.addr %s133, 9
        %s135 = smul.addr %s134, 4
        %s136 = scalar_lea.vmem %s0, %s135
        %s137 = smul.u32 32, %s9
      $region28: #{_lambda_.11} parent=23 // pred_fallthru
        _
    $region24: #{_lambda_.11} parent=5 // pred_fallthru
      _
    %p138 = scmp.le.s32.totalorder 1, %s9
    %p139 = scmp.lt.s32.totalorder %s9, 3
    %p140 = pnand %p138, %p139
    %p141 = pneg %p140
    // Predicated region
    $region29: #{_lambda_.11} parent=5 // pred_check
      _
    $region30: #{_lambda_.11} parent=5 // pred_check_branch
      %143 = sbr.rel (%p140) target = $region32
    $region31: #{_lambda_.11} parent=5 // pred_region
      %s144 = ssub.s32 %s9, 1
      %s145 = smul.u32 32, %s14
      %p146 = scmp.lt.s32.totalorder %s145, 63
      %s147 = scalar_select %p146, %s145, 63
      %s148 = smul.addr %s147, 9
      %s149 = smul.addr %s148, 4
      %s150 = scalar_lea.vmem %s0, %s149
      %p151 = pneg %p35
      %p152 = pneg %p32
      %p153 = pneg %p56
      %p154 = pneg %p53
      %p155 = pneg %p77
      %p156 = pneg %p74
      %p157 = pneg %p103
      %p158 = pneg %p100
      %s159 = smul.u32 32, %s14
      %p160 = scmp.lt.s32.totalorder %s159, 63
      %s161 = scalar_select %p160, %s159, 63
      %s162 = smul.addr %s161, 8
      %s163 = scalar_lea.vmem %s3, %s162
      %s164 = smul.u32 32, %s14
      %p165 = scmp.lt.s32.totalorder %s164, 63
      %s166 = scalar_select %p165, %s164, 63
      %s167 = smul.addr %s166, 9
      %s168 = smul.addr %s167, 4
      %s169 = scalar_lea.vmem %s0, %s168
      %s170 = smul.u32 32, %s14
      %s171 = smul.u32 32, %s14
      %p172 = scmp.lt.s32.totalorder %s171, 63
      %s173 = scalar_select %p172, %s171, 63
      %s174 = smul.addr %s173, 8
      %s175 = scalar_lea.vmem %s3, %s174
      %s176 = smul.u32 32, %s14
      %v178 = vld [vmem:[%s169] sm:$0xff]
      %v179 = vld [vmem:[%s169 + $0x8] sm:$0xff]
      %v180 = vld [vmem:[%s169 + $0x10] sm:$0xff]
      %v181 = vld [vmem:[%s169 + $0x18] sm:$0xff]
      %v182 = vld [vmem:[%s169 + $0x20] sm:$0xf]
      %v183 = vld [vmem:[%s169 + $0x24] sm:$0xff]
      %v184 = vld [vmem:[%s169 + $0x2c] sm:$0xff]
      %v185 = vld [vmem:[%s169 + $0x34] sm:$0xff]
      %v186 = vld [vmem:[%s169 + $0x3c] sm:$0xff]
      %v187 = vld [vmem:[%s169 + $0x44] sm:$0xf]
      %v188 = vld [vmem:[%s169 + $0x48] sm:$0xff]
      %v189 = vld [vmem:[%s169 + $0x50] sm:$0xff]
      %v190 = vld [vmem:[%s169 + $0x58] sm:$0xff]
      %v191 = vld [vmem:[%s169 + $0x60] sm:$0xff]
      %v192 = vld [vmem:[%s169 + $0x68] sm:$0xf]
      %v193 = vld [vmem:[%s169 + $0x6c] sm:$0xff]
      %v194 = vld [vmem:[%s169 + $0x74] sm:$0xff]
      %v195 = vld [vmem:[%s169 + $0x7c] sm:$0xff]
      %v196 = vld [vmem:[%s169 + $0x84] sm:$0xff]
      %v197 = vld [vmem:[%s169 + $0x8c] sm:$0xf]
      %v198 = vld [vmem:[%s169 + $0x90] sm:$0xff]
      %v199 = vld [vmem:[%s169 + $0x98] sm:$0xff]
      %v200 = vld [vmem:[%s169 + $0xa0] sm:$0xff]
      %v201 = vld [vmem:[%s169 + $0xa8] sm:$0xff]
      %v202 = vld [vmem:[%s169 + $0xb0] sm:$0xf]
      %v203 = vld [vmem:[%s169 + $0xb4] sm:$0xff]
      %v204 = vld [vmem:[%s169 + $0xbc] sm:$0xff]
      %v205 = vld [vmem:[%s169 + $0xc4] sm:$0xff]
      %v206 = vld [vmem:[%s169 + $0xcc] sm:$0xff]
      %v207 = vld [vmem:[%s169 + $0xd4] sm:$0xf]
      %v208 = vld [vmem:[%s169 + $0xd8] sm:$0xff]
      %v209 = vld [vmem:[%s169 + $0xe0] sm:$0xff]
      %v210 = vld [vmem:[%s169 + $0xe8] sm:$0xff]
      %v211 = vld [vmem:[%s169 + $0xf0] sm:$0xff]
      %v212 = vld [vmem:[%s169 + $0xf8] sm:$0xf]
      %v213 = vld [vmem:[%s169 + $0xfc] sm:$0xff]
      %v214 = vld [vmem:[%s169 + $0x104] sm:$0xff]
      %v215 = vld [vmem:[%s169 + $0x10c] sm:$0xff]
      %v216 = vld [vmem:[%s169 + $0x114] sm:$0xff]
      %v217 = vld [vmem:[%s169 + $0x11c] sm:$0xf]
      %v218 = vld [vmem:[%s169 + $0x120] sm:$0xff]
      %v219 = vld [vmem:[%s169 + $0x128] sm:$0xff]
      %v220 = vld [vmem:[%s169 + $0x130] sm:$0xff]
      %v221 = vld [vmem:[%s169 + $0x138] sm:$0xff]
      %v222 = vld [vmem:[%s169 + $0x140] sm:$0xf]
      %v223 = vld [vmem:[%s169 + $0x144] sm:$0xff]
      %v224 = vld [vmem:[%s169 + $0x14c] sm:$0xff]
      %v225 = vld [vmem:[%s169 + $0x154] sm:$0xff]
      %v226 = vld [vmem:[%s169 + $0x15c] sm:$0xff]
      %v227 = vld [vmem:[%s169 + $0x164] sm:$0xf]
      %v228 = vld [vmem:[%s169 + $0x168] sm:$0xff]
      %v229 = vld [vmem:[%s169 + $0x170] sm:$0xff]
      %v230 = vld [vmem:[%s169 + $0x178] sm:$0xff]
      %v231 = vld [vmem:[%s169 + $0x180] sm:$0xff]
      %v232 = vld [vmem:[%s169 + $0x188] sm:$0xf]
      %v233 = vld [vmem:[%s169 + $0x18c] sm:$0xff]
      %v234 = vld [vmem:[%s169 + $0x194] sm:$0xff]
      %v235 = vld [vmem:[%s169 + $0x19c] sm:$0xff]
      %v236 = vld [vmem:[%s169 + $0x1a4] sm:$0xff]
      %v237 = vld [vmem:[%s169 + $0x1ac] sm:$0xf]
      %v238 = vld [vmem:[%s169 + $0x1b0] sm:$0xff]
      %v239 = vld [vmem:[%s169 + $0x1b8] sm:$0xff]
      %v240 = vld [vmem:[%s169 + $0x1c0] sm:$0xff]
      %v241 = vld [vmem:[%s169 + $0x1c8] sm:$0xff]
      %v242 = vld [vmem:[%s169 + $0x1d0] sm:$0xf]
      %v243 = vld [vmem:[%s169 + $0x1d4] sm:$0xff]
      %v244 = vld [vmem:[%s169 + $0x1dc] sm:$0xff]
      %v245 = vld [vmem:[%s169 + $0x1e4] sm:$0xff]
      %v246 = vld [vmem:[%s169 + $0x1ec] sm:$0xff]
      %v247 = vld [vmem:[%s169 + $0x1f4] sm:$0xf]
      %v248 = vld [vmem:[%s169 + $0x1f8] sm:$0xff]
      %v249 = vld [vmem:[%s169 + $0x200] sm:$0xff]
      %v250 = vld [vmem:[%s169 + $0x208] sm:$0xff]
      %v251 = vld [vmem:[%s169 + $0x210] sm:$0xff]
      %v252 = vld [vmem:[%s169 + $0x218] sm:$0xf]
      %v253 = vld [vmem:[%s169 + $0x21c] sm:$0xff]
      %v254 = vld [vmem:[%s169 + $0x224] sm:$0xff]
      %v255 = vld [vmem:[%s169 + $0x22c] sm:$0xff]
      %v256 = vld [vmem:[%s169 + $0x234] sm:$0xff]
      %v257 = vld [vmem:[%s169 + $0x23c] sm:$0xf]
      %v258 = vld [vmem:[%s169 + $0x240] sm:$0xff]
      %v259 = vld [vmem:[%s169 + $0x248] sm:$0xff]
      %v260 = vld [vmem:[%s169 + $0x250] sm:$0xff]
      %v261 = vld [vmem:[%s169 + $0x258] sm:$0xff]
      %v262 = vld [vmem:[%s169 + $0x260] sm:$0xf]
      %v263 = vld [vmem:[%s169 + $0x264] sm:$0xff]
      %v264 = vld [vmem:[%s169 + $0x26c] sm:$0xff]
      %v265 = vld [vmem:[%s169 + $0x274] sm:$0xff]
      %v266 = vld [vmem:[%s169 + $0x27c] sm:$0xff]
      %v267 = vld [vmem:[%s169 + $0x284] sm:$0xf]
      %v268 = vld [vmem:[%s169 + $0x288] sm:$0xff]
      %v269 = vld [vmem:[%s169 + $0x290] sm:$0xff]
      %v270 = vld [vmem:[%s169 + $0x298] sm:$0xff]
      %v271 = vld [vmem:[%s169 + $0x2a0] sm:$0xff]
      %v272 = vld [vmem:[%s169 + $0x2a8] sm:$0xf]
      %v273 = vld [vmem:[%s169 + $0x2ac] sm:$0xff]
      %v274 = vld [vmem:[%s169 + $0x2b4] sm:$0xff]
      %v275 = vld [vmem:[%s169 + $0x2bc] sm:$0xff]
      %v276 = vld [vmem:[%s169 + $0x2c4] sm:$0xff]
      %v277 = vld [vmem:[%s169 + $0x2cc] sm:$0xf]
      %v278 = vld [vmem:[%s169 + $0x2d0] sm:$0xff]
      %v279 = vld [vmem:[%s169 + $0x2d8] sm:$0xff]
      %v280 = vld [vmem:[%s169 + $0x2e0] sm:$0xff]
      %v281 = vld [vmem:[%s169 + $0x2e8] sm:$0xff]
      %v282 = vld [vmem:[%s169 + $0x2f0] sm:$0xf]
      %v283 = vld [vmem:[%s169 + $0x2f4] sm:$0xff]
      %v284 = vld [vmem:[%s169 + $0x2fc] sm:$0xff]
      %v285 = vld [vmem:[%s169 + $0x304] sm:$0xff]
      %v286 = vld [vmem:[%s169 + $0x30c] sm:$0xff]
      %v287 = vld [vmem:[%s169 + $0x314] sm:$0xf]
      %v288 = vld [vmem:[%s169 + $0x318] sm:$0xff]
      %v289 = vld [vmem:[%s169 + $0x320] sm:$0xff]
      %v290 = vld [vmem:[%s169 + $0x328] sm:$0xff]
      %v291 = vld [vmem:[%s169 + $0x330] sm:$0xff]
      %v292 = vld [vmem:[%s169 + $0x338] sm:$0xf]
      %v293 = vld [vmem:[%s169 + $0x33c] sm:$0xff]
      %v294 = vld [vmem:[%s169 + $0x344] sm:$0xff]
      %v295 = vld [vmem:[%s169 + $0x34c] sm:$0xff]
      %v296 = vld [vmem:[%s169 + $0x354] sm:$0xff]
      %v297 = vld [vmem:[%s169 + $0x35c] sm:$0xf]
      %v298 = vld [vmem:[%s169 + $0x360] sm:$0xff]
      %v299 = vld [vmem:[%s169 + $0x368] sm:$0xff]
      %v300 = vld [vmem:[%s169 + $0x370] sm:$0xff]
      %v301 = vld [vmem:[%s169 + $0x378] sm:$0xff]
      %v302 = vld [vmem:[%s169 + $0x380] sm:$0xf]
      %v303 = vld [vmem:[%s169 + $0x384] sm:$0xff]
      %v304 = vld [vmem:[%s169 + $0x38c] sm:$0xff]
      %v305 = vld [vmem:[%s169 + $0x394] sm:$0xff]
      %v306 = vld [vmem:[%s169 + $0x39c] sm:$0xff]
      %v307 = vld [vmem:[%s169 + $0x3a4] sm:$0xf]
      %v308 = vld [vmem:[%s169 + $0x3a8] sm:$0xff]
      %v309 = vld [vmem:[%s169 + $0x3b0] sm:$0xff]
      %v310 = vld [vmem:[%s169 + $0x3b8] sm:$0xff]
      %v311 = vld [vmem:[%s169 + $0x3c0] sm:$0xff]
      %v312 = vld [vmem:[%s169 + $0x3c8] sm:$0xf]
      %v313 = vld [vmem:[%s169 + $0x3cc] sm:$0xff]
      %v314 = vld [vmem:[%s169 + $0x3d4] sm:$0xff]
      %v315 = vld [vmem:[%s169 + $0x3dc] sm:$0xff]
      %v316 = vld [vmem:[%s169 + $0x3e4] sm:$0xff]
      %v317 = vld [vmem:[%s169 + $0x3ec] sm:$0xf]
      %v318 = vld [vmem:[%s169 + $0x3f0] sm:$0xff]
      %v319 = vld [vmem:[%s169 + $0x3f8] sm:$0xff]
      %v320 = vld [vmem:[%s169 + $0x400] sm:$0xff]
      %v321 = vld [vmem:[%s169 + $0x408] sm:$0xff]
      %v322 = vld [vmem:[%s169 + $0x410] sm:$0xf]
      %v323 = vld [vmem:[%s169 + $0x414] sm:$0xff]
      %v324 = vld [vmem:[%s169 + $0x41c] sm:$0xff]
      %v325 = vld [vmem:[%s169 + $0x424] sm:$0xff]
      %v326 = vld [vmem:[%s169 + $0x42c] sm:$0xff]
      %v327 = vld [vmem:[%s169 + $0x434] sm:$0xf]
      %v328 = vld [vmem:[%s169 + $0x438] sm:$0xff]
      %v329 = vld [vmem:[%s169 + $0x440] sm:$0xff]
      %v330 = vld [vmem:[%s169 + $0x448] sm:$0xff]
      %v331 = vld [vmem:[%s169 + $0x450] sm:$0xff]
      %v332 = vld [vmem:[%s169 + $0x458] sm:$0xf]
      %v333 = vld [vmem:[%s169 + $0x45c] sm:$0xff]
      %v334 = vld [vmem:[%s169 + $0x464] sm:$0xff]
      %v335 = vld [vmem:[%s169 + $0x46c] sm:$0xff]
      %v336 = vld [vmem:[%s169 + $0x474] sm:$0xff]
      %v337 = vld [vmem:[%s169 + $0x47c] sm:$0xf]
      %v338 = vld [vmem:[%s1] sm:$0xf]
      %v339 = vld [vmem:[%s1 + $0x4] sm:$0xf]
      %v340 = vld [vmem:[%s1 + $0x8] sm:$0xf]
      %v341 = vld [vmem:[%s1 + $0xc] sm:$0xf]
      %v342 = vld [vmem:[%s1 + $0x10] sm:$0xf]
      %v343 = vld [vmem:[%s1 + $0x14] sm:$0xf]
      %v344 = vld [vmem:[%s1 + $0x18] sm:$0xf]
      %v345 = vld [vmem:[%s1 + $0x1c] sm:$0xf]
      %v346 = vld [vmem:[%s1 + $0x20] sm:$0xf]
      %v347 = vld [vmem:[%s1 + $0x24] sm:$0xf]
      %v348 = vld [vmem:[%s1 + $0x28] sm:$0xf]
      %v349 = vld [vmem:[%s1 + $0x2c] sm:$0xf]
      %v350 = vld [vmem:[%s1 + $0x30] sm:$0xf]
      %v351 = vld [vmem:[%s1 + $0x34] sm:$0xf]
      %v352 = vld [vmem:[%s1 + $0x38] sm:$0xf]
      %v353 = vld [vmem:[%s1 + $0x3c] sm:$0xf]
      %v354 = vld [vmem:[%s1 + $0x40] sm:$0xf]
      %v355 = vld [vmem:[%s1 + $0x44] sm:$0xf]
      %v356 = vld [vmem:[%s1 + $0x48] sm:$0xf]
      %v357 = vld [vmem:[%s1 + $0x4c] sm:$0xf]
      %v358 = vld [vmem:[%s1 + $0x50] sm:$0xf]
      %v359 = vld [vmem:[%s1 + $0x54] sm:$0xf]
      %v360 = vld [vmem:[%s1 + $0x58] sm:$0xf]
      %v361 = vld [vmem:[%s1 + $0x5c] sm:$0xf]
      %v362 = vld [vmem:[%s1 + $0x60] sm:$0xf]
      %v363 = vld [vmem:[%s1 + $0x64] sm:$0xf]
      %v364 = vld [vmem:[%s1 + $0x68] sm:$0xf]
      %v365 = vld [vmem:[%s1 + $0x6c] sm:$0xf]
      %v366 = vld [vmem:[%s1 + $0x70] sm:$0xf]
      %v367 = vld [vmem:[%s1 + $0x74] sm:$0xf]
      %v368 = vld [vmem:[%s1 + $0x78] sm:$0xf]
      %v369 = vld [vmem:[%s1 + $0x7c] sm:$0xf]
      %v370 = vld [vmem:[%s1 + $0x80] sm:$0xf]
      %v371 = vld [vmem:[%s1 + $0x84] sm:$0xf]
      %v372 = vld [vmem:[%s1 + $0x88] sm:$0xf]
      %v373 = vld [vmem:[%s1 + $0x8c] sm:$0xf]
      %v374 = vld [vmem:[%s1 + $0x90] sm:$0xf]
      %v375 = vld [vmem:[%s1 + $0x94] sm:$0xf]
      %v376 = vld [vmem:[%s1 + $0x98] sm:$0xf]
      %v377 = vld [vmem:[%s1 + $0x9c] sm:$0xf]
      %v378 = vld [vmem:[%s1 + $0xa0] sm:$0xf]
      %v379 = vld [vmem:[%s1 + $0xa4] sm:$0xf]
      %v380 = vld [vmem:[%s1 + $0xa8] sm:$0xf]
      %v381 = vld [vmem:[%s1 + $0xac] sm:$0xf]
      %v382 = vld [vmem:[%s1 + $0xb0] sm:$0xf]
      %v383 = vld [vmem:[%s1 + $0xb4] sm:$0xf]
      %v384 = vld [vmem:[%s1 + $0xb8] sm:$0xf]
      %v385 = vld [vmem:[%s1 + $0xbc] sm:$0xf]
      %v386 = vld [vmem:[%s1 + $0xc0] sm:$0xf]
      %v387 = vld [vmem:[%s1 + $0xc4] sm:$0xf]
      %v388 = vld [vmem:[%s1 + $0xc8] sm:$0xf]
      %v389 = vld [vmem:[%s1 + $0xcc] sm:$0xf]
      %v390 = vld [vmem:[%s1 + $0xd0] sm:$0xf]
      %v391 = vld [vmem:[%s1 + $0xd4] sm:$0xf]
      %v392 = vld [vmem:[%s1 + $0xd8] sm:$0xf]
      %v393 = vld [vmem:[%s1 + $0xdc] sm:$0xf]
      %v394 = vld [vmem:[%s1 + $0xe0] sm:$0xf]
      %v395 = vld [vmem:[%s1 + $0xe4] sm:$0xf]
      %v396 = vld [vmem:[%s1 + $0xe8] sm:$0xf]
      %v397 = vld [vmem:[%s1 + $0xec] sm:$0xf]
      %v398 = vld [vmem:[%s1 + $0xf0] sm:$0xf]
      %v399 = vld [vmem:[%s1 + $0xf4] sm:$0xf]
      %v400 = vld [vmem:[%s1 + $0xf8] sm:$0xf]
      %v401 = vld [vmem:[%s1 + $0xfc] sm:$0xf]
      %v402 = vld [vmem:[%s1 + $0x100] sm:$0xf]
      %v403 = vld [vmem:[%s1 + $0x104] sm:$0xf]
      %v404 = vld [vmem:[%s1 + $0x108] sm:$0xf]
      %v405 = vld [vmem:[%s1 + $0x10c] sm:$0xf]
      %v406 = vld [vmem:[%s1 + $0x110] sm:$0xf]
      %v407 = vld [vmem:[%s1 + $0x114] sm:$0xf]
      %v408 = vld [vmem:[%s1 + $0x118] sm:$0xf]
      %v409 = vld [vmem:[%s1 + $0x11c] sm:$0xf]
      %v410 = vld [vmem:[%s1 + $0x120] sm:$0xf]
      %v411 = vld [vmem:[%s1 + $0x124] sm:$0xf]
      %v412 = vld [vmem:[%s1 + $0x128] sm:$0xf]
      %v413 = vld [vmem:[%s1 + $0x12c] sm:$0xf]
      %v414 = vld [vmem:[%s1 + $0x130] sm:$0xf]
      %v415 = vld [vmem:[%s1 + $0x134] sm:$0xf]
      %v416 = vld [vmem:[%s1 + $0x138] sm:$0xf]
      %v417 = vld [vmem:[%s1 + $0x13c] sm:$0xf]
      %v418 = vld [vmem:[%s1 + $0x140] sm:$0xf]
      %v419 = vld [vmem:[%s1 + $0x144] sm:$0xf]
      %v420 = vld [vmem:[%s1 + $0x148] sm:$0xf]
      %v421 = vld [vmem:[%s1 + $0x14c] sm:$0xf]
      %v422 = vld [vmem:[%s1 + $0x150] sm:$0xf]
      %v423 = vld [vmem:[%s1 + $0x154] sm:$0xf]
      %v424 = vld [vmem:[%s1 + $0x158] sm:$0xf]
      %v425 = vld [vmem:[%s1 + $0x15c] sm:$0xf]
      %v426 = vld [vmem:[%s1 + $0x160] sm:$0xf]
      %v427 = vld [vmem:[%s1 + $0x164] sm:$0xf]
      %v428 = vld [vmem:[%s1 + $0x168] sm:$0xf]
      %v429 = vld [vmem:[%s1 + $0x16c] sm:$0xf]
      %v430 = vld [vmem:[%s1 + $0x170] sm:$0xf]
      %v431 = vld [vmem:[%s1 + $0x174] sm:$0xf]
      %v432 = vld [vmem:[%s1 + $0x178] sm:$0xf]
      %v433 = vld [vmem:[%s1 + $0x17c] sm:$0xf]
      %v434 = vld [vmem:[%s1 + $0x180] sm:$0xf]
      %v435 = vld [vmem:[%s1 + $0x184] sm:$0xf]
      %v436 = vld [vmem:[%s1 + $0x188] sm:$0xf]
      %v437 = vld [vmem:[%s1 + $0x18c] sm:$0xf]
      %v438 = vld [vmem:[%s1 + $0x190] sm:$0xf]
      %v439 = vld [vmem:[%s1 + $0x194] sm:$0xf]
      %v440 = vld [vmem:[%s1 + $0x198] sm:$0xf]
      %v441 = vld [vmem:[%s1 + $0x19c] sm:$0xf]
      %v442 = vld [vmem:[%s1 + $0x1a0] sm:$0xf]
      %v443 = vld [vmem:[%s1 + $0x1a4] sm:$0xf]
      %v444 = vld [vmem:[%s1 + $0x1a8] sm:$0xf]
      %v445 = vld [vmem:[%s1 + $0x1ac] sm:$0xf]
      %v446 = vld [vmem:[%s1 + $0x1b0] sm:$0xf]
      %v447 = vld [vmem:[%s1 + $0x1b4] sm:$0xf]
      %v448 = vld [vmem:[%s1 + $0x1b8] sm:$0xf]
      %v449 = vld [vmem:[%s1 + $0x1bc] sm:$0xf]
      %v450 = vld [vmem:[%s1 + $0x1c0] sm:$0xf]
      %v451 = vld [vmem:[%s1 + $0x1c4] sm:$0xf]
      %v452 = vld [vmem:[%s1 + $0x1c8] sm:$0xf]
      %v453 = vld [vmem:[%s1 + $0x1cc] sm:$0xf]
      %v454 = vld [vmem:[%s1 + $0x1d0] sm:$0xf]
      %v455 = vld [vmem:[%s1 + $0x1d4] sm:$0xf]
      %v456 = vld [vmem:[%s1 + $0x1d8] sm:$0xf]
      %v457 = vld [vmem:[%s1 + $0x1dc] sm:$0xf]
      %v458 = vld [vmem:[%s1 + $0x1e0] sm:$0xf]
      %v459 = vld [vmem:[%s1 + $0x1e4] sm:$0xf]
      %v460 = vld [vmem:[%s1 + $0x1e8] sm:$0xf]
      %v461 = vld [vmem:[%s1 + $0x1ec] sm:$0xf]
      %v462 = vld [vmem:[%s1 + $0x1f0] sm:$0xf]
      %v463 = vld [vmem:[%s1 + $0x1f4] sm:$0xf]
      %v464 = vld [vmem:[%s1 + $0x1f8] sm:$0xf]
      %v465 = vld [vmem:[%s1 + $0x1fc] sm:$0xf]
      %v466 = vld [vmem:[%s1 + $0x200] sm:$0xf]
      %v467 = vld [vmem:[%s1 + $0x204] sm:$0xf]
      %v468 = vld [vmem:[%s1 + $0x208] sm:$0xf]
      %v469 = vld [vmem:[%s1 + $0x20c] sm:$0xf]
      %v470 = vld [vmem:[%s1 + $0x210] sm:$0xf]
      %v471 = vld [vmem:[%s1 + $0x214] sm:$0xf]
      %v472 = vld [vmem:[%s1 + $0x218] sm:$0xf]
      %v473 = vld [vmem:[%s1 + $0x21c] sm:$0xf]
      %v474 = vld [vmem:[%s1 + $0x220] sm:$0xf]
      %v475 = vld [vmem:[%s1 + $0x224] sm:$0xf]
      %v476 = vld [vmem:[%s1 + $0x228] sm:$0xf]
      %v477 = vld [vmem:[%s1 + $0x22c] sm:$0xf]
      %v478 = vld [vmem:[%s1 + $0x230] sm:$0xf]
      %v479 = vld [vmem:[%s1 + $0x234] sm:$0xf]
      %v480 = vld [vmem:[%s1 + $0x238] sm:$0xf]
      %v481 = vld [vmem:[%s1 + $0x23c] sm:$0xf]
      %v482 = vld [vmem:[%s2] sm:$0x1]
      %v484 = vlaneseq
      %v485 = vshrl.u32 %v484, 7
      %v486 = vsub.s32 0, %v485
      %v487 = vrot.slane %v482, %v486
      %v649 = vunpack.c.l.b16 %v178
      %v650 = vunpack.c.h.b16 %v178
      %v651 = vunpack.c.l.b16 %v179
      %v652 = vunpack.c.h.b16 %v179
      %v653 = vunpack.c.l.b16 %v180
      %v654 = vunpack.c.h.b16 %v180
      %v655 = vunpack.c.l.b16 %v181
      %v656 = vunpack.c.h.b16 %v181
      %v657 = vunpack.c.l.b16 %v182
      %v658 = vunpack.c.l.b16 %v183
      %v659 = vunpack.c.h.b16 %v183
      %v660 = vunpack.c.l.b16 %v184
      %v661 = vunpack.c.h.b16 %v184
      %v662 = vunpack.c.l.b16 %v185
      %v663 = vunpack.c.h.b16 %v185
      %v664 = vunpack.c.l.b16 %v186
      %v665 = vunpack.c.h.b16 %v186
      %v666 = vunpack.c.l.b16 %v187
      %v667 = vunpack.c.l.b16 %v188
      %v668 = vunpack.c.h.b16 %v188
      %v669 = vunpack.c.l.b16 %v189
      %v670 = vunpack.c.h.b16 %v189
      %v671 = vunpack.c.l.b16 %v190
      %v672 = vunpack.c.h.b16 %v190
      %v673 = vunpack.c.l.b16 %v191
      %v674 = vunpack.c.h.b16 %v191
      %v675 = vunpack.c.l.b16 %v192
      %v676 = vunpack.c.l.b16 %v193
      %v677 = vunpack.c.h.b16 %v193
      %v678 = vunpack.c.l.b16 %v194
      %v679 = vunpack.c.h.b16 %v194
      %v680 = vunpack.c.l.b16 %v195
      %v681 = vunpack.c.h.b16 %v195
      %v682 = vunpack.c.l.b16 %v196
      %v683 = vunpack.c.h.b16 %v196
      %v684 = vunpack.c.l.b16 %v197
      %v685 = vunpack.c.l.b16 %v198
      %v686 = vunpack.c.h.b16 %v198
      %v687 = vunpack.c.l.b16 %v199
      %v688 = vunpack.c.h.b16 %v199
      %v689 = vunpack.c.l.b16 %v200
      %v690 = vunpack.c.h.b16 %v200
      %v691 = vunpack.c.l.b16 %v201
      %v692 = vunpack.c.h.b16 %v201
      %v693 = vunpack.c.l.b16 %v202
      %v694 = vunpack.c.l.b16 %v203
      %v695 = vunpack.c.h.b16 %v203
      %v696 = vunpack.c.l.b16 %v204
      %v697 = vunpack.c.h.b16 %v204
      %v698 = vunpack.c.l.b16 %v205
      %v699 = vunpack.c.h.b16 %v205
      %v700 = vunpack.c.l.b16 %v206
      %v701 = vunpack.c.h.b16 %v206
      %v702 = vunpack.c.l.b16 %v207
      %v703 = vunpack.c.l.b16 %v208
      %v704 = vunpack.c.h.b16 %v208
      %v705 = vunpack.c.l.b16 %v209
      %v706 = vunpack.c.h.b16 %v209
      %v707 = vunpack.c.l.b16 %v210
      %v708 = vunpack.c.h.b16 %v210
      %v709 = vunpack.c.l.b16 %v211
      %v710 = vunpack.c.h.b16 %v211
      %v711 = vunpack.c.l.b16 %v212
      %v712 = vunpack.c.l.b16 %v213
      %v713 = vunpack.c.h.b16 %v213
      %v714 = vunpack.c.l.b16 %v214
      %v715 = vunpack.c.h.b16 %v214
      %v716 = vunpack.c.l.b16 %v215
      %v717 = vunpack.c.h.b16 %v215
      %v718 = vunpack.c.l.b16 %v216
      %v719 = vunpack.c.h.b16 %v216
      %v720 = vunpack.c.l.b16 %v217
      %v721 = vunpack.c.l.b16 %v218
      %v722 = vunpack.c.h.b16 %v218
      %v723 = vunpack.c.l.b16 %v219
      %v724 = vunpack.c.h.b16 %v219
      %v725 = vunpack.c.l.b16 %v220
      %v726 = vunpack.c.h.b16 %v220
      %v727 = vunpack.c.l.b16 %v221
      %v728 = vunpack.c.h.b16 %v221
      %v729 = vunpack.c.l.b16 %v222
      %v730 = vunpack.c.l.b16 %v223
      %v731 = vunpack.c.h.b16 %v223
      %v732 = vunpack.c.l.b16 %v224
      %v733 = vunpack.c.h.b16 %v224
      %v734 = vunpack.c.l.b16 %v225
      %v735 = vunpack.c.h.b16 %v225
      %v736 = vunpack.c.l.b16 %v226
      %v737 = vunpack.c.h.b16 %v226
      %v738 = vunpack.c.l.b16 %v227
      %v739 = vunpack.c.l.b16 %v228
      %v740 = vunpack.c.h.b16 %v228
      %v741 = vunpack.c.l.b16 %v229
      %v742 = vunpack.c.h.b16 %v229
      %v743 = vunpack.c.l.b16 %v230
      %v744 = vunpack.c.h.b16 %v230
      %v745 = vunpack.c.l.b16 %v231
      %v746 = vunpack.c.h.b16 %v231
      %v747 = vunpack.c.l.b16 %v232
      %v748 = vunpack.c.l.b16 %v233
      %v749 = vunpack.c.h.b16 %v233
      %v750 = vunpack.c.l.b16 %v234
      %v751 = vunpack.c.h.b16 %v234
      %v752 = vunpack.c.l.b16 %v235
      %v753 = vunpack.c.h.b16 %v235
      %v754 = vunpack.c.l.b16 %v236
      %v755 = vunpack.c.h.b16 %v236
      %v756 = vunpack.c.l.b16 %v237
      %v757 = vunpack.c.l.b16 %v238
      %v758 = vunpack.c.h.b16 %v238
      %v759 = vunpack.c.l.b16 %v239
      %v760 = vunpack.c.h.b16 %v239
      %v761 = vunpack.c.l.b16 %v240
      %v762 = vunpack.c.h.b16 %v240
      %v763 = vunpack.c.l.b16 %v241
      %v764 = vunpack.c.h.b16 %v241
      %v765 = vunpack.c.l.b16 %v242
      %v766 = vunpack.c.l.b16 %v243
      %v767 = vunpack.c.h.b16 %v243
      %v768 = vunpack.c.l.b16 %v244
      %v769 = vunpack.c.h.b16 %v244
      %v770 = vunpack.c.l.b16 %v245
      %v771 = vunpack.c.h.b16 %v245
      %v772 = vunpack.c.l.b16 %v246
      %v773 = vunpack.c.h.b16 %v246
      %v774 = vunpack.c.l.b16 %v247
      %v775 = vunpack.c.l.b16 %v248
      %v776 = vunpack.c.h.b16 %v248
      %v777 = vunpack.c.l.b16 %v249
      %v778 = vunpack.c.h.b16 %v249
      %v779 = vunpack.c.l.b16 %v250
      %v780 = vunpack.c.h.b16 %v250
      %v781 = vunpack.c.l.b16 %v251
      %v782 = vunpack.c.h.b16 %v251
      %v783 = vunpack.c.l.b16 %v252
      %v784 = vunpack.c.l.b16 %v253
      %v785 = vunpack.c.h.b16 %v253
      %v786 = vunpack.c.l.b16 %v254
      %v787 = vunpack.c.h.b16 %v254
      %v788 = vunpack.c.l.b16 %v255
      %v789 = vunpack.c.h.b16 %v255
      %v790 = vunpack.c.l.b16 %v256
      %v791 = vunpack.c.h.b16 %v256
      %v792 = vunpack.c.l.b16 %v257
      %v793 = vunpack.c.l.b16 %v258
      %v794 = vunpack.c.h.b16 %v258
      %v795 = vunpack.c.l.b16 %v259
      %v796 = vunpack.c.h.b16 %v259
      %v797 = vunpack.c.l.b16 %v260
      %v798 = vunpack.c.h.b16 %v260
      %v799 = vunpack.c.l.b16 %v261
      %v800 = vunpack.c.h.b16 %v261
      %v801 = vunpack.c.l.b16 %v262
      %v802 = vunpack.c.l.b16 %v263
      %v803 = vunpack.c.h.b16 %v263
      %v804 = vunpack.c.l.b16 %v264
      %v805 = vunpack.c.h.b16 %v264
      %v806 = vunpack.c.l.b16 %v265
      %v807 = vunpack.c.h.b16 %v265
      %v808 = vunpack.c.l.b16 %v266
      %v809 = vunpack.c.h.b16 %v266
      %v810 = vunpack.c.l.b16 %v267
      %v811 = vunpack.c.l.b16 %v268
      %v812 = vunpack.c.h.b16 %v268
      %v813 = vunpack.c.l.b16 %v269
      %v814 = vunpack.c.h.b16 %v269
      %v815 = vunpack.c.l.b16 %v270
      %v816 = vunpack.c.h.b16 %v270
      %v817 = vunpack.c.l.b16 %v271
      %v818 = vunpack.c.h.b16 %v271
      %v819 = vunpack.c.l.b16 %v272
      %v820 = vunpack.c.l.b16 %v273
      %v821 = vunpack.c.h.b16 %v273
      %v822 = vunpack.c.l.b16 %v274
      %v823 = vunpack.c.h.b16 %v274
      %v824 = vunpack.c.l.b16 %v275
      %v825 = vunpack.c.h.b16 %v275
      %v826 = vunpack.c.l.b16 %v276
      %v827 = vunpack.c.h.b16 %v276
      %v828 = vunpack.c.l.b16 %v277
      %v829 = vunpack.c.l.b16 %v278
      %v830 = vunpack.c.h.b16 %v278
      %v831 = vunpack.c.l.b16 %v279
      %v832 = vunpack.c.h.b16 %v279
      %v833 = vunpack.c.l.b16 %v280
      %v834 = vunpack.c.h.b16 %v280
      %v835 = vunpack.c.l.b16 %v281
      %v836 = vunpack.c.h.b16 %v281
      %v837 = vunpack.c.l.b16 %v282
      %v838 = vunpack.c.l.b16 %v283
      %v839 = vunpack.c.h.b16 %v283
      %v840 = vunpack.c.l.b16 %v284
      %v841 = vunpack.c.h.b16 %v284
      %v842 = vunpack.c.l.b16 %v285
      %v843 = vunpack.c.h.b16 %v285
      %v844 = vunpack.c.l.b16 %v286
      %v845 = vunpack.c.h.b16 %v286
      %v846 = vunpack.c.l.b16 %v287
      %v847 = vunpack.c.l.b16 %v288
      %v848 = vunpack.c.h.b16 %v288
      %v849 = vunpack.c.l.b16 %v289
      %v850 = vunpack.c.h.b16 %v289
      %v851 = vunpack.c.l.b16 %v290
      %v852 = vunpack.c.h.b16 %v290
      %v853 = vunpack.c.l.b16 %v291
      %v854 = vunpack.c.h.b16 %v291
      %v855 = vunpack.c.l.b16 %v292
      %v856 = vunpack.c.l.b16 %v293
      %v857 = vunpack.c.h.b16 %v293
      %v858 = vunpack.c.l.b16 %v294
      %v859 = vunpack.c.h.b16 %v294
      %v860 = vunpack.c.l.b16 %v295
      %v861 = vunpack.c.h.b16 %v295
      %v862 = vunpack.c.l.b16 %v296
      %v863 = vunpack.c.h.b16 %v296
      %v864 = vunpack.c.l.b16 %v297
      %v865 = vunpack.c.l.b16 %v298
      %v866 = vunpack.c.h.b16 %v298
      %v867 = vunpack.c.l.b16 %v299
      %v868 = vunpack.c.h.b16 %v299
      %v869 = vunpack.c.l.b16 %v300
      %v870 = vunpack.c.h.b16 %v300
      %v871 = vunpack.c.l.b16 %v301
      %v872 = vunpack.c.h.b16 %v301
      %v873 = vunpack.c.l.b16 %v302
      %v874 = vunpack.c.l.b16 %v303
      %v875 = vunpack.c.h.b16 %v303
      %v876 = vunpack.c.l.b16 %v304
      %v877 = vunpack.c.h.b16 %v304
      %v878 = vunpack.c.l.b16 %v305
      %v879 = vunpack.c.h.b16 %v305
      %v880 = vunpack.c.l.b16 %v306
      %v881 = vunpack.c.h.b16 %v306
      %v882 = vunpack.c.l.b16 %v307
      %v883 = vunpack.c.l.b16 %v308
      %v884 = vunpack.c.h.b16 %v308
      %v885 = vunpack.c.l.b16 %v309
      %v886 = vunpack.c.h.b16 %v309
      %v887 = vunpack.c.l.b16 %v310
      %v888 = vunpack.c.h.b16 %v310
      %v889 = vunpack.c.l.b16 %v311
      %v890 = vunpack.c.h.b16 %v311
      %v891 = vunpack.c.l.b16 %v312
      %v892 = vunpack.c.l.b16 %v313
      %v893 = vunpack.c.h.b16 %v313
      %v894 = vunpack.c.l.b16 %v314
      %v895 = vunpack.c.h.b16 %v314
      %v896 = vunpack.c.l.b16 %v315
      %v897 = vunpack.c.h.b16 %v315
      %v898 = vunpack.c.l.b16 %v316
      %v899 = vunpack.c.h.b16 %v316
      %v900 = vunpack.c.l.b16 %v317
      %v901 = vunpack.c.l.b16 %v318
      %v902 = vunpack.c.h.b16 %v318
      %v903 = vunpack.c.l.b16 %v319
      %v904 = vunpack.c.h.b16 %v319
      %v905 = vunpack.c.l.b16 %v320
      %v906 = vunpack.c.h.b16 %v320
      %v907 = vunpack.c.l.b16 %v321
      %v908 = vunpack.c.h.b16 %v321
      %v909 = vunpack.c.l.b16 %v322
      %v910 = vunpack.c.l.b16 %v323
      %v911 = vunpack.c.h.b16 %v323
      %v912 = vunpack.c.l.b16 %v324
      %v913 = vunpack.c.h.b16 %v324
      %v914 = vunpack.c.l.b16 %v325
      %v915 = vunpack.c.h.b16 %v325
      %v916 = vunpack.c.l.b16 %v326
      %v917 = vunpack.c.h.b16 %v326
      %v918 = vunpack.c.l.b16 %v327
      %v919 = vunpack.c.l.b16 %v328
      %v920 = vunpack.c.h.b16 %v328
      %v921 = vunpack.c.l.b16 %v329
      %v922 = vunpack.c.h.b16 %v329
      %v923 = vunpack.c.l.b16 %v330
      %v924 = vunpack.c.h.b16 %v330
      %v925 = vunpack.c.l.b16 %v331
      %v926 = vunpack.c.h.b16 %v331
      %v927 = vunpack.c.l.b16 %v332
      %v928 = vunpack.c.l.b16 %v333
      %v929 = vunpack.c.h.b16 %v333
      %v930 = vunpack.c.l.b16 %v334
      %v931 = vunpack.c.h.b16 %v334
      %v932 = vunpack.c.l.b16 %v335
      %v933 = vunpack.c.h.b16 %v335
      %v934 = vunpack.c.l.b16 %v336
      %v935 = vunpack.c.h.b16 %v336
      %v936 = vunpack.c.l.b16 %v337
      %v937 = vpack.c.b16 %v658, %v649
      %v938 = vpack.c.b16 %v659, %v650
      %v939 = vpack.c.b16 %v660, %v651
      %v940 = vpack.c.b16 %v661, %v652
      %v941 = vpack.c.b16 %v662, %v653
      %v942 = vpack.c.b16 %v663, %v654
      %v943 = vpack.c.b16 %v664, %v655
      %v944 = vpack.c.b16 %v665, %v656
      %v945 = vpack.c.b16 %v666, %v657
      %v946 = vpack.c.b16 %v676, %v667
      %v947 = vpack.c.b16 %v677, %v668
      %v948 = vpack.c.b16 %v678, %v669
      %v949 = vpack.c.b16 %v679, %v670
      %v950 = vpack.c.b16 %v680, %v671
      %v951 = vpack.c.b16 %v681, %v672
      %v952 = vpack.c.b16 %v682, %v673
      %v953 = vpack.c.b16 %v683, %v674
      %v954 = vpack.c.b16 %v684, %v675
      %v955 = vpack.c.b16 %v694, %v685
      %v956 = vpack.c.b16 %v695, %v686
      %v957 = vpack.c.b16 %v696, %v687
      %v958 = vpack.c.b16 %v697, %v688
      %v959 = vpack.c.b16 %v698, %v689
      %v960 = vpack.c.b16 %v699, %v690
      %v961 = vpack.c.b16 %v700, %v691
      %v962 = vpack.c.b16 %v701, %v692
      %v963 = vpack.c.b16 %v702, %v693
      %v964 = vpack.c.b16 %v712, %v703
      %v965 = vpack.c.b16 %v713, %v704
      %v966 = vpack.c.b16 %v714, %v705
      %v967 = vpack.c.b16 %v715, %v706
      %v968 = vpack.c.b16 %v716, %v707
      %v969 = vpack.c.b16 %v717, %v708
      %v970 = vpack.c.b16 %v718, %v709
      %v971 = vpack.c.b16 %v719, %v710
      %v972 = vpack.c.b16 %v720, %v711
      %v973 = vpack.c.b16 %v730, %v721
      %v974 = vpack.c.b16 %v731, %v722
      %v975 = vpack.c.b16 %v732, %v723
      %v976 = vpack.c.b16 %v733, %v724
      %v977 = vpack.c.b16 %v734, %v725
      %v978 = vpack.c.b16 %v735, %v726
      %v979 = vpack.c.b16 %v736, %v727
      %v980 = vpack.c.b16 %v737, %v728
      %v981 = vpack.c.b16 %v738, %v729
      %v982 = vpack.c.b16 %v748, %v739
      %v983 = vpack.c.b16 %v749, %v740
      %v984 = vpack.c.b16 %v750, %v741
      %v985 = vpack.c.b16 %v751, %v742
      %v986 = vpack.c.b16 %v752, %v743
      %v987 = vpack.c.b16 %v753, %v744
      %v988 = vpack.c.b16 %v754, %v745
      %v989 = vpack.c.b16 %v755, %v746
      %v990 = vpack.c.b16 %v756, %v747
      %v991 = vpack.c.b16 %v766, %v757
      %v992 = vpack.c.b16 %v767, %v758
      %v993 = vpack.c.b16 %v768, %v759
      %v994 = vpack.c.b16 %v769, %v760
      %v995 = vpack.c.b16 %v770, %v761
      %v996 = vpack.c.b16 %v771, %v762
      %v997 = vpack.c.b16 %v772, %v763
      %v998 = vpack.c.b16 %v773, %v764
      %v999 = vpack.c.b16 %v774, %v765
      %v1000 = vpack.c.b16 %v784, %v775
      %v1001 = vpack.c.b16 %v785, %v776
      %v1002 = vpack.c.b16 %v786, %v777
      %v1003 = vpack.c.b16 %v787, %v778
      %v1004 = vpack.c.b16 %v788, %v779
      %v1005 = vpack.c.b16 %v789, %v780
      %v1006 = vpack.c.b16 %v790, %v781
      %v1007 = vpack.c.b16 %v791, %v782
      %v1008 = vpack.c.b16 %v792, %v783
      %v1009 = vpack.c.b16 %v802, %v793
      %v1010 = vpack.c.b16 %v803, %v794
      %v1011 = vpack.c.b16 %v804, %v795
      %v1012 = vpack.c.b16 %v805, %v796
      %v1013 = vpack.c.b16 %v806, %v797
      %v1014 = vpack.c.b16 %v807, %v798
      %v1015 = vpack.c.b16 %v808, %v799
      %v1016 = vpack.c.b16 %v809, %v800
      %v1017 = vpack.c.b16 %v810, %v801
      %v1018 = vpack.c.b16 %v820, %v811
      %v1019 = vpack.c.b16 %v821, %v812
      %v1020 = vpack.c.b16 %v822, %v813
      %v1021 = vpack.c.b16 %v823, %v814
      %v1022 = vpack.c.b16 %v824, %v815
      %v1023 = vpack.c.b16 %v825, %v816
      %v1024 = vpack.c.b16 %v826, %v817
      %v1025 = vpack.c.b16 %v827, %v818
      %v1026 = vpack.c.b16 %v828, %v819
      %v1027 = vpack.c.b16 %v838, %v829
      %v1028 = vpack.c.b16 %v839, %v830
      %v1029 = vpack.c.b16 %v840, %v831
      %v1030 = vpack.c.b16 %v841, %v832
      %v1031 = vpack.c.b16 %v842, %v833
      %v1032 = vpack.c.b16 %v843, %v834
      %v1033 = vpack.c.b16 %v844, %v835
      %v1034 = vpack.c.b16 %v845, %v836
      %v1035 = vpack.c.b16 %v846, %v837
      %v1036 = vpack.c.b16 %v856, %v847
      %v1037 = vpack.c.b16 %v857, %v848
      %v1038 = vpack.c.b16 %v858, %v849
      %v1039 = vpack.c.b16 %v859, %v850
      %v1040 = vpack.c.b16 %v860, %v851
      %v1041 = vpack.c.b16 %v861, %v852
      %v1042 = vpack.c.b16 %v862, %v853
      %v1043 = vpack.c.b16 %v863, %v854
      %v1044 = vpack.c.b16 %v864, %v855
      %v1045 = vpack.c.b16 %v874, %v865
      %v1046 = vpack.c.b16 %v875, %v866
      %v1047 = vpack.c.b16 %v876, %v867
      %v1048 = vpack.c.b16 %v877, %v868
      %v1049 = vpack.c.b16 %v878, %v869
      %v1050 = vpack.c.b16 %v879, %v870
      %v1051 = vpack.c.b16 %v880, %v871
      %v1052 = vpack.c.b16 %v881, %v872
      %v1053 = vpack.c.b16 %v882, %v873
      %v1054 = vpack.c.b16 %v892, %v883
      %v1055 = vpack.c.b16 %v893, %v884
      %v1056 = vpack.c.b16 %v894, %v885
      %v1057 = vpack.c.b16 %v895, %v886
      %v1058 = vpack.c.b16 %v896, %v887
      %v1059 = vpack.c.b16 %v897, %v888
      %v1060 = vpack.c.b16 %v898, %v889
      %v1061 = vpack.c.b16 %v899, %v890
      %v1062 = vpack.c.b16 %v900, %v891
      %v1063 = vpack.c.b16 %v910, %v901
      %v1064 = vpack.c.b16 %v911, %v902
      %v1065 = vpack.c.b16 %v912, %v903
      %v1066 = vpack.c.b16 %v913, %v904
      %v1067 = vpack.c.b16 %v914, %v905
      %v1068 = vpack.c.b16 %v915, %v906
      %v1069 = vpack.c.b16 %v916, %v907
      %v1070 = vpack.c.b16 %v917, %v908
      %v1071 = vpack.c.b16 %v918, %v909
      %v1072 = vpack.c.b16 %v928, %v919
      %v1073 = vpack.c.b16 %v929, %v920
      %v1074 = vpack.c.b16 %v930, %v921
      %v1075 = vpack.c.b16 %v931, %v922
      %v1076 = vpack.c.b16 %v932, %v923
      %v1077 = vpack.c.b16 %v933, %v924
      %v1078 = vpack.c.b16 %v934, %v925
      %v1079 = vpack.c.b16 %v935, %v926
      %v1080 = vpack.c.b16 %v936, %v927
      %v1369 = vunpack.c.l.b16 %v338
      %v1370 = vunpack.c.l.b16 %v339
      %v1371 = vunpack.c.l.b16 %v340
      %v1372 = vunpack.c.l.b16 %v341
      %v1373 = vunpack.c.l.b16 %v342
      %v1374 = vunpack.c.l.b16 %v343
      %v1375 = vunpack.c.l.b16 %v344
      %v1376 = vunpack.c.l.b16 %v345
      %v1377 = vunpack.c.l.b16 %v346
      %v1378 = vunpack.c.l.b16 %v347
      %v1379 = vunpack.c.l.b16 %v348
      %v1380 = vunpack.c.l.b16 %v349
      %v1381 = vunpack.c.l.b16 %v350
      %v1382 = vunpack.c.l.b16 %v351
      %v1383 = vunpack.c.l.b16 %v352
      %v1384 = vunpack.c.l.b16 %v353
      %v1385 = vunpack.c.l.b16 %v354
      %v1386 = vunpack.c.l.b16 %v355
      %v1387 = vunpack.c.l.b16 %v356
      %v1388 = vunpack.c.l.b16 %v357
      %v1389 = vunpack.c.l.b16 %v358
      %v1390 = vunpack.c.l.b16 %v359
      %v1391 = vunpack.c.l.b16 %v360
      %v1392 = vunpack.c.l.b16 %v361
      %v1393 = vunpack.c.l.b16 %v362
      %v1394 = vunpack.c.l.b16 %v363
      %v1395 = vunpack.c.l.b16 %v364
      %v1396 = vunpack.c.l.b16 %v365
      %v1397 = vunpack.c.l.b16 %v366
      %v1398 = vunpack.c.l.b16 %v367
      %v1399 = vunpack.c.l.b16 %v368
      %v1400 = vunpack.c.l.b16 %v369
      %v1401 = vunpack.c.l.b16 %v370
      %v1402 = vunpack.c.l.b16 %v371
      %v1403 = vunpack.c.l.b16 %v372
      %v1404 = vunpack.c.l.b16 %v373
      %v1405 = vunpack.c.l.b16 %v374
      %v1406 = vunpack.c.l.b16 %v375
      %v1407 = vunpack.c.l.b16 %v376
      %v1408 = vunpack.c.l.b16 %v377
      %v1409 = vunpack.c.l.b16 %v378
      %v1410 = vunpack.c.l.b16 %v379
      %v1411 = vunpack.c.l.b16 %v380
      %v1412 = vunpack.c.l.b16 %v381
      %v1413 = vunpack.c.l.b16 %v382
      %v1414 = vunpack.c.l.b16 %v383
      %v1415 = vunpack.c.l.b16 %v384
      %v1416 = vunpack.c.l.b16 %v385
      %v1417 = vunpack.c.l.b16 %v386
      %v1418 = vunpack.c.l.b16 %v387
      %v1419 = vunpack.c.l.b16 %v388
      %v1420 = vunpack.c.l.b16 %v389
      %v1421 = vunpack.c.l.b16 %v390
      %v1422 = vunpack.c.l.b16 %v391
      %v1423 = vunpack.c.l.b16 %v392
      %v1424 = vunpack.c.l.b16 %v393
      %v1425 = vunpack.c.l.b16 %v394
      %v1426 = vunpack.c.l.b16 %v395
      %v1427 = vunpack.c.l.b16 %v396
      %v1428 = vunpack.c.l.b16 %v397
      %v1429 = vunpack.c.l.b16 %v398
      %v1430 = vunpack.c.l.b16 %v399
      %v1431 = vunpack.c.l.b16 %v400
      %v1432 = vunpack.c.l.b16 %v401
      %v1433 = vunpack.c.l.b16 %v402
      %v1434 = vunpack.c.l.b16 %v403
      %v1435 = vunpack.c.l.b16 %v404
      %v1436 = vunpack.c.l.b16 %v405
      %v1437 = vunpack.c.l.b16 %v406
      %v1438 = vunpack.c.l.b16 %v407
      %v1439 = vunpack.c.l.b16 %v408
      %v1440 = vunpack.c.l.b16 %v409
      %v1441 = vunpack.c.l.b16 %v410
      %v1442 = vunpack.c.l.b16 %v411
      %v1443 = vunpack.c.l.b16 %v412
      %v1444 = vunpack.c.l.b16 %v413
      %v1445 = vunpack.c.l.b16 %v414
      %v1446 = vunpack.c.l.b16 %v415
      %v1447 = vunpack.c.l.b16 %v416
      %v1448 = vunpack.c.l.b16 %v417
      %v1449 = vunpack.c.l.b16 %v418
      %v1450 = vunpack.c.l.b16 %v419
      %v1451 = vunpack.c.l.b16 %v420
      %v1452 = vunpack.c.l.b16 %v421
      %v1453 = vunpack.c.l.b16 %v422
      %v1454 = vunpack.c.l.b16 %v423
      %v1455 = vunpack.c.l.b16 %v424
      %v1456 = vunpack.c.l.b16 %v425
      %v1457 = vunpack.c.l.b16 %v426
      %v1458 = vunpack.c.l.b16 %v427
      %v1459 = vunpack.c.l.b16 %v428
      %v1460 = vunpack.c.l.b16 %v429
      %v1461 = vunpack.c.l.b16 %v430
      %v1462 = vunpack.c.l.b16 %v431
      %v1463 = vunpack.c.l.b16 %v432
      %v1464 = vunpack.c.l.b16 %v433
      %v1465 = vunpack.c.l.b16 %v434
      %v1466 = vunpack.c.l.b16 %v435
      %v1467 = vunpack.c.l.b16 %v436
      %v1468 = vunpack.c.l.b16 %v437
      %v1469 = vunpack.c.l.b16 %v438
      %v1470 = vunpack.c.l.b16 %v439
      %v1471 = vunpack.c.l.b16 %v440
      %v1472 = vunpack.c.l.b16 %v441
      %v1473 = vunpack.c.l.b16 %v442
      %v1474 = vunpack.c.l.b16 %v443
      %v1475 = vunpack.c.l.b16 %v444
      %v1476 = vunpack.c.l.b16 %v445
      %v1477 = vunpack.c.l.b16 %v446
      %v1478 = vunpack.c.l.b16 %v447
      %v1479 = vunpack.c.l.b16 %v448
      %v1480 = vunpack.c.l.b16 %v449
      %v1481 = vunpack.c.l.b16 %v450
      %v1482 = vunpack.c.l.b16 %v451
      %v1483 = vunpack.c.l.b16 %v452
      %v1484 = vunpack.c.l.b16 %v453
      %v1485 = vunpack.c.l.b16 %v454
      %v1486 = vunpack.c.l.b16 %v455
      %v1487 = vunpack.c.l.b16 %v456
      %v1488 = vunpack.c.l.b16 %v457
      %v1489 = vunpack.c.l.b16 %v458
      %v1490 = vunpack.c.l.b16 %v459
      %v1491 = vunpack.c.l.b16 %v460
      %v1492 = vunpack.c.l.b16 %v461
      %v1493 = vunpack.c.l.b16 %v462
      %v1494 = vunpack.c.l.b16 %v463
      %v1495 = vunpack.c.l.b16 %v464
      %v1496 = vunpack.c.l.b16 %v465
      %v1497 = vunpack.c.l.b16 %v466
      %v1498 = vunpack.c.l.b16 %v467
      %v1499 = vunpack.c.l.b16 %v468
      %v1500 = vunpack.c.l.b16 %v469
      %v1501 = vunpack.c.l.b16 %v470
      %v1502 = vunpack.c.l.b16 %v471
      %v1503 = vunpack.c.l.b16 %v472
      %v1504 = vunpack.c.l.b16 %v473
      %v1505 = vunpack.c.l.b16 %v474
      %v1506 = vunpack.c.l.b16 %v475
      %v1507 = vunpack.c.l.b16 %v476
      %v1508 = vunpack.c.l.b16 %v477
      %v1509 = vunpack.c.l.b16 %v478
      %v1510 = vunpack.c.l.b16 %v479
      %v1511 = vunpack.c.l.b16 %v480
      %v1512 = vunpack.c.l.b16 %v481
      %v1513 = vpack.c.b16 %v1370, %v1369
      %v1514 = vpack.c.b16 %v1372, %v1371
      %v1515 = vpack.c.b16 %v1374, %v1373
      %v1516 = vpack.c.b16 %v1376, %v1375
      %v1517 = vpack.c.b16 %v1378, %v1377
      %v1518 = vpack.c.b16 %v1380, %v1379
      %v1519 = vpack.c.b16 %v1382, %v1381
      %v1520 = vpack.c.b16 %v1384, %v1383
      %v1521 = vpack.c.b16 %v1386, %v1385
      %v1522 = vpack.c.b16 %v1388, %v1387
      %v1523 = vpack.c.b16 %v1390, %v1389
      %v1524 = vpack.c.b16 %v1392, %v1391
      %v1525 = vpack.c.b16 %v1394, %v1393
      %v1526 = vpack.c.b16 %v1396, %v1395
      %v1527 = vpack.c.b16 %v1398, %v1397
      %v1528 = vpack.c.b16 %v1400, %v1399
      %v1529 = vpack.c.b16 %v1402, %v1401
      %v1530 = vpack.c.b16 %v1404, %v1403
      %v1531 = vpack.c.b16 %v1406, %v1405
      %v1532 = vpack.c.b16 %v1408, %v1407
      %v1533 = vpack.c.b16 %v1410, %v1409
      %v1534 = vpack.c.b16 %v1412, %v1411
      %v1535 = vpack.c.b16 %v1414, %v1413
      %v1536 = vpack.c.b16 %v1416, %v1415
      %v1537 = vpack.c.b16 %v1418, %v1417
      %v1538 = vpack.c.b16 %v1420, %v1419
      %v1539 = vpack.c.b16 %v1422, %v1421
      %v1540 = vpack.c.b16 %v1424, %v1423
      %v1541 = vpack.c.b16 %v1426, %v1425
      %v1542 = vpack.c.b16 %v1428, %v1427
      %v1543 = vpack.c.b16 %v1430, %v1429
      %v1544 = vpack.c.b16 %v1432, %v1431
      %v1545 = vpack.c.b16 %v1434, %v1433
      %v1546 = vpack.c.b16 %v1436, %v1435
      %v1547 = vpack.c.b16 %v1438, %v1437
      %v1548 = vpack.c.b16 %v1440, %v1439
      %v1549 = vpack.c.b16 %v1442, %v1441
      %v1550 = vpack.c.b16 %v1444, %v1443
      %v1551 = vpack.c.b16 %v1446, %v1445
      %v1552 = vpack.c.b16 %v1448, %v1447
      %v1553 = vpack.c.b16 %v1450, %v1449
      %v1554 = vpack.c.b16 %v1452, %v1451
      %v1555 = vpack.c.b16 %v1454, %v1453
      %v1556 = vpack.c.b16 %v1456, %v1455
      %v1557 = vpack.c.b16 %v1458, %v1457
      %v1558 = vpack.c.b16 %v1460, %v1459
      %v1559 = vpack.c.b16 %v1462, %v1461
      %v1560 = vpack.c.b16 %v1464, %v1463
      %v1561 = vpack.c.b16 %v1466, %v1465
      %v1562 = vpack.c.b16 %v1468, %v1467
      %v1563 = vpack.c.b16 %v1470, %v1469
      %v1564 = vpack.c.b16 %v1472, %v1471
      %v1565 = vpack.c.b16 %v1474, %v1473
      %v1566 = vpack.c.b16 %v1476, %v1475
      %v1567 = vpack.c.b16 %v1478, %v1477
      %v1568 = vpack.c.b16 %v1480, %v1479
      %v1569 = vpack.c.b16 %v1482, %v1481
      %v1570 = vpack.c.b16 %v1484, %v1483
      %v1571 = vpack.c.b16 %v1486, %v1485
      %v1572 = vpack.c.b16 %v1488, %v1487
      %v1573 = vpack.c.b16 %v1490, %v1489
      %v1574 = vpack.c.b16 %v1492, %v1491
      %v1575 = vpack.c.b16 %v1494, %v1493
      %v1576 = vpack.c.b16 %v1496, %v1495
      %v1577 = vpack.c.b16 %v1498, %v1497
      %v1578 = vpack.c.b16 %v1500, %v1499
      %v1579 = vpack.c.b16 %v1502, %v1501
      %v1580 = vpack.c.b16 %v1504, %v1503
      %v1581 = vpack.c.b16 %v1506, %v1505
      %v1582 = vpack.c.b16 %v1508, %v1507
      %v1583 = vpack.c.b16 %v1510, %v1509
      %v1584 = vpack.c.b16 %v1512, %v1511
      %1657 = vmatprep.subr.bf16.mxu0 0
      %1658 = vmatpush1.bf16.msra.mxu0 %v1520
      %1659 = vmatprep.subr.bf16.mxu0 0
      %1660 = vmatpush1.bf16.msra.mxu0 %v1519
      %1661 = vmatprep.subr.bf16.mxu0 0
      %1662 = vmatpush1.bf16.msra.mxu0 %v1518
      %1663 = vmatprep.subr.bf16.mxu0 0
      %1664 = vmatpush1.bf16.msra.mxu0 %v1517
      %1665 = vmatprep.subr.bf16.mxu0 0
      %1666 = vmatpush1.bf16.msra.mxu0 %v1516
      %1667 = vmatprep.subr.bf16.mxu0 0
      %1668 = vmatpush1.bf16.msra.mxu0 %v1515
      %1669 = vmatprep.subr.bf16.mxu0 0
      %1670 = vmatpush1.bf16.msra.mxu0 %v1514
      %1671 = vmatprep.subr.bf16.mxu0 0
      %1672 = vmatpush1.bf16.msra.mxu0 %v1513
      %1673 = vmatprep.subr.bf16.mxu0 0
      %1674 = vmatpush2.bf16.msra.mxu0 %v1528
      %1675 = vmatprep.subr.bf16.mxu0 0
      %1676 = vmatpush2.bf16.msra.mxu0 %v1527
      %1677 = vmatprep.subr.bf16.mxu0 0
      %1678 = vmatpush2.bf16.msra.mxu0 %v1526
      %1679 = vmatprep.subr.bf16.mxu0 0
      %1680 = vmatpush2.bf16.msra.mxu0 %v1525
      %1681 = vmatprep.subr.bf16.mxu0 0
      %1682 = vmatpush2.bf16.msra.mxu0 %v1524
      %1683 = vmatprep.subr.bf16.mxu0 0
      %1684 = vmatpush2.bf16.msra.mxu0 %v1523
      %1685 = vmatprep.subr.bf16.mxu0 0
      %1686 = vmatpush2.bf16.msra.mxu0 %v1522
      %1687 = vmatprep.subr.bf16.mxu0 0
      %1688 = vmatpush2.bf16.msra.mxu0 %v1521
      %1689 = vmatprep.mubr.bf16.mxu0 %v938
      %1690 = vmatmul.mubr.bf16.gmra.mxu0 %v937
      %v1691 = vpop.f32.mrf.mxu0
      %v1692 = vadd.f32 %v487, %v1691
      %v1693 = vpop.f32.mrf.mxu0
      %v1694 = vpop.f32.mrf.mxu0
      %v1695 = vadd.f32 %v487, %v1694
      %v1696 = vpop.f32.mrf.mxu0
      %1697 = vmatprep.mubr.bf16.mxu0 %v947
      %1698 = vmatmul.mubr.bf16.gmra.mxu0 %v946
      %v1699 = vpop.f32.mrf.mxu0
      %v1700 = vadd.f32 %v487, %v1699
      %v1701 = vpop.f32.mrf.mxu0
      %v1702 = vpop.f32.mrf.mxu0
      %v1703 = vadd.f32 %v487, %v1702
      %v1704 = vpop.f32.mrf.mxu0
      %1705 = vmatprep.mubr.bf16.mxu0 %v956
      %1706 = vmatmul.mubr.bf16.gmra.mxu0 %v955
      %v1707 = vpop.f32.mrf.mxu0
      %v1708 = vadd.f32 %v487, %v1707
      %v1709 = vpop.f32.mrf.mxu0
      %v1710 = vpop.f32.mrf.mxu0
      %v1711 = vadd.f32 %v487, %v1710
      %v1712 = vpop.f32.mrf.mxu0
      %1713 = vmatprep.mubr.bf16.mxu0 %v965
      %1714 = vmatmul.mubr.bf16.gmra.mxu0 %v964
      %v1715 = vpop.f32.mrf.mxu0
      %v1716 = vadd.f32 %v487, %v1715
      %v1717 = vpop.f32.mrf.mxu0
      %v1718 = vpop.f32.mrf.mxu0
      %v1719 = vadd.f32 %v487, %v1718
      %v1720 = vpop.f32.mrf.mxu0
      %1721 = vmatprep.mubr.bf16.mxu0 %v974
      %1722 = vmatmul.mubr.bf16.gmra.mxu0 %v973
      %v1723 = vpop.f32.mrf.mxu0
      %v1724 = vadd.f32 %v487, %v1723
      %v1725 = vpop.f32.mrf.mxu0
      %v1726 = vpop.f32.mrf.mxu0
      %v1727 = vadd.f32 %v487, %v1726
      %v1728 = vpop.f32.mrf.mxu0
      %1729 = vmatprep.mubr.bf16.mxu0 %v983
      %1730 = vmatmul.mubr.bf16.gmra.mxu0 %v982
      %v1731 = vpop.f32.mrf.mxu0
      %v1732 = vadd.f32 %v487, %v1731
      %v1733 = vpop.f32.mrf.mxu0
      %v1734 = vpop.f32.mrf.mxu0
      %v1735 = vadd.f32 %v487, %v1734
      %v1736 = vpop.f32.mrf.mxu0
      %1737 = vmatprep.mubr.bf16.mxu0 %v992
      %1738 = vmatmul.mubr.bf16.gmra.mxu0 %v991
      %v1739 = vpop.f32.mrf.mxu0
      %v1740 = vadd.f32 %v487, %v1739
      %v1741 = vpop.f32.mrf.mxu0
      %v1742 = vpop.f32.mrf.mxu0
      %v1743 = vadd.f32 %v487, %v1742
      %v1744 = vpop.f32.mrf.mxu0
      %1745 = vmatprep.mubr.bf16.mxu0 %v1001
      %1746 = vmatmul.mubr.bf16.gmra.mxu0 %v1000
      %v1747 = vpop.f32.mrf.mxu0
      %v1748 = vadd.f32 %v487, %v1747
      %v1749 = vpop.f32.mrf.mxu0
      %v1750 = vpop.f32.mrf.mxu0
      %v1751 = vadd.f32 %v487, %v1750
      %v1752 = vpop.f32.mrf.mxu0
      %1753 = vmatprep.mubr.bf16.mxu0 %v1010
      %1754 = vmatmul.mubr.bf16.gmra.mxu0 %v1009
      %v1755 = vpop.f32.mrf.mxu0
      %v1756 = vadd.f32 %v487, %v1755
      %v1757 = vpop.f32.mrf.mxu0
      %v1758 = vpop.f32.mrf.mxu0
      %v1759 = vadd.f32 %v487, %v1758
      %v1760 = vpop.f32.mrf.mxu0
      %1761 = vmatprep.mubr.bf16.mxu0 %v1019
      %1762 = vmatmul.mubr.bf16.gmra.mxu0 %v1018
      %v1763 = vpop.f32.mrf.mxu0
      %v1764 = vadd.f32 %v487, %v1763
      %v1765 = vpop.f32.mrf.mxu0
      %v1766 = vpop.f32.mrf.mxu0
      %v1767 = vadd.f32 %v487, %v1766
      %v1768 = vpop.f32.mrf.mxu0
      %1769 = vmatprep.mubr.bf16.mxu0 %v1028
      %1770 = vmatmul.mubr.bf16.gmra.mxu0 %v1027
      %v1771 = vpop.f32.mrf.mxu0
      %v1772 = vadd.f32 %v487, %v1771
      %v1773 = vpop.f32.mrf.mxu0
      %v1774 = vpop.f32.mrf.mxu0
      %v1775 = vadd.f32 %v487, %v1774
      %v1776 = vpop.f32.mrf.mxu0
      %1777 = vmatprep.mubr.bf16.mxu0 %v1037
      %1778 = vmatmul.mubr.bf16.gmra.mxu0 %v1036
      %v1779 = vpop.f32.mrf.mxu0
      %v1780 = vadd.f32 %v487, %v1779
      %v1781 = vpop.f32.mrf.mxu0
      %v1782 = vpop.f32.mrf.mxu0
      %v1783 = vadd.f32 %v487, %v1782
      %v1784 = vpop.f32.mrf.mxu0
      %1785 = vmatprep.mubr.bf16.mxu0 %v1046
      %1786 = vmatmul.mubr.bf16.gmra.mxu0 %v1045
      %v1787 = vpop.f32.mrf.mxu0
      %v1788 = vadd.f32 %v487, %v1787
      %v1789 = vpop.f32.mrf.mxu0
      %v1790 = vpop.f32.mrf.mxu0
      %v1791 = vadd.f32 %v487, %v1790
      %v1792 = vpop.f32.mrf.mxu0
      %1793 = vmatprep.mubr.bf16.mxu0 %v1055
      %1794 = vmatmul.mubr.bf16.gmra.mxu0 %v1054
      %v1795 = vpop.f32.mrf.mxu0
      %v1796 = vadd.f32 %v487, %v1795
      %v1797 = vpop.f32.mrf.mxu0
      %v1798 = vpop.f32.mrf.mxu0
      %v1799 = vadd.f32 %v487, %v1798
      %v1800 = vpop.f32.mrf.mxu0
      %1801 = vmatprep.mubr.bf16.mxu0 %v1064
      %1802 = vmatmul.mubr.bf16.gmra.mxu0 %v1063
      %v1803 = vpop.f32.mrf.mxu0
      %v1804 = vadd.f32 %v487, %v1803
      %v1805 = vpop.f32.mrf.mxu0
      %v1806 = vpop.f32.mrf.mxu0
      %v1807 = vadd.f32 %v487, %v1806
      %v1808 = vpop.f32.mrf.mxu0
      %1809 = vmatprep.mubr.bf16.mxu0 %v1073
      %1810 = vmatmul.mubr.bf16.gmra.mxu0 %v1072
      %v1811 = vpop.f32.mrf.mxu0
      %v1812 = vadd.f32 %v487, %v1811
      %v1813 = vpop.f32.mrf.mxu0
      %v1814 = vpop.f32.mrf.mxu0
      %v1815 = vadd.f32 %v487, %v1814
      %v1816 = vpop.f32.mrf.mxu0
      %1817 = vdwg.mxu0
      %1818 = vmatprep.subr.bf16.mxu0 0
      %1819 = vmatpush1.bf16.msra.mxu0 %v1536
      %1820 = vmatprep.subr.bf16.mxu0 0
      %1821 = vmatpush1.bf16.msra.mxu0 %v1535
      %1822 = vmatprep.subr.bf16.mxu0 0
      %1823 = vmatpush1.bf16.msra.mxu0 %v1534
      %1824 = vmatprep.subr.bf16.mxu0 0
      %1825 = vmatpush1.bf16.msra.mxu0 %v1533
      %1826 = vmatprep.subr.bf16.mxu0 0
      %1827 = vmatpush1.bf16.msra.mxu0 %v1532
      %1828 = vmatprep.subr.bf16.mxu0 0
      %1829 = vmatpush1.bf16.msra.mxu0 %v1531
      %1830 = vmatprep.subr.bf16.mxu0 0
      %1831 = vmatpush1.bf16.msra.mxu0 %v1530
      %1832 = vmatprep.subr.bf16.mxu0 0
      %1833 = vmatpush1.bf16.msra.mxu0 %v1529
      %1834 = vmatprep.subr.bf16.mxu0 0
      %1835 = vmatpush2.bf16.msra.mxu0 %v1544
      %1836 = vmatprep.subr.bf16.mxu0 0
      %1837 = vmatpush2.bf16.msra.mxu0 %v1543
      %1838 = vmatprep.subr.bf16.mxu0 0
      %1839 = vmatpush2.bf16.msra.mxu0 %v1542
      %1840 = vmatprep.subr.bf16.mxu0 0
      %1841 = vmatpush2.bf16.msra.mxu0 %v1541
      %1842 = vmatprep.subr.bf16.mxu0 0
      %1843 = vmatpush2.bf16.msra.mxu0 %v1540
      %1844 = vmatprep.subr.bf16.mxu0 0
      %1845 = vmatpush2.bf16.msra.mxu0 %v1539
      %1846 = vmatprep.subr.bf16.mxu0 0
      %1847 = vmatpush2.bf16.msra.mxu0 %v1538
      %1848 = vmatprep.subr.bf16.mxu0 0
      %1849 = vmatpush2.bf16.msra.mxu0 %v1537
      %1850 = vmatprep.mubr.bf16.mxu0 %v940
      %1851 = vmatmul.mubr.bf16.gmra.mxu0 %v939
      %v1852 = vpop.f32.mrf.mxu0
      %v1853 = vadd.f32 %v1692, %v1852
      %v1854 = vpop.f32.mrf.mxu0
      %v1855 = vpop.f32.mrf.mxu0
      %v1856 = vadd.f32 %v1695, %v1855
      %v1857 = vpop.f32.mrf.mxu0
      %1858 = vmatprep.mubr.bf16.mxu0 %v949
      %1859 = vmatmul.mubr.bf16.gmra.mxu0 %v948
      %v1860 = vpop.f32.mrf.mxu0
      %v1861 = vadd.f32 %v1700, %v1860
      %v1862 = vpop.f32.mrf.mxu0
      %v1863 = vpop.f32.mrf.mxu0
      %v1864 = vadd.f32 %v1703, %v1863
      %v1865 = vpop.f32.mrf.mxu0
      %1866 = vmatprep.mubr.bf16.mxu0 %v958
      %1867 = vmatmul.mubr.bf16.gmra.mxu0 %v957
      %v1868 = vpop.f32.mrf.mxu0
      %v1869 = vadd.f32 %v1708, %v1868
      %v1870 = vpop.f32.mrf.mxu0
      %v1871 = vpop.f32.mrf.mxu0
      %v1872 = vadd.f32 %v1711, %v1871
      %v1873 = vpop.f32.mrf.mxu0
      %1874 = vmatprep.mubr.bf16.mxu0 %v967
      %1875 = vmatmul.mubr.bf16.gmra.mxu0 %v966
      %v1876 = vpop.f32.mrf.mxu0
      %v1877 = vadd.f32 %v1716, %v1876
      %v1878 = vpop.f32.mrf.mxu0
      %v1879 = vpop.f32.mrf.mxu0
      %v1880 = vadd.f32 %v1719, %v1879
      %v1881 = vpop.f32.mrf.mxu0
      %1882 = vmatprep.mubr.bf16.mxu0 %v976
      %1883 = vmatmul.mubr.bf16.gmra.mxu0 %v975
      %v1884 = vpop.f32.mrf.mxu0
      %v1885 = vadd.f32 %v1724, %v1884
      %v1886 = vpop.f32.mrf.mxu0
      %v1887 = vpop.f32.mrf.mxu0
      %v1888 = vadd.f32 %v1727, %v1887
      %v1889 = vpop.f32.mrf.mxu0
      %1890 = vmatprep.mubr.bf16.mxu0 %v985
      %1891 = vmatmul.mubr.bf16.gmra.mxu0 %v984
      %v1892 = vpop.f32.mrf.mxu0
      %v1893 = vadd.f32 %v1732, %v1892
      %v1894 = vpop.f32.mrf.mxu0
      %v1895 = vpop.f32.mrf.mxu0
      %v1896 = vadd.f32 %v1735, %v1895
      %v1897 = vpop.f32.mrf.mxu0
      %1898 = vmatprep.mubr.bf16.mxu0 %v994
      %1899 = vmatmul.mubr.bf16.gmra.mxu0 %v993
      %v1900 = vpop.f32.mrf.mxu0
      %v1901 = vadd.f32 %v1740, %v1900
      %v1902 = vpop.f32.mrf.mxu0
      %v1903 = vpop.f32.mrf.mxu0
      %v1904 = vadd.f32 %v1743, %v1903
      %v1905 = vpop.f32.mrf.mxu0
      %1906 = vmatprep.mubr.bf16.mxu0 %v1003
      %1907 = vmatmul.mubr.bf16.gmra.mxu0 %v1002
      %v1908 = vpop.f32.mrf.mxu0
      %v1909 = vadd.f32 %v1748, %v1908
      %v1910 = vpop.f32.mrf.mxu0
      %v1911 = vpop.f32.mrf.mxu0
      %v1912 = vadd.f32 %v1751, %v1911
      %v1913 = vpop.f32.mrf.mxu0
      %1914 = vmatprep.mubr.bf16.mxu0 %v1012
      %1915 = vmatmul.mubr.bf16.gmra.mxu0 %v1011
      %v1916 = vpop.f32.mrf.mxu0
      %v1917 = vadd.f32 %v1756, %v1916
      %v1918 = vpop.f32.mrf.mxu0
      %v1919 = vpop.f32.mrf.mxu0
      %v1920 = vadd.f32 %v1759, %v1919
      %v1921 = vpop.f32.mrf.mxu0
      %1922 = vmatprep.mubr.bf16.mxu0 %v1021
      %1923 = vmatmul.mubr.bf16.gmra.mxu0 %v1020
      %v1924 = vpop.f32.mrf.mxu0
      %v1925 = vadd.f32 %v1764, %v1924
      %v1926 = vpop.f32.mrf.mxu0
      %v1927 = vpop.f32.mrf.mxu0
      %v1928 = vadd.f32 %v1767, %v1927
      %v1929 = vpop.f32.mrf.mxu0
      %1930 = vmatprep.mubr.bf16.mxu0 %v1030
      %1931 = vmatmul.mubr.bf16.gmra.mxu0 %v1029
      %v1932 = vpop.f32.mrf.mxu0
      %v1933 = vadd.f32 %v1772, %v1932
      %v1934 = vpop.f32.mrf.mxu0
      %v1935 = vpop.f32.mrf.mxu0
      %v1936 = vadd.f32 %v1775, %v1935
      %v1937 = vpop.f32.mrf.mxu0
      %1938 = vmatprep.mubr.bf16.mxu0 %v1039
      %1939 = vmatmul.mubr.bf16.gmra.mxu0 %v1038
      %v1940 = vpop.f32.mrf.mxu0
      %v1941 = vadd.f32 %v1780, %v1940
      %v1942 = vpop.f32.mrf.mxu0
      %v1943 = vpop.f32.mrf.mxu0
      %v1944 = vadd.f32 %v1783, %v1943
      %v1945 = vpop.f32.mrf.mxu0
      %1946 = vmatprep.mubr.bf16.mxu0 %v1048
      %1947 = vmatmul.mubr.bf16.gmra.mxu0 %v1047
      %v1948 = vpop.f32.mrf.mxu0
      %v1949 = vadd.f32 %v1788, %v1948
      %v1950 = vpop.f32.mrf.mxu0
      %v1951 = vpop.f32.mrf.mxu0
      %v1952 = vadd.f32 %v1791, %v1951
      %v1953 = vpop.f32.mrf.mxu0
      %1954 = vmatprep.mubr.bf16.mxu0 %v1057
      %1955 = vmatmul.mubr.bf16.gmra.mxu0 %v1056
      %v1956 = vpop.f32.mrf.mxu0
      %v1957 = vadd.f32 %v1796, %v1956
      %v1958 = vpop.f32.mrf.mxu0
      %v1959 = vpop.f32.mrf.mxu0
      %v1960 = vadd.f32 %v1799, %v1959
      %v1961 = vpop.f32.mrf.mxu0
      %1962 = vmatprep.mubr.bf16.mxu0 %v1066
      %1963 = vmatmul.mubr.bf16.gmra.mxu0 %v1065
      %v1964 = vpop.f32.mrf.mxu0
      %v1965 = vadd.f32 %v1804, %v1964
      %v1966 = vpop.f32.mrf.mxu0
      %v1967 = vpop.f32.mrf.mxu0
      %v1968 = vadd.f32 %v1807, %v1967
      %v1969 = vpop.f32.mrf.mxu0
      %1970 = vmatprep.mubr.bf16.mxu0 %v1075
      %1971 = vmatmul.mubr.bf16.gmra.mxu0 %v1074
      %v1972 = vpop.f32.mrf.mxu0
      %v1973 = vadd.f32 %v1812, %v1972
      %v1974 = vpop.f32.mrf.mxu0
      %v1975 = vpop.f32.mrf.mxu0
      %v1976 = vadd.f32 %v1815, %v1975
      %v1977 = vpop.f32.mrf.mxu0
      %1978 = vdwg.mxu0
      %1979 = vmatprep.subr.bf16.mxu0 0
      %1980 = vmatpush1.bf16.msra.mxu0 %v1552
      %1981 = vmatprep.subr.bf16.mxu0 0
      %1982 = vmatpush1.bf16.msra.mxu0 %v1551
      %1983 = vmatprep.subr.bf16.mxu0 0
      %1984 = vmatpush1.bf16.msra.mxu0 %v1550
      %1985 = vmatprep.subr.bf16.mxu0 0
      %1986 = vmatpush1.bf16.msra.mxu0 %v1549
      %1987 = vmatprep.subr.bf16.mxu0 0
      %1988 = vmatpush1.bf16.msra.mxu0 %v1548
      %1989 = vmatprep.subr.bf16.mxu0 0
      %1990 = vmatpush1.bf16.msra.mxu0 %v1547
      %1991 = vmatprep.subr.bf16.mxu0 0
      %1992 = vmatpush1.bf16.msra.mxu0 %v1546
      %1993 = vmatprep.subr.bf16.mxu0 0
      %1994 = vmatpush1.bf16.msra.mxu0 %v1545
      %1995 = vmatprep.subr.bf16.mxu0 0
      %1996 = vmatpush2.bf16.msra.mxu0 %v1560
      %1997 = vmatprep.subr.bf16.mxu0 0
      %1998 = vmatpush2.bf16.msra.mxu0 %v1559
      %1999 = vmatprep.subr.bf16.mxu0 0
      %2000 = vmatpush2.bf16.msra.mxu0 %v1558
      %2001 = vmatprep.subr.bf16.mxu0 0
      %2002 = vmatpush2.bf16.msra.mxu0 %v1557
      %2003 = vmatprep.subr.bf16.mxu0 0
      %2004 = vmatpush2.bf16.msra.mxu0 %v1556
      %2005 = vmatprep.subr.bf16.mxu0 0
      %2006 = vmatpush2.bf16.msra.mxu0 %v1555
      %2007 = vmatprep.subr.bf16.mxu0 0
      %2008 = vmatpush2.bf16.msra.mxu0 %v1554
      %2009 = vmatprep.subr.bf16.mxu0 0
      %2010 = vmatpush2.bf16.msra.mxu0 %v1553
      %2011 = vmatprep.mubr.bf16.mxu0 %v942
      %2012 = vmatmul.mubr.bf16.gmra.mxu0 %v941
      %v2013 = vpop.f32.mrf.mxu0
      %v2014 = vadd.f32 %v1853, %v2013
      %v2015 = vpop.f32.mrf.mxu0
      %v2016 = vpop.f32.mrf.mxu0
      %v2017 = vadd.f32 %v1856, %v2016
      %v2018 = vpop.f32.mrf.mxu0
      %2019 = vmatprep.mubr.bf16.mxu0 %v951
      %2020 = vmatmul.mubr.bf16.gmra.mxu0 %v950
      %v2021 = vpop.f32.mrf.mxu0
      %v2022 = vadd.f32 %v1861, %v2021
      %v2023 = vpop.f32.mrf.mxu0
      %v2024 = vpop.f32.mrf.mxu0
      %v2025 = vadd.f32 %v1864, %v2024
      %v2026 = vpop.f32.mrf.mxu0
      %2027 = vmatprep.mubr.bf16.mxu0 %v960
      %2028 = vmatmul.mubr.bf16.gmra.mxu0 %v959
      %v2029 = vpop.f32.mrf.mxu0
      %v2030 = vadd.f32 %v1869, %v2029
      %v2031 = vpop.f32.mrf.mxu0
      %v2032 = vpop.f32.mrf.mxu0
      %v2033 = vadd.f32 %v1872, %v2032
      %v2034 = vpop.f32.mrf.mxu0
      %2035 = vmatprep.mubr.bf16.mxu0 %v969
      %2036 = vmatmul.mubr.bf16.gmra.mxu0 %v968
      %v2037 = vpop.f32.mrf.mxu0
      %v2038 = vadd.f32 %v1877, %v2037
      %v2039 = vpop.f32.mrf.mxu0
      %v2040 = vpop.f32.mrf.mxu0
      %v2041 = vadd.f32 %v1880, %v2040
      %v2042 = vpop.f32.mrf.mxu0
      %2043 = vmatprep.mubr.bf16.mxu0 %v978
      %2044 = vmatmul.mubr.bf16.gmra.mxu0 %v977
      %v2045 = vpop.f32.mrf.mxu0
      %v2046 = vadd.f32 %v1885, %v2045
      %v2047 = vpop.f32.mrf.mxu0
      %v2048 = vpop.f32.mrf.mxu0
      %v2049 = vadd.f32 %v1888, %v2048
      %v2050 = vpop.f32.mrf.mxu0
      %2051 = vmatprep.mubr.bf16.mxu0 %v987
      %2052 = vmatmul.mubr.bf16.gmra.mxu0 %v986
      %v2053 = vpop.f32.mrf.mxu0
      %v2054 = vadd.f32 %v1893, %v2053
      %v2055 = vpop.f32.mrf.mxu0
      %v2056 = vpop.f32.mrf.mxu0
      %v2057 = vadd.f32 %v1896, %v2056
      %v2058 = vpop.f32.mrf.mxu0
      %2059 = vmatprep.mubr.bf16.mxu0 %v996
      %2060 = vmatmul.mubr.bf16.gmra.mxu0 %v995
      %v2061 = vpop.f32.mrf.mxu0
      %v2062 = vadd.f32 %v1901, %v2061
      %v2063 = vpop.f32.mrf.mxu0
      %v2064 = vpop.f32.mrf.mxu0
      %v2065 = vadd.f32 %v1904, %v2064
      %v2066 = vpop.f32.mrf.mxu0
      %2067 = vmatprep.mubr.bf16.mxu0 %v1005
      %2068 = vmatmul.mubr.bf16.gmra.mxu0 %v1004
      %v2069 = vpop.f32.mrf.mxu0
      %v2070 = vadd.f32 %v1909, %v2069
      %v2071 = vpop.f32.mrf.mxu0
      %v2072 = vpop.f32.mrf.mxu0
      %v2073 = vadd.f32 %v1912, %v2072
      %v2074 = vpop.f32.mrf.mxu0
      %2075 = vmatprep.mubr.bf16.mxu0 %v1014
      %2076 = vmatmul.mubr.bf16.gmra.mxu0 %v1013
      %v2077 = vpop.f32.mrf.mxu0
      %v2078 = vadd.f32 %v1917, %v2077
      %v2079 = vpop.f32.mrf.mxu0
      %v2080 = vpop.f32.mrf.mxu0
      %v2081 = vadd.f32 %v1920, %v2080
      %v2082 = vpop.f32.mrf.mxu0
      %2083 = vmatprep.mubr.bf16.mxu0 %v1023
      %2084 = vmatmul.mubr.bf16.gmra.mxu0 %v1022
      %v2085 = vpop.f32.mrf.mxu0
      %v2086 = vadd.f32 %v1925, %v2085
      %v2087 = vpop.f32.mrf.mxu0
      %v2088 = vpop.f32.mrf.mxu0
      %v2089 = vadd.f32 %v1928, %v2088
      %v2090 = vpop.f32.mrf.mxu0
      %2091 = vmatprep.mubr.bf16.mxu0 %v1032
      %2092 = vmatmul.mubr.bf16.gmra.mxu0 %v1031
      %v2093 = vpop.f32.mrf.mxu0
      %v2094 = vadd.f32 %v1933, %v2093
      %v2095 = vpop.f32.mrf.mxu0
      %v2096 = vpop.f32.mrf.mxu0
      %v2097 = vadd.f32 %v1936, %v2096
      %v2098 = vpop.f32.mrf.mxu0
      %2099 = vmatprep.mubr.bf16.mxu0 %v1041
      %2100 = vmatmul.mubr.bf16.gmra.mxu0 %v1040
      %v2101 = vpop.f32.mrf.mxu0
      %v2102 = vadd.f32 %v1941, %v2101
      %v2103 = vpop.f32.mrf.mxu0
      %v2104 = vpop.f32.mrf.mxu0
      %v2105 = vadd.f32 %v1944, %v2104
      %v2106 = vpop.f32.mrf.mxu0
      %2107 = vmatprep.mubr.bf16.mxu0 %v1050
      %2108 = vmatmul.mubr.bf16.gmra.mxu0 %v1049
      %v2109 = vpop.f32.mrf.mxu0
      %v2110 = vadd.f32 %v1949, %v2109
      %v2111 = vpop.f32.mrf.mxu0
      %v2112 = vpop.f32.mrf.mxu0
      %v2113 = vadd.f32 %v1952, %v2112
      %v2114 = vpop.f32.mrf.mxu0
      %2115 = vmatprep.mubr.bf16.mxu0 %v1059
      %2116 = vmatmul.mubr.bf16.gmra.mxu0 %v1058
      %v2117 = vpop.f32.mrf.mxu0
      %v2118 = vadd.f32 %v1957, %v2117
      %v2119 = vpop.f32.mrf.mxu0
      %v2120 = vpop.f32.mrf.mxu0
      %v2121 = vadd.f32 %v1960, %v2120
      %v2122 = vpop.f32.mrf.mxu0
      %2123 = vmatprep.mubr.bf16.mxu0 %v1068
      %2124 = vmatmul.mubr.bf16.gmra.mxu0 %v1067
      %v2125 = vpop.f32.mrf.mxu0
      %v2126 = vadd.f32 %v1965, %v2125
      %v2127 = vpop.f32.mrf.mxu0
      %v2128 = vpop.f32.mrf.mxu0
      %v2129 = vadd.f32 %v1968, %v2128
      %v2130 = vpop.f32.mrf.mxu0
      %2131 = vmatprep.mubr.bf16.mxu0 %v1077
      %2132 = vmatmul.mubr.bf16.gmra.mxu0 %v1076
      %v2133 = vpop.f32.mrf.mxu0
      %v2134 = vadd.f32 %v1973, %v2133
      %v2135 = vpop.f32.mrf.mxu0
      %v2136 = vpop.f32.mrf.mxu0
      %v2137 = vadd.f32 %v1976, %v2136
      %v2138 = vpop.f32.mrf.mxu0
      %2139 = vdwg.mxu0
      %2140 = vmatprep.subr.bf16.mxu0 0
      %2141 = vmatpush1.bf16.msra.mxu0 %v1568
      %2142 = vmatprep.subr.bf16.mxu0 0
      %2143 = vmatpush1.bf16.msra.mxu0 %v1567
      %2144 = vmatprep.subr.bf16.mxu0 0
      %2145 = vmatpush1.bf16.msra.mxu0 %v1566
      %2146 = vmatprep.subr.bf16.mxu0 0
      %2147 = vmatpush1.bf16.msra.mxu0 %v1565
      %2148 = vmatprep.subr.bf16.mxu0 0
      %2149 = vmatpush1.bf16.msra.mxu0 %v1564
      %2150 = vmatprep.subr.bf16.mxu0 0
      %2151 = vmatpush1.bf16.msra.mxu0 %v1563
      %2152 = vmatprep.subr.bf16.mxu0 0
      %2153 = vmatpush1.bf16.msra.mxu0 %v1562
      %2154 = vmatprep.subr.bf16.mxu0 0
      %2155 = vmatpush1.bf16.msra.mxu0 %v1561
      %2156 = vmatprep.subr.bf16.mxu0 0
      %2157 = vmatpush2.bf16.msra.mxu0 %v1576
      %2158 = vmatprep.subr.bf16.mxu0 0
      %2159 = vmatpush2.bf16.msra.mxu0 %v1575
      %2160 = vmatprep.subr.bf16.mxu0 0
      %2161 = vmatpush2.bf16.msra.mxu0 %v1574
      %2162 = vmatprep.subr.bf16.mxu0 0
      %2163 = vmatpush2.bf16.msra.mxu0 %v1573
      %2164 = vmatprep.subr.bf16.mxu0 0
      %2165 = vmatpush2.bf16.msra.mxu0 %v1572
      %2166 = vmatprep.subr.bf16.mxu0 0
      %2167 = vmatpush2.bf16.msra.mxu0 %v1571
      %2168 = vmatprep.subr.bf16.mxu0 0
      %2169 = vmatpush2.bf16.msra.mxu0 %v1570
      %2170 = vmatprep.subr.bf16.mxu0 0
      %2171 = vmatpush2.bf16.msra.mxu0 %v1569
      %2172 = vmatprep.mubr.bf16.mxu0 %v944
      %2173 = vmatmul.mubr.bf16.gmra.mxu0 %v943
      %v2174 = vpop.f32.mrf.mxu0
      %v2175 = vadd.f32 %v2014, %v2174
      %v2176 = vpop.f32.mrf.mxu0
      %v2177 = vpop.f32.mrf.mxu0
      %v2178 = vadd.f32 %v2017, %v2177
      %v2179 = vpop.f32.mrf.mxu0
      %2180 = vmatprep.mubr.bf16.mxu0 %v953
      %2181 = vmatmul.mubr.bf16.gmra.mxu0 %v952
      %v2182 = vpop.f32.mrf.mxu0
      %v2183 = vadd.f32 %v2022, %v2182
      %v2184 = vpop.f32.mrf.mxu0
      %v2185 = vpop.f32.mrf.mxu0
      %v2186 = vadd.f32 %v2025, %v2185
      %v2187 = vpop.f32.mrf.mxu0
      %2188 = vmatprep.mubr.bf16.mxu0 %v962
      %2189 = vmatmul.mubr.bf16.gmra.mxu0 %v961
      %v2190 = vpop.f32.mrf.mxu0
      %v2191 = vadd.f32 %v2030, %v2190
      %v2192 = vpop.f32.mrf.mxu0
      %v2193 = vpop.f32.mrf.mxu0
      %v2194 = vadd.f32 %v2033, %v2193
      %v2195 = vpop.f32.mrf.mxu0
      %2196 = vmatprep.mubr.bf16.mxu0 %v971
      %2197 = vmatmul.mubr.bf16.gmra.mxu0 %v970
      %v2198 = vpop.f32.mrf.mxu0
      %v2199 = vadd.f32 %v2038, %v2198
      %v2200 = vpop.f32.mrf.mxu0
      %v2201 = vpop.f32.mrf.mxu0
      %v2202 = vadd.f32 %v2041, %v2201
      %v2203 = vpop.f32.mrf.mxu0
      %2204 = vmatprep.mubr.bf16.mxu0 %v980
      %2205 = vmatmul.mubr.bf16.gmra.mxu0 %v979
      %v2206 = vpop.f32.mrf.mxu0
      %v2207 = vadd.f32 %v2046, %v2206
      %v2208 = vpop.f32.mrf.mxu0
      %v2209 = vpop.f32.mrf.mxu0
      %v2210 = vadd.f32 %v2049, %v2209
      %v2211 = vpop.f32.mrf.mxu0
      %2212 = vmatprep.mubr.bf16.mxu0 %v989
      %2213 = vmatmul.mubr.bf16.gmra.mxu0 %v988
      %v2214 = vpop.f32.mrf.mxu0
      %v2215 = vadd.f32 %v2054, %v2214
      %v2216 = vpop.f32.mrf.mxu0
      %v2217 = vpop.f32.mrf.mxu0
      %v2218 = vadd.f32 %v2057, %v2217
      %v2219 = vpop.f32.mrf.mxu0
      %2220 = vmatprep.mubr.bf16.mxu0 %v998
      %2221 = vmatmul.mubr.bf16.gmra.mxu0 %v997
      %v2222 = vpop.f32.mrf.mxu0
      %v2223 = vadd.f32 %v2062, %v2222
      %v2224 = vpop.f32.mrf.mxu0
      %v2225 = vpop.f32.mrf.mxu0
      %v2226 = vadd.f32 %v2065, %v2225
      %v2227 = vpop.f32.mrf.mxu0
      %2228 = vmatprep.mubr.bf16.mxu0 %v1007
      %2229 = vmatmul.mubr.bf16.gmra.mxu0 %v1006
      %v2230 = vpop.f32.mrf.mxu0
      %v2231 = vadd.f32 %v2070, %v2230
      %v2232 = vpop.f32.mrf.mxu0
      %v2233 = vpop.f32.mrf.mxu0
      %v2234 = vadd.f32 %v2073, %v2233
      %v2235 = vpop.f32.mrf.mxu0
      %2236 = vmatprep.mubr.bf16.mxu0 %v1016
      %2237 = vmatmul.mubr.bf16.gmra.mxu0 %v1015
      %v2238 = vpop.f32.mrf.mxu0
      %v2239 = vadd.f32 %v2078, %v2238
      %v2240 = vpop.f32.mrf.mxu0
      %v2241 = vpop.f32.mrf.mxu0
      %v2242 = vadd.f32 %v2081, %v2241
      %v2243 = vpop.f32.mrf.mxu0
      %2244 = vmatprep.mubr.bf16.mxu0 %v1025
      %2245 = vmatmul.mubr.bf16.gmra.mxu0 %v1024
      %v2246 = vpop.f32.mrf.mxu0
      %v2247 = vadd.f32 %v2086, %v2246
      %v2248 = vpop.f32.mrf.mxu0
      %v2249 = vpop.f32.mrf.mxu0
      %v2250 = vadd.f32 %v2089, %v2249
      %v2251 = vpop.f32.mrf.mxu0
      %2252 = vmatprep.mubr.bf16.mxu0 %v1034
      %2253 = vmatmul.mubr.bf16.gmra.mxu0 %v1033
      %v2254 = vpop.f32.mrf.mxu0
      %v2255 = vadd.f32 %v2094, %v2254
      %v2256 = vpop.f32.mrf.mxu0
      %v2257 = vpop.f32.mrf.mxu0
      %v2258 = vadd.f32 %v2097, %v2257
      %v2259 = vpop.f32.mrf.mxu0
      %2260 = vmatprep.mubr.bf16.mxu0 %v1043
      %2261 = vmatmul.mubr.bf16.gmra.mxu0 %v1042
      %v2262 = vpop.f32.mrf.mxu0
      %v2263 = vadd.f32 %v2102, %v2262
      %v2264 = vpop.f32.mrf.mxu0
      %v2265 = vpop.f32.mrf.mxu0
      %v2266 = vadd.f32 %v2105, %v2265
      %v2267 = vpop.f32.mrf.mxu0
      %2268 = vmatprep.mubr.bf16.mxu0 %v1052
      %2269 = vmatmul.mubr.bf16.gmra.mxu0 %v1051
      %v2270 = vpop.f32.mrf.mxu0
      %v2271 = vadd.f32 %v2110, %v2270
      %v2272 = vpop.f32.mrf.mxu0
      %v2273 = vpop.f32.mrf.mxu0
      %v2274 = vadd.f32 %v2113, %v2273
      %v2275 = vpop.f32.mrf.mxu0
      %2276 = vmatprep.mubr.bf16.mxu0 %v1061
      %2277 = vmatmul.mubr.bf16.gmra.mxu0 %v1060
      %v2278 = vpop.f32.mrf.mxu0
      %v2279 = vadd.f32 %v2118, %v2278
      %v2280 = vpop.f32.mrf.mxu0
      %v2281 = vpop.f32.mrf.mxu0
      %v2282 = vadd.f32 %v2121, %v2281
      %v2283 = vpop.f32.mrf.mxu0
      %2284 = vmatprep.mubr.bf16.mxu0 %v1070
      %2285 = vmatmul.mubr.bf16.gmra.mxu0 %v1069
      %v2286 = vpop.f32.mrf.mxu0
      %v2287 = vadd.f32 %v2126, %v2286
      %v2288 = vpop.f32.mrf.mxu0
      %v2289 = vpop.f32.mrf.mxu0
      %v2290 = vadd.f32 %v2129, %v2289
      %v2291 = vpop.f32.mrf.mxu0
      %2292 = vmatprep.mubr.bf16.mxu0 %v1079
      %2293 = vmatmul.mubr.bf16.gmra.mxu0 %v1078
      %v2294 = vpop.f32.mrf.mxu0
      %v2295 = vadd.f32 %v2134, %v2294
      %v2296 = vpop.f32.mrf.mxu0
      %v2297 = vpop.f32.mrf.mxu0
      %v2298 = vadd.f32 %v2137, %v2297
      %v2299 = vpop.f32.mrf.mxu0
      %2300 = vdwg.mxu0
      %2301 = vmatprep.subr.bf16.mxu0 0
      %2302 = vmatpush1.bf16.msra.mxu0 %v1584
      %2303 = vmatprep.subr.bf16.mxu0 0
      %2304 = vmatpush1.bf16.msra.mxu0 %v1583
      %2305 = vmatprep.subr.bf16.mxu0 0
      %2306 = vmatpush1.bf16.msra.mxu0 %v1582
      %2307 = vmatprep.subr.bf16.mxu0 0
      %2308 = vmatpush1.bf16.msra.mxu0 %v1581
      %2309 = vmatprep.subr.bf16.mxu0 0
      %2310 = vmatpush1.bf16.msra.mxu0 %v1580
      %2311 = vmatprep.subr.bf16.mxu0 0
      %2312 = vmatpush1.bf16.msra.mxu0 %v1579
      %2313 = vmatprep.subr.bf16.mxu0 0
      %2314 = vmatpush1.bf16.msra.mxu0 %v1578
      %2315 = vmatprep.subr.bf16.mxu0 0
      %2316 = vmatpush1.bf16.msra.mxu0 %v1577
      %2317 = vmatprep.subr.bf16.mxu0 0
      %2318 = vmatpush2.bf16.msra.mxu0 0
      %2319 = vmatprep.subr.bf16.mxu0 0
      %2320 = vmatpush2.bf16.msra.mxu0 0
      %2321 = vmatprep.subr.bf16.mxu0 0
      %2322 = vmatpush2.bf16.msra.mxu0 0
      %2323 = vmatprep.subr.bf16.mxu0 0
      %2324 = vmatpush2.bf16.msra.mxu0 0
      %2325 = vmatprep.subr.bf16.mxu0 0
      %2326 = vmatpush2.bf16.msra.mxu0 0
      %2327 = vmatprep.subr.bf16.mxu0 0
      %2328 = vmatpush2.bf16.msra.mxu0 0
      %2329 = vmatprep.subr.bf16.mxu0 0
      %2330 = vmatpush2.bf16.msra.mxu0 0
      %2331 = vmatprep.subr.bf16.mxu0 0
      %2332 = vmatpush2.bf16.msra.mxu0 0
      %2333 = vmatprep.mubr.bf16.mxu0 0
      %2334 = vmatmul.mubr.bf16.gmra.mxu0 %v945
      %v2335 = vpop.f32.mrf.mxu0
      %v2336 = vadd.f32 %v2175, %v2335
      %v2337 = vpop.f32.mrf.mxu0
      %v2338 = vpop.f32.mrf.mxu0
      %v2339 = vadd.f32 %v2178, %v2338
      %v2340 = vpop.f32.mrf.mxu0
      %2341 = vmatprep.mubr.bf16.mxu0 0
      %2342 = vmatmul.mubr.bf16.gmra.mxu0 %v954
      %v2343 = vpop.f32.mrf.mxu0
      %v2344 = vadd.f32 %v2183, %v2343
      %v2345 = vpop.f32.mrf.mxu0
      %v2346 = vpop.f32.mrf.mxu0
      %v2347 = vadd.f32 %v2186, %v2346
      %v2348 = vpop.f32.mrf.mxu0
      %2349 = vmatprep.mubr.bf16.mxu0 0
      %2350 = vmatmul.mubr.bf16.gmra.mxu0 %v963
      %v2351 = vpop.f32.mrf.mxu0
      %v2352 = vadd.f32 %v2191, %v2351
      %v2353 = vpop.f32.mrf.mxu0
      %v2354 = vpop.f32.mrf.mxu0
      %v2355 = vadd.f32 %v2194, %v2354
      %v2356 = vpop.f32.mrf.mxu0
      %2357 = vmatprep.mubr.bf16.mxu0 0
      %2358 = vmatmul.mubr.bf16.gmra.mxu0 %v972
      %v2359 = vpop.f32.mrf.mxu0
      %v2360 = vadd.f32 %v2199, %v2359
      %v2361 = vpop.f32.mrf.mxu0
      %v2362 = vpop.f32.mrf.mxu0
      %v2363 = vadd.f32 %v2202, %v2362
      %v2364 = vpop.f32.mrf.mxu0
      %2365 = vmatprep.mubr.bf16.mxu0 0
      %2366 = vmatmul.mubr.bf16.gmra.mxu0 %v981
      %v2367 = vpop.f32.mrf.mxu0
      %v2368 = vadd.f32 %v2207, %v2367
      %v2369 = vpop.f32.mrf.mxu0
      %v2370 = vpop.f32.mrf.mxu0
      %v2371 = vadd.f32 %v2210, %v2370
      %v2372 = vpop.f32.mrf.mxu0
      %2373 = vmatprep.mubr.bf16.mxu0 0
      %2374 = vmatmul.mubr.bf16.gmra.mxu0 %v990
      %v2375 = vpop.f32.mrf.mxu0
      %v2376 = vadd.f32 %v2215, %v2375
      %v2377 = vpop.f32.mrf.mxu0
      %v2378 = vpop.f32.mrf.mxu0
      %v2379 = vadd.f32 %v2218, %v2378
      %v2380 = vpop.f32.mrf.mxu0
      %2381 = vmatprep.mubr.bf16.mxu0 0
      %2382 = vmatmul.mubr.bf16.gmra.mxu0 %v999
      %v2383 = vpop.f32.mrf.mxu0
      %v2384 = vadd.f32 %v2223, %v2383
      %v2385 = vpop.f32.mrf.mxu0
      %v2386 = vpop.f32.mrf.mxu0
      %v2387 = vadd.f32 %v2226, %v2386
      %v2388 = vpop.f32.mrf.mxu0
      %2389 = vmatprep.mubr.bf16.mxu0 0
      %2390 = vmatmul.mubr.bf16.gmra.mxu0 %v1008
      %v2391 = vpop.f32.mrf.mxu0
      %v2392 = vadd.f32 %v2231, %v2391
      %v2393 = vpop.f32.mrf.mxu0
      %v2394 = vpop.f32.mrf.mxu0
      %v2395 = vadd.f32 %v2234, %v2394
      %v2396 = vpop.f32.mrf.mxu0
      %2397 = vmatprep.mubr.bf16.mxu0 0
      %2398 = vmatmul.mubr.bf16.gmra.mxu0 %v1017
      %v2399 = vpop.f32.mrf.mxu0
      %v2400 = vadd.f32 %v2239, %v2399
      %v2401 = vpop.f32.mrf.mxu0
      %v2402 = vpop.f32.mrf.mxu0
      %v2403 = vadd.f32 %v2242, %v2402
      %v2404 = vpop.f32.mrf.mxu0
      %2405 = vmatprep.mubr.bf16.mxu0 0
      %2406 = vmatmul.mubr.bf16.gmra.mxu0 %v1026
      %v2407 = vpop.f32.mrf.mxu0
      %v2408 = vadd.f32 %v2247, %v2407
      %v2409 = vpop.f32.mrf.mxu0
      %v2410 = vpop.f32.mrf.mxu0
      %v2411 = vadd.f32 %v2250, %v2410
      %v2412 = vpop.f32.mrf.mxu0
      %2413 = vmatprep.mubr.bf16.mxu0 0
      %2414 = vmatmul.mubr.bf16.gmra.mxu0 %v1035
      %v2415 = vpop.f32.mrf.mxu0
      %v2416 = vadd.f32 %v2255, %v2415
      %v2417 = vpop.f32.mrf.mxu0
      %v2418 = vpop.f32.mrf.mxu0
      %v2419 = vadd.f32 %v2258, %v2418
      %v2420 = vpop.f32.mrf.mxu0
      %2421 = vmatprep.mubr.bf16.mxu0 0
      %2422 = vmatmul.mubr.bf16.gmra.mxu0 %v1044
      %v2423 = vpop.f32.mrf.mxu0
      %v2424 = vadd.f32 %v2263, %v2423
      %v2425 = vpop.f32.mrf.mxu0
      %v2426 = vpop.f32.mrf.mxu0
      %v2427 = vadd.f32 %v2266, %v2426
      %v2428 = vpop.f32.mrf.mxu0
      %2429 = vmatprep.mubr.bf16.mxu0 0
      %2430 = vmatmul.mubr.bf16.gmra.mxu0 %v1053
      %v2431 = vpop.f32.mrf.mxu0
      %v2432 = vadd.f32 %v2271, %v2431
      %v2433 = vpop.f32.mrf.mxu0
      %v2434 = vpop.f32.mrf.mxu0
      %v2435 = vadd.f32 %v2274, %v2434
      %v2436 = vpop.f32.mrf.mxu0
      %2437 = vmatprep.mubr.bf16.mxu0 0
      %2438 = vmatmul.mubr.bf16.gmra.mxu0 %v1062
      %v2439 = vpop.f32.mrf.mxu0
      %v2440 = vadd.f32 %v2279, %v2439
      %v2441 = vpop.f32.mrf.mxu0
      %v2442 = vpop.f32.mrf.mxu0
      %v2443 = vadd.f32 %v2282, %v2442
      %v2444 = vpop.f32.mrf.mxu0
      %2445 = vmatprep.mubr.bf16.mxu0 0
      %2446 = vmatmul.mubr.bf16.gmra.mxu0 %v1071
      %v2447 = vpop.f32.mrf.mxu0
      %v2448 = vadd.f32 %v2287, %v2447
      %v2449 = vpop.f32.mrf.mxu0
      %v2450 = vpop.f32.mrf.mxu0
      %v2451 = vadd.f32 %v2290, %v2450
      %v2452 = vpop.f32.mrf.mxu0
      %2453 = vmatprep.mubr.bf16.mxu0 0
      %2454 = vmatmul.mubr.bf16.gmra.mxu0 %v1080
      %v2455 = vpop.f32.mrf.mxu0
      %v2456 = vadd.f32 %v2295, %v2455
      %v2457 = vpop.f32.mrf.mxu0
      %v2458 = vpop.f32.mrf.mxu0
      %v2459 = vadd.f32 %v2298, %v2458
      %v2460 = vpop.f32.mrf.mxu0
      %2461 = vdwg.mxu0
      %v2462 = vmax.f32 %v2336, 0.0
      %v2463 = vmax.f32 %v2339, 0.0
      %v2464 = vmax.f32 %v2344, 0.0
      %v2465 = vmax.f32 %v2347, 0.0
      %v2466 = vmax.f32 %v2352, 0.0
      %v2467 = vmax.f32 %v2355, 0.0
      %v2468 = vmax.f32 %v2360, 0.0
      %v2469 = vmax.f32 %v2363, 0.0
      %v2470 = vmax.f32 %v2368, 0.0
      %v2471 = vmax.f32 %v2371, 0.0
      %v2472 = vmax.f32 %v2376, 0.0
      %v2473 = vmax.f32 %v2379, 0.0
      %v2474 = vmax.f32 %v2384, 0.0
      %v2475 = vmax.f32 %v2387, 0.0
      %v2476 = vmax.f32 %v2392, 0.0
      %v2477 = vmax.f32 %v2395, 0.0
      %v2478 = vmax.f32 %v2400, 0.0
      %v2479 = vmax.f32 %v2403, 0.0
      %v2480 = vmax.f32 %v2408, 0.0
      %v2481 = vmax.f32 %v2411, 0.0
      %v2482 = vmax.f32 %v2416, 0.0
      %v2483 = vmax.f32 %v2419, 0.0
      %v2484 = vmax.f32 %v2424, 0.0
      %v2485 = vmax.f32 %v2427, 0.0
      %v2486 = vmax.f32 %v2432, 0.0
      %v2487 = vmax.f32 %v2435, 0.0
      %v2488 = vmax.f32 %v2440, 0.0
      %v2489 = vmax.f32 %v2443, 0.0
      %v2490 = vmax.f32 %v2448, 0.0
      %v2491 = vmax.f32 %v2451, 0.0
      %v2492 = vmax.f32 %v2456, 0.0
      %v2493 = vmax.f32 %v2459, 0.0
      %2494 = vst [vmem:[%s175] sm:$0xff] %v2462
      %2495 = vst [vmem:[%s175 + $0x8] sm:$0xff] %v2463
      %2496 = vst [vmem:[%s175 + $0x10] sm:$0xff] %v2464
      %2497 = vst [vmem:[%s175 + $0x18] sm:$0xff] %v2465
      %2498 = vst [vmem:[%s175 + $0x20] sm:$0xff] %v2466
      %2499 = vst [vmem:[%s175 + $0x28] sm:$0xff] %v2467
      %2500 = vst [vmem:[%s175 + $0x30] sm:$0xff] %v2468
      %2501 = vst [vmem:[%s175 + $0x38] sm:$0xff] %v2469
      %2502 = vst [vmem:[%s175 + $0x40] sm:$0xff] %v2470
      %2503 = vst [vmem:[%s175 + $0x48] sm:$0xff] %v2471
      %2504 = vst [vmem:[%s175 + $0x50] sm:$0xff] %v2472
      %2505 = vst [vmem:[%s175 + $0x58] sm:$0xff] %v2473
      %2506 = vst [vmem:[%s175 + $0x60] sm:$0xff] %v2474
      %2507 = vst [vmem:[%s175 + $0x68] sm:$0xff] %v2475
      %2508 = vst [vmem:[%s175 + $0x70] sm:$0xff] %v2476
      %2509 = vst [vmem:[%s175 + $0x78] sm:$0xff] %v2477
      %2510 = vst [vmem:[%s175 + $0x80] sm:$0xff] %v2478
      %2511 = vst [vmem:[%s175 + $0x88] sm:$0xff] %v2479
      %2512 = vst [vmem:[%s175 + $0x90] sm:$0xff] %v2480
      %2513 = vst [vmem:[%s175 + $0x98] sm:$0xff] %v2481
      %2514 = vst [vmem:[%s175 + $0xa0] sm:$0xff] %v2482
      %2515 = vst [vmem:[%s175 + $0xa8] sm:$0xff] %v2483
      %2516 = vst [vmem:[%s175 + $0xb0] sm:$0xff] %v2484
      %2517 = vst [vmem:[%s175 + $0xb8] sm:$0xff] %v2485
      %2518 = vst [vmem:[%s175 + $0xc0] sm:$0xff] %v2486
      %2519 = vst [vmem:[%s175 + $0xc8] sm:$0xff] %v2487
      %2520 = vst [vmem:[%s175 + $0xd0] sm:$0xff] %v2488
      %2521 = vst [vmem:[%s175 + $0xd8] sm:$0xff] %v2489
      %2522 = vst [vmem:[%s175 + $0xe0] sm:$0xff] %v2490
      %2523 = vst [vmem:[%s175 + $0xe8] sm:$0xff] %v2491
      %2524 = vst [vmem:[%s175 + $0xf0] sm:$0xff] %v2492
      %2525 = vst [vmem:[%s175 + $0xf8] sm:$0xff] %v2493
      %s2526 = smul.u32 32, %s14
      %p2527 = scmp.lt.s32.totalorder %s2526, 63
      %s2528 = scalar_select %p2527, %s2526, 63
      %s2529 = smul.addr %s2528, 8
      %s2530 = scalar_lea.vmem %s3, %s2529
      // Predicated region
      $region33: #{_lambda_.11} parent=31 // pred_check
        %p2531 = pneg %p100
      $region34: #{_lambda_.11} parent=31 // pred_check_branch
        %2533 = sbr.rel (%p2531) target = $region36
      $region35: #{_lambda_.11} parent=31 // pred_region
        %s2534 = smul.u32 32, %s14
      $region36: #{_lambda_.11} parent=31 // pred_fallthru
        _
    $region32: #{_lambda_.11} parent=5 // pred_fallthru
      _
    %p2535 = scmp.le.s32.totalorder 2, %s9
    // Predicated region
    $region37: #{_lambda_.11} parent=5 // pred_check
      %p2536 = pneg %p2535
    $region38: #{_lambda_.11} parent=5 // pred_check_branch
      %2538 = sbr.rel (%p2536) target = $region40
    $region39: #{_lambda_.11} parent=5 // pred_region
      %s2539 = ssub.s32 %s9, 2
      // Predicated region
      $region41: #{_lambda_.11} parent=39 // pred_check
        %p2540 = pneg %p106
      $region42: #{_lambda_.11} parent=39 // pred_check_branch
        %2542 = sbr.rel (%p2540) target = $region44
      $region43: #{_lambda_.11} parent=39 // pred_region
        %s2543 = smul.u32 32, %s15
        %p2544 = scmp.lt.s32.totalorder %s2543, 63
        %s2545 = scalar_select %p2544, %s2543, 63
        %s2546 = smul.addr %s2545, 8
        %s2547 = scalar_lea.vmem %s3, %s2546
      $region44: #{_lambda_.11} parent=39 // pred_fallthru
        _
    $region40: #{_lambda_.11} parent=5 // pred_fallthru
      _
  $region6: #{_lambda_.11} parent=0 // loop_footer
    %s13 = sadd.s32 1, %s9
  $region7: #{_lambda_.11} parent=0 // loop_footer_branch
    %8 = sbr.rel target = $region3
  $region8: #{_lambda_.11} parent=0 // loop_exit
    _

// kernel: _lambda_.15
$region0: #{_lambda_.15}
  #allocation0 [shape = 'u32[]', space=smem, size = 0x4, offset = 0x4, fixed_abs, tag = 'smem constant byte address 0x4 - core index']
  #allocation1 [shape = 'u32[144,128]{1,0:T(1,128)}', space=vmem, size = 0x12000, scoped, tag = 'internal scratch']
  %s0 = inlined_call_operand.vmem [shape: bf16[128,128], index: 0, kind: input, shape index: {}]
  %s1 = inlined_call_operand.vmem [shape: bf16[128,128], index: 1, kind: input, shape index: {}]
  %s2 = inlined_call_operand.vmem [shape: f32[1,128], index: 2, kind: input, shape index: {}]
  %s3 = inlined_call_operand.vmem [shape: f32[128,128], index: 3, kind: output, shape index: {}]
  %s4 = sld [smem:[#allocation0]]
  $region22: #{_lambda_.15} parent=0
    _
  %s6 = ssub.s32 1, %s4
  %s7 = scalar_select 0, %s6, %s4
  // Predicated region
  $region2: #{_lambda_.15} parent=0 // pred_check
    _
  $region3: #{_lambda_.15} parent=0 // pred_check_branch
    %9 = sbr.rel (0) target = $region5
  $region4: #{_lambda_.15} parent=0 // pred_region
    _
  $region5: #{_lambda_.15} parent=0 // pred_fallthru
    _
  // Predicated region
  $region6: #{_lambda_.15} parent=0 // pred_check
    _
  $region7: #{_lambda_.15} parent=0 // pred_check_branch
    %11 = sbr.rel (0) target = $region9
  $region8: #{_lambda_.15} parent=0 // pred_region
    _
  $region9: #{_lambda_.15} parent=0 // pred_fallthru
    _
  // Predicated region
  $region10: #{_lambda_.15} parent=0 // pred_check
    _
  $region11: #{_lambda_.15} parent=0 // pred_check_branch
    %13 = sbr.rel (0) target = $region13
  $region12: #{_lambda_.15} parent=0 // pred_region
    _
  $region13: #{_lambda_.15} parent=0 // pred_fallthru
    _
  %v15 = vld [vmem:[%s0] sm:$0xf]
  %v16 = vld [vmem:[%s0 + $0x4] sm:$0xf]
  %v17 = vld [vmem:[%s0 + $0x8] sm:$0xf]
  %v18 = vld [vmem:[%s0 + $0xc] sm:$0xf]
  %v19 = vld [vmem:[%s0 + $0x10] sm:$0xf]
  %v20 = vld [vmem:[%s0 + $0x14] sm:$0xf]
  %v21 = vld [vmem:[%s0 + $0x18] sm:$0xf]
  %v22 = vld [vmem:[%s0 + $0x1c] sm:$0xf]
  %v23 = vld [vmem:[%s0 + $0x20] sm:$0xf]
  %v24 = vld [vmem:[%s0 + $0x24] sm:$0xf]
  %v25 = vld [vmem:[%s0 + $0x28] sm:$0xf]
  %v26 = vld [vmem:[%s0 + $0x2c] sm:$0xf]
  %v27 = vld [vmem:[%s0 + $0x30] sm:$0xf]
  %v28 = vld [vmem:[%s0 + $0x34] sm:$0xf]
  %v29 = vld [vmem:[%s0 + $0x38] sm:$0xf]
  %v30 = vld [vmem:[%s0 + $0x3c] sm:$0xf]
  %v31 = vld [vmem:[%s1] sm:$0xf]
  %v32 = vld [vmem:[%s1 + $0x4] sm:$0xf]
  %v33 = vld [vmem:[%s1 + $0x8] sm:$0xf]
  %v34 = vld [vmem:[%s1 + $0xc] sm:$0xf]
  %v35 = vld [vmem:[%s1 + $0x10] sm:$0xf]
  %v36 = vld [vmem:[%s1 + $0x14] sm:$0xf]
  %v37 = vld [vmem:[%s1 + $0x18] sm:$0xf]
  %v38 = vld [vmem:[%s1 + $0x1c] sm:$0xf]
  %v39 = vld [vmem:[%s1 + $0x20] sm:$0xf]
  %v40 = vld [vmem:[%s1 + $0x24] sm:$0xf]
  %v41 = vld [vmem:[%s1 + $0x28] sm:$0xf]
  %v42 = vld [vmem:[%s1 + $0x2c] sm:$0xf]
  %v43 = vld [vmem:[%s1 + $0x30] sm:$0xf]
  %v44 = vld [vmem:[%s1 + $0x34] sm:$0xf]
  %v45 = vld [vmem:[%s1 + $0x38] sm:$0xf]
  %v46 = vld [vmem:[%s1 + $0x3c] sm:$0xf]
  %v47 = vld [vmem:[%s2] sm:$0x1]
  %v49 = vlaneseq
  %v50 = vshrl.u32 %v49, 7
  %v51 = vsub.s32 0, %v50
  %v52 = vrot.slane %v47, %v51
  %v70 = vunpack.c.l.b16 %v15
  %v71 = vunpack.c.l.b16 %v16
  %v72 = vunpack.c.l.b16 %v17
  %v73 = vunpack.c.l.b16 %v18
  %v74 = vunpack.c.l.b16 %v19
  %v75 = vunpack.c.l.b16 %v20
  %v76 = vunpack.c.l.b16 %v21
  %v77 = vunpack.c.l.b16 %v22
  %v78 = vunpack.c.l.b16 %v23
  %v79 = vunpack.c.l.b16 %v24
  %v80 = vunpack.c.l.b16 %v25
  %v81 = vunpack.c.l.b16 %v26
  %v82 = vunpack.c.l.b16 %v27
  %v83 = vunpack.c.l.b16 %v28
  %v84 = vunpack.c.l.b16 %v29
  %v85 = vunpack.c.l.b16 %v30
  %v86 = vpack.c.b16 %v71, %v70
  %v87 = vpack.c.b16 %v73, %v72
  %v88 = vpack.c.b16 %v75, %v74
  %v89 = vpack.c.b16 %v77, %v76
  %v90 = vpack.c.b16 %v79, %v78
  %v91 = vpack.c.b16 %v81, %v80
  %v92 = vpack.c.b16 %v83, %v82
  %v93 = vpack.c.b16 %v85, %v84
  %v118 = vunpack.c.l.b16 %v31
  %v119 = vunpack.c.l.b16 %v32
  %v120 = vunpack.c.l.b16 %v33
  %v121 = vunpack.c.l.b16 %v34
  %v122 = vunpack.c.l.b16 %v35
  %v123 = vunpack.c.l.b16 %v36
  %v124 = vunpack.c.l.b16 %v37
  %v125 = vunpack.c.l.b16 %v38
  %v126 = vunpack.c.l.b16 %v39
  %v127 = vunpack.c.l.b16 %v40
  %v128 = vunpack.c.l.b16 %v41
  %v129 = vunpack.c.l.b16 %v42
  %v130 = vunpack.c.l.b16 %v43
  %v131 = vunpack.c.l.b16 %v44
  %v132 = vunpack.c.l.b16 %v45
  %v133 = vunpack.c.l.b16 %v46
  %v134 = vpack.c.b16 %v119, %v118
  %v135 = vpack.c.b16 %v121, %v120
  %v136 = vpack.c.b16 %v123, %v122
  %v137 = vpack.c.b16 %v125, %v124
  %v138 = vpack.c.b16 %v127, %v126
  %v139 = vpack.c.b16 %v129, %v128
  %v140 = vpack.c.b16 %v131, %v130
  %v141 = vpack.c.b16 %v133, %v132
  %150 = vmatprep.subr.bf16.mxu0 0
  %151 = vmatpush1.bf16.msra.mxu0 %v141
  %152 = vmatprep.subr.bf16.mxu0 0
  %153 = vmatpush1.bf16.msra.mxu0 %v140
  %154 = vmatprep.subr.bf16.mxu0 0
  %155 = vmatpush1.bf16.msra.mxu0 %v139
  %156 = vmatprep.subr.bf16.mxu0 0
  %157 = vmatpush1.bf16.msra.mxu0 %v138
  %158 = vmatprep.subr.bf16.mxu0 0
  %159 = vmatpush1.bf16.msra.mxu0 %v137
  %160 = vmatprep.subr.bf16.mxu0 0
  %161 = vmatpush1.bf16.msra.mxu0 %v136
  %162 = vmatprep.subr.bf16.mxu0 0
  %163 = vmatpush1.bf16.msra.mxu0 %v135
  %164 = vmatprep.subr.bf16.mxu0 0
  %165 = vmatpush1.bf16.msra.mxu0 %v134
  %166 = vmatprep.subr.bf16.mxu0 0
  %167 = vmatpush2.bf16.msra.mxu0 0
  %168 = vmatprep.subr.bf16.mxu0 0
  %169 = vmatpush2.bf16.msra.mxu0 0
  %170 = vmatprep.subr.bf16.mxu0 0
  %171 = vmatpush2.bf16.msra.mxu0 0
  %172 = vmatprep.subr.bf16.mxu0 0
  %173 = vmatpush2.bf16.msra.mxu0 0
  %174 = vmatprep.subr.bf16.mxu0 0
  %175 = vmatpush2.bf16.msra.mxu0 0
  %176 = vmatprep.subr.bf16.mxu0 0
  %177 = vmatpush2.bf16.msra.mxu0 0
  %178 = vmatprep.subr.bf16.mxu0 0
  %179 = vmatpush2.bf16.msra.mxu0 0
  %180 = vmatprep.subr.bf16.mxu0 0
  %181 = vmatpush2.bf16.msra.mxu0 0
  %182 = vmatprep.mubr.bf16.mxu0 0
  %183 = vmatmul.mubr.bf16.gmra.mxu0 %v86
  %v184 = vpop.f32.mrf.mxu0
  %v185 = vadd.f32 %v52, %v184
  %v186 = vpop.f32.mrf.mxu0
  %v187 = vpop.f32.mrf.mxu0
  %v188 = vadd.f32 %v52, %v187
  %v189 = vpop.f32.mrf.mxu0
  %190 = vmatprep.mubr.bf16.mxu0 0
  %191 = vmatmul.mubr.bf16.gmra.mxu0 %v87
  %v192 = vpop.f32.mrf.mxu0
  %v193 = vadd.f32 %v52, %v192
  %v194 = vpop.f32.mrf.mxu0
  %v195 = vpop.f32.mrf.mxu0
  %v196 = vadd.f32 %v52, %v195
  %v197 = vpop.f32.mrf.mxu0
  %198 = vmatprep.mubr.bf16.mxu0 0
  %199 = vmatmul.mubr.bf16.gmra.mxu0 %v88
  %v200 = vpop.f32.mrf.mxu0
  %v201 = vadd.f32 %v52, %v200
  %v202 = vpop.f32.mrf.mxu0
  %v203 = vpop.f32.mrf.mxu0
  %v204 = vadd.f32 %v52, %v203
  %v205 = vpop.f32.mrf.mxu0
  %206 = vmatprep.mubr.bf16.mxu0 0
  %207 = vmatmul.mubr.bf16.gmra.mxu0 %v89
  %v208 = vpop.f32.mrf.mxu0
  %v209 = vadd.f32 %v52, %v208
  %v210 = vpop.f32.mrf.mxu0
  %v211 = vpop.f32.mrf.mxu0
  %v212 = vadd.f32 %v52, %v211
  %v213 = vpop.f32.mrf.mxu0
  %214 = vmatprep.mubr.bf16.mxu0 0
  %215 = vmatmul.mubr.bf16.gmra.mxu0 %v90
  %v216 = vpop.f32.mrf.mxu0
  %v217 = vadd.f32 %v52, %v216
  %v218 = vpop.f32.mrf.mxu0
  %v219 = vpop.f32.mrf.mxu0
  %v220 = vadd.f32 %v52, %v219
  %v221 = vpop.f32.mrf.mxu0
  %222 = vmatprep.mubr.bf16.mxu0 0
  %223 = vmatmul.mubr.bf16.gmra.mxu0 %v91
  %v224 = vpop.f32.mrf.mxu0
  %v225 = vadd.f32 %v52, %v224
  %v226 = vpop.f32.mrf.mxu0
  %v227 = vpop.f32.mrf.mxu0
  %v228 = vadd.f32 %v52, %v227
  %v229 = vpop.f32.mrf.mxu0
  %230 = vmatprep.mubr.bf16.mxu0 0
  %231 = vmatmul.mubr.bf16.gmra.mxu0 %v92
  %v232 = vpop.f32.mrf.mxu0
  %v233 = vadd.f32 %v52, %v232
  %v234 = vpop.f32.mrf.mxu0
  %v235 = vpop.f32.mrf.mxu0
  %v236 = vadd.f32 %v52, %v235
  %v237 = vpop.f32.mrf.mxu0
  %238 = vmatprep.mubr.bf16.mxu0 0
  %239 = vmatmul.mubr.bf16.gmra.mxu0 %v93
  %v240 = vpop.f32.mrf.mxu0
  %v241 = vadd.f32 %v52, %v240
  %v242 = vpop.f32.mrf.mxu0
  %v243 = vpop.f32.mrf.mxu0
  %v244 = vadd.f32 %v52, %v243
  %v245 = vpop.f32.mrf.mxu0
  %246 = vdwg.mxu0
  %247 = vst [vmem:[%s3] sm:$0xff] %v185
  %248 = vst [vmem:[%s3 + $0x8] sm:$0xff] %v188
  %249 = vst [vmem:[%s3 + $0x10] sm:$0xff] %v193
  %250 = vst [vmem:[%s3 + $0x18] sm:$0xff] %v196
  %251 = vst [vmem:[%s3 + $0x20] sm:$0xff] %v201
  %252 = vst [vmem:[%s3 + $0x28] sm:$0xff] %v204
  %253 = vst [vmem:[%s3 + $0x30] sm:$0xff] %v209
  %254 = vst [vmem:[%s3 + $0x38] sm:$0xff] %v212
  %255 = vst [vmem:[%s3 + $0x40] sm:$0xff] %v217
  %256 = vst [vmem:[%s3 + $0x48] sm:$0xff] %v220
  %257 = vst [vmem:[%s3 + $0x50] sm:$0xff] %v225
  %258 = vst [vmem:[%s3 + $0x58] sm:$0xff] %v228
  %259 = vst [vmem:[%s3 + $0x60] sm:$0xff] %v233
  %260 = vst [vmem:[%s3 + $0x68] sm:$0xff] %v236
  %261 = vst [vmem:[%s3 + $0x70] sm:$0xff] %v241
  %262 = vst [vmem:[%s3 + $0x78] sm:$0xff] %v244
  // Predicated region
  $region14: #{_lambda_.15} parent=0 // pred_check
    _
  $region15: #{_lambda_.15} parent=0 // pred_check_branch
    %264 = sbr.rel (0) target = $region17
  $region16: #{_lambda_.15} parent=0 // pred_region
    _
  $region17: #{_lambda_.15} parent=0 // pred_fallthru
    _
  // Predicated region
  $region18: #{_lambda_.15} parent=0 // pred_check
    _
  $region19: #{_lambda_.15} parent=0 // pred_check_branch
    %266 = sbr.rel (0) target = $region21
  $region20: #{_lambda_.15} parent=0 // pred_region
    _
  $region21: #{_lambda_.15} parent=0 // pred_fallthru
    _

// kernel: _lambda_.12
$region0: #{_lambda_.12}
  #allocation0 [shape = 'u32[]', space=smem, size = 0x4, offset = 0x4, fixed_abs, tag = 'smem constant byte address 0x4 - core index']
  #allocation1 [shape = 'u32[144,128]{1,0:T(1,128)}', space=vmem, size = 0x12000, scoped, tag = 'internal scratch']
  %s0 = inlined_call_operand.vmem [shape: bf16[512,1152], index: 0, kind: input, shape index: {}]
  %s1 = inlined_call_operand.vmem [shape: bf16[1152,128], index: 1, kind: input, shape index: {}]
  %s2 = inlined_call_operand.vmem [shape: f32[1,128], index: 2, kind: input, shape index: {}]
  %s3 = inlined_call_operand.vmem [shape: f32[512,128], index: 3, kind: input, shape index: {}]
  %s4 = inlined_call_operand.vmem [shape: f32[512,128], index: 4, kind: output, shape index: {}]
  %s5 = sld [smem:[#allocation0]]
  $region49: #{_lambda_.12} parent=0
    _
  %s7 = ssub.s32 1, %s5
  %s8 = scalar_select 0, %s7, %s5
  loop: start=0, step=1, limit=4
  $region2: #{_lambda_.12} parent=0 // loop_pre_header
    _
  $region3: #{_lambda_.12} parent=0 // loop_header
    %s10 = sphi 0, %s14
    %p11 = scmp.ge.s32.totalorder %s10, 4
    %s20 = sphi 0, %s22
    %s23 = sphi 0, %s20
    %s24 = sphi 0, %s23
    %s40 = sphi 0, %s24
    %s44 = sphi 0, %s44
    %s46 = sphi 0, %s44
    %s47 = sphi 0, %s46
    %s61 = sphi 0, %s47
    %s65 = sphi 0, %s65
    %s67 = sphi 0, %s65
    %s68 = sphi 0, %s67
    %s82 = sphi 0, %s68
    %s88 = sphi 0, %s90
    %s91 = sphi 0, %s88
    %s92 = sphi 0, %s91
    %s108 = sphi 0, %s92
    %s114 = sphi 0, %s116
    %s117 = sphi 0, %s114
    %s118 = sphi 0, %s117
    %s134 = sphi 0, %s118
  $region4: #{_lambda_.12} parent=0 // loop_header_branch
    %13 = sbr.rel (%p11) target = $region8
  $region5: #{_lambda_.12} parent=0 // loop_body
    %s15 = ssub.s32 %s10, 1
    %s16 = ssub.s32 %s10, 2
    %s17 = sadd.s32 %s10, 1
    %s18 = ssub.s32 %s10, %s17
    %p19 = scmp.eq.s32.totalorder %s18, 0
    %s21 = sadd.s32 %s20, 1
    %s22 = scalar_select %p19, %s20, %s21
    %p25 = pneg %p19
    %p26 = scmp.eq.s32.totalorder %s10, 1
    %p27 = por %p25, %p26
    %p28 = scmp.ne.s32.totalorder %s20, %s23
    %p29 = scmp.eq.s32.totalorder %s10, 0
    %p30 = por %p28, %p29
    %p31 = scmp.ne.s32.totalorder %s20, %s23
    %p32 = scmp.eq.s32.totalorder %s15, 1
    %p33 = por %p31, %p32
    %p34 = scmp.ne.s32.totalorder %s23, %s24
    %p35 = scmp.eq.s32.totalorder %s15, 0
    %p36 = por %p34, %p35
    %p37 = scmp.ne.s32.totalorder %s23, %s24
    %p38 = scmp.eq.s32.totalorder %s16, 1
    %p39 = por %p37, %p38
    %p41 = scmp.ne.s32.totalorder %s24, %s40
    %p42 = scmp.eq.s32.totalorder %s16, 0
    %p43 = por %p41, %p42
    %s45 = sadd.s32 %s44, 1
    %p48 = scmp.eq.s32.totalorder %s10, 1
    %p49 = scmp.ne.s32.totalorder %s44, %s46
    %p50 = scmp.eq.s32.totalorder %s10, 0
    %p51 = por %p49, %p50
    %p52 = scmp.ne.s32.totalorder %s44, %s46
    %p53 = scmp.eq.s32.totalorder %s15, 1
    %p54 = por %p52, %p53
    %p55 = scmp.ne.s32.totalorder %s46, %s47
    %p56 = scmp.eq.s32.totalorder %s15, 0
    %p57 = por %p55, %p56
    %p58 = scmp.ne.s32.totalorder %s46, %s47
    %p59 = scmp.eq.s32.totalorder %s16, 1
    %p60 = por %p58, %p59
    %p62 = scmp.ne.s32.totalorder %s47, %s61
    %p63 = scmp.eq.s32.totalorder %s16, 0
    %p64 = por %p62, %p63
    %s66 = sadd.s32 %s65, 1
    %p69 = scmp.eq.s32.totalorder %s10, 1
    %p70 = scmp.ne.s32.totalorder %s65, %s67
    %p71 = scmp.eq.s32.totalorder %s10, 0
    %p72 = por %p70, %p71
    %p73 = scmp.ne.s32.totalorder %s65, %s67
    %p74 = scmp.eq.s32.totalorder %s15, 1
    %p75 = por %p73, %p74
    %p76 = scmp.ne.s32.totalorder %s67, %s68
    %p77 = scmp.eq.s32.totalorder %s15, 0
    %p78 = por %p76, %p77
    %p79 = scmp.ne.s32.totalorder %s67, %s68
    %p80 = scmp.eq.s32.totalorder %s16, 1
    %p81 = por %p79, %p80
    %p83 = scmp.ne.s32.totalorder %s68, %s82
    %p84 = scmp.eq.s32.totalorder %s16, 0
    %p85 = por %p83, %p84
    %s86 = ssub.s32 %s10, %s17
    %p87 = scmp.eq.s32.totalorder %s86, 0
    %s89 = sadd.s32 %s88, 1
    %s90 = scalar_select %p87, %s88, %s89
    %p93 = pneg %p87
    %p94 = scmp.eq.s32.totalorder %s10, 1
    %p95 = por %p93, %p94
    %p96 = scmp.ne.s32.totalorder %s88, %s91
    %p97 = scmp.eq.s32.totalorder %s10, 0
    %p98 = por %p96, %p97
    %p99 = scmp.ne.s32.totalorder %s88, %s91
    %p100 = scmp.eq.s32.totalorder %s15, 1
    %p101 = por %p99, %p100
    %p102 = scmp.ne.s32.totalorder %s91, %s92
    %p103 = scmp.eq.s32.totalorder %s15, 0
    %p104 = por %p102, %p103
    %p105 = scmp.ne.s32.totalorder %s91, %s92
    %p106 = scmp.eq.s32.totalorder %s16, 1
    %p107 = por %p105, %p106
    %p109 = scmp.ne.s32.totalorder %s92, %s108
    %p110 = scmp.eq.s32.totalorder %s16, 0
    %p111 = por %p109, %p110
    %s112 = ssub.s32 %s10, %s17
    %p113 = scmp.eq.s32.totalorder %s112, 0
    %s115 = sadd.s32 %s114, 1
    %s116 = scalar_select %p113, %s114, %s115
    %p119 = pneg %p113
    %p120 = scmp.eq.s32.totalorder %s10, 1
    %p121 = por %p119, %p120
    %p122 = scmp.ne.s32.totalorder %s114, %s117
    %p123 = scmp.eq.s32.totalorder %s10, 0
    %p124 = por %p122, %p123
    %p125 = scmp.ne.s32.totalorder %s114, %s117
    %p126 = scmp.eq.s32.totalorder %s15, 1
    %p127 = por %p125, %p126
    %p128 = scmp.ne.s32.totalorder %s117, %s118
    %p129 = scmp.eq.s32.totalorder %s15, 0
    %p130 = por %p128, %p129
    %p131 = scmp.ne.s32.totalorder %s117, %s118
    %p132 = scmp.eq.s32.totalorder %s16, 1
    %p133 = por %p131, %p132
    %p135 = scmp.ne.s32.totalorder %s118, %s134
    %p136 = scmp.eq.s32.totalorder %s16, 0
    %p137 = por %p135, %p136
    %p138 = scmp.le.s32.totalorder 1, %s10
    %p139 = scmp.lt.s32.totalorder %s10, 3
    %p140 = pnand %p138, %p139
    %p141 = pneg %p140
    // Predicated region
    $region9: #{_lambda_.12} parent=5 // pred_check
      _
    $region10: #{_lambda_.12} parent=5 // pred_check_branch
      %143 = sbr.rel (%p140) target = $region12
    $region11: #{_lambda_.12} parent=5 // pred_region
      %s144 = ssub.s32 %s10, 1
      // Predicated region
      $region13: #{_lambda_.12} parent=11 // pred_check
        %p145 = pneg %p57
      $region14: #{_lambda_.12} parent=11 // pred_check_branch
        %147 = sbr.rel (%p145) target = $region16
      $region15: #{_lambda_.12} parent=11 // pred_region
        _
      $region16: #{_lambda_.12} parent=11 // pred_fallthru
        _
      // Predicated region
      $region17: #{_lambda_.12} parent=11 // pred_check
        %p148 = pneg %p78
      $region18: #{_lambda_.12} parent=11 // pred_check_branch
        %150 = sbr.rel (%p148) target = $region20
      $region19: #{_lambda_.12} parent=11 // pred_region
        _
      $region20: #{_lambda_.12} parent=11 // pred_fallthru
        _
    $region12: #{_lambda_.12} parent=5 // pred_fallthru
      _
    %p151 = scmp.lt.s32.totalorder %s10, 2
    // Predicated region
    $region21: #{_lambda_.12} parent=5 // pred_check
      %p152 = pneg %p151
    $region22: #{_lambda_.12} parent=5 // pred_check_branch
      %154 = sbr.rel (%p152) target = $region24
    $region23: #{_lambda_.12} parent=5 // pred_region
      // Predicated region
      $region25: #{_lambda_.12} parent=23 // pred_check
        %p155 = pneg %p30
      $region26: #{_lambda_.12} parent=23 // pred_check_branch
        %157 = sbr.rel (%p155) target = $region28
      $region27: #{_lambda_.12} parent=23 // pred_region
        %s158 = smul.u32 32, %s10
        %p159 = scmp.lt.s32.totalorder %s158, 63
        %s160 = scalar_select %p159, %s158, 63
        %s161 = smul.addr %s160, 9
        %s162 = smul.addr %s161, 4
        %s163 = scalar_lea.vmem %s0, %s162
        %s164 = smul.u32 32, %s10
      $region28: #{_lambda_.12} parent=23 // pred_fallthru
        _
      // Predicated region
      $region29: #{_lambda_.12} parent=23 // pred_check
        %p165 = pneg %p98
      $region30: #{_lambda_.12} parent=23 // pred_check_branch
        %167 = sbr.rel (%p165) target = $region32
      $region31: #{_lambda_.12} parent=23 // pred_region
        %s168 = smul.u32 32, %s10
        %p169 = scmp.lt.s32.totalorder %s168, 63
        %s170 = scalar_select %p169, %s168, 63
        %s171 = smul.addr %s170, 8
        %s172 = scalar_lea.vmem %s3, %s171
        %s173 = smul.u32 32, %s10
      $region32: #{_lambda_.12} parent=23 // pred_fallthru
        _
    $region24: #{_lambda_.12} parent=5 // pred_fallthru
      _
    %p174 = scmp.le.s32.totalorder 1, %s10
    %p175 = scmp.lt.s32.totalorder %s10, 3
    %p176 = pnand %p174, %p175
    %p177 = pneg %p176
    // Predicated region
    $region33: #{_lambda_.12} parent=5 // pred_check
      _
    $region34: #{_lambda_.12} parent=5 // pred_check_branch
      %179 = sbr.rel (%p176) target = $region36
    $region35: #{_lambda_.12} parent=5 // pred_region
      %s180 = ssub.s32 %s10, 1
      %s181 = smul.u32 32, %s15
      %p182 = scmp.lt.s32.totalorder %s181, 63
      %s183 = scalar_select %p182, %s181, 63
      %s184 = smul.addr %s183, 9
      %s185 = smul.addr %s184, 4
      %s186 = scalar_lea.vmem %s0, %s185
      %p187 = pneg %p36
      %p188 = pneg %p33
      %p189 = pneg %p57
      %p190 = pneg %p54
      %p191 = pneg %p78
      %p192 = pneg %p75
      %s193 = smul.u32 32, %s15
      %p194 = scmp.lt.s32.totalorder %s193, 63
      %s195 = scalar_select %p194, %s193, 63
      %s196 = smul.addr %s195, 8
      %s197 = scalar_lea.vmem %s3, %s196
      %p198 = pneg %p104
      %p199 = pneg %p101
      %p200 = pneg %p130
      %p201 = pneg %p127
      %s202 = smul.u32 32, %s15
      %p203 = scmp.lt.s32.totalorder %s202, 63
      %s204 = scalar_select %p203, %s202, 63
      %s205 = smul.addr %s204, 8
      %s206 = scalar_lea.vmem %s4, %s205
      %s207 = smul.u32 32, %s15
      %p208 = scmp.lt.s32.totalorder %s207, 63
      %s209 = scalar_select %p208, %s207, 63
      %s210 = smul.addr %s209, 9
      %s211 = smul.addr %s210, 4
      %s212 = scalar_lea.vmem %s0, %s211
      %s213 = smul.u32 32, %s15
      %s214 = smul.u32 32, %s15
      %p215 = scmp.lt.s32.totalorder %s214, 63
      %s216 = scalar_select %p215, %s214, 63
      %s217 = smul.addr %s216, 8
      %s218 = scalar_lea.vmem %s3, %s217
      %s219 = smul.u32 32, %s15
      %s220 = smul.u32 32, %s15
      %p221 = scmp.lt.s32.totalorder %s220, 63
      %s222 = scalar_select %p221, %s220, 63
      %s223 = smul.addr %s222, 8
      %s224 = scalar_lea.vmem %s4, %s223
      %s225 = smul.u32 32, %s15
      %v227 = vld [vmem:[%s212] sm:$0xff]
      %v228 = vld [vmem:[%s212 + $0x8] sm:$0xff]
      %v229 = vld [vmem:[%s212 + $0x10] sm:$0xff]
      %v230 = vld [vmem:[%s212 + $0x18] sm:$0xff]
      %v231 = vld [vmem:[%s212 + $0x20] sm:$0xf]
      %v232 = vld [vmem:[%s212 + $0x24] sm:$0xff]
      %v233 = vld [vmem:[%s212 + $0x2c] sm:$0xff]
      %v234 = vld [vmem:[%s212 + $0x34] sm:$0xff]
      %v235 = vld [vmem:[%s212 + $0x3c] sm:$0xff]
      %v236 = vld [vmem:[%s212 + $0x44] sm:$0xf]
      %v237 = vld [vmem:[%s212 + $0x48] sm:$0xff]
      %v238 = vld [vmem:[%s212 + $0x50] sm:$0xff]
      %v239 = vld [vmem:[%s212 + $0x58] sm:$0xff]
      %v240 = vld [vmem:[%s212 + $0x60] sm:$0xff]
      %v241 = vld [vmem:[%s212 + $0x68] sm:$0xf]
      %v242 = vld [vmem:[%s212 + $0x6c] sm:$0xff]
      %v243 = vld [vmem:[%s212 + $0x74] sm:$0xff]
      %v244 = vld [vmem:[%s212 + $0x7c] sm:$0xff]
      %v245 = vld [vmem:[%s212 + $0x84] sm:$0xff]
      %v246 = vld [vmem:[%s212 + $0x8c] sm:$0xf]
      %v247 = vld [vmem:[%s212 + $0x90] sm:$0xff]
      %v248 = vld [vmem:[%s212 + $0x98] sm:$0xff]
      %v249 = vld [vmem:[%s212 + $0xa0] sm:$0xff]
      %v250 = vld [vmem:[%s212 + $0xa8] sm:$0xff]
      %v251 = vld [vmem:[%s212 + $0xb0] sm:$0xf]
      %v252 = vld [vmem:[%s212 + $0xb4] sm:$0xff]
      %v253 = vld [vmem:[%s212 + $0xbc] sm:$0xff]
      %v254 = vld [vmem:[%s212 + $0xc4] sm:$0xff]
      %v255 = vld [vmem:[%s212 + $0xcc] sm:$0xff]
      %v256 = vld [vmem:[%s212 + $0xd4] sm:$0xf]
      %v257 = vld [vmem:[%s212 + $0xd8] sm:$0xff]
      %v258 = vld [vmem:[%s212 + $0xe0] sm:$0xff]
      %v259 = vld [vmem:[%s212 + $0xe8] sm:$0xff]
      %v260 = vld [vmem:[%s212 + $0xf0] sm:$0xff]
      %v261 = vld [vmem:[%s212 + $0xf8] sm:$0xf]
      %v262 = vld [vmem:[%s212 + $0xfc] sm:$0xff]
      %v263 = vld [vmem:[%s212 + $0x104] sm:$0xff]
      %v264 = vld [vmem:[%s212 + $0x10c] sm:$0xff]
      %v265 = vld [vmem:[%s212 + $0x114] sm:$0xff]
      %v266 = vld [vmem:[%s212 + $0x11c] sm:$0xf]
      %v267 = vld [vmem:[%s212 + $0x120] sm:$0xff]
      %v268 = vld [vmem:[%s212 + $0x128] sm:$0xff]
      %v269 = vld [vmem:[%s212 + $0x130] sm:$0xff]
      %v270 = vld [vmem:[%s212 + $0x138] sm:$0xff]
      %v271 = vld [vmem:[%s212 + $0x140] sm:$0xf]
      %v272 = vld [vmem:[%s212 + $0x144] sm:$0xff]
      %v273 = vld [vmem:[%s212 + $0x14c] sm:$0xff]
      %v274 = vld [vmem:[%s212 + $0x154] sm:$0xff]
      %v275 = vld [vmem:[%s212 + $0x15c] sm:$0xff]
      %v276 = vld [vmem:[%s212 + $0x164] sm:$0xf]
      %v277 = vld [vmem:[%s212 + $0x168] sm:$0xff]
      %v278 = vld [vmem:[%s212 + $0x170] sm:$0xff]
      %v279 = vld [vmem:[%s212 + $0x178] sm:$0xff]
      %v280 = vld [vmem:[%s212 + $0x180] sm:$0xff]
      %v281 = vld [vmem:[%s212 + $0x188] sm:$0xf]
      %v282 = vld [vmem:[%s212 + $0x18c] sm:$0xff]
      %v283 = vld [vmem:[%s212 + $0x194] sm:$0xff]
      %v284 = vld [vmem:[%s212 + $0x19c] sm:$0xff]
      %v285 = vld [vmem:[%s212 + $0x1a4] sm:$0xff]
      %v286 = vld [vmem:[%s212 + $0x1ac] sm:$0xf]
      %v287 = vld [vmem:[%s212 + $0x1b0] sm:$0xff]
      %v288 = vld [vmem:[%s212 + $0x1b8] sm:$0xff]
      %v289 = vld [vmem:[%s212 + $0x1c0] sm:$0xff]
      %v290 = vld [vmem:[%s212 + $0x1c8] sm:$0xff]
      %v291 = vld [vmem:[%s212 + $0x1d0] sm:$0xf]
      %v292 = vld [vmem:[%s212 + $0x1d4] sm:$0xff]
      %v293 = vld [vmem:[%s212 + $0x1dc] sm:$0xff]
      %v294 = vld [vmem:[%s212 + $0x1e4] sm:$0xff]
      %v295 = vld [vmem:[%s212 + $0x1ec] sm:$0xff]
      %v296 = vld [vmem:[%s212 + $0x1f4] sm:$0xf]
      %v297 = vld [vmem:[%s212 + $0x1f8] sm:$0xff]
      %v298 = vld [vmem:[%s212 + $0x200] sm:$0xff]
      %v299 = vld [vmem:[%s212 + $0x208] sm:$0xff]
      %v300 = vld [vmem:[%s212 + $0x210] sm:$0xff]
      %v301 = vld [vmem:[%s212 + $0x218] sm:$0xf]
      %v302 = vld [vmem:[%s212 + $0x21c] sm:$0xff]
      %v303 = vld [vmem:[%s212 + $0x224] sm:$0xff]
      %v304 = vld [vmem:[%s212 + $0x22c] sm:$0xff]
      %v305 = vld [vmem:[%s212 + $0x234] sm:$0xff]
      %v306 = vld [vmem:[%s212 + $0x23c] sm:$0xf]
      %v307 = vld [vmem:[%s212 + $0x240] sm:$0xff]
      %v308 = vld [vmem:[%s212 + $0x248] sm:$0xff]
      %v309 = vld [vmem:[%s212 + $0x250] sm:$0xff]
      %v310 = vld [vmem:[%s212 + $0x258] sm:$0xff]
      %v311 = vld [vmem:[%s212 + $0x260] sm:$0xf]
      %v312 = vld [vmem:[%s212 + $0x264] sm:$0xff]
      %v313 = vld [vmem:[%s212 + $0x26c] sm:$0xff]
      %v314 = vld [vmem:[%s212 + $0x274] sm:$0xff]
      %v315 = vld [vmem:[%s212 + $0x27c] sm:$0xff]
      %v316 = vld [vmem:[%s212 + $0x284] sm:$0xf]
      %v317 = vld [vmem:[%s212 + $0x288] sm:$0xff]
      %v318 = vld [vmem:[%s212 + $0x290] sm:$0xff]
      %v319 = vld [vmem:[%s212 + $0x298] sm:$0xff]
      %v320 = vld [vmem:[%s212 + $0x2a0] sm:$0xff]
      %v321 = vld [vmem:[%s212 + $0x2a8] sm:$0xf]
      %v322 = vld [vmem:[%s212 + $0x2ac] sm:$0xff]
      %v323 = vld [vmem:[%s212 + $0x2b4] sm:$0xff]
      %v324 = vld [vmem:[%s212 + $0x2bc] sm:$0xff]
      %v325 = vld [vmem:[%s212 + $0x2c4] sm:$0xff]
      %v326 = vld [vmem:[%s212 + $0x2cc] sm:$0xf]
      %v327 = vld [vmem:[%s212 + $0x2d0] sm:$0xff]
      %v328 = vld [vmem:[%s212 + $0x2d8] sm:$0xff]
      %v329 = vld [vmem:[%s212 + $0x2e0] sm:$0xff]
      %v330 = vld [vmem:[%s212 + $0x2e8] sm:$0xff]
      %v331 = vld [vmem:[%s212 + $0x2f0] sm:$0xf]
      %v332 = vld [vmem:[%s212 + $0x2f4] sm:$0xff]
      %v333 = vld [vmem:[%s212 + $0x2fc] sm:$0xff]
      %v334 = vld [vmem:[%s212 + $0x304] sm:$0xff]
      %v335 = vld [vmem:[%s212 + $0x30c] sm:$0xff]
      %v336 = vld [vmem:[%s212 + $0x314] sm:$0xf]
      %v337 = vld [vmem:[%s212 + $0x318] sm:$0xff]
      %v338 = vld [vmem:[%s212 + $0x320] sm:$0xff]
      %v339 = vld [vmem:[%s212 + $0x328] sm:$0xff]
      %v340 = vld [vmem:[%s212 + $0x330] sm:$0xff]
      %v341 = vld [vmem:[%s212 + $0x338] sm:$0xf]
      %v342 = vld [vmem:[%s212 + $0x33c] sm:$0xff]
      %v343 = vld [vmem:[%s212 + $0x344] sm:$0xff]
      %v344 = vld [vmem:[%s212 + $0x34c] sm:$0xff]
      %v345 = vld [vmem:[%s212 + $0x354] sm:$0xff]
      %v346 = vld [vmem:[%s212 + $0x35c] sm:$0xf]
      %v347 = vld [vmem:[%s212 + $0x360] sm:$0xff]
      %v348 = vld [vmem:[%s212 + $0x368] sm:$0xff]
      %v349 = vld [vmem:[%s212 + $0x370] sm:$0xff]
      %v350 = vld [vmem:[%s212 + $0x378] sm:$0xff]
      %v351 = vld [vmem:[%s212 + $0x380] sm:$0xf]
      %v352 = vld [vmem:[%s212 + $0x384] sm:$0xff]
      %v353 = vld [vmem:[%s212 + $0x38c] sm:$0xff]
      %v354 = vld [vmem:[%s212 + $0x394] sm:$0xff]
      %v355 = vld [vmem:[%s212 + $0x39c] sm:$0xff]
      %v356 = vld [vmem:[%s212 + $0x3a4] sm:$0xf]
      %v357 = vld [vmem:[%s212 + $0x3a8] sm:$0xff]
      %v358 = vld [vmem:[%s212 + $0x3b0] sm:$0xff]
      %v359 = vld [vmem:[%s212 + $0x3b8] sm:$0xff]
      %v360 = vld [vmem:[%s212 + $0x3c0] sm:$0xff]
      %v361 = vld [vmem:[%s212 + $0x3c8] sm:$0xf]
      %v362 = vld [vmem:[%s212 + $0x3cc] sm:$0xff]
      %v363 = vld [vmem:[%s212 + $0x3d4] sm:$0xff]
      %v364 = vld [vmem:[%s212 + $0x3dc] sm:$0xff]
      %v365 = vld [vmem:[%s212 + $0x3e4] sm:$0xff]
      %v366 = vld [vmem:[%s212 + $0x3ec] sm:$0xf]
      %v367 = vld [vmem:[%s212 + $0x3f0] sm:$0xff]
      %v368 = vld [vmem:[%s212 + $0x3f8] sm:$0xff]
      %v369 = vld [vmem:[%s212 + $0x400] sm:$0xff]
      %v370 = vld [vmem:[%s212 + $0x408] sm:$0xff]
      %v371 = vld [vmem:[%s212 + $0x410] sm:$0xf]
      %v372 = vld [vmem:[%s212 + $0x414] sm:$0xff]
      %v373 = vld [vmem:[%s212 + $0x41c] sm:$0xff]
      %v374 = vld [vmem:[%s212 + $0x424] sm:$0xff]
      %v375 = vld [vmem:[%s212 + $0x42c] sm:$0xff]
      %v376 = vld [vmem:[%s212 + $0x434] sm:$0xf]
      %v377 = vld [vmem:[%s212 + $0x438] sm:$0xff]
      %v378 = vld [vmem:[%s212 + $0x440] sm:$0xff]
      %v379 = vld [vmem:[%s212 + $0x448] sm:$0xff]
      %v380 = vld [vmem:[%s212 + $0x450] sm:$0xff]
      %v381 = vld [vmem:[%s212 + $0x458] sm:$0xf]
      %v382 = vld [vmem:[%s212 + $0x45c] sm:$0xff]
      %v383 = vld [vmem:[%s212 + $0x464] sm:$0xff]
      %v384 = vld [vmem:[%s212 + $0x46c] sm:$0xff]
      %v385 = vld [vmem:[%s212 + $0x474] sm:$0xff]
      %v386 = vld [vmem:[%s212 + $0x47c] sm:$0xf]
      %v387 = vld [vmem:[%s1] sm:$0xf]
      %v388 = vld [vmem:[%s1 + $0x4] sm:$0xf]
      %v389 = vld [vmem:[%s1 + $0x8] sm:$0xf]
      %v390 = vld [vmem:[%s1 + $0xc] sm:$0xf]
      %v391 = vld [vmem:[%s1 + $0x10] sm:$0xf]
      %v392 = vld [vmem:[%s1 + $0x14] sm:$0xf]
      %v393 = vld [vmem:[%s1 + $0x18] sm:$0xf]
      %v394 = vld [vmem:[%s1 + $0x1c] sm:$0xf]
      %v395 = vld [vmem:[%s1 + $0x20] sm:$0xf]
      %v396 = vld [vmem:[%s1 + $0x24] sm:$0xf]
      %v397 = vld [vmem:[%s1 + $0x28] sm:$0xf]
      %v398 = vld [vmem:[%s1 + $0x2c] sm:$0xf]
      %v399 = vld [vmem:[%s1 + $0x30] sm:$0xf]
      %v400 = vld [vmem:[%s1 + $0x34] sm:$0xf]
      %v401 = vld [vmem:[%s1 + $0x38] sm:$0xf]
      %v402 = vld [vmem:[%s1 + $0x3c] sm:$0xf]
      %v403 = vld [vmem:[%s1 + $0x40] sm:$0xf]
      %v404 = vld [vmem:[%s1 + $0x44] sm:$0xf]
      %v405 = vld [vmem:[%s1 + $0x48] sm:$0xf]
      %v406 = vld [vmem:[%s1 + $0x4c] sm:$0xf]
      %v407 = vld [vmem:[%s1 + $0x50] sm:$0xf]
      %v408 = vld [vmem:[%s1 + $0x54] sm:$0xf]
      %v409 = vld [vmem:[%s1 + $0x58] sm:$0xf]
      %v410 = vld [vmem:[%s1 + $0x5c] sm:$0xf]
      %v411 = vld [vmem:[%s1 + $0x60] sm:$0xf]
      %v412 = vld [vmem:[%s1 + $0x64] sm:$0xf]
      %v413 = vld [vmem:[%s1 + $0x68] sm:$0xf]
      %v414 = vld [vmem:[%s1 + $0x6c] sm:$0xf]
      %v415 = vld [vmem:[%s1 + $0x70] sm:$0xf]
      %v416 = vld [vmem:[%s1 + $0x74] sm:$0xf]
      %v417 = vld [vmem:[%s1 + $0x78] sm:$0xf]
      %v418 = vld [vmem:[%s1 + $0x7c] sm:$0xf]
      %v419 = vld [vmem:[%s1 + $0x80] sm:$0xf]
      %v420 = vld [vmem:[%s1 + $0x84] sm:$0xf]
      %v421 = vld [vmem:[%s1 + $0x88] sm:$0xf]
      %v422 = vld [vmem:[%s1 + $0x8c] sm:$0xf]
      %v423 = vld [vmem:[%s1 + $0x90] sm:$0xf]
      %v424 = vld [vmem:[%s1 + $0x94] sm:$0xf]
      %v425 = vld [vmem:[%s1 + $0x98] sm:$0xf]
      %v426 = vld [vmem:[%s1 + $0x9c] sm:$0xf]
      %v427 = vld [vmem:[%s1 + $0xa0] sm:$0xf]
      %v428 = vld [vmem:[%s1 + $0xa4] sm:$0xf]
      %v429 = vld [vmem:[%s1 + $0xa8] sm:$0xf]
      %v430 = vld [vmem:[%s1 + $0xac] sm:$0xf]
      %v431 = vld [vmem:[%s1 + $0xb0] sm:$0xf]
      %v432 = vld [vmem:[%s1 + $0xb4] sm:$0xf]
      %v433 = vld [vmem:[%s1 + $0xb8] sm:$0xf]
      %v434 = vld [vmem:[%s1 + $0xbc] sm:$0xf]
      %v435 = vld [vmem:[%s1 + $0xc0] sm:$0xf]
      %v436 = vld [vmem:[%s1 + $0xc4] sm:$0xf]
      %v437 = vld [vmem:[%s1 + $0xc8] sm:$0xf]
      %v438 = vld [vmem:[%s1 + $0xcc] sm:$0xf]
      %v439 = vld [vmem:[%s1 + $0xd0] sm:$0xf]
      %v440 = vld [vmem:[%s1 + $0xd4] sm:$0xf]
      %v441 = vld [vmem:[%s1 + $0xd8] sm:$0xf]
      %v442 = vld [vmem:[%s1 + $0xdc] sm:$0xf]
      %v443 = vld [vmem:[%s1 + $0xe0] sm:$0xf]
      %v444 = vld [vmem:[%s1 + $0xe4] sm:$0xf]
      %v445 = vld [vmem:[%s1 + $0xe8] sm:$0xf]
      %v446 = vld [vmem:[%s1 + $0xec] sm:$0xf]
      %v447 = vld [vmem:[%s1 + $0xf0] sm:$0xf]
      %v448 = vld [vmem:[%s1 + $0xf4] sm:$0xf]
      %v449 = vld [vmem:[%s1 + $0xf8] sm:$0xf]
      %v450 = vld [vmem:[%s1 + $0xfc] sm:$0xf]
      %v451 = vld [vmem:[%s1 + $0x100] sm:$0xf]
      %v452 = vld [vmem:[%s1 + $0x104] sm:$0xf]
      %v453 = vld [vmem:[%s1 + $0x108] sm:$0xf]
      %v454 = vld [vmem:[%s1 + $0x10c] sm:$0xf]
      %v455 = vld [vmem:[%s1 + $0x110] sm:$0xf]
      %v456 = vld [vmem:[%s1 + $0x114] sm:$0xf]
      %v457 = vld [vmem:[%s1 + $0x118] sm:$0xf]
      %v458 = vld [vmem:[%s1 + $0x11c] sm:$0xf]
      %v459 = vld [vmem:[%s1 + $0x120] sm:$0xf]
      %v460 = vld [vmem:[%s1 + $0x124] sm:$0xf]
      %v461 = vld [vmem:[%s1 + $0x128] sm:$0xf]
      %v462 = vld [vmem:[%s1 + $0x12c] sm:$0xf]
      %v463 = vld [vmem:[%s1 + $0x130] sm:$0xf]
      %v464 = vld [vmem:[%s1 + $0x134] sm:$0xf]
      %v465 = vld [vmem:[%s1 + $0x138] sm:$0xf]
      %v466 = vld [vmem:[%s1 + $0x13c] sm:$0xf]
      %v467 = vld [vmem:[%s1 + $0x140] sm:$0xf]
      %v468 = vld [vmem:[%s1 + $0x144] sm:$0xf]
      %v469 = vld [vmem:[%s1 + $0x148] sm:$0xf]
      %v470 = vld [vmem:[%s1 + $0x14c] sm:$0xf]
      %v471 = vld [vmem:[%s1 + $0x150] sm:$0xf]
      %v472 = vld [vmem:[%s1 + $0x154] sm:$0xf]
      %v473 = vld [vmem:[%s1 + $0x158] sm:$0xf]
      %v474 = vld [vmem:[%s1 + $0x15c] sm:$0xf]
      %v475 = vld [vmem:[%s1 + $0x160] sm:$0xf]
      %v476 = vld [vmem:[%s1 + $0x164] sm:$0xf]
      %v477 = vld [vmem:[%s1 + $0x168] sm:$0xf]
      %v478 = vld [vmem:[%s1 + $0x16c] sm:$0xf]
      %v479 = vld [vmem:[%s1 + $0x170] sm:$0xf]
      %v480 = vld [vmem:[%s1 + $0x174] sm:$0xf]
      %v481 = vld [vmem:[%s1 + $0x178] sm:$0xf]
      %v482 = vld [vmem:[%s1 + $0x17c] sm:$0xf]
      %v483 = vld [vmem:[%s1 + $0x180] sm:$0xf]
      %v484 = vld [vmem:[%s1 + $0x184] sm:$0xf]
      %v485 = vld [vmem:[%s1 + $0x188] sm:$0xf]
      %v486 = vld [vmem:[%s1 + $0x18c] sm:$0xf]
      %v487 = vld [vmem:[%s1 + $0x190] sm:$0xf]
      %v488 = vld [vmem:[%s1 + $0x194] sm:$0xf]
      %v489 = vld [vmem:[%s1 + $0x198] sm:$0xf]
      %v490 = vld [vmem:[%s1 + $0x19c] sm:$0xf]
      %v491 = vld [vmem:[%s1 + $0x1a0] sm:$0xf]
      %v492 = vld [vmem:[%s1 + $0x1a4] sm:$0xf]
      %v493 = vld [vmem:[%s1 + $0x1a8] sm:$0xf]
      %v494 = vld [vmem:[%s1 + $0x1ac] sm:$0xf]
      %v495 = vld [vmem:[%s1 + $0x1b0] sm:$0xf]
      %v496 = vld [vmem:[%s1 + $0x1b4] sm:$0xf]
      %v497 = vld [vmem:[%s1 + $0x1b8] sm:$0xf]
      %v498 = vld [vmem:[%s1 + $0x1bc] sm:$0xf]
      %v499 = vld [vmem:[%s1 + $0x1c0] sm:$0xf]
      %v500 = vld [vmem:[%s1 + $0x1c4] sm:$0xf]
      %v501 = vld [vmem:[%s1 + $0x1c8] sm:$0xf]
      %v502 = vld [vmem:[%s1 + $0x1cc] sm:$0xf]
      %v503 = vld [vmem:[%s1 + $0x1d0] sm:$0xf]
      %v504 = vld [vmem:[%s1 + $0x1d4] sm:$0xf]
      %v505 = vld [vmem:[%s1 + $0x1d8] sm:$0xf]
      %v506 = vld [vmem:[%s1 + $0x1dc] sm:$0xf]
      %v507 = vld [vmem:[%s1 + $0x1e0] sm:$0xf]
      %v508 = vld [vmem:[%s1 + $0x1e4] sm:$0xf]
      %v509 = vld [vmem:[%s1 + $0x1e8] sm:$0xf]
      %v510 = vld [vmem:[%s1 + $0x1ec] sm:$0xf]
      %v511 = vld [vmem:[%s1 + $0x1f0] sm:$0xf]
      %v512 = vld [vmem:[%s1 + $0x1f4] sm:$0xf]
      %v513 = vld [vmem:[%s1 + $0x1f8] sm:$0xf]
      %v514 = vld [vmem:[%s1 + $0x1fc] sm:$0xf]
      %v515 = vld [vmem:[%s1 + $0x200] sm:$0xf]
      %v516 = vld [vmem:[%s1 + $0x204] sm:$0xf]
      %v517 = vld [vmem:[%s1 + $0x208] sm:$0xf]
      %v518 = vld [vmem:[%s1 + $0x20c] sm:$0xf]
      %v519 = vld [vmem:[%s1 + $0x210] sm:$0xf]
      %v520 = vld [vmem:[%s1 + $0x214] sm:$0xf]
      %v521 = vld [vmem:[%s1 + $0x218] sm:$0xf]
      %v522 = vld [vmem:[%s1 + $0x21c] sm:$0xf]
      %v523 = vld [vmem:[%s1 + $0x220] sm:$0xf]
      %v524 = vld [vmem:[%s1 + $0x224] sm:$0xf]
      %v525 = vld [vmem:[%s1 + $0x228] sm:$0xf]
      %v526 = vld [vmem:[%s1 + $0x22c] sm:$0xf]
      %v527 = vld [vmem:[%s1 + $0x230] sm:$0xf]
      %v528 = vld [vmem:[%s1 + $0x234] sm:$0xf]
      %v529 = vld [vmem:[%s1 + $0x238] sm:$0xf]
      %v530 = vld [vmem:[%s1 + $0x23c] sm:$0xf]
      %v531 = vld [vmem:[%s2] sm:$0x1]
      %v533 = vlaneseq
      %v534 = vshrl.u32 %v533, 7
      %v535 = vsub.s32 0, %v534
      %v536 = vrot.slane %v531, %v535
      %v698 = vunpack.c.l.b16 %v227
      %v699 = vunpack.c.h.b16 %v227
      %v700 = vunpack.c.l.b16 %v228
      %v701 = vunpack.c.h.b16 %v228
      %v702 = vunpack.c.l.b16 %v229
      %v703 = vunpack.c.h.b16 %v229
      %v704 = vunpack.c.l.b16 %v230
      %v705 = vunpack.c.h.b16 %v230
      %v706 = vunpack.c.l.b16 %v231
      %v707 = vunpack.c.l.b16 %v232
      %v708 = vunpack.c.h.b16 %v232
      %v709 = vunpack.c.l.b16 %v233
      %v710 = vunpack.c.h.b16 %v233
      %v711 = vunpack.c.l.b16 %v234
      %v712 = vunpack.c.h.b16 %v234
      %v713 = vunpack.c.l.b16 %v235
      %v714 = vunpack.c.h.b16 %v235
      %v715 = vunpack.c.l.b16 %v236
      %v716 = vunpack.c.l.b16 %v237
      %v717 = vunpack.c.h.b16 %v237
      %v718 = vunpack.c.l.b16 %v238
      %v719 = vunpack.c.h.b16 %v238
      %v720 = vunpack.c.l.b16 %v239
      %v721 = vunpack.c.h.b16 %v239
      %v722 = vunpack.c.l.b16 %v240
      %v723 = vunpack.c.h.b16 %v240
      %v724 = vunpack.c.l.b16 %v241
      %v725 = vunpack.c.l.b16 %v242
      %v726 = vunpack.c.h.b16 %v242
      %v727 = vunpack.c.l.b16 %v243
      %v728 = vunpack.c.h.b16 %v243
      %v729 = vunpack.c.l.b16 %v244
      %v730 = vunpack.c.h.b16 %v244
      %v731 = vunpack.c.l.b16 %v245
      %v732 = vunpack.c.h.b16 %v245
      %v733 = vunpack.c.l.b16 %v246
      %v734 = vunpack.c.l.b16 %v247
      %v735 = vunpack.c.h.b16 %v247
      %v736 = vunpack.c.l.b16 %v248
      %v737 = vunpack.c.h.b16 %v248
      %v738 = vunpack.c.l.b16 %v249
      %v739 = vunpack.c.h.b16 %v249
      %v740 = vunpack.c.l.b16 %v250
      %v741 = vunpack.c.h.b16 %v250
      %v742 = vunpack.c.l.b16 %v251
      %v743 = vunpack.c.l.b16 %v252
      %v744 = vunpack.c.h.b16 %v252
      %v745 = vunpack.c.l.b16 %v253
      %v746 = vunpack.c.h.b16 %v253
      %v747 = vunpack.c.l.b16 %v254
      %v748 = vunpack.c.h.b16 %v254
      %v749 = vunpack.c.l.b16 %v255
      %v750 = vunpack.c.h.b16 %v255
      %v751 = vunpack.c.l.b16 %v256
      %v752 = vunpack.c.l.b16 %v257
      %v753 = vunpack.c.h.b16 %v257
      %v754 = vunpack.c.l.b16 %v258
      %v755 = vunpack.c.h.b16 %v258
      %v756 = vunpack.c.l.b16 %v259
      %v757 = vunpack.c.h.b16 %v259
      %v758 = vunpack.c.l.b16 %v260
      %v759 = vunpack.c.h.b16 %v260
      %v760 = vunpack.c.l.b16 %v261
      %v761 = vunpack.c.l.b16 %v262
      %v762 = vunpack.c.h.b16 %v262
      %v763 = vunpack.c.l.b16 %v263
      %v764 = vunpack.c.h.b16 %v263
      %v765 = vunpack.c.l.b16 %v264
      %v766 = vunpack.c.h.b16 %v264
      %v767 = vunpack.c.l.b16 %v265
      %v768 = vunpack.c.h.b16 %v265
      %v769 = vunpack.c.l.b16 %v266
      %v770 = vunpack.c.l.b16 %v267
      %v771 = vunpack.c.h.b16 %v267
      %v772 = vunpack.c.l.b16 %v268
      %v773 = vunpack.c.h.b16 %v268
      %v774 = vunpack.c.l.b16 %v269
      %v775 = vunpack.c.h.b16 %v269
      %v776 = vunpack.c.l.b16 %v270
      %v777 = vunpack.c.h.b16 %v270
      %v778 = vunpack.c.l.b16 %v271
      %v779 = vunpack.c.l.b16 %v272
      %v780 = vunpack.c.h.b16 %v272
      %v781 = vunpack.c.l.b16 %v273
      %v782 = vunpack.c.h.b16 %v273
      %v783 = vunpack.c.l.b16 %v274
      %v784 = vunpack.c.h.b16 %v274
      %v785 = vunpack.c.l.b16 %v275
      %v786 = vunpack.c.h.b16 %v275
      %v787 = vunpack.c.l.b16 %v276
      %v788 = vunpack.c.l.b16 %v277
      %v789 = vunpack.c.h.b16 %v277
      %v790 = vunpack.c.l.b16 %v278
      %v791 = vunpack.c.h.b16 %v278
      %v792 = vunpack.c.l.b16 %v279
      %v793 = vunpack.c.h.b16 %v279
      %v794 = vunpack.c.l.b16 %v280
      %v795 = vunpack.c.h.b16 %v280
      %v796 = vunpack.c.l.b16 %v281
      %v797 = vunpack.c.l.b16 %v282
      %v798 = vunpack.c.h.b16 %v282
      %v799 = vunpack.c.l.b16 %v283
      %v800 = vunpack.c.h.b16 %v283
      %v801 = vunpack.c.l.b16 %v284
      %v802 = vunpack.c.h.b16 %v284
      %v803 = vunpack.c.l.b16 %v285
      %v804 = vunpack.c.h.b16 %v285
      %v805 = vunpack.c.l.b16 %v286
      %v806 = vunpack.c.l.b16 %v287
      %v807 = vunpack.c.h.b16 %v287
      %v808 = vunpack.c.l.b16 %v288
      %v809 = vunpack.c.h.b16 %v288
      %v810 = vunpack.c.l.b16 %v289
      %v811 = vunpack.c.h.b16 %v289
      %v812 = vunpack.c.l.b16 %v290
      %v813 = vunpack.c.h.b16 %v290
      %v814 = vunpack.c.l.b16 %v291
      %v815 = vunpack.c.l.b16 %v292
      %v816 = vunpack.c.h.b16 %v292
      %v817 = vunpack.c.l.b16 %v293
      %v818 = vunpack.c.h.b16 %v293
      %v819 = vunpack.c.l.b16 %v294
      %v820 = vunpack.c.h.b16 %v294
      %v821 = vunpack.c.l.b16 %v295
      %v822 = vunpack.c.h.b16 %v295
      %v823 = vunpack.c.l.b16 %v296
      %v824 = vunpack.c.l.b16 %v297
      %v825 = vunpack.c.h.b16 %v297
      %v826 = vunpack.c.l.b16 %v298
      %v827 = vunpack.c.h.b16 %v298
      %v828 = vunpack.c.l.b16 %v299
      %v829 = vunpack.c.h.b16 %v299
      %v830 = vunpack.c.l.b16 %v300
      %v831 = vunpack.c.h.b16 %v300
      %v832 = vunpack.c.l.b16 %v301
      %v833 = vunpack.c.l.b16 %v302
      %v834 = vunpack.c.h.b16 %v302
      %v835 = vunpack.c.l.b16 %v303
      %v836 = vunpack.c.h.b16 %v303
      %v837 = vunpack.c.l.b16 %v304
      %v838 = vunpack.c.h.b16 %v304
      %v839 = vunpack.c.l.b16 %v305
      %v840 = vunpack.c.h.b16 %v305
      %v841 = vunpack.c.l.b16 %v306
      %v842 = vunpack.c.l.b16 %v307
      %v843 = vunpack.c.h.b16 %v307
      %v844 = vunpack.c.l.b16 %v308
      %v845 = vunpack.c.h.b16 %v308
      %v846 = vunpack.c.l.b16 %v309
      %v847 = vunpack.c.h.b16 %v309
      %v848 = vunpack.c.l.b16 %v310
      %v849 = vunpack.c.h.b16 %v310
      %v850 = vunpack.c.l.b16 %v311
      %v851 = vunpack.c.l.b16 %v312
      %v852 = vunpack.c.h.b16 %v312
      %v853 = vunpack.c.l.b16 %v313
      %v854 = vunpack.c.h.b16 %v313
      %v855 = vunpack.c.l.b16 %v314
      %v856 = vunpack.c.h.b16 %v314
      %v857 = vunpack.c.l.b16 %v315
      %v858 = vunpack.c.h.b16 %v315
      %v859 = vunpack.c.l.b16 %v316
      %v860 = vunpack.c.l.b16 %v317
      %v861 = vunpack.c.h.b16 %v317
      %v862 = vunpack.c.l.b16 %v318
      %v863 = vunpack.c.h.b16 %v318
      %v864 = vunpack.c.l.b16 %v319
      %v865 = vunpack.c.h.b16 %v319
      %v866 = vunpack.c.l.b16 %v320
      %v867 = vunpack.c.h.b16 %v320
      %v868 = vunpack.c.l.b16 %v321
      %v869 = vunpack.c.l.b16 %v322
      %v870 = vunpack.c.h.b16 %v322
      %v871 = vunpack.c.l.b16 %v323
      %v872 = vunpack.c.h.b16 %v323
      %v873 = vunpack.c.l.b16 %v324
      %v874 = vunpack.c.h.b16 %v324
      %v875 = vunpack.c.l.b16 %v325
      %v876 = vunpack.c.h.b16 %v325
      %v877 = vunpack.c.l.b16 %v326
      %v878 = vunpack.c.l.b16 %v327
      %v879 = vunpack.c.h.b16 %v327
      %v880 = vunpack.c.l.b16 %v328
      %v881 = vunpack.c.h.b16 %v328
      %v882 = vunpack.c.l.b16 %v329
      %v883 = vunpack.c.h.b16 %v329
      %v884 = vunpack.c.l.b16 %v330
      %v885 = vunpack.c.h.b16 %v330
      %v886 = vunpack.c.l.b16 %v331
      %v887 = vunpack.c.l.b16 %v332
      %v888 = vunpack.c.h.b16 %v332
      %v889 = vunpack.c.l.b16 %v333
      %v890 = vunpack.c.h.b16 %v333
      %v891 = vunpack.c.l.b16 %v334
      %v892 = vunpack.c.h.b16 %v334
      %v893 = vunpack.c.l.b16 %v335
      %v894 = vunpack.c.h.b16 %v335
      %v895 = vunpack.c.l.b16 %v336
      %v896 = vunpack.c.l.b16 %v337
      %v897 = vunpack.c.h.b16 %v337
      %v898 = vunpack.c.l.b16 %v338
      %v899 = vunpack.c.h.b16 %v338
      %v900 = vunpack.c.l.b16 %v339
      %v901 = vunpack.c.h.b16 %v339
      %v902 = vunpack.c.l.b16 %v340
      %v903 = vunpack.c.h.b16 %v340
      %v904 = vunpack.c.l.b16 %v341
      %v905 = vunpack.c.l.b16 %v342
      %v906 = vunpack.c.h.b16 %v342
      %v907 = vunpack.c.l.b16 %v343
      %v908 = vunpack.c.h.b16 %v343
      %v909 = vunpack.c.l.b16 %v344
      %v910 = vunpack.c.h.b16 %v344
      %v911 = vunpack.c.l.b16 %v345
      %v912 = vunpack.c.h.b16 %v345
      %v913 = vunpack.c.l.b16 %v346
      %v914 = vunpack.c.l.b16 %v347
      %v915 = vunpack.c.h.b16 %v347
      %v916 = vunpack.c.l.b16 %v348
      %v917 = vunpack.c.h.b16 %v348
      %v918 = vunpack.c.l.b16 %v349
      %v919 = vunpack.c.h.b16 %v349
      %v920 = vunpack.c.l.b16 %v350
      %v921 = vunpack.c.h.b16 %v350
      %v922 = vunpack.c.l.b16 %v351
      %v923 = vunpack.c.l.b16 %v352
      %v924 = vunpack.c.h.b16 %v352
      %v925 = vunpack.c.l.b16 %v353
      %v926 = vunpack.c.h.b16 %v353
      %v927 = vunpack.c.l.b16 %v354
      %v928 = vunpack.c.h.b16 %v354
      %v929 = vunpack.c.l.b16 %v355
      %v930 = vunpack.c.h.b16 %v355
      %v931 = vunpack.c.l.b16 %v356
      %v932 = vunpack.c.l.b16 %v357
      %v933 = vunpack.c.h.b16 %v357
      %v934 = vunpack.c.l.b16 %v358
      %v935 = vunpack.c.h.b16 %v358
      %v936 = vunpack.c.l.b16 %v359
      %v937 = vunpack.c.h.b16 %v359
      %v938 = vunpack.c.l.b16 %v360
      %v939 = vunpack.c.h.b16 %v360
      %v940 = vunpack.c.l.b16 %v361
      %v941 = vunpack.c.l.b16 %v362
      %v942 = vunpack.c.h.b16 %v362
      %v943 = vunpack.c.l.b16 %v363
      %v944 = vunpack.c.h.b16 %v363
      %v945 = vunpack.c.l.b16 %v364
      %v946 = vunpack.c.h.b16 %v364
      %v947 = vunpack.c.l.b16 %v365
      %v948 = vunpack.c.h.b16 %v365
      %v949 = vunpack.c.l.b16 %v366
      %v950 = vunpack.c.l.b16 %v367
      %v951 = vunpack.c.h.b16 %v367
      %v952 = vunpack.c.l.b16 %v368
      %v953 = vunpack.c.h.b16 %v368
      %v954 = vunpack.c.l.b16 %v369
      %v955 = vunpack.c.h.b16 %v369
      %v956 = vunpack.c.l.b16 %v370
      %v957 = vunpack.c.h.b16 %v370
      %v958 = vunpack.c.l.b16 %v371
      %v959 = vunpack.c.l.b16 %v372
      %v960 = vunpack.c.h.b16 %v372
      %v961 = vunpack.c.l.b16 %v373
      %v962 = vunpack.c.h.b16 %v373
      %v963 = vunpack.c.l.b16 %v374
      %v964 = vunpack.c.h.b16 %v374
      %v965 = vunpack.c.l.b16 %v375
      %v966 = vunpack.c.h.b16 %v375
      %v967 = vunpack.c.l.b16 %v376
      %v968 = vunpack.c.l.b16 %v377
      %v969 = vunpack.c.h.b16 %v377
      %v970 = vunpack.c.l.b16 %v378
      %v971 = vunpack.c.h.b16 %v378
      %v972 = vunpack.c.l.b16 %v379
      %v973 = vunpack.c.h.b16 %v379
      %v974 = vunpack.c.l.b16 %v380
      %v975 = vunpack.c.h.b16 %v380
      %v976 = vunpack.c.l.b16 %v381
      %v977 = vunpack.c.l.b16 %v382
      %v978 = vunpack.c.h.b16 %v382
      %v979 = vunpack.c.l.b16 %v383
      %v980 = vunpack.c.h.b16 %v383
      %v981 = vunpack.c.l.b16 %v384
      %v982 = vunpack.c.h.b16 %v384
      %v983 = vunpack.c.l.b16 %v385
      %v984 = vunpack.c.h.b16 %v385
      %v985 = vunpack.c.l.b16 %v386
      %v986 = vpack.c.b16 %v707, %v698
      %v987 = vpack.c.b16 %v708, %v699
      %v988 = vpack.c.b16 %v709, %v700
      %v989 = vpack.c.b16 %v710, %v701
      %v990 = vpack.c.b16 %v711, %v702
      %v991 = vpack.c.b16 %v712, %v703
      %v992 = vpack.c.b16 %v713, %v704
      %v993 = vpack.c.b16 %v714, %v705
      %v994 = vpack.c.b16 %v715, %v706
      %v995 = vpack.c.b16 %v725, %v716
      %v996 = vpack.c.b16 %v726, %v717
      %v997 = vpack.c.b16 %v727, %v718
      %v998 = vpack.c.b16 %v728, %v719
      %v999 = vpack.c.b16 %v729, %v720
      %v1000 = vpack.c.b16 %v730, %v721
      %v1001 = vpack.c.b16 %v731, %v722
      %v1002 = vpack.c.b16 %v732, %v723
      %v1003 = vpack.c.b16 %v733, %v724
      %v1004 = vpack.c.b16 %v743, %v734
      %v1005 = vpack.c.b16 %v744, %v735
      %v1006 = vpack.c.b16 %v745, %v736
      %v1007 = vpack.c.b16 %v746, %v737
      %v1008 = vpack.c.b16 %v747, %v738
      %v1009 = vpack.c.b16 %v748, %v739
      %v1010 = vpack.c.b16 %v749, %v740
      %v1011 = vpack.c.b16 %v750, %v741
      %v1012 = vpack.c.b16 %v751, %v742
      %v1013 = vpack.c.b16 %v761, %v752
      %v1014 = vpack.c.b16 %v762, %v753
      %v1015 = vpack.c.b16 %v763, %v754
      %v1016 = vpack.c.b16 %v764, %v755
      %v1017 = vpack.c.b16 %v765, %v756
      %v1018 = vpack.c.b16 %v766, %v757
      %v1019 = vpack.c.b16 %v767, %v758
      %v1020 = vpack.c.b16 %v768, %v759
      %v1021 = vpack.c.b16 %v769, %v760
      %v1022 = vpack.c.b16 %v779, %v770
      %v1023 = vpack.c.b16 %v780, %v771
      %v1024 = vpack.c.b16 %v781, %v772
      %v1025 = vpack.c.b16 %v782, %v773
      %v1026 = vpack.c.b16 %v783, %v774
      %v1027 = vpack.c.b16 %v784, %v775
      %v1028 = vpack.c.b16 %v785, %v776
      %v1029 = vpack.c.b16 %v786, %v777
      %v1030 = vpack.c.b16 %v787, %v778
      %v1031 = vpack.c.b16 %v797, %v788
      %v1032 = vpack.c.b16 %v798, %v789
      %v1033 = vpack.c.b16 %v799, %v790
      %v1034 = vpack.c.b16 %v800, %v791
      %v1035 = vpack.c.b16 %v801, %v792
      %v1036 = vpack.c.b16 %v802, %v793
      %v1037 = vpack.c.b16 %v803, %v794
      %v1038 = vpack.c.b16 %v804, %v795
      %v1039 = vpack.c.b16 %v805, %v796
      %v1040 = vpack.c.b16 %v815, %v806
      %v1041 = vpack.c.b16 %v816, %v807
      %v1042 = vpack.c.b16 %v817, %v808
      %v1043 = vpack.c.b16 %v818, %v809
      %v1044 = vpack.c.b16 %v819, %v810
      %v1045 = vpack.c.b16 %v820, %v811
      %v1046 = vpack.c.b16 %v821, %v812
      %v1047 = vpack.c.b16 %v822, %v813
      %v1048 = vpack.c.b16 %v823, %v814
      %v1049 = vpack.c.b16 %v833, %v824
      %v1050 = vpack.c.b16 %v834, %v825
      %v1051 = vpack.c.b16 %v835, %v826
      %v1052 = vpack.c.b16 %v836, %v827
      %v1053 = vpack.c.b16 %v837, %v828
      %v1054 = vpack.c.b16 %v838, %v829
      %v1055 = vpack.c.b16 %v839, %v830
      %v1056 = vpack.c.b16 %v840, %v831
      %v1057 = vpack.c.b16 %v841, %v832
      %v1058 = vpack.c.b16 %v851, %v842
      %v1059 = vpack.c.b16 %v852, %v843
      %v1060 = vpack.c.b16 %v853, %v844
      %v1061 = vpack.c.b16 %v854, %v845
      %v1062 = vpack.c.b16 %v855, %v846
      %v1063 = vpack.c.b16 %v856, %v847
      %v1064 = vpack.c.b16 %v857, %v848
      %v1065 = vpack.c.b16 %v858, %v849
      %v1066 = vpack.c.b16 %v859, %v850
      %v1067 = vpack.c.b16 %v869, %v860
      %v1068 = vpack.c.b16 %v870, %v861
      %v1069 = vpack.c.b16 %v871, %v862
      %v1070 = vpack.c.b16 %v872, %v863
      %v1071 = vpack.c.b16 %v873, %v864
      %v1072 = vpack.c.b16 %v874, %v865
      %v1073 = vpack.c.b16 %v875, %v866
      %v1074 = vpack.c.b16 %v876, %v867
      %v1075 = vpack.c.b16 %v877, %v868
      %v1076 = vpack.c.b16 %v887, %v878
      %v1077 = vpack.c.b16 %v888, %v879
      %v1078 = vpack.c.b16 %v889, %v880
      %v1079 = vpack.c.b16 %v890, %v881
      %v1080 = vpack.c.b16 %v891, %v882
      %v1081 = vpack.c.b16 %v892, %v883
      %v1082 = vpack.c.b16 %v893, %v884
      %v1083 = vpack.c.b16 %v894, %v885
      %v1084 = vpack.c.b16 %v895, %v886
      %v1085 = vpack.c.b16 %v905, %v896
      %v1086 = vpack.c.b16 %v906, %v897
      %v1087 = vpack.c.b16 %v907, %v898
      %v1088 = vpack.c.b16 %v908, %v899
      %v1089 = vpack.c.b16 %v909, %v900
      %v1090 = vpack.c.b16 %v910, %v901
      %v1091 = vpack.c.b16 %v911, %v902
      %v1092 = vpack.c.b16 %v912, %v903
      %v1093 = vpack.c.b16 %v913, %v904
      %v1094 = vpack.c.b16 %v923, %v914
      %v1095 = vpack.c.b16 %v924, %v915
      %v1096 = vpack.c.b16 %v925, %v916
      %v1097 = vpack.c.b16 %v926, %v917
      %v1098 = vpack.c.b16 %v927, %v918
      %v1099 = vpack.c.b16 %v928, %v919
      %v1100 = vpack.c.b16 %v929, %v920
      %v1101 = vpack.c.b16 %v930, %v921
      %v1102 = vpack.c.b16 %v931, %v922
      %v1103 = vpack.c.b16 %v941, %v932
      %v1104 = vpack.c.b16 %v942, %v933
      %v1105 = vpack.c.b16 %v943, %v934
      %v1106 = vpack.c.b16 %v944, %v935
      %v1107 = vpack.c.b16 %v945, %v936
      %v1108 = vpack.c.b16 %v946, %v937
      %v1109 = vpack.c.b16 %v947, %v938
      %v1110 = vpack.c.b16 %v948, %v939
      %v1111 = vpack.c.b16 %v949, %v940
      %v1112 = vpack.c.b16 %v959, %v950
      %v1113 = vpack.c.b16 %v960, %v951
      %v1114 = vpack.c.b16 %v961, %v952
      %v1115 = vpack.c.b16 %v962, %v953
      %v1116 = vpack.c.b16 %v963, %v954
      %v1117 = vpack.c.b16 %v964, %v955
      %v1118 = vpack.c.b16 %v965, %v956
      %v1119 = vpack.c.b16 %v966, %v957
      %v1120 = vpack.c.b16 %v967, %v958
      %v1121 = vpack.c.b16 %v977, %v968
      %v1122 = vpack.c.b16 %v978, %v969
      %v1123 = vpack.c.b16 %v979, %v970
      %v1124 = vpack.c.b16 %v980, %v971
      %v1125 = vpack.c.b16 %v981, %v972
      %v1126 = vpack.c.b16 %v982, %v973
      %v1127 = vpack.c.b16 %v983, %v974
      %v1128 = vpack.c.b16 %v984, %v975
      %v1129 = vpack.c.b16 %v985, %v976
      %v1418 = vunpack.c.l.b16 %v387
      %v1419 = vunpack.c.l.b16 %v388
      %v1420 = vunpack.c.l.b16 %v389
      %v1421 = vunpack.c.l.b16 %v390
      %v1422 = vunpack.c.l.b16 %v391
      %v1423 = vunpack.c.l.b16 %v392
      %v1424 = vunpack.c.l.b16 %v393
      %v1425 = vunpack.c.l.b16 %v394
      %v1426 = vunpack.c.l.b16 %v395
      %v1427 = vunpack.c.l.b16 %v396
      %v1428 = vunpack.c.l.b16 %v397
      %v1429 = vunpack.c.l.b16 %v398
      %v1430 = vunpack.c.l.b16 %v399
      %v1431 = vunpack.c.l.b16 %v400
      %v1432 = vunpack.c.l.b16 %v401
      %v1433 = vunpack.c.l.b16 %v402
      %v1434 = vunpack.c.l.b16 %v403
      %v1435 = vunpack.c.l.b16 %v404
      %v1436 = vunpack.c.l.b16 %v405
      %v1437 = vunpack.c.l.b16 %v406
      %v1438 = vunpack.c.l.b16 %v407
      %v1439 = vunpack.c.l.b16 %v408
      %v1440 = vunpack.c.l.b16 %v409
      %v1441 = vunpack.c.l.b16 %v410
      %v1442 = vunpack.c.l.b16 %v411
      %v1443 = vunpack.c.l.b16 %v412
      %v1444 = vunpack.c.l.b16 %v413
      %v1445 = vunpack.c.l.b16 %v414
      %v1446 = vunpack.c.l.b16 %v415
      %v1447 = vunpack.c.l.b16 %v416
      %v1448 = vunpack.c.l.b16 %v417
      %v1449 = vunpack.c.l.b16 %v418
      %v1450 = vunpack.c.l.b16 %v419
      %v1451 = vunpack.c.l.b16 %v420
      %v1452 = vunpack.c.l.b16 %v421
      %v1453 = vunpack.c.l.b16 %v422
      %v1454 = vunpack.c.l.b16 %v423
      %v1455 = vunpack.c.l.b16 %v424
      %v1456 = vunpack.c.l.b16 %v425
      %v1457 = vunpack.c.l.b16 %v426
      %v1458 = vunpack.c.l.b16 %v427
      %v1459 = vunpack.c.l.b16 %v428
      %v1460 = vunpack.c.l.b16 %v429
      %v1461 = vunpack.c.l.b16 %v430
      %v1462 = vunpack.c.l.b16 %v431
      %v1463 = vunpack.c.l.b16 %v432
      %v1464 = vunpack.c.l.b16 %v433
      %v1465 = vunpack.c.l.b16 %v434
      %v1466 = vunpack.c.l.b16 %v435
      %v1467 = vunpack.c.l.b16 %v436
      %v1468 = vunpack.c.l.b16 %v437
      %v1469 = vunpack.c.l.b16 %v438
      %v1470 = vunpack.c.l.b16 %v439
      %v1471 = vunpack.c.l.b16 %v440
      %v1472 = vunpack.c.l.b16 %v441
      %v1473 = vunpack.c.l.b16 %v442
      %v1474 = vunpack.c.l.b16 %v443
      %v1475 = vunpack.c.l.b16 %v444
      %v1476 = vunpack.c.l.b16 %v445
      %v1477 = vunpack.c.l.b16 %v446
      %v1478 = vunpack.c.l.b16 %v447
      %v1479 = vunpack.c.l.b16 %v448
      %v1480 = vunpack.c.l.b16 %v449
      %v1481 = vunpack.c.l.b16 %v450
      %v1482 = vunpack.c.l.b16 %v451
      %v1483 = vunpack.c.l.b16 %v452
      %v1484 = vunpack.c.l.b16 %v453
      %v1485 = vunpack.c.l.b16 %v454
      %v1486 = vunpack.c.l.b16 %v455
      %v1487 = vunpack.c.l.b16 %v456
      %v1488 = vunpack.c.l.b16 %v457
      %v1489 = vunpack.c.l.b16 %v458
      %v1490 = vunpack.c.l.b16 %v459
      %v1491 = vunpack.c.l.b16 %v460
      %v1492 = vunpack.c.l.b16 %v461
      %v1493 = vunpack.c.l.b16 %v462
      %v1494 = vunpack.c.l.b16 %v463
      %v1495 = vunpack.c.l.b16 %v464
      %v1496 = vunpack.c.l.b16 %v465
      %v1497 = vunpack.c.l.b16 %v466
      %v1498 = vunpack.c.l.b16 %v467
      %v1499 = vunpack.c.l.b16 %v468
      %v1500 = vunpack.c.l.b16 %v469
      %v1501 = vunpack.c.l.b16 %v470
      %v1502 = vunpack.c.l.b16 %v471
      %v1503 = vunpack.c.l.b16 %v472
      %v1504 = vunpack.c.l.b16 %v473
      %v1505 = vunpack.c.l.b16 %v474
      %v1506 = vunpack.c.l.b16 %v475
      %v1507 = vunpack.c.l.b16 %v476
      %v1508 = vunpack.c.l.b16 %v477
      %v1509 = vunpack.c.l.b16 %v478
      %v1510 = vunpack.c.l.b16 %v479
      %v1511 = vunpack.c.l.b16 %v480
      %v1512 = vunpack.c.l.b16 %v481
      %v1513 = vunpack.c.l.b16 %v482
      %v1514 = vunpack.c.l.b16 %v483
      %v1515 = vunpack.c.l.b16 %v484
      %v1516 = vunpack.c.l.b16 %v485
      %v1517 = vunpack.c.l.b16 %v486
      %v1518 = vunpack.c.l.b16 %v487
      %v1519 = vunpack.c.l.b16 %v488
      %v1520 = vunpack.c.l.b16 %v489
      %v1521 = vunpack.c.l.b16 %v490
      %v1522 = vunpack.c.l.b16 %v491
      %v1523 = vunpack.c.l.b16 %v492
      %v1524 = vunpack.c.l.b16 %v493
      %v1525 = vunpack.c.l.b16 %v494
      %v1526 = vunpack.c.l.b16 %v495
      %v1527 = vunpack.c.l.b16 %v496
      %v1528 = vunpack.c.l.b16 %v497
      %v1529 = vunpack.c.l.b16 %v498
      %v1530 = vunpack.c.l.b16 %v499
      %v1531 = vunpack.c.l.b16 %v500
      %v1532 = vunpack.c.l.b16 %v501
      %v1533 = vunpack.c.l.b16 %v502
      %v1534 = vunpack.c.l.b16 %v503
      %v1535 = vunpack.c.l.b16 %v504
      %v1536 = vunpack.c.l.b16 %v505
      %v1537 = vunpack.c.l.b16 %v506
      %v1538 = vunpack.c.l.b16 %v507
      %v1539 = vunpack.c.l.b16 %v508
      %v1540 = vunpack.c.l.b16 %v509
      %v1541 = vunpack.c.l.b16 %v510
      %v1542 = vunpack.c.l.b16 %v511
      %v1543 = vunpack.c.l.b16 %v512
      %v1544 = vunpack.c.l.b16 %v513
      %v1545 = vunpack.c.l.b16 %v514
      %v1546 = vunpack.c.l.b16 %v515
      %v1547 = vunpack.c.l.b16 %v516
      %v1548 = vunpack.c.l.b16 %v517
      %v1549 = vunpack.c.l.b16 %v518
      %v1550 = vunpack.c.l.b16 %v519
      %v1551 = vunpack.c.l.b16 %v520
      %v1552 = vunpack.c.l.b16 %v521
      %v1553 = vunpack.c.l.b16 %v522
      %v1554 = vunpack.c.l.b16 %v523
      %v1555 = vunpack.c.l.b16 %v524
      %v1556 = vunpack.c.l.b16 %v525
      %v1557 = vunpack.c.l.b16 %v526
      %v1558 = vunpack.c.l.b16 %v527
      %v1559 = vunpack.c.l.b16 %v528
      %v1560 = vunpack.c.l.b16 %v529
      %v1561 = vunpack.c.l.b16 %v530
      %v1562 = vpack.c.b16 %v1419, %v1418
      %v1563 = vpack.c.b16 %v1421, %v1420
      %v1564 = vpack.c.b16 %v1423, %v1422
      %v1565 = vpack.c.b16 %v1425, %v1424
      %v1566 = vpack.c.b16 %v1427, %v1426
      %v1567 = vpack.c.b16 %v1429, %v1428
      %v1568 = vpack.c.b16 %v1431, %v1430
      %v1569 = vpack.c.b16 %v1433, %v1432
      %v1570 = vpack.c.b16 %v1435, %v1434
      %v1571 = vpack.c.b16 %v1437, %v1436
      %v1572 = vpack.c.b16 %v1439, %v1438
      %v1573 = vpack.c.b16 %v1441, %v1440
      %v1574 = vpack.c.b16 %v1443, %v1442
      %v1575 = vpack.c.b16 %v1445, %v1444
      %v1576 = vpack.c.b16 %v1447, %v1446
      %v1577 = vpack.c.b16 %v1449, %v1448
      %v1578 = vpack.c.b16 %v1451, %v1450
      %v1579 = vpack.c.b16 %v1453, %v1452
      %v1580 = vpack.c.b16 %v1455, %v1454
      %v1581 = vpack.c.b16 %v1457, %v1456
      %v1582 = vpack.c.b16 %v1459, %v1458
      %v1583 = vpack.c.b16 %v1461, %v1460
      %v1584 = vpack.c.b16 %v1463, %v1462
      %v1585 = vpack.c.b16 %v1465, %v1464
      %v1586 = vpack.c.b16 %v1467, %v1466
      %v1587 = vpack.c.b16 %v1469, %v1468
      %v1588 = vpack.c.b16 %v1471, %v1470
      %v1589 = vpack.c.b16 %v1473, %v1472
      %v1590 = vpack.c.b16 %v1475, %v1474
      %v1591 = vpack.c.b16 %v1477, %v1476
      %v1592 = vpack.c.b16 %v1479, %v1478
      %v1593 = vpack.c.b16 %v1481, %v1480
      %v1594 = vpack.c.b16 %v1483, %v1482
      %v1595 = vpack.c.b16 %v1485, %v1484
      %v1596 = vpack.c.b16 %v1487, %v1486
      %v1597 = vpack.c.b16 %v1489, %v1488
      %v1598 = vpack.c.b16 %v1491, %v1490
      %v1599 = vpack.c.b16 %v1493, %v1492
      %v1600 = vpack.c.b16 %v1495, %v1494
      %v1601 = vpack.c.b16 %v1497, %v1496
      %v1602 = vpack.c.b16 %v1499, %v1498
      %v1603 = vpack.c.b16 %v1501, %v1500
      %v1604 = vpack.c.b16 %v1503, %v1502
      %v1605 = vpack.c.b16 %v1505, %v1504
      %v1606 = vpack.c.b16 %v1507, %v1506
      %v1607 = vpack.c.b16 %v1509, %v1508
      %v1608 = vpack.c.b16 %v1511, %v1510
      %v1609 = vpack.c.b16 %v1513, %v1512
      %v1610 = vpack.c.b16 %v1515, %v1514
      %v1611 = vpack.c.b16 %v1517, %v1516
      %v1612 = vpack.c.b16 %v1519, %v1518
      %v1613 = vpack.c.b16 %v1521, %v1520
      %v1614 = vpack.c.b16 %v1523, %v1522
      %v1615 = vpack.c.b16 %v1525, %v1524
      %v1616 = vpack.c.b16 %v1527, %v1526
      %v1617 = vpack.c.b16 %v1529, %v1528
      %v1618 = vpack.c.b16 %v1531, %v1530
      %v1619 = vpack.c.b16 %v1533, %v1532
      %v1620 = vpack.c.b16 %v1535, %v1534
      %v1621 = vpack.c.b16 %v1537, %v1536
      %v1622 = vpack.c.b16 %v1539, %v1538
      %v1623 = vpack.c.b16 %v1541, %v1540
      %v1624 = vpack.c.b16 %v1543, %v1542
      %v1625 = vpack.c.b16 %v1545, %v1544
      %v1626 = vpack.c.b16 %v1547, %v1546
      %v1627 = vpack.c.b16 %v1549, %v1548
      %v1628 = vpack.c.b16 %v1551, %v1550
      %v1629 = vpack.c.b16 %v1553, %v1552
      %v1630 = vpack.c.b16 %v1555, %v1554
      %v1631 = vpack.c.b16 %v1557, %v1556
      %v1632 = vpack.c.b16 %v1559, %v1558
      %v1633 = vpack.c.b16 %v1561, %v1560
      %1706 = vmatprep.subr.bf16.mxu0 0
      %1707 = vmatpush1.bf16.msra.mxu0 %v1569
      %1708 = vmatprep.subr.bf16.mxu0 0
      %1709 = vmatpush1.bf16.msra.mxu0 %v1568
      %1710 = vmatprep.subr.bf16.mxu0 0
      %1711 = vmatpush1.bf16.msra.mxu0 %v1567
      %1712 = vmatprep.subr.bf16.mxu0 0
      %1713 = vmatpush1.bf16.msra.mxu0 %v1566
      %1714 = vmatprep.subr.bf16.mxu0 0
      %1715 = vmatpush1.bf16.msra.mxu0 %v1565
      %1716 = vmatprep.subr.bf16.mxu0 0
      %1717 = vmatpush1.bf16.msra.mxu0 %v1564
      %1718 = vmatprep.subr.bf16.mxu0 0
      %1719 = vmatpush1.bf16.msra.mxu0 %v1563
      %1720 = vmatprep.subr.bf16.mxu0 0
      %1721 = vmatpush1.bf16.msra.mxu0 %v1562
      %1722 = vmatprep.subr.bf16.mxu0 0
      %1723 = vmatpush2.bf16.msra.mxu0 %v1577
      %1724 = vmatprep.subr.bf16.mxu0 0
      %1725 = vmatpush2.bf16.msra.mxu0 %v1576
      %1726 = vmatprep.subr.bf16.mxu0 0
      %1727 = vmatpush2.bf16.msra.mxu0 %v1575
      %1728 = vmatprep.subr.bf16.mxu0 0
      %1729 = vmatpush2.bf16.msra.mxu0 %v1574
      %1730 = vmatprep.subr.bf16.mxu0 0
      %1731 = vmatpush2.bf16.msra.mxu0 %v1573
      %1732 = vmatprep.subr.bf16.mxu0 0
      %1733 = vmatpush2.bf16.msra.mxu0 %v1572
      %1734 = vmatprep.subr.bf16.mxu0 0
      %1735 = vmatpush2.bf16.msra.mxu0 %v1571
      %1736 = vmatprep.subr.bf16.mxu0 0
      %1737 = vmatpush2.bf16.msra.mxu0 %v1570
      %1738 = vmatprep.mubr.bf16.mxu0 %v987
      %1739 = vmatmul.mubr.bf16.gmra.mxu0 %v986
      %v1740 = vpop.f32.mrf.mxu0
      %v1741 = vadd.f32 %v536, %v1740
      %v1742 = vpop.f32.mrf.mxu0
      %v1743 = vpop.f32.mrf.mxu0
      %v1744 = vadd.f32 %v536, %v1743
      %v1745 = vpop.f32.mrf.mxu0
      %1746 = vmatprep.mubr.bf16.mxu0 %v996
      %1747 = vmatmul.mubr.bf16.gmra.mxu0 %v995
      %v1748 = vpop.f32.mrf.mxu0
      %v1749 = vadd.f32 %v536, %v1748
      %v1750 = vpop.f32.mrf.mxu0
      %v1751 = vpop.f32.mrf.mxu0
      %v1752 = vadd.f32 %v536, %v1751
      %v1753 = vpop.f32.mrf.mxu0
      %1754 = vmatprep.mubr.bf16.mxu0 %v1005
      %1755 = vmatmul.mubr.bf16.gmra.mxu0 %v1004
      %v1756 = vpop.f32.mrf.mxu0
      %v1757 = vadd.f32 %v536, %v1756
      %v1758 = vpop.f32.mrf.mxu0
      %v1759 = vpop.f32.mrf.mxu0
      %v1760 = vadd.f32 %v536, %v1759
      %v1761 = vpop.f32.mrf.mxu0
      %1762 = vmatprep.mubr.bf16.mxu0 %v1014
      %1763 = vmatmul.mubr.bf16.gmra.mxu0 %v1013
      %v1764 = vpop.f32.mrf.mxu0
      %v1765 = vadd.f32 %v536, %v1764
      %v1766 = vpop.f32.mrf.mxu0
      %v1767 = vpop.f32.mrf.mxu0
      %v1768 = vadd.f32 %v536, %v1767
      %v1769 = vpop.f32.mrf.mxu0
      %1770 = vmatprep.mubr.bf16.mxu0 %v1023
      %1771 = vmatmul.mubr.bf16.gmra.mxu0 %v1022
      %v1772 = vpop.f32.mrf.mxu0
      %v1773 = vadd.f32 %v536, %v1772
      %v1774 = vpop.f32.mrf.mxu0
      %v1775 = vpop.f32.mrf.mxu0
      %v1776 = vadd.f32 %v536, %v1775
      %v1777 = vpop.f32.mrf.mxu0
      %1778 = vmatprep.mubr.bf16.mxu0 %v1032
      %1779 = vmatmul.mubr.bf16.gmra.mxu0 %v1031
      %v1780 = vpop.f32.mrf.mxu0
      %v1781 = vadd.f32 %v536, %v1780
      %v1782 = vpop.f32.mrf.mxu0
      %v1783 = vpop.f32.mrf.mxu0
      %v1784 = vadd.f32 %v536, %v1783
      %v1785 = vpop.f32.mrf.mxu0
      %1786 = vmatprep.mubr.bf16.mxu0 %v1041
      %1787 = vmatmul.mubr.bf16.gmra.mxu0 %v1040
      %v1788 = vpop.f32.mrf.mxu0
      %v1789 = vadd.f32 %v536, %v1788
      %v1790 = vpop.f32.mrf.mxu0
      %v1791 = vpop.f32.mrf.mxu0
      %v1792 = vadd.f32 %v536, %v1791
      %v1793 = vpop.f32.mrf.mxu0
      %1794 = vmatprep.mubr.bf16.mxu0 %v1050
      %1795 = vmatmul.mubr.bf16.gmra.mxu0 %v1049
      %v1796 = vpop.f32.mrf.mxu0
      %v1797 = vadd.f32 %v536, %v1796
      %v1798 = vpop.f32.mrf.mxu0
      %v1799 = vpop.f32.mrf.mxu0
      %v1800 = vadd.f32 %v536, %v1799
      %v1801 = vpop.f32.mrf.mxu0
      %1802 = vmatprep.mubr.bf16.mxu0 %v1059
      %1803 = vmatmul.mubr.bf16.gmra.mxu0 %v1058
      %v1804 = vpop.f32.mrf.mxu0
      %v1805 = vadd.f32 %v536, %v1804
      %v1806 = vpop.f32.mrf.mxu0
      %v1807 = vpop.f32.mrf.mxu0
      %v1808 = vadd.f32 %v536, %v1807
      %v1809 = vpop.f32.mrf.mxu0
      %1810 = vmatprep.mubr.bf16.mxu0 %v1068
      %1811 = vmatmul.mubr.bf16.gmra.mxu0 %v1067
      %v1812 = vpop.f32.mrf.mxu0
      %v1813 = vadd.f32 %v536, %v1812
      %v1814 = vpop.f32.mrf.mxu0
      %v1815 = vpop.f32.mrf.mxu0
      %v1816 = vadd.f32 %v536, %v1815
      %v1817 = vpop.f32.mrf.mxu0
      %1818 = vmatprep.mubr.bf16.mxu0 %v1077
      %1819 = vmatmul.mubr.bf16.gmra.mxu0 %v1076
      %v1820 = vpop.f32.mrf.mxu0
      %v1821 = vadd.f32 %v536, %v1820
      %v1822 = vpop.f32.mrf.mxu0
      %v1823 = vpop.f32.mrf.mxu0
      %v1824 = vadd.f32 %v536, %v1823
      %v1825 = vpop.f32.mrf.mxu0
      %1826 = vmatprep.mubr.bf16.mxu0 %v1086
      %1827 = vmatmul.mubr.bf16.gmra.mxu0 %v1085
      %v1828 = vpop.f32.mrf.mxu0
      %v1829 = vadd.f32 %v536, %v1828
      %v1830 = vpop.f32.mrf.mxu0
      %v1831 = vpop.f32.mrf.mxu0
      %v1832 = vadd.f32 %v536, %v1831
      %v1833 = vpop.f32.mrf.mxu0
      %1834 = vmatprep.mubr.bf16.mxu0 %v1095
      %1835 = vmatmul.mubr.bf16.gmra.mxu0 %v1094
      %v1836 = vpop.f32.mrf.mxu0
      %v1837 = vadd.f32 %v536, %v1836
      %v1838 = vpop.f32.mrf.mxu0
      %v1839 = vpop.f32.mrf.mxu0
      %v1840 = vadd.f32 %v536, %v1839
      %v1841 = vpop.f32.mrf.mxu0
      %1842 = vmatprep.mubr.bf16.mxu0 %v1104
      %1843 = vmatmul.mubr.bf16.gmra.mxu0 %v1103
      %v1844 = vpop.f32.mrf.mxu0
      %v1845 = vadd.f32 %v536, %v1844
      %v1846 = vpop.f32.mrf.mxu0
      %v1847 = vpop.f32.mrf.mxu0
      %v1848 = vadd.f32 %v536, %v1847
      %v1849 = vpop.f32.mrf.mxu0
      %1850 = vmatprep.mubr.bf16.mxu0 %v1113
      %1851 = vmatmul.mubr.bf16.gmra.mxu0 %v1112
      %v1852 = vpop.f32.mrf.mxu0
      %v1853 = vadd.f32 %v536, %v1852
      %v1854 = vpop.f32.mrf.mxu0
      %v1855 = vpop.f32.mrf.mxu0
      %v1856 = vadd.f32 %v536, %v1855
      %v1857 = vpop.f32.mrf.mxu0
      %1858 = vmatprep.mubr.bf16.mxu0 %v1122
      %1859 = vmatmul.mubr.bf16.gmra.mxu0 %v1121
      %v1860 = vpop.f32.mrf.mxu0
      %v1861 = vadd.f32 %v536, %v1860
      %v1862 = vpop.f32.mrf.mxu0
      %v1863 = vpop.f32.mrf.mxu0
      %v1864 = vadd.f32 %v536, %v1863
      %v1865 = vpop.f32.mrf.mxu0
      %1866 = vdwg.mxu0
      %1867 = vmatprep.subr.bf16.mxu0 0
      %1868 = vmatpush1.bf16.msra.mxu0 %v1585
      %1869 = vmatprep.subr.bf16.mxu0 0
      %1870 = vmatpush1.bf16.msra.mxu0 %v1584
      %1871 = vmatprep.subr.bf16.mxu0 0
      %1872 = vmatpush1.bf16.msra.mxu0 %v1583
      %1873 = vmatprep.subr.bf16.mxu0 0
      %1874 = vmatpush1.bf16.msra.mxu0 %v1582
      %1875 = vmatprep.subr.bf16.mxu0 0
      %1876 = vmatpush1.bf16.msra.mxu0 %v1581
      %1877 = vmatprep.subr.bf16.mxu0 0
      %1878 = vmatpush1.bf16.msra.mxu0 %v1580
      %1879 = vmatprep.subr.bf16.mxu0 0
      %1880 = vmatpush1.bf16.msra.mxu0 %v1579
      %1881 = vmatprep.subr.bf16.mxu0 0
      %1882 = vmatpush1.bf16.msra.mxu0 %v1578
      %1883 = vmatprep.subr.bf16.mxu0 0
      %1884 = vmatpush2.bf16.msra.mxu0 %v1593
      %1885 = vmatprep.subr.bf16.mxu0 0
      %1886 = vmatpush2.bf16.msra.mxu0 %v1592
      %1887 = vmatprep.subr.bf16.mxu0 0
      %1888 = vmatpush2.bf16.msra.mxu0 %v1591
      %1889 = vmatprep.subr.bf16.mxu0 0
      %1890 = vmatpush2.bf16.msra.mxu0 %v1590
      %1891 = vmatprep.subr.bf16.mxu0 0
      %1892 = vmatpush2.bf16.msra.mxu0 %v1589
      %1893 = vmatprep.subr.bf16.mxu0 0
      %1894 = vmatpush2.bf16.msra.mxu0 %v1588
      %1895 = vmatprep.subr.bf16.mxu0 0
      %1896 = vmatpush2.bf16.msra.mxu0 %v1587
      %1897 = vmatprep.subr.bf16.mxu0 0
      %1898 = vmatpush2.bf16.msra.mxu0 %v1586
      %1899 = vmatprep.mubr.bf16.mxu0 %v989
      %1900 = vmatmul.mubr.bf16.gmra.mxu0 %v988
      %v1901 = vpop.f32.mrf.mxu0
      %v1902 = vadd.f32 %v1741, %v1901
      %v1903 = vpop.f32.mrf.mxu0
      %v1904 = vpop.f32.mrf.mxu0
      %v1905 = vadd.f32 %v1744, %v1904
      %v1906 = vpop.f32.mrf.mxu0
      %1907 = vmatprep.mubr.bf16.mxu0 %v998
      %1908 = vmatmul.mubr.bf16.gmra.mxu0 %v997
      %v1909 = vpop.f32.mrf.mxu0
      %v1910 = vadd.f32 %v1749, %v1909
      %v1911 = vpop.f32.mrf.mxu0
      %v1912 = vpop.f32.mrf.mxu0
      %v1913 = vadd.f32 %v1752, %v1912
      %v1914 = vpop.f32.mrf.mxu0
      %1915 = vmatprep.mubr.bf16.mxu0 %v1007
      %1916 = vmatmul.mubr.bf16.gmra.mxu0 %v1006
      %v1917 = vpop.f32.mrf.mxu0
      %v1918 = vadd.f32 %v1757, %v1917
      %v1919 = vpop.f32.mrf.mxu0
      %v1920 = vpop.f32.mrf.mxu0
      %v1921 = vadd.f32 %v1760, %v1920
      %v1922 = vpop.f32.mrf.mxu0
      %1923 = vmatprep.mubr.bf16.mxu0 %v1016
      %1924 = vmatmul.mubr.bf16.gmra.mxu0 %v1015
      %v1925 = vpop.f32.mrf.mxu0
      %v1926 = vadd.f32 %v1765, %v1925
      %v1927 = vpop.f32.mrf.mxu0
      %v1928 = vpop.f32.mrf.mxu0
      %v1929 = vadd.f32 %v1768, %v1928
      %v1930 = vpop.f32.mrf.mxu0
      %1931 = vmatprep.mubr.bf16.mxu0 %v1025
      %1932 = vmatmul.mubr.bf16.gmra.mxu0 %v1024
      %v1933 = vpop.f32.mrf.mxu0
      %v1934 = vadd.f32 %v1773, %v1933
      %v1935 = vpop.f32.mrf.mxu0
      %v1936 = vpop.f32.mrf.mxu0
      %v1937 = vadd.f32 %v1776, %v1936
      %v1938 = vpop.f32.mrf.mxu0
      %1939 = vmatprep.mubr.bf16.mxu0 %v1034
      %1940 = vmatmul.mubr.bf16.gmra.mxu0 %v1033
      %v1941 = vpop.f32.mrf.mxu0
      %v1942 = vadd.f32 %v1781, %v1941
      %v1943 = vpop.f32.mrf.mxu0
      %v1944 = vpop.f32.mrf.mxu0
      %v1945 = vadd.f32 %v1784, %v1944
      %v1946 = vpop.f32.mrf.mxu0
      %1947 = vmatprep.mubr.bf16.mxu0 %v1043
      %1948 = vmatmul.mubr.bf16.gmra.mxu0 %v1042
      %v1949 = vpop.f32.mrf.mxu0
      %v1950 = vadd.f32 %v1789, %v1949
      %v1951 = vpop.f32.mrf.mxu0
      %v1952 = vpop.f32.mrf.mxu0
      %v1953 = vadd.f32 %v1792, %v1952
      %v1954 = vpop.f32.mrf.mxu0
      %1955 = vmatprep.mubr.bf16.mxu0 %v1052
      %1956 = vmatmul.mubr.bf16.gmra.mxu0 %v1051
      %v1957 = vpop.f32.mrf.mxu0
      %v1958 = vadd.f32 %v1797, %v1957
      %v1959 = vpop.f32.mrf.mxu0
      %v1960 = vpop.f32.mrf.mxu0
      %v1961 = vadd.f32 %v1800, %v1960
      %v1962 = vpop.f32.mrf.mxu0
      %1963 = vmatprep.mubr.bf16.mxu0 %v1061
      %1964 = vmatmul.mubr.bf16.gmra.mxu0 %v1060
      %v1965 = vpop.f32.mrf.mxu0
      %v1966 = vadd.f32 %v1805, %v1965
      %v1967 = vpop.f32.mrf.mxu0
      %v1968 = vpop.f32.mrf.mxu0
      %v1969 = vadd.f32 %v1808, %v1968
      %v1970 = vpop.f32.mrf.mxu0
      %1971 = vmatprep.mubr.bf16.mxu0 %v1070
      %1972 = vmatmul.mubr.bf16.gmra.mxu0 %v1069
      %v1973 = vpop.f32.mrf.mxu0
      %v1974 = vadd.f32 %v1813, %v1973
      %v1975 = vpop.f32.mrf.mxu0
      %v1976 = vpop.f32.mrf.mxu0
      %v1977 = vadd.f32 %v1816, %v1976
      %v1978 = vpop.f32.mrf.mxu0
      %1979 = vmatprep.mubr.bf16.mxu0 %v1079
      %1980 = vmatmul.mubr.bf16.gmra.mxu0 %v1078
      %v1981 = vpop.f32.mrf.mxu0
      %v1982 = vadd.f32 %v1821, %v1981
      %v1983 = vpop.f32.mrf.mxu0
      %v1984 = vpop.f32.mrf.mxu0
      %v1985 = vadd.f32 %v1824, %v1984
      %v1986 = vpop.f32.mrf.mxu0
      %1987 = vmatprep.mubr.bf16.mxu0 %v1088
      %1988 = vmatmul.mubr.bf16.gmra.mxu0 %v1087
      %v1989 = vpop.f32.mrf.mxu0
      %v1990 = vadd.f32 %v1829, %v1989
      %v1991 = vpop.f32.mrf.mxu0
      %v1992 = vpop.f32.mrf.mxu0
      %v1993 = vadd.f32 %v1832, %v1992
      %v1994 = vpop.f32.mrf.mxu0
      %1995 = vmatprep.mubr.bf16.mxu0 %v1097
      %1996 = vmatmul.mubr.bf16.gmra.mxu0 %v1096
      %v1997 = vpop.f32.mrf.mxu0
      %v1998 = vadd.f32 %v1837, %v1997
      %v1999 = vpop.f32.mrf.mxu0
      %v2000 = vpop.f32.mrf.mxu0
      %v2001 = vadd.f32 %v1840, %v2000
      %v2002 = vpop.f32.mrf.mxu0
      %2003 = vmatprep.mubr.bf16.mxu0 %v1106
      %2004 = vmatmul.mubr.bf16.gmra.mxu0 %v1105
      %v2005 = vpop.f32.mrf.mxu0
      %v2006 = vadd.f32 %v1845, %v2005
      %v2007 = vpop.f32.mrf.mxu0
      %v2008 = vpop.f32.mrf.mxu0
      %v2009 = vadd.f32 %v1848, %v2008
      %v2010 = vpop.f32.mrf.mxu0
      %2011 = vmatprep.mubr.bf16.mxu0 %v1115
      %2012 = vmatmul.mubr.bf16.gmra.mxu0 %v1114
      %v2013 = vpop.f32.mrf.mxu0
      %v2014 = vadd.f32 %v1853, %v2013
      %v2015 = vpop.f32.mrf.mxu0
      %v2016 = vpop.f32.mrf.mxu0
      %v2017 = vadd.f32 %v1856, %v2016
      %v2018 = vpop.f32.mrf.mxu0
      %2019 = vmatprep.mubr.bf16.mxu0 %v1124
      %2020 = vmatmul.mubr.bf16.gmra.mxu0 %v1123
      %v2021 = vpop.f32.mrf.mxu0
      %v2022 = vadd.f32 %v1861, %v2021
      %v2023 = vpop.f32.mrf.mxu0
      %v2024 = vpop.f32.mrf.mxu0
      %v2025 = vadd.f32 %v1864, %v2024
      %v2026 = vpop.f32.mrf.mxu0
      %2027 = vdwg.mxu0
      %2028 = vmatprep.subr.bf16.mxu0 0
      %2029 = vmatpush1.bf16.msra.mxu0 %v1601
      %2030 = vmatprep.subr.bf16.mxu0 0
      %2031 = vmatpush1.bf16.msra.mxu0 %v1600
      %2032 = vmatprep.subr.bf16.mxu0 0
      %2033 = vmatpush1.bf16.msra.mxu0 %v1599
      %2034 = vmatprep.subr.bf16.mxu0 0
      %2035 = vmatpush1.bf16.msra.mxu0 %v1598
      %2036 = vmatprep.subr.bf16.mxu0 0
      %2037 = vmatpush1.bf16.msra.mxu0 %v1597
      %2038 = vmatprep.subr.bf16.mxu0 0
      %2039 = vmatpush1.bf16.msra.mxu0 %v1596
      %2040 = vmatprep.subr.bf16.mxu0 0
      %2041 = vmatpush1.bf16.msra.mxu0 %v1595
      %2042 = vmatprep.subr.bf16.mxu0 0
      %2043 = vmatpush1.bf16.msra.mxu0 %v1594
      %2044 = vmatprep.subr.bf16.mxu0 0
      %2045 = vmatpush2.bf16.msra.mxu0 %v1609
      %2046 = vmatprep.subr.bf16.mxu0 0
      %2047 = vmatpush2.bf16.msra.mxu0 %v1608
      %2048 = vmatprep.subr.bf16.mxu0 0
      %2049 = vmatpush2.bf16.msra.mxu0 %v1607
      %2050 = vmatprep.subr.bf16.mxu0 0
      %2051 = vmatpush2.bf16.msra.mxu0 %v1606
      %2052 = vmatprep.subr.bf16.mxu0 0
      %2053 = vmatpush2.bf16.msra.mxu0 %v1605
      %2054 = vmatprep.subr.bf16.mxu0 0
      %2055 = vmatpush2.bf16.msra.mxu0 %v1604
      %2056 = vmatprep.subr.bf16.mxu0 0
      %2057 = vmatpush2.bf16.msra.mxu0 %v1603
      %2058 = vmatprep.subr.bf16.mxu0 0
      %2059 = vmatpush2.bf16.msra.mxu0 %v1602
      %2060 = vmatprep.mubr.bf16.mxu0 %v991
      %2061 = vmatmul.mubr.bf16.gmra.mxu0 %v990
      %v2062 = vpop.f32.mrf.mxu0
      %v2063 = vadd.f32 %v1902, %v2062
      %v2064 = vpop.f32.mrf.mxu0
      %v2065 = vpop.f32.mrf.mxu0
      %v2066 = vadd.f32 %v1905, %v2065
      %v2067 = vpop.f32.mrf.mxu0
      %2068 = vmatprep.mubr.bf16.mxu0 %v1000
      %2069 = vmatmul.mubr.bf16.gmra.mxu0 %v999
      %v2070 = vpop.f32.mrf.mxu0
      %v2071 = vadd.f32 %v1910, %v2070
      %v2072 = vpop.f32.mrf.mxu0
      %v2073 = vpop.f32.mrf.mxu0
      %v2074 = vadd.f32 %v1913, %v2073
      %v2075 = vpop.f32.mrf.mxu0
      %2076 = vmatprep.mubr.bf16.mxu0 %v1009
      %2077 = vmatmul.mubr.bf16.gmra.mxu0 %v1008
      %v2078 = vpop.f32.mrf.mxu0
      %v2079 = vadd.f32 %v1918, %v2078
      %v2080 = vpop.f32.mrf.mxu0
      %v2081 = vpop.f32.mrf.mxu0
      %v2082 = vadd.f32 %v1921, %v2081
      %v2083 = vpop.f32.mrf.mxu0
      %2084 = vmatprep.mubr.bf16.mxu0 %v1018
      %2085 = vmatmul.mubr.bf16.gmra.mxu0 %v1017
      %v2086 = vpop.f32.mrf.mxu0
      %v2087 = vadd.f32 %v1926, %v2086
      %v2088 = vpop.f32.mrf.mxu0
      %v2089 = vpop.f32.mrf.mxu0
      %v2090 = vadd.f32 %v1929, %v2089
      %v2091 = vpop.f32.mrf.mxu0
      %2092 = vmatprep.mubr.bf16.mxu0 %v1027
      %2093 = vmatmul.mubr.bf16.gmra.mxu0 %v1026
      %v2094 = vpop.f32.mrf.mxu0
      %v2095 = vadd.f32 %v1934, %v2094
      %v2096 = vpop.f32.mrf.mxu0
      %v2097 = vpop.f32.mrf.mxu0
      %v2098 = vadd.f32 %v1937, %v2097
      %v2099 = vpop.f32.mrf.mxu0
      %2100 = vmatprep.mubr.bf16.mxu0 %v1036
      %2101 = vmatmul.mubr.bf16.gmra.mxu0 %v1035
      %v2102 = vpop.f32.mrf.mxu0
      %v2103 = vadd.f32 %v1942, %v2102
      %v2104 = vpop.f32.mrf.mxu0
      %v2105 = vpop.f32.mrf.mxu0
      %v2106 = vadd.f32 %v1945, %v2105
      %v2107 = vpop.f32.mrf.mxu0
      %2108 = vmatprep.mubr.bf16.mxu0 %v1045
      %2109 = vmatmul.mubr.bf16.gmra.mxu0 %v1044
      %v2110 = vpop.f32.mrf.mxu0
      %v2111 = vadd.f32 %v1950, %v2110
      %v2112 = vpop.f32.mrf.mxu0
      %v2113 = vpop.f32.mrf.mxu0
      %v2114 = vadd.f32 %v1953, %v2113
      %v2115 = vpop.f32.mrf.mxu0
      %2116 = vmatprep.mubr.bf16.mxu0 %v1054
      %2117 = vmatmul.mubr.bf16.gmra.mxu0 %v1053
      %v2118 = vpop.f32.mrf.mxu0
      %v2119 = vadd.f32 %v1958, %v2118
      %v2120 = vpop.f32.mrf.mxu0
      %v2121 = vpop.f32.mrf.mxu0
      %v2122 = vadd.f32 %v1961, %v2121
      %v2123 = vpop.f32.mrf.mxu0
      %2124 = vmatprep.mubr.bf16.mxu0 %v1063
      %2125 = vmatmul.mubr.bf16.gmra.mxu0 %v1062
      %v2126 = vpop.f32.mrf.mxu0
      %v2127 = vadd.f32 %v1966, %v2126
      %v2128 = vpop.f32.mrf.mxu0
      %v2129 = vpop.f32.mrf.mxu0
      %v2130 = vadd.f32 %v1969, %v2129
      %v2131 = vpop.f32.mrf.mxu0
      %2132 = vmatprep.mubr.bf16.mxu0 %v1072
      %2133 = vmatmul.mubr.bf16.gmra.mxu0 %v1071
      %v2134 = vpop.f32.mrf.mxu0
      %v2135 = vadd.f32 %v1974, %v2134
      %v2136 = vpop.f32.mrf.mxu0
      %v2137 = vpop.f32.mrf.mxu0
      %v2138 = vadd.f32 %v1977, %v2137
      %v2139 = vpop.f32.mrf.mxu0
      %2140 = vmatprep.mubr.bf16.mxu0 %v1081
      %2141 = vmatmul.mubr.bf16.gmra.mxu0 %v1080
      %v2142 = vpop.f32.mrf.mxu0
      %v2143 = vadd.f32 %v1982, %v2142
      %v2144 = vpop.f32.mrf.mxu0
      %v2145 = vpop.f32.mrf.mxu0
      %v2146 = vadd.f32 %v1985, %v2145
      %v2147 = vpop.f32.mrf.mxu0
      %2148 = vmatprep.mubr.bf16.mxu0 %v1090
      %2149 = vmatmul.mubr.bf16.gmra.mxu0 %v1089
      %v2150 = vpop.f32.mrf.mxu0
      %v2151 = vadd.f32 %v1990, %v2150
      %v2152 = vpop.f32.mrf.mxu0
      %v2153 = vpop.f32.mrf.mxu0
      %v2154 = vadd.f32 %v1993, %v2153
      %v2155 = vpop.f32.mrf.mxu0
      %2156 = vmatprep.mubr.bf16.mxu0 %v1099
      %2157 = vmatmul.mubr.bf16.gmra.mxu0 %v1098
      %v2158 = vpop.f32.mrf.mxu0
      %v2159 = vadd.f32 %v1998, %v2158
      %v2160 = vpop.f32.mrf.mxu0
      %v2161 = vpop.f32.mrf.mxu0
      %v2162 = vadd.f32 %v2001, %v2161
      %v2163 = vpop.f32.mrf.mxu0
      %2164 = vmatprep.mubr.bf16.mxu0 %v1108
      %2165 = vmatmul.mubr.bf16.gmra.mxu0 %v1107
      %v2166 = vpop.f32.mrf.mxu0
      %v2167 = vadd.f32 %v2006, %v2166
      %v2168 = vpop.f32.mrf.mxu0
      %v2169 = vpop.f32.mrf.mxu0
      %v2170 = vadd.f32 %v2009, %v2169
      %v2171 = vpop.f32.mrf.mxu0
      %2172 = vmatprep.mubr.bf16.mxu0 %v1117
      %2173 = vmatmul.mubr.bf16.gmra.mxu0 %v1116
      %v2174 = vpop.f32.mrf.mxu0
      %v2175 = vadd.f32 %v2014, %v2174
      %v2176 = vpop.f32.mrf.mxu0
      %v2177 = vpop.f32.mrf.mxu0
      %v2178 = vadd.f32 %v2017, %v2177
      %v2179 = vpop.f32.mrf.mxu0
      %2180 = vmatprep.mubr.bf16.mxu0 %v1126
      %2181 = vmatmul.mubr.bf16.gmra.mxu0 %v1125
      %v2182 = vpop.f32.mrf.mxu0
      %v2183 = vadd.f32 %v2022, %v2182
      %v2184 = vpop.f32.mrf.mxu0
      %v2185 = vpop.f32.mrf.mxu0
      %v2186 = vadd.f32 %v2025, %v2185
      %v2187 = vpop.f32.mrf.mxu0
      %2188 = vdwg.mxu0
      %2189 = vmatprep.subr.bf16.mxu0 0
      %2190 = vmatpush1.bf16.msra.mxu0 %v1617
      %2191 = vmatprep.subr.bf16.mxu0 0
      %2192 = vmatpush1.bf16.msra.mxu0 %v1616
      %2193 = vmatprep.subr.bf16.mxu0 0
      %2194 = vmatpush1.bf16.msra.mxu0 %v1615
      %2195 = vmatprep.subr.bf16.mxu0 0
      %2196 = vmatpush1.bf16.msra.mxu0 %v1614
      %2197 = vmatprep.subr.bf16.mxu0 0
      %2198 = vmatpush1.bf16.msra.mxu0 %v1613
      %2199 = vmatprep.subr.bf16.mxu0 0
      %2200 = vmatpush1.bf16.msra.mxu0 %v1612
      %2201 = vmatprep.subr.bf16.mxu0 0
      %2202 = vmatpush1.bf16.msra.mxu0 %v1611
      %2203 = vmatprep.subr.bf16.mxu0 0
      %2204 = vmatpush1.bf16.msra.mxu0 %v1610
      %2205 = vmatprep.subr.bf16.mxu0 0
      %2206 = vmatpush2.bf16.msra.mxu0 %v1625
      %2207 = vmatprep.subr.bf16.mxu0 0
      %2208 = vmatpush2.bf16.msra.mxu0 %v1624
      %2209 = vmatprep.subr.bf16.mxu0 0
      %2210 = vmatpush2.bf16.msra.mxu0 %v1623
      %2211 = vmatprep.subr.bf16.mxu0 0
      %2212 = vmatpush2.bf16.msra.mxu0 %v1622
      %2213 = vmatprep.subr.bf16.mxu0 0
      %2214 = vmatpush2.bf16.msra.mxu0 %v1621
      %2215 = vmatprep.subr.bf16.mxu0 0
      %2216 = vmatpush2.bf16.msra.mxu0 %v1620
      %2217 = vmatprep.subr.bf16.mxu0 0
      %2218 = vmatpush2.bf16.msra.mxu0 %v1619
      %2219 = vmatprep.subr.bf16.mxu0 0
      %2220 = vmatpush2.bf16.msra.mxu0 %v1618
      %2221 = vmatprep.mubr.bf16.mxu0 %v993
      %2222 = vmatmul.mubr.bf16.gmra.mxu0 %v992
      %v2223 = vpop.f32.mrf.mxu0
      %v2224 = vadd.f32 %v2063, %v2223
      %v2225 = vpop.f32.mrf.mxu0
      %v2226 = vpop.f32.mrf.mxu0
      %v2227 = vadd.f32 %v2066, %v2226
      %v2228 = vpop.f32.mrf.mxu0
      %2229 = vmatprep.mubr.bf16.mxu0 %v1002
      %2230 = vmatmul.mubr.bf16.gmra.mxu0 %v1001
      %v2231 = vpop.f32.mrf.mxu0
      %v2232 = vadd.f32 %v2071, %v2231
      %v2233 = vpop.f32.mrf.mxu0
      %v2234 = vpop.f32.mrf.mxu0
      %v2235 = vadd.f32 %v2074, %v2234
      %v2236 = vpop.f32.mrf.mxu0
      %2237 = vmatprep.mubr.bf16.mxu0 %v1011
      %2238 = vmatmul.mubr.bf16.gmra.mxu0 %v1010
      %v2239 = vpop.f32.mrf.mxu0
      %v2240 = vadd.f32 %v2079, %v2239
      %v2241 = vpop.f32.mrf.mxu0
      %v2242 = vpop.f32.mrf.mxu0
      %v2243 = vadd.f32 %v2082, %v2242
      %v2244 = vpop.f32.mrf.mxu0
      %2245 = vmatprep.mubr.bf16.mxu0 %v1020
      %2246 = vmatmul.mubr.bf16.gmra.mxu0 %v1019
      %v2247 = vpop.f32.mrf.mxu0
      %v2248 = vadd.f32 %v2087, %v2247
      %v2249 = vpop.f32.mrf.mxu0
      %v2250 = vpop.f32.mrf.mxu0
      %v2251 = vadd.f32 %v2090, %v2250
      %v2252 = vpop.f32.mrf.mxu0
      %2253 = vmatprep.mubr.bf16.mxu0 %v1029
      %2254 = vmatmul.mubr.bf16.gmra.mxu0 %v1028
      %v2255 = vpop.f32.mrf.mxu0
      %v2256 = vadd.f32 %v2095, %v2255
      %v2257 = vpop.f32.mrf.mxu0
      %v2258 = vpop.f32.mrf.mxu0
      %v2259 = vadd.f32 %v2098, %v2258
      %v2260 = vpop.f32.mrf.mxu0
      %2261 = vmatprep.mubr.bf16.mxu0 %v1038
      %2262 = vmatmul.mubr.bf16.gmra.mxu0 %v1037
      %v2263 = vpop.f32.mrf.mxu0
      %v2264 = vadd.f32 %v2103, %v2263
      %v2265 = vpop.f32.mrf.mxu0
      %v2266 = vpop.f32.mrf.mxu0
      %v2267 = vadd.f32 %v2106, %v2266
      %v2268 = vpop.f32.mrf.mxu0
      %2269 = vmatprep.mubr.bf16.mxu0 %v1047
      %2270 = vmatmul.mubr.bf16.gmra.mxu0 %v1046
      %v2271 = vpop.f32.mrf.mxu0
      %v2272 = vadd.f32 %v2111, %v2271
      %v2273 = vpop.f32.mrf.mxu0
      %v2274 = vpop.f32.mrf.mxu0
      %v2275 = vadd.f32 %v2114, %v2274
      %v2276 = vpop.f32.mrf.mxu0
      %2277 = vmatprep.mubr.bf16.mxu0 %v1056
      %2278 = vmatmul.mubr.bf16.gmra.mxu0 %v1055
      %v2279 = vpop.f32.mrf.mxu0
      %v2280 = vadd.f32 %v2119, %v2279
      %v2281 = vpop.f32.mrf.mxu0
      %v2282 = vpop.f32.mrf.mxu0
      %v2283 = vadd.f32 %v2122, %v2282
      %v2284 = vpop.f32.mrf.mxu0
      %2285 = vmatprep.mubr.bf16.mxu0 %v1065
      %2286 = vmatmul.mubr.bf16.gmra.mxu0 %v1064
      %v2287 = vpop.f32.mrf.mxu0
      %v2288 = vadd.f32 %v2127, %v2287
      %v2289 = vpop.f32.mrf.mxu0
      %v2290 = vpop.f32.mrf.mxu0
      %v2291 = vadd.f32 %v2130, %v2290
      %v2292 = vpop.f32.mrf.mxu0
      %2293 = vmatprep.mubr.bf16.mxu0 %v1074
      %2294 = vmatmul.mubr.bf16.gmra.mxu0 %v1073
      %v2295 = vpop.f32.mrf.mxu0
      %v2296 = vadd.f32 %v2135, %v2295
      %v2297 = vpop.f32.mrf.mxu0
      %v2298 = vpop.f32.mrf.mxu0
      %v2299 = vadd.f32 %v2138, %v2298
      %v2300 = vpop.f32.mrf.mxu0
      %2301 = vmatprep.mubr.bf16.mxu0 %v1083
      %2302 = vmatmul.mubr.bf16.gmra.mxu0 %v1082
      %v2303 = vpop.f32.mrf.mxu0
      %v2304 = vadd.f32 %v2143, %v2303
      %v2305 = vpop.f32.mrf.mxu0
      %v2306 = vpop.f32.mrf.mxu0
      %v2307 = vadd.f32 %v2146, %v2306
      %v2308 = vpop.f32.mrf.mxu0
      %2309 = vmatprep.mubr.bf16.mxu0 %v1092
      %2310 = vmatmul.mubr.bf16.gmra.mxu0 %v1091
      %v2311 = vpop.f32.mrf.mxu0
      %v2312 = vadd.f32 %v2151, %v2311
      %v2313 = vpop.f32.mrf.mxu0
      %v2314 = vpop.f32.mrf.mxu0
      %v2315 = vadd.f32 %v2154, %v2314
      %v2316 = vpop.f32.mrf.mxu0
      %2317 = vmatprep.mubr.bf16.mxu0 %v1101
      %2318 = vmatmul.mubr.bf16.gmra.mxu0 %v1100
      %v2319 = vpop.f32.mrf.mxu0
      %v2320 = vadd.f32 %v2159, %v2319
      %v2321 = vpop.f32.mrf.mxu0
      %v2322 = vpop.f32.mrf.mxu0
      %v2323 = vadd.f32 %v2162, %v2322
      %v2324 = vpop.f32.mrf.mxu0
      %2325 = vmatprep.mubr.bf16.mxu0 %v1110
      %2326 = vmatmul.mubr.bf16.gmra.mxu0 %v1109
      %v2327 = vpop.f32.mrf.mxu0
      %v2328 = vadd.f32 %v2167, %v2327
      %v2329 = vpop.f32.mrf.mxu0
      %v2330 = vpop.f32.mrf.mxu0
      %v2331 = vadd.f32 %v2170, %v2330
      %v2332 = vpop.f32.mrf.mxu0
      %2333 = vmatprep.mubr.bf16.mxu0 %v1119
      %2334 = vmatmul.mubr.bf16.gmra.mxu0 %v1118
      %v2335 = vpop.f32.mrf.mxu0
      %v2336 = vadd.f32 %v2175, %v2335
      %v2337 = vpop.f32.mrf.mxu0
      %v2338 = vpop.f32.mrf.mxu0
      %v2339 = vadd.f32 %v2178, %v2338
      %v2340 = vpop.f32.mrf.mxu0
      %2341 = vmatprep.mubr.bf16.mxu0 %v1128
      %2342 = vmatmul.mubr.bf16.gmra.mxu0 %v1127
      %v2343 = vpop.f32.mrf.mxu0
      %v2344 = vadd.f32 %v2183, %v2343
      %v2345 = vpop.f32.mrf.mxu0
      %v2346 = vpop.f32.mrf.mxu0
      %v2347 = vadd.f32 %v2186, %v2346
      %v2348 = vpop.f32.mrf.mxu0
      %2349 = vdwg.mxu0
      %2350 = vmatprep.subr.bf16.mxu0 0
      %2351 = vmatpush1.bf16.msra.mxu0 %v1633
      %2352 = vmatprep.subr.bf16.mxu0 0
      %2353 = vmatpush1.bf16.msra.mxu0 %v1632
      %2354 = vmatprep.subr.bf16.mxu0 0
      %2355 = vmatpush1.bf16.msra.mxu0 %v1631
      %2356 = vmatprep.subr.bf16.mxu0 0
      %2357 = vmatpush1.bf16.msra.mxu0 %v1630
      %2358 = vmatprep.subr.bf16.mxu0 0
      %2359 = vmatpush1.bf16.msra.mxu0 %v1629
      %2360 = vmatprep.subr.bf16.mxu0 0
      %2361 = vmatpush1.bf16.msra.mxu0 %v1628
      %2362 = vmatprep.subr.bf16.mxu0 0
      %2363 = vmatpush1.bf16.msra.mxu0 %v1627
      %2364 = vmatprep.subr.bf16.mxu0 0
      %2365 = vmatpush1.bf16.msra.mxu0 %v1626
      %2366 = vmatprep.subr.bf16.mxu0 0
      %2367 = vmatpush2.bf16.msra.mxu0 0
      %2368 = vmatprep.subr.bf16.mxu0 0
      %2369 = vmatpush2.bf16.msra.mxu0 0
      %2370 = vmatprep.subr.bf16.mxu0 0
      %2371 = vmatpush2.bf16.msra.mxu0 0
      %2372 = vmatprep.subr.bf16.mxu0 0
      %2373 = vmatpush2.bf16.msra.mxu0 0
      %2374 = vmatprep.subr.bf16.mxu0 0
      %2375 = vmatpush2.bf16.msra.mxu0 0
      %2376 = vmatprep.subr.bf16.mxu0 0
      %2377 = vmatpush2.bf16.msra.mxu0 0
      %2378 = vmatprep.subr.bf16.mxu0 0
      %2379 = vmatpush2.bf16.msra.mxu0 0
      %2380 = vmatprep.subr.bf16.mxu0 0
      %2381 = vmatpush2.bf16.msra.mxu0 0
      %2382 = vmatprep.mubr.bf16.mxu0 0
      %2383 = vmatmul.mubr.bf16.gmra.mxu0 %v994
      %v2384 = vpop.f32.mrf.mxu0
      %v2385 = vadd.f32 %v2224, %v2384
      %v2386 = vpop.f32.mrf.mxu0
      %v2387 = vpop.f32.mrf.mxu0
      %v2388 = vadd.f32 %v2227, %v2387
      %v2389 = vpop.f32.mrf.mxu0
      %2390 = vmatprep.mubr.bf16.mxu0 0
      %2391 = vmatmul.mubr.bf16.gmra.mxu0 %v1003
      %v2392 = vpop.f32.mrf.mxu0
      %v2393 = vadd.f32 %v2232, %v2392
      %v2394 = vpop.f32.mrf.mxu0
      %v2395 = vpop.f32.mrf.mxu0
      %v2396 = vadd.f32 %v2235, %v2395
      %v2397 = vpop.f32.mrf.mxu0
      %2398 = vmatprep.mubr.bf16.mxu0 0
      %2399 = vmatmul.mubr.bf16.gmra.mxu0 %v1012
      %v2400 = vpop.f32.mrf.mxu0
      %v2401 = vadd.f32 %v2240, %v2400
      %v2402 = vpop.f32.mrf.mxu0
      %v2403 = vpop.f32.mrf.mxu0
      %v2404 = vadd.f32 %v2243, %v2403
      %v2405 = vpop.f32.mrf.mxu0
      %2406 = vmatprep.mubr.bf16.mxu0 0
      %2407 = vmatmul.mubr.bf16.gmra.mxu0 %v1021
      %v2408 = vpop.f32.mrf.mxu0
      %v2409 = vadd.f32 %v2248, %v2408
      %v2410 = vpop.f32.mrf.mxu0
      %v2411 = vpop.f32.mrf.mxu0
      %v2412 = vadd.f32 %v2251, %v2411
      %v2413 = vpop.f32.mrf.mxu0
      %2414 = vmatprep.mubr.bf16.mxu0 0
      %2415 = vmatmul.mubr.bf16.gmra.mxu0 %v1030
      %v2416 = vpop.f32.mrf.mxu0
      %v2417 = vadd.f32 %v2256, %v2416
      %v2418 = vpop.f32.mrf.mxu0
      %v2419 = vpop.f32.mrf.mxu0
      %v2420 = vadd.f32 %v2259, %v2419
      %v2421 = vpop.f32.mrf.mxu0
      %2422 = vmatprep.mubr.bf16.mxu0 0
      %2423 = vmatmul.mubr.bf16.gmra.mxu0 %v1039
      %v2424 = vpop.f32.mrf.mxu0
      %v2425 = vadd.f32 %v2264, %v2424
      %v2426 = vpop.f32.mrf.mxu0
      %v2427 = vpop.f32.mrf.mxu0
      %v2428 = vadd.f32 %v2267, %v2427
      %v2429 = vpop.f32.mrf.mxu0
      %2430 = vmatprep.mubr.bf16.mxu0 0
      %2431 = vmatmul.mubr.bf16.gmra.mxu0 %v1048
      %v2432 = vpop.f32.mrf.mxu0
      %v2433 = vadd.f32 %v2272, %v2432
      %v2434 = vpop.f32.mrf.mxu0
      %v2435 = vpop.f32.mrf.mxu0
      %v2436 = vadd.f32 %v2275, %v2435
      %v2437 = vpop.f32.mrf.mxu0
      %2438 = vmatprep.mubr.bf16.mxu0 0
      %2439 = vmatmul.mubr.bf16.gmra.mxu0 %v1057
      %v2440 = vpop.f32.mrf.mxu0
      %v2441 = vadd.f32 %v2280, %v2440
      %v2442 = vpop.f32.mrf.mxu0
      %v2443 = vpop.f32.mrf.mxu0
      %v2444 = vadd.f32 %v2283, %v2443
      %v2445 = vpop.f32.mrf.mxu0
      %2446 = vmatprep.mubr.bf16.mxu0 0
      %2447 = vmatmul.mubr.bf16.gmra.mxu0 %v1066
      %v2448 = vpop.f32.mrf.mxu0
      %v2449 = vadd.f32 %v2288, %v2448
      %v2450 = vpop.f32.mrf.mxu0
      %v2451 = vpop.f32.mrf.mxu0
      %v2452 = vadd.f32 %v2291, %v2451
      %v2453 = vpop.f32.mrf.mxu0
      %2454 = vmatprep.mubr.bf16.mxu0 0
      %2455 = vmatmul.mubr.bf16.gmra.mxu0 %v1075
      %v2456 = vpop.f32.mrf.mxu0
      %v2457 = vadd.f32 %v2296, %v2456
      %v2458 = vpop.f32.mrf.mxu0
      %v2459 = vpop.f32.mrf.mxu0
      %v2460 = vadd.f32 %v2299, %v2459
      %v2461 = vpop.f32.mrf.mxu0
      %2462 = vmatprep.mubr.bf16.mxu0 0
      %2463 = vmatmul.mubr.bf16.gmra.mxu0 %v1084
      %v2464 = vpop.f32.mrf.mxu0
      %v2465 = vadd.f32 %v2304, %v2464
      %v2466 = vpop.f32.mrf.mxu0
      %v2467 = vpop.f32.mrf.mxu0
      %v2468 = vadd.f32 %v2307, %v2467
      %v2469 = vpop.f32.mrf.mxu0
      %2470 = vmatprep.mubr.bf16.mxu0 0
      %2471 = vmatmul.mubr.bf16.gmra.mxu0 %v1093
      %v2472 = vpop.f32.mrf.mxu0
      %v2473 = vadd.f32 %v2312, %v2472
      %v2474 = vpop.f32.mrf.mxu0
      %v2475 = vpop.f32.mrf.mxu0
      %v2476 = vadd.f32 %v2315, %v2475
      %v2477 = vpop.f32.mrf.mxu0
      %2478 = vmatprep.mubr.bf16.mxu0 0
      %2479 = vmatmul.mubr.bf16.gmra.mxu0 %v1102
      %v2480 = vpop.f32.mrf.mxu0
      %v2481 = vadd.f32 %v2320, %v2480
      %v2482 = vpop.f32.mrf.mxu0
      %v2483 = vpop.f32.mrf.mxu0
      %v2484 = vadd.f32 %v2323, %v2483
      %v2485 = vpop.f32.mrf.mxu0
      %2486 = vmatprep.mubr.bf16.mxu0 0
      %2487 = vmatmul.mubr.bf16.gmra.mxu0 %v1111
      %v2488 = vpop.f32.mrf.mxu0
      %v2489 = vadd.f32 %v2328, %v2488
      %v2490 = vpop.f32.mrf.mxu0
      %v2491 = vpop.f32.mrf.mxu0
      %v2492 = vadd.f32 %v2331, %v2491
      %v2493 = vpop.f32.mrf.mxu0
      %2494 = vmatprep.mubr.bf16.mxu0 0
      %2495 = vmatmul.mubr.bf16.gmra.mxu0 %v1120
      %v2496 = vpop.f32.mrf.mxu0
      %v2497 = vadd.f32 %v2336, %v2496
      %v2498 = vpop.f32.mrf.mxu0
      %v2499 = vpop.f32.mrf.mxu0
      %v2500 = vadd.f32 %v2339, %v2499
      %v2501 = vpop.f32.mrf.mxu0
      %2502 = vmatprep.mubr.bf16.mxu0 0
      %2503 = vmatmul.mubr.bf16.gmra.mxu0 %v1129
      %v2504 = vpop.f32.mrf.mxu0
      %v2505 = vadd.f32 %v2344, %v2504
      %v2506 = vpop.f32.mrf.mxu0
      %v2507 = vpop.f32.mrf.mxu0
      %v2508 = vadd.f32 %v2347, %v2507
      %v2509 = vpop.f32.mrf.mxu0
      %2510 = vdwg.mxu0
      %v2511 = vld [vmem:[%s218] sm:$0xff]
      %v2512 = vld [vmem:[%s218 + $0x8] sm:$0xff]
      %v2513 = vld [vmem:[%s218 + $0x10] sm:$0xff]
      %v2514 = vld [vmem:[%s218 + $0x18] sm:$0xff]
      %v2515 = vld [vmem:[%s218 + $0x20] sm:$0xff]
      %v2516 = vld [vmem:[%s218 + $0x28] sm:$0xff]
      %v2517 = vld [vmem:[%s218 + $0x30] sm:$0xff]
      %v2518 = vld [vmem:[%s218 + $0x38] sm:$0xff]
      %v2519 = vld [vmem:[%s218 + $0x40] sm:$0xff]
      %v2520 = vld [vmem:[%s218 + $0x48] sm:$0xff]
      %v2521 = vld [vmem:[%s218 + $0x50] sm:$0xff]
      %v2522 = vld [vmem:[%s218 + $0x58] sm:$0xff]
      %v2523 = vld [vmem:[%s218 + $0x60] sm:$0xff]
      %v2524 = vld [vmem:[%s218 + $0x68] sm:$0xff]
      %v2525 = vld [vmem:[%s218 + $0x70] sm:$0xff]
      %v2526 = vld [vmem:[%s218 + $0x78] sm:$0xff]
      %v2527 = vld [vmem:[%s218 + $0x80] sm:$0xff]
      %v2528 = vld [vmem:[%s218 + $0x88] sm:$0xff]
      %v2529 = vld [vmem:[%s218 + $0x90] sm:$0xff]
      %v2530 = vld [vmem:[%s218 + $0x98] sm:$0xff]
      %v2531 = vld [vmem:[%s218 + $0xa0] sm:$0xff]
      %v2532 = vld [vmem:[%s218 + $0xa8] sm:$0xff]
      %v2533 = vld [vmem:[%s218 + $0xb0] sm:$0xff]
      %v2534 = vld [vmem:[%s218 + $0xb8] sm:$0xff]
      %v2535 = vld [vmem:[%s218 + $0xc0] sm:$0xff]
      %v2536 = vld [vmem:[%s218 + $0xc8] sm:$0xff]
      %v2537 = vld [vmem:[%s218 + $0xd0] sm:$0xff]
      %v2538 = vld [vmem:[%s218 + $0xd8] sm:$0xff]
      %v2539 = vld [vmem:[%s218 + $0xe0] sm:$0xff]
      %v2540 = vld [vmem:[%s218 + $0xe8] sm:$0xff]
      %v2541 = vld [vmem:[%s218 + $0xf0] sm:$0xff]
      %v2542 = vld [vmem:[%s218 + $0xf8] sm:$0xff]
      %v2543 = vadd.f32 %v2385, %v2511
      %v2544 = vadd.f32 %v2388, %v2512
      %v2545 = vadd.f32 %v2393, %v2513
      %v2546 = vadd.f32 %v2396, %v2514
      %v2547 = vadd.f32 %v2401, %v2515
      %v2548 = vadd.f32 %v2404, %v2516
      %v2549 = vadd.f32 %v2409, %v2517
      %v2550 = vadd.f32 %v2412, %v2518
      %v2551 = vadd.f32 %v2417, %v2519
      %v2552 = vadd.f32 %v2420, %v2520
      %v2553 = vadd.f32 %v2425, %v2521
      %v2554 = vadd.f32 %v2428, %v2522
      %v2555 = vadd.f32 %v2433, %v2523
      %v2556 = vadd.f32 %v2436, %v2524
      %v2557 = vadd.f32 %v2441, %v2525
      %v2558 = vadd.f32 %v2444, %v2526
      %v2559 = vadd.f32 %v2449, %v2527
      %v2560 = vadd.f32 %v2452, %v2528
      %v2561 = vadd.f32 %v2457, %v2529
      %v2562 = vadd.f32 %v2460, %v2530
      %v2563 = vadd.f32 %v2465, %v2531
      %v2564 = vadd.f32 %v2468, %v2532
      %v2565 = vadd.f32 %v2473, %v2533
      %v2566 = vadd.f32 %v2476, %v2534
      %v2567 = vadd.f32 %v2481, %v2535
      %v2568 = vadd.f32 %v2484, %v2536
      %v2569 = vadd.f32 %v2489, %v2537
      %v2570 = vadd.f32 %v2492, %v2538
      %v2571 = vadd.f32 %v2497, %v2539
      %v2572 = vadd.f32 %v2500, %v2540
      %v2573 = vadd.f32 %v2505, %v2541
      %v2574 = vadd.f32 %v2508, %v2542
      %v2575 = vmax.f32 %v2543, 0.0
      %v2576 = vmax.f32 %v2544, 0.0
      %v2577 = vmax.f32 %v2545, 0.0
      %v2578 = vmax.f32 %v2546, 0.0
      %v2579 = vmax.f32 %v2547, 0.0
      %v2580 = vmax.f32 %v2548, 0.0
      %v2581 = vmax.f32 %v2549, 0.0
      %v2582 = vmax.f32 %v2550, 0.0
      %v2583 = vmax.f32 %v2551, 0.0
      %v2584 = vmax.f32 %v2552, 0.0
      %v2585 = vmax.f32 %v2553, 0.0
      %v2586 = vmax.f32 %v2554, 0.0
      %v2587 = vmax.f32 %v2555, 0.0
      %v2588 = vmax.f32 %v2556, 0.0
      %v2589 = vmax.f32 %v2557, 0.0
      %v2590 = vmax.f32 %v2558, 0.0
      %v2591 = vmax.f32 %v2559, 0.0
      %v2592 = vmax.f32 %v2560, 0.0
      %v2593 = vmax.f32 %v2561, 0.0
      %v2594 = vmax.f32 %v2562, 0.0
      %v2595 = vmax.f32 %v2563, 0.0
      %v2596 = vmax.f32 %v2564, 0.0
      %v2597 = vmax.f32 %v2565, 0.0
      %v2598 = vmax.f32 %v2566, 0.0
      %v2599 = vmax.f32 %v2567, 0.0
      %v2600 = vmax.f32 %v2568, 0.0
      %v2601 = vmax.f32 %v2569, 0.0
      %v2602 = vmax.f32 %v2570, 0.0
      %v2603 = vmax.f32 %v2571, 0.0
      %v2604 = vmax.f32 %v2572, 0.0
      %v2605 = vmax.f32 %v2573, 0.0
      %v2606 = vmax.f32 %v2574, 0.0
      %2607 = vst [vmem:[%s224] sm:$0xff] %v2575
      %2608 = vst [vmem:[%s224 + $0x8] sm:$0xff] %v2576
      %2609 = vst [vmem:[%s224 + $0x10] sm:$0xff] %v2577
      %2610 = vst [vmem:[%s224 + $0x18] sm:$0xff] %v2578
      %2611 = vst [vmem:[%s224 + $0x20] sm:$0xff] %v2579
      %2612 = vst [vmem:[%s224 + $0x28] sm:$0xff] %v2580
      %2613 = vst [vmem:[%s224 + $0x30] sm:$0xff] %v2581
      %2614 = vst [vmem:[%s224 + $0x38] sm:$0xff] %v2582
      %2615 = vst [vmem:[%s224 + $0x40] sm:$0xff] %v2583
      %2616 = vst [vmem:[%s224 + $0x48] sm:$0xff] %v2584
      %2617 = vst [vmem:[%s224 + $0x50] sm:$0xff] %v2585
      %2618 = vst [vmem:[%s224 + $0x58] sm:$0xff] %v2586
      %2619 = vst [vmem:[%s224 + $0x60] sm:$0xff] %v2587
      %2620 = vst [vmem:[%s224 + $0x68] sm:$0xff] %v2588
      %2621 = vst [vmem:[%s224 + $0x70] sm:$0xff] %v2589
      %2622 = vst [vmem:[%s224 + $0x78] sm:$0xff] %v2590
      %2623 = vst [vmem:[%s224 + $0x80] sm:$0xff] %v2591
      %2624 = vst [vmem:[%s224 + $0x88] sm:$0xff] %v2592
      %2625 = vst [vmem:[%s224 + $0x90] sm:$0xff] %v2593
      %2626 = vst [vmem:[%s224 + $0x98] sm:$0xff] %v2594
      %2627 = vst [vmem:[%s224 + $0xa0] sm:$0xff] %v2595
      %2628 = vst [vmem:[%s224 + $0xa8] sm:$0xff] %v2596
      %2629 = vst [vmem:[%s224 + $0xb0] sm:$0xff] %v2597
      %2630 = vst [vmem:[%s224 + $0xb8] sm:$0xff] %v2598
      %2631 = vst [vmem:[%s224 + $0xc0] sm:$0xff] %v2599
      %2632 = vst [vmem:[%s224 + $0xc8] sm:$0xff] %v2600
      %2633 = vst [vmem:[%s224 + $0xd0] sm:$0xff] %v2601
      %2634 = vst [vmem:[%s224 + $0xd8] sm:$0xff] %v2602
      %2635 = vst [vmem:[%s224 + $0xe0] sm:$0xff] %v2603
      %2636 = vst [vmem:[%s224 + $0xe8] sm:$0xff] %v2604
      %2637 = vst [vmem:[%s224 + $0xf0] sm:$0xff] %v2605
      %2638 = vst [vmem:[%s224 + $0xf8] sm:$0xff] %v2606
      %s2639 = smul.u32 32, %s15
      %p2640 = scmp.lt.s32.totalorder %s2639, 63
      %s2641 = scalar_select %p2640, %s2639, 63
      %s2642 = smul.addr %s2641, 8
      %s2643 = scalar_lea.vmem %s4, %s2642
      // Predicated region
      $region37: #{_lambda_.12} parent=35 // pred_check
        %p2644 = pneg %p127
      $region38: #{_lambda_.12} parent=35 // pred_check_branch
        %2646 = sbr.rel (%p2644) target = $region40
      $region39: #{_lambda_.12} parent=35 // pred_region
        %s2647 = smul.u32 32, %s15
      $region40: #{_lambda_.12} parent=35 // pred_fallthru
        _
    $region36: #{_lambda_.12} parent=5 // pred_fallthru
      _
    %p2648 = scmp.le.s32.totalorder 2, %s10
    // Predicated region
    $region41: #{_lambda_.12} parent=5 // pred_check
      %p2649 = pneg %p2648
    $region42: #{_lambda_.12} parent=5 // pred_check_branch
      %2651 = sbr.rel (%p2649) target = $region44
    $region43: #{_lambda_.12} parent=5 // pred_region
      %s2652 = ssub.s32 %s10, 2
      // Predicated region
      $region45: #{_lambda_.12} parent=43 // pred_check
        %p2653 = pneg %p133
      $region46: #{_lambda_.12} parent=43 // pred_check_branch
        %2655 = sbr.rel (%p2653) target = $region48
      $region47: #{_lambda_.12} parent=43 // pred_region
        %s2656 = smul.u32 32, %s16
        %p2657 = scmp.lt.s32.totalorder %s2656, 63
        %s2658 = scalar_select %p2657, %s2656, 63
        %s2659 = smul.addr %s2658, 8
        %s2660 = scalar_lea.vmem %s4, %s2659
      $region48: #{_lambda_.12} parent=43 // pred_fallthru
        _
    $region44: #{_lambda_.12} parent=5 // pred_fallthru
      _
  $region6: #{_lambda_.12} parent=0 // loop_footer
    %s14 = sadd.s32 1, %s10
  $region7: #{_lambda_.12} parent=0 // loop_footer_branch
    %9 = sbr.rel target = $region3
  $region8: #{_lambda_.12} parent=0 // loop_exit
    _

// kernel: _lambda_.16
$region0: #{_lambda_.16}
  #allocation0 [shape = 'u32[]', space=smem, size = 0x4, offset = 0x4, fixed_abs, tag = 'smem constant byte address 0x4 - core index']
  #allocation1 [shape = 'u32[144,128]{1,0:T(1,128)}', space=vmem, size = 0x12000, scoped, tag = 'internal scratch']
  %s0 = inlined_call_operand.vmem [shape: bf16[128,1152], index: 0, kind: input, shape index: {}]
  %s1 = inlined_call_operand.vmem [shape: bf16[1152,128], index: 1, kind: input, shape index: {}]
  %s2 = inlined_call_operand.vmem [shape: f32[1,128], index: 2, kind: input, shape index: {}]
  %s3 = inlined_call_operand.vmem [shape: f32[128,128], index: 3, kind: output, shape index: {}]
  %s4 = sld [smem:[#allocation0]]
  $region22: #{_lambda_.16} parent=0
    _
  %s6 = ssub.s32 1, %s4
  %s7 = scalar_select 0, %s6, %s4
  // Predicated region
  $region2: #{_lambda_.16} parent=0 // pred_check
    _
  $region3: #{_lambda_.16} parent=0 // pred_check_branch
    %9 = sbr.rel (0) target = $region5
  $region4: #{_lambda_.16} parent=0 // pred_region
    _
  $region5: #{_lambda_.16} parent=0 // pred_fallthru
    _
  // Predicated region
  $region6: #{_lambda_.16} parent=0 // pred_check
    _
  $region7: #{_lambda_.16} parent=0 // pred_check_branch
    %11 = sbr.rel (0) target = $region9
  $region8: #{_lambda_.16} parent=0 // pred_region
    _
  $region9: #{_lambda_.16} parent=0 // pred_fallthru
    _
  // Predicated region
  $region10: #{_lambda_.16} parent=0 // pred_check
    _
  $region11: #{_lambda_.16} parent=0 // pred_check_branch
    %13 = sbr.rel (0) target = $region13
  $region12: #{_lambda_.16} parent=0 // pred_region
    _
  $region13: #{_lambda_.16} parent=0 // pred_fallthru
    _
  %v15 = vld [vmem:[%s0] sm:$0xff]
  %v16 = vld [vmem:[%s0 + $0x8] sm:$0xff]
  %v17 = vld [vmem:[%s0 + $0x10] sm:$0xff]
  %v18 = vld [vmem:[%s0 + $0x18] sm:$0xff]
  %v19 = vld [vmem:[%s0 + $0x20] sm:$0xf]
  %v20 = vld [vmem:[%s0 + $0x24] sm:$0xff]
  %v21 = vld [vmem:[%s0 + $0x2c] sm:$0xff]
  %v22 = vld [vmem:[%s0 + $0x34] sm:$0xff]
  %v23 = vld [vmem:[%s0 + $0x3c] sm:$0xff]
  %v24 = vld [vmem:[%s0 + $0x44] sm:$0xf]
  %v25 = vld [vmem:[%s0 + $0x48] sm:$0xff]
  %v26 = vld [vmem:[%s0 + $0x50] sm:$0xff]
  %v27 = vld [vmem:[%s0 + $0x58] sm:$0xff]
  %v28 = vld [vmem:[%s0 + $0x60] sm:$0xff]
  %v29 = vld [vmem:[%s0 + $0x68] sm:$0xf]
  %v30 = vld [vmem:[%s0 + $0x6c] sm:$0xff]
  %v31 = vld [vmem:[%s0 + $0x74] sm:$0xff]
  %v32 = vld [vmem:[%s0 + $0x7c] sm:$0xff]
  %v33 = vld [vmem:[%s0 + $0x84] sm:$0xff]
  %v34 = vld [vmem:[%s0 + $0x8c] sm:$0xf]
  %v35 = vld [vmem:[%s0 + $0x90] sm:$0xff]
  %v36 = vld [vmem:[%s0 + $0x98] sm:$0xff]
  %v37 = vld [vmem:[%s0 + $0xa0] sm:$0xff]
  %v38 = vld [vmem:[%s0 + $0xa8] sm:$0xff]
  %v39 = vld [vmem:[%s0 + $0xb0] sm:$0xf]
  %v40 = vld [vmem:[%s0 + $0xb4] sm:$0xff]
  %v41 = vld [vmem:[%s0 + $0xbc] sm:$0xff]
  %v42 = vld [vmem:[%s0 + $0xc4] sm:$0xff]
  %v43 = vld [vmem:[%s0 + $0xcc] sm:$0xff]
  %v44 = vld [vmem:[%s0 + $0xd4] sm:$0xf]
  %v45 = vld [vmem:[%s0 + $0xd8] sm:$0xff]
  %v46 = vld [vmem:[%s0 + $0xe0] sm:$0xff]
  %v47 = vld [vmem:[%s0 + $0xe8] sm:$0xff]
  %v48 = vld [vmem:[%s0 + $0xf0] sm:$0xff]
  %v49 = vld [vmem:[%s0 + $0xf8] sm:$0xf]
  %v50 = vld [vmem:[%s0 + $0xfc] sm:$0xff]
  %v51 = vld [vmem:[%s0 + $0x104] sm:$0xff]
  %v52 = vld [vmem:[%s0 + $0x10c] sm:$0xff]
  %v53 = vld [vmem:[%s0 + $0x114] sm:$0xff]
  %v54 = vld [vmem:[%s0 + $0x11c] sm:$0xf]
  %v55 = vld [vmem:[%s0 + $0x120] sm:$0xff]
  %v56 = vld [vmem:[%s0 + $0x128] sm:$0xff]
  %v57 = vld [vmem:[%s0 + $0x130] sm:$0xff]
  %v58 = vld [vmem:[%s0 + $0x138] sm:$0xff]
  %v59 = vld [vmem:[%s0 + $0x140] sm:$0xf]
  %v60 = vld [vmem:[%s0 + $0x144] sm:$0xff]
  %v61 = vld [vmem:[%s0 + $0x14c] sm:$0xff]
  %v62 = vld [vmem:[%s0 + $0x154] sm:$0xff]
  %v63 = vld [vmem:[%s0 + $0x15c] sm:$0xff]
  %v64 = vld [vmem:[%s0 + $0x164] sm:$0xf]
  %v65 = vld [vmem:[%s0 + $0x168] sm:$0xff]
  %v66 = vld [vmem:[%s0 + $0x170] sm:$0xff]
  %v67 = vld [vmem:[%s0 + $0x178] sm:$0xff]
  %v68 = vld [vmem:[%s0 + $0x180] sm:$0xff]
  %v69 = vld [vmem:[%s0 + $0x188] sm:$0xf]
  %v70 = vld [vmem:[%s0 + $0x18c] sm:$0xff]
  %v71 = vld [vmem:[%s0 + $0x194] sm:$0xff]
  %v72 = vld [vmem:[%s0 + $0x19c] sm:$0xff]
  %v73 = vld [vmem:[%s0 + $0x1a4] sm:$0xff]
  %v74 = vld [vmem:[%s0 + $0x1ac] sm:$0xf]
  %v75 = vld [vmem:[%s0 + $0x1b0] sm:$0xff]
  %v76 = vld [vmem:[%s0 + $0x1b8] sm:$0xff]
  %v77 = vld [vmem:[%s0 + $0x1c0] sm:$0xff]
  %v78 = vld [vmem:[%s0 + $0x1c8] sm:$0xff]
  %v79 = vld [vmem:[%s0 + $0x1d0] sm:$0xf]
  %v80 = vld [vmem:[%s0 + $0x1d4] sm:$0xff]
  %v81 = vld [vmem:[%s0 + $0x1dc] sm:$0xff]
  %v82 = vld [vmem:[%s0 + $0x1e4] sm:$0xff]
  %v83 = vld [vmem:[%s0 + $0x1ec] sm:$0xff]
  %v84 = vld [vmem:[%s0 + $0x1f4] sm:$0xf]
  %v85 = vld [vmem:[%s0 + $0x1f8] sm:$0xff]
  %v86 = vld [vmem:[%s0 + $0x200] sm:$0xff]
  %v87 = vld [vmem:[%s0 + $0x208] sm:$0xff]
  %v88 = vld [vmem:[%s0 + $0x210] sm:$0xff]
  %v89 = vld [vmem:[%s0 + $0x218] sm:$0xf]
  %v90 = vld [vmem:[%s0 + $0x21c] sm:$0xff]
  %v91 = vld [vmem:[%s0 + $0x224] sm:$0xff]
  %v92 = vld [vmem:[%s0 + $0x22c] sm:$0xff]
  %v93 = vld [vmem:[%s0 + $0x234] sm:$0xff]
  %v94 = vld [vmem:[%s0 + $0x23c] sm:$0xf]
  %v95 = vld [vmem:[%s1] sm:$0xf]
  %v96 = vld [vmem:[%s1 + $0x4] sm:$0xf]
  %v97 = vld [vmem:[%s1 + $0x8] sm:$0xf]
  %v98 = vld [vmem:[%s1 + $0xc] sm:$0xf]
  %v99 = vld [vmem:[%s1 + $0x10] sm:$0xf]
  %v100 = vld [vmem:[%s1 + $0x14] sm:$0xf]
  %v101 = vld [vmem:[%s1 + $0x18] sm:$0xf]
  %v102 = vld [vmem:[%s1 + $0x1c] sm:$0xf]
  %v103 = vld [vmem:[%s1 + $0x20] sm:$0xf]
  %v104 = vld [vmem:[%s1 + $0x24] sm:$0xf]
  %v105 = vld [vmem:[%s1 + $0x28] sm:$0xf]
  %v106 = vld [vmem:[%s1 + $0x2c] sm:$0xf]
  %v107 = vld [vmem:[%s1 + $0x30] sm:$0xf]
  %v108 = vld [vmem:[%s1 + $0x34] sm:$0xf]
  %v109 = vld [vmem:[%s1 + $0x38] sm:$0xf]
  %v110 = vld [vmem:[%s1 + $0x3c] sm:$0xf]
  %v111 = vld [vmem:[%s1 + $0x40] sm:$0xf]
  %v112 = vld [vmem:[%s1 + $0x44] sm:$0xf]
  %v113 = vld [vmem:[%s1 + $0x48] sm:$0xf]
  %v114 = vld [vmem:[%s1 + $0x4c] sm:$0xf]
  %v115 = vld [vmem:[%s1 + $0x50] sm:$0xf]
  %v116 = vld [vmem:[%s1 + $0x54] sm:$0xf]
  %v117 = vld [vmem:[%s1 + $0x58] sm:$0xf]
  %v118 = vld [vmem:[%s1 + $0x5c] sm:$0xf]
  %v119 = vld [vmem:[%s1 + $0x60] sm:$0xf]
  %v120 = vld [vmem:[%s1 + $0x64] sm:$0xf]
  %v121 = vld [vmem:[%s1 + $0x68] sm:$0xf]
  %v122 = vld [vmem:[%s1 + $0x6c] sm:$0xf]
  %v123 = vld [vmem:[%s1 + $0x70] sm:$0xf]
  %v124 = vld [vmem:[%s1 + $0x74] sm:$0xf]
  %v125 = vld [vmem:[%s1 + $0x78] sm:$0xf]
  %v126 = vld [vmem:[%s1 + $0x7c] sm:$0xf]
  %v127 = vld [vmem:[%s1 + $0x80] sm:$0xf]
  %v128 = vld [vmem:[%s1 + $0x84] sm:$0xf]
  %v129 = vld [vmem:[%s1 + $0x88] sm:$0xf]
  %v130 = vld [vmem:[%s1 + $0x8c] sm:$0xf]
  %v131 = vld [vmem:[%s1 + $0x90] sm:$0xf]
  %v132 = vld [vmem:[%s1 + $0x94] sm:$0xf]
  %v133 = vld [vmem:[%s1 + $0x98] sm:$0xf]
  %v134 = vld [vmem:[%s1 + $0x9c] sm:$0xf]
  %v135 = vld [vmem:[%s1 + $0xa0] sm:$0xf]
  %v136 = vld [vmem:[%s1 + $0xa4] sm:$0xf]
  %v137 = vld [vmem:[%s1 + $0xa8] sm:$0xf]
  %v138 = vld [vmem:[%s1 + $0xac] sm:$0xf]
  %v139 = vld [vmem:[%s1 + $0xb0] sm:$0xf]
  %v140 = vld [vmem:[%s1 + $0xb4] sm:$0xf]
  %v141 = vld [vmem:[%s1 + $0xb8] sm:$0xf]
  %v142 = vld [vmem:[%s1 + $0xbc] sm:$0xf]
  %v143 = vld [vmem:[%s1 + $0xc0] sm:$0xf]
  %v144 = vld [vmem:[%s1 + $0xc4] sm:$0xf]
  %v145 = vld [vmem:[%s1 + $0xc8] sm:$0xf]
  %v146 = vld [vmem:[%s1 + $0xcc] sm:$0xf]
  %v147 = vld [vmem:[%s1 + $0xd0] sm:$0xf]
  %v148 = vld [vmem:[%s1 + $0xd4] sm:$0xf]
  %v149 = vld [vmem:[%s1 + $0xd8] sm:$0xf]
  %v150 = vld [vmem:[%s1 + $0xdc] sm:$0xf]
  %v151 = vld [vmem:[%s1 + $0xe0] sm:$0xf]
  %v152 = vld [vmem:[%s1 + $0xe4] sm:$0xf]
  %v153 = vld [vmem:[%s1 + $0xe8] sm:$0xf]
  %v154 = vld [vmem:[%s1 + $0xec] sm:$0xf]
  %v155 = vld [vmem:[%s1 + $0xf0] sm:$0xf]
  %v156 = vld [vmem:[%s1 + $0xf4] sm:$0xf]
  %v157 = vld [vmem:[%s1 + $0xf8] sm:$0xf]
  %v158 = vld [vmem:[%s1 + $0xfc] sm:$0xf]
  %v159 = vld [vmem:[%s1 + $0x100] sm:$0xf]
  %v160 = vld [vmem:[%s1 + $0x104] sm:$0xf]
  %v161 = vld [vmem:[%s1 + $0x108] sm:$0xf]
  %v162 = vld [vmem:[%s1 + $0x10c] sm:$0xf]
  %v163 = vld [vmem:[%s1 + $0x110] sm:$0xf]
  %v164 = vld [vmem:[%s1 + $0x114] sm:$0xf]
  %v165 = vld [vmem:[%s1 + $0x118] sm:$0xf]
  %v166 = vld [vmem:[%s1 + $0x11c] sm:$0xf]
  %v167 = vld [vmem:[%s1 + $0x120] sm:$0xf]
  %v168 = vld [vmem:[%s1 + $0x124] sm:$0xf]
  %v169 = vld [vmem:[%s1 + $0x128] sm:$0xf]
  %v170 = vld [vmem:[%s1 + $0x12c] sm:$0xf]
  %v171 = vld [vmem:[%s1 + $0x130] sm:$0xf]
  %v172 = vld [vmem:[%s1 + $0x134] sm:$0xf]
  %v173 = vld [vmem:[%s1 + $0x138] sm:$0xf]
  %v174 = vld [vmem:[%s1 + $0x13c] sm:$0xf]
  %v175 = vld [vmem:[%s1 + $0x140] sm:$0xf]
  %v176 = vld [vmem:[%s1 + $0x144] sm:$0xf]
  %v177 = vld [vmem:[%s1 + $0x148] sm:$0xf]
  %v178 = vld [vmem:[%s1 + $0x14c] sm:$0xf]
  %v179 = vld [vmem:[%s1 + $0x150] sm:$0xf]
  %v180 = vld [vmem:[%s1 + $0x154] sm:$0xf]
  %v181 = vld [vmem:[%s1 + $0x158] sm:$0xf]
  %v182 = vld [vmem:[%s1 + $0x15c] sm:$0xf]
  %v183 = vld [vmem:[%s1 + $0x160] sm:$0xf]
  %v184 = vld [vmem:[%s1 + $0x164] sm:$0xf]
  %v185 = vld [vmem:[%s1 + $0x168] sm:$0xf]
  %v186 = vld [vmem:[%s1 + $0x16c] sm:$0xf]
  %v187 = vld [vmem:[%s1 + $0x170] sm:$0xf]
  %v188 = vld [vmem:[%s1 + $0x174] sm:$0xf]
  %v189 = vld [vmem:[%s1 + $0x178] sm:$0xf]
  %v190 = vld [vmem:[%s1 + $0x17c] sm:$0xf]
  %v191 = vld [vmem:[%s1 + $0x180] sm:$0xf]
  %v192 = vld [vmem:[%s1 + $0x184] sm:$0xf]
  %v193 = vld [vmem:[%s1 + $0x188] sm:$0xf]
  %v194 = vld [vmem:[%s1 + $0x18c] sm:$0xf]
  %v195 = vld [vmem:[%s1 + $0x190] sm:$0xf]
  %v196 = vld [vmem:[%s1 + $0x194] sm:$0xf]
  %v197 = vld [vmem:[%s1 + $0x198] sm:$0xf]
  %v198 = vld [vmem:[%s1 + $0x19c] sm:$0xf]
  %v199 = vld [vmem:[%s1 + $0x1a0] sm:$0xf]
  %v200 = vld [vmem:[%s1 + $0x1a4] sm:$0xf]
  %v201 = vld [vmem:[%s1 + $0x1a8] sm:$0xf]
  %v202 = vld [vmem:[%s1 + $0x1ac] sm:$0xf]
  %v203 = vld [vmem:[%s1 + $0x1b0] sm:$0xf]
  %v204 = vld [vmem:[%s1 + $0x1b4] sm:$0xf]
  %v205 = vld [vmem:[%s1 + $0x1b8] sm:$0xf]
  %v206 = vld [vmem:[%s1 + $0x1bc] sm:$0xf]
  %v207 = vld [vmem:[%s1 + $0x1c0] sm:$0xf]
  %v208 = vld [vmem:[%s1 + $0x1c4] sm:$0xf]
  %v209 = vld [vmem:[%s1 + $0x1c8] sm:$0xf]
  %v210 = vld [vmem:[%s1 + $0x1cc] sm:$0xf]
  %v211 = vld [vmem:[%s1 + $0x1d0] sm:$0xf]
  %v212 = vld [vmem:[%s1 + $0x1d4] sm:$0xf]
  %v213 = vld [vmem:[%s1 + $0x1d8] sm:$0xf]
  %v214 = vld [vmem:[%s1 + $0x1dc] sm:$0xf]
  %v215 = vld [vmem:[%s1 + $0x1e0] sm:$0xf]
  %v216 = vld [vmem:[%s1 + $0x1e4] sm:$0xf]
  %v217 = vld [vmem:[%s1 + $0x1e8] sm:$0xf]
  %v218 = vld [vmem:[%s1 + $0x1ec] sm:$0xf]
  %v219 = vld [vmem:[%s1 + $0x1f0] sm:$0xf]
  %v220 = vld [vmem:[%s1 + $0x1f4] sm:$0xf]
  %v221 = vld [vmem:[%s1 + $0x1f8] sm:$0xf]
  %v222 = vld [vmem:[%s1 + $0x1fc] sm:$0xf]
  %v223 = vld [vmem:[%s1 + $0x200] sm:$0xf]
  %v224 = vld [vmem:[%s1 + $0x204] sm:$0xf]
  %v225 = vld [vmem:[%s1 + $0x208] sm:$0xf]
  %v226 = vld [vmem:[%s1 + $0x20c] sm:$0xf]
  %v227 = vld [vmem:[%s1 + $0x210] sm:$0xf]
  %v228 = vld [vmem:[%s1 + $0x214] sm:$0xf]
  %v229 = vld [vmem:[%s1 + $0x218] sm:$0xf]
  %v230 = vld [vmem:[%s1 + $0x21c] sm:$0xf]
  %v231 = vld [vmem:[%s1 + $0x220] sm:$0xf]
  %v232 = vld [vmem:[%s1 + $0x224] sm:$0xf]
  %v233 = vld [vmem:[%s1 + $0x228] sm:$0xf]
  %v234 = vld [vmem:[%s1 + $0x22c] sm:$0xf]
  %v235 = vld [vmem:[%s1 + $0x230] sm:$0xf]
  %v236 = vld [vmem:[%s1 + $0x234] sm:$0xf]
  %v237 = vld [vmem:[%s1 + $0x238] sm:$0xf]
  %v238 = vld [vmem:[%s1 + $0x23c] sm:$0xf]
  %v239 = vld [vmem:[%s2] sm:$0x1]
  %v241 = vlaneseq
  %v242 = vshrl.u32 %v241, 7
  %v243 = vsub.s32 0, %v242
  %v244 = vrot.slane %v239, %v243
  %v326 = vunpack.c.l.b16 %v15
  %v327 = vunpack.c.h.b16 %v15
  %v328 = vunpack.c.l.b16 %v16
  %v329 = vunpack.c.h.b16 %v16
  %v330 = vunpack.c.l.b16 %v17
  %v331 = vunpack.c.h.b16 %v17
  %v332 = vunpack.c.l.b16 %v18
  %v333 = vunpack.c.h.b16 %v18
  %v334 = vunpack.c.l.b16 %v19
  %v335 = vunpack.c.l.b16 %v20
  %v336 = vunpack.c.h.b16 %v20
  %v337 = vunpack.c.l.b16 %v21
  %v338 = vunpack.c.h.b16 %v21
  %v339 = vunpack.c.l.b16 %v22
  %v340 = vunpack.c.h.b16 %v22
  %v341 = vunpack.c.l.b16 %v23
  %v342 = vunpack.c.h.b16 %v23
  %v343 = vunpack.c.l.b16 %v24
  %v344 = vunpack.c.l.b16 %v25
  %v345 = vunpack.c.h.b16 %v25
  %v346 = vunpack.c.l.b16 %v26
  %v347 = vunpack.c.h.b16 %v26
  %v348 = vunpack.c.l.b16 %v27
  %v349 = vunpack.c.h.b16 %v27
  %v350 = vunpack.c.l.b16 %v28
  %v351 = vunpack.c.h.b16 %v28
  %v352 = vunpack.c.l.b16 %v29
  %v353 = vunpack.c.l.b16 %v30
  %v354 = vunpack.c.h.b16 %v30
  %v355 = vunpack.c.l.b16 %v31
  %v356 = vunpack.c.h.b16 %v31
  %v357 = vunpack.c.l.b16 %v32
  %v358 = vunpack.c.h.b16 %v32
  %v359 = vunpack.c.l.b16 %v33
  %v360 = vunpack.c.h.b16 %v33
  %v361 = vunpack.c.l.b16 %v34
  %v362 = vunpack.c.l.b16 %v35
  %v363 = vunpack.c.h.b16 %v35
  %v364 = vunpack.c.l.b16 %v36
  %v365 = vunpack.c.h.b16 %v36
  %v366 = vunpack.c.l.b16 %v37
  %v367 = vunpack.c.h.b16 %v37
  %v368 = vunpack.c.l.b16 %v38
  %v369 = vunpack.c.h.b16 %v38
  %v370 = vunpack.c.l.b16 %v39
  %v371 = vunpack.c.l.b16 %v40
  %v372 = vunpack.c.h.b16 %v40
  %v373 = vunpack.c.l.b16 %v41
  %v374 = vunpack.c.h.b16 %v41
  %v375 = vunpack.c.l.b16 %v42
  %v376 = vunpack.c.h.b16 %v42
  %v377 = vunpack.c.l.b16 %v43
  %v378 = vunpack.c.h.b16 %v43
  %v379 = vunpack.c.l.b16 %v44
  %v380 = vunpack.c.l.b16 %v45
  %v381 = vunpack.c.h.b16 %v45
  %v382 = vunpack.c.l.b16 %v46
  %v383 = vunpack.c.h.b16 %v46
  %v384 = vunpack.c.l.b16 %v47
  %v385 = vunpack.c.h.b16 %v47
  %v386 = vunpack.c.l.b16 %v48
  %v387 = vunpack.c.h.b16 %v48
  %v388 = vunpack.c.l.b16 %v49
  %v389 = vunpack.c.l.b16 %v50
  %v390 = vunpack.c.h.b16 %v50
  %v391 = vunpack.c.l.b16 %v51
  %v392 = vunpack.c.h.b16 %v51
  %v393 = vunpack.c.l.b16 %v52
  %v394 = vunpack.c.h.b16 %v52
  %v395 = vunpack.c.l.b16 %v53
  %v396 = vunpack.c.h.b16 %v53
  %v397 = vunpack.c.l.b16 %v54
  %v398 = vunpack.c.l.b16 %v55
  %v399 = vunpack.c.h.b16 %v55
  %v400 = vunpack.c.l.b16 %v56
  %v401 = vunpack.c.h.b16 %v56
  %v402 = vunpack.c.l.b16 %v57
  %v403 = vunpack.c.h.b16 %v57
  %v404 = vunpack.c.l.b16 %v58
  %v405 = vunpack.c.h.b16 %v58
  %v406 = vunpack.c.l.b16 %v59
  %v407 = vunpack.c.l.b16 %v60
  %v408 = vunpack.c.h.b16 %v60
  %v409 = vunpack.c.l.b16 %v61
  %v410 = vunpack.c.h.b16 %v61
  %v411 = vunpack.c.l.b16 %v62
  %v412 = vunpack.c.h.b16 %v62
  %v413 = vunpack.c.l.b16 %v63
  %v414 = vunpack.c.h.b16 %v63
  %v415 = vunpack.c.l.b16 %v64
  %v416 = vunpack.c.l.b16 %v65
  %v417 = vunpack.c.h.b16 %v65
  %v418 = vunpack.c.l.b16 %v66
  %v419 = vunpack.c.h.b16 %v66
  %v420 = vunpack.c.l.b16 %v67
  %v421 = vunpack.c.h.b16 %v67
  %v422 = vunpack.c.l.b16 %v68
  %v423 = vunpack.c.h.b16 %v68
  %v424 = vunpack.c.l.b16 %v69
  %v425 = vunpack.c.l.b16 %v70
  %v426 = vunpack.c.h.b16 %v70
  %v427 = vunpack.c.l.b16 %v71
  %v428 = vunpack.c.h.b16 %v71
  %v429 = vunpack.c.l.b16 %v72
  %v430 = vunpack.c.h.b16 %v72
  %v431 = vunpack.c.l.b16 %v73
  %v432 = vunpack.c.h.b16 %v73
  %v433 = vunpack.c.l.b16 %v74
  %v434 = vunpack.c.l.b16 %v75
  %v435 = vunpack.c.h.b16 %v75
  %v436 = vunpack.c.l.b16 %v76
  %v437 = vunpack.c.h.b16 %v76
  %v438 = vunpack.c.l.b16 %v77
  %v439 = vunpack.c.h.b16 %v77
  %v440 = vunpack.c.l.b16 %v78
  %v441 = vunpack.c.h.b16 %v78
  %v442 = vunpack.c.l.b16 %v79
  %v443 = vunpack.c.l.b16 %v80
  %v444 = vunpack.c.h.b16 %v80
  %v445 = vunpack.c.l.b16 %v81
  %v446 = vunpack.c.h.b16 %v81
  %v447 = vunpack.c.l.b16 %v82
  %v448 = vunpack.c.h.b16 %v82
  %v449 = vunpack.c.l.b16 %v83
  %v450 = vunpack.c.h.b16 %v83
  %v451 = vunpack.c.l.b16 %v84
  %v452 = vunpack.c.l.b16 %v85
  %v453 = vunpack.c.h.b16 %v85
  %v454 = vunpack.c.l.b16 %v86
  %v455 = vunpack.c.h.b16 %v86
  %v456 = vunpack.c.l.b16 %v87
  %v457 = vunpack.c.h.b16 %v87
  %v458 = vunpack.c.l.b16 %v88
  %v459 = vunpack.c.h.b16 %v88
  %v460 = vunpack.c.l.b16 %v89
  %v461 = vunpack.c.l.b16 %v90
  %v462 = vunpack.c.h.b16 %v90
  %v463 = vunpack.c.l.b16 %v91
  %v464 = vunpack.c.h.b16 %v91
  %v465 = vunpack.c.l.b16 %v92
  %v466 = vunpack.c.h.b16 %v92
  %v467 = vunpack.c.l.b16 %v93
  %v468 = vunpack.c.h.b16 %v93
  %v469 = vunpack.c.l.b16 %v94
  %v470 = vpack.c.b16 %v335, %v326
  %v471 = vpack.c.b16 %v336, %v327
  %v472 = vpack.c.b16 %v337, %v328
  %v473 = vpack.c.b16 %v338, %v329
  %v474 = vpack.c.b16 %v339, %v330
  %v475 = vpack.c.b16 %v340, %v331
  %v476 = vpack.c.b16 %v341, %v332
  %v477 = vpack.c.b16 %v342, %v333
  %v478 = vpack.c.b16 %v343, %v334
  %v479 = vpack.c.b16 %v353, %v344
  %v480 = vpack.c.b16 %v354, %v345
  %v481 = vpack.c.b16 %v355, %v346
  %v482 = vpack.c.b16 %v356, %v347
  %v483 = vpack.c.b16 %v357, %v348
  %v484 = vpack.c.b16 %v358, %v349
  %v485 = vpack.c.b16 %v359, %v350
  %v486 = vpack.c.b16 %v360, %v351
  %v487 = vpack.c.b16 %v361, %v352
  %v488 = vpack.c.b16 %v371, %v362
  %v489 = vpack.c.b16 %v372, %v363
  %v490 = vpack.c.b16 %v373, %v364
  %v491 = vpack.c.b16 %v374, %v365
  %v492 = vpack.c.b16 %v375, %v366
  %v493 = vpack.c.b16 %v376, %v367
  %v494 = vpack.c.b16 %v377, %v368
  %v495 = vpack.c.b16 %v378, %v369
  %v496 = vpack.c.b16 %v379, %v370
  %v497 = vpack.c.b16 %v389, %v380
  %v498 = vpack.c.b16 %v390, %v381
  %v499 = vpack.c.b16 %v391, %v382
  %v500 = vpack.c.b16 %v392, %v383
  %v501 = vpack.c.b16 %v393, %v384
  %v502 = vpack.c.b16 %v394, %v385
  %v503 = vpack.c.b16 %v395, %v386
  %v504 = vpack.c.b16 %v396, %v387
  %v505 = vpack.c.b16 %v397, %v388
  %v506 = vpack.c.b16 %v407, %v398
  %v507 = vpack.c.b16 %v408, %v399
  %v508 = vpack.c.b16 %v409, %v400
  %v509 = vpack.c.b16 %v410, %v401
  %v510 = vpack.c.b16 %v411, %v402
  %v511 = vpack.c.b16 %v412, %v403
  %v512 = vpack.c.b16 %v413, %v404
  %v513 = vpack.c.b16 %v414, %v405
  %v514 = vpack.c.b16 %v415, %v406
  %v515 = vpack.c.b16 %v425, %v416
  %v516 = vpack.c.b16 %v426, %v417
  %v517 = vpack.c.b16 %v427, %v418
  %v518 = vpack.c.b16 %v428, %v419
  %v519 = vpack.c.b16 %v429, %v420
  %v520 = vpack.c.b16 %v430, %v421
  %v521 = vpack.c.b16 %v431, %v422
  %v522 = vpack.c.b16 %v432, %v423
  %v523 = vpack.c.b16 %v433, %v424
  %v524 = vpack.c.b16 %v443, %v434
  %v525 = vpack.c.b16 %v444, %v435
  %v526 = vpack.c.b16 %v445, %v436
  %v527 = vpack.c.b16 %v446, %v437
  %v528 = vpack.c.b16 %v447, %v438
  %v529 = vpack.c.b16 %v448, %v439
  %v530 = vpack.c.b16 %v449, %v440
  %v531 = vpack.c.b16 %v450, %v441
  %v532 = vpack.c.b16 %v451, %v442
  %v533 = vpack.c.b16 %v461, %v452
  %v534 = vpack.c.b16 %v462, %v453
  %v535 = vpack.c.b16 %v463, %v454
  %v536 = vpack.c.b16 %v464, %v455
  %v537 = vpack.c.b16 %v465, %v456
  %v538 = vpack.c.b16 %v466, %v457
  %v539 = vpack.c.b16 %v467, %v458
  %v540 = vpack.c.b16 %v468, %v459
  %v541 = vpack.c.b16 %v469, %v460
  %v758 = vunpack.c.l.b16 %v95
  %v759 = vunpack.c.l.b16 %v96
  %v760 = vunpack.c.l.b16 %v97
  %v761 = vunpack.c.l.b16 %v98
  %v762 = vunpack.c.l.b16 %v99
  %v763 = vunpack.c.l.b16 %v100
  %v764 = vunpack.c.l.b16 %v101
  %v765 = vunpack.c.l.b16 %v102
  %v766 = vunpack.c.l.b16 %v103
  %v767 = vunpack.c.l.b16 %v104
  %v768 = vunpack.c.l.b16 %v105
  %v769 = vunpack.c.l.b16 %v106
  %v770 = vunpack.c.l.b16 %v107
  %v771 = vunpack.c.l.b16 %v108
  %v772 = vunpack.c.l.b16 %v109
  %v773 = vunpack.c.l.b16 %v110
  %v774 = vunpack.c.l.b16 %v111
  %v775 = vunpack.c.l.b16 %v112
  %v776 = vunpack.c.l.b16 %v113
  %v777 = vunpack.c.l.b16 %v114
  %v778 = vunpack.c.l.b16 %v115
  %v779 = vunpack.c.l.b16 %v116
  %v780 = vunpack.c.l.b16 %v117
  %v781 = vunpack.c.l.b16 %v118
  %v782 = vunpack.c.l.b16 %v119
  %v783 = vunpack.c.l.b16 %v120
  %v784 = vunpack.c.l.b16 %v121
  %v785 = vunpack.c.l.b16 %v122
  %v786 = vunpack.c.l.b16 %v123
  %v787 = vunpack.c.l.b16 %v124
  %v788 = vunpack.c.l.b16 %v125
  %v789 = vunpack.c.l.b16 %v126
  %v790 = vunpack.c.l.b16 %v127
  %v791 = vunpack.c.l.b16 %v128
  %v792 = vunpack.c.l.b16 %v129
  %v793 = vunpack.c.l.b16 %v130
  %v794 = vunpack.c.l.b16 %v131
  %v795 = vunpack.c.l.b16 %v132
  %v796 = vunpack.c.l.b16 %v133
  %v797 = vunpack.c.l.b16 %v134
  %v798 = vunpack.c.l.b16 %v135
  %v799 = vunpack.c.l.b16 %v136
  %v800 = vunpack.c.l.b16 %v137
  %v801 = vunpack.c.l.b16 %v138
  %v802 = vunpack.c.l.b16 %v139
  %v803 = vunpack.c.l.b16 %v140
  %v804 = vunpack.c.l.b16 %v141
  %v805 = vunpack.c.l.b16 %v142
  %v806 = vunpack.c.l.b16 %v143
  %v807 = vunpack.c.l.b16 %v144
  %v808 = vunpack.c.l.b16 %v145
  %v809 = vunpack.c.l.b16 %v146
  %v810 = vunpack.c.l.b16 %v147
  %v811 = vunpack.c.l.b16 %v148
  %v812 = vunpack.c.l.b16 %v149
  %v813 = vunpack.c.l.b16 %v150
  %v814 = vunpack.c.l.b16 %v151
  %v815 = vunpack.c.l.b16 %v152
  %v816 = vunpack.c.l.b16 %v153
  %v817 = vunpack.c.l.b16 %v154
  %v818 = vunpack.c.l.b16 %v155
  %v819 = vunpack.c.l.b16 %v156
  %v820 = vunpack.c.l.b16 %v157
  %v821 = vunpack.c.l.b16 %v158
  %v822 = vunpack.c.l.b16 %v159
  %v823 = vunpack.c.l.b16 %v160
  %v824 = vunpack.c.l.b16 %v161
  %v825 = vunpack.c.l.b16 %v162
  %v826 = vunpack.c.l.b16 %v163
  %v827 = vunpack.c.l.b16 %v164
  %v828 = vunpack.c.l.b16 %v165
  %v829 = vunpack.c.l.b16 %v166
  %v830 = vunpack.c.l.b16 %v167
  %v831 = vunpack.c.l.b16 %v168
  %v832 = vunpack.c.l.b16 %v169
  %v833 = vunpack.c.l.b16 %v170
  %v834 = vunpack.c.l.b16 %v171
  %v835 = vunpack.c.l.b16 %v172
  %v836 = vunpack.c.l.b16 %v173
  %v837 = vunpack.c.l.b16 %v174
  %v838 = vunpack.c.l.b16 %v175
  %v839 = vunpack.c.l.b16 %v176
  %v840 = vunpack.c.l.b16 %v177
  %v841 = vunpack.c.l.b16 %v178
  %v842 = vunpack.c.l.b16 %v179
  %v843 = vunpack.c.l.b16 %v180
  %v844 = vunpack.c.l.b16 %v181
  %v845 = vunpack.c.l.b16 %v182
  %v846 = vunpack.c.l.b16 %v183
  %v847 = vunpack.c.l.b16 %v184
  %v848 = vunpack.c.l.b16 %v185
  %v849 = vunpack.c.l.b16 %v186
  %v850 = vunpack.c.l.b16 %v187
  %v851 = vunpack.c.l.b16 %v188
  %v852 = vunpack.c.l.b16 %v189
  %v853 = vunpack.c.l.b16 %v190
  %v854 = vunpack.c.l.b16 %v191
  %v855 = vunpack.c.l.b16 %v192
  %v856 = vunpack.c.l.b16 %v193
  %v857 = vunpack.c.l.b16 %v194
  %v858 = vunpack.c.l.b16 %v195
  %v859 = vunpack.c.l.b16 %v196
  %v860 = vunpack.c.l.b16 %v197
  %v861 = vunpack.c.l.b16 %v198
  %v862 = vunpack.c.l.b16 %v199
  %v863 = vunpack.c.l.b16 %v200
  %v864 = vunpack.c.l.b16 %v201
  %v865 = vunpack.c.l.b16 %v202
  %v866 = vunpack.c.l.b16 %v203
  %v867 = vunpack.c.l.b16 %v204
  %v868 = vunpack.c.l.b16 %v205
  %v869 = vunpack.c.l.b16 %v206
  %v870 = vunpack.c.l.b16 %v207
  %v871 = vunpack.c.l.b16 %v208
  %v872 = vunpack.c.l.b16 %v209
  %v873 = vunpack.c.l.b16 %v210
  %v874 = vunpack.c.l.b16 %v211
  %v875 = vunpack.c.l.b16 %v212
  %v876 = vunpack.c.l.b16 %v213
  %v877 = vunpack.c.l.b16 %v214
  %v878 = vunpack.c.l.b16 %v215
  %v879 = vunpack.c.l.b16 %v216
  %v880 = vunpack.c.l.b16 %v217
  %v881 = vunpack.c.l.b16 %v218
  %v882 = vunpack.c.l.b16 %v219
  %v883 = vunpack.c.l.b16 %v220
  %v884 = vunpack.c.l.b16 %v221
  %v885 = vunpack.c.l.b16 %v222
  %v886 = vunpack.c.l.b16 %v223
  %v887 = vunpack.c.l.b16 %v224
  %v888 = vunpack.c.l.b16 %v225
  %v889 = vunpack.c.l.b16 %v226
  %v890 = vunpack.c.l.b16 %v227
  %v891 = vunpack.c.l.b16 %v228
  %v892 = vunpack.c.l.b16 %v229
  %v893 = vunpack.c.l.b16 %v230
  %v894 = vunpack.c.l.b16 %v231
  %v895 = vunpack.c.l.b16 %v232
  %v896 = vunpack.c.l.b16 %v233
  %v897 = vunpack.c.l.b16 %v234
  %v898 = vunpack.c.l.b16 %v235
  %v899 = vunpack.c.l.b16 %v236
  %v900 = vunpack.c.l.b16 %v237
  %v901 = vunpack.c.l.b16 %v238
  %v902 = vpack.c.b16 %v759, %v758
  %v903 = vpack.c.b16 %v761, %v760
  %v904 = vpack.c.b16 %v763, %v762
  %v905 = vpack.c.b16 %v765, %v764
  %v906 = vpack.c.b16 %v767, %v766
  %v907 = vpack.c.b16 %v769, %v768
  %v908 = vpack.c.b16 %v771, %v770
  %v909 = vpack.c.b16 %v773, %v772
  %v910 = vpack.c.b16 %v775, %v774
  %v911 = vpack.c.b16 %v777, %v776
  %v912 = vpack.c.b16 %v779, %v778
  %v913 = vpack.c.b16 %v781, %v780
  %v914 = vpack.c.b16 %v783, %v782
  %v915 = vpack.c.b16 %v785, %v784
  %v916 = vpack.c.b16 %v787, %v786
  %v917 = vpack.c.b16 %v789, %v788
  %v918 = vpack.c.b16 %v791, %v790
  %v919 = vpack.c.b16 %v793, %v792
  %v920 = vpack.c.b16 %v795, %v794
  %v921 = vpack.c.b16 %v797, %v796
  %v922 = vpack.c.b16 %v799, %v798
  %v923 = vpack.c.b16 %v801, %v800
  %v924 = vpack.c.b16 %v803, %v802
  %v925 = vpack.c.b16 %v805, %v804
  %v926 = vpack.c.b16 %v807, %v806
  %v927 = vpack.c.b16 %v809, %v808
  %v928 = vpack.c.b16 %v811, %v810
  %v929 = vpack.c.b16 %v813, %v812
  %v930 = vpack.c.b16 %v815, %v814
  %v931 = vpack.c.b16 %v817, %v816
  %v932 = vpack.c.b16 %v819, %v818
  %v933 = vpack.c.b16 %v821, %v820
  %v934 = vpack.c.b16 %v823, %v822
  %v935 = vpack.c.b16 %v825, %v824
  %v936 = vpack.c.b16 %v827, %v826
  %v937 = vpack.c.b16 %v829, %v828
  %v938 = vpack.c.b16 %v831, %v830
  %v939 = vpack.c.b16 %v833, %v832
  %v940 = vpack.c.b16 %v835, %v834
  %v941 = vpack.c.b16 %v837, %v836
  %v942 = vpack.c.b16 %v839, %v838
  %v943 = vpack.c.b16 %v841, %v840
  %v944 = vpack.c.b16 %v843, %v842
  %v945 = vpack.c.b16 %v845, %v844
  %v946 = vpack.c.b16 %v847, %v846
  %v947 = vpack.c.b16 %v849, %v848
  %v948 = vpack.c.b16 %v851, %v850
  %v949 = vpack.c.b16 %v853, %v852
  %v950 = vpack.c.b16 %v855, %v854
  %v951 = vpack.c.b16 %v857, %v856
  %v952 = vpack.c.b16 %v859, %v858
  %v953 = vpack.c.b16 %v861, %v860
  %v954 = vpack.c.b16 %v863, %v862
  %v955 = vpack.c.b16 %v865, %v864
  %v956 = vpack.c.b16 %v867, %v866
  %v957 = vpack.c.b16 %v869, %v868
  %v958 = vpack.c.b16 %v871, %v870
  %v959 = vpack.c.b16 %v873, %v872
  %v960 = vpack.c.b16 %v875, %v874
  %v961 = vpack.c.b16 %v877, %v876
  %v962 = vpack.c.b16 %v879, %v878
  %v963 = vpack.c.b16 %v881, %v880
  %v964 = vpack.c.b16 %v883, %v882
  %v965 = vpack.c.b16 %v885, %v884
  %v966 = vpack.c.b16 %v887, %v886
  %v967 = vpack.c.b16 %v889, %v888
  %v968 = vpack.c.b16 %v891, %v890
  %v969 = vpack.c.b16 %v893, %v892
  %v970 = vpack.c.b16 %v895, %v894
  %v971 = vpack.c.b16 %v897, %v896
  %v972 = vpack.c.b16 %v899, %v898
  %v973 = vpack.c.b16 %v901, %v900
  %1046 = vmatprep.subr.bf16.mxu0 0
  %1047 = vmatpush1.bf16.msra.mxu0 %v909
  %1048 = vmatprep.subr.bf16.mxu0 0
  %1049 = vmatpush1.bf16.msra.mxu0 %v908
  %1050 = vmatprep.subr.bf16.mxu0 0
  %1051 = vmatpush1.bf16.msra.mxu0 %v907
  %1052 = vmatprep.subr.bf16.mxu0 0
  %1053 = vmatpush1.bf16.msra.mxu0 %v906
  %1054 = vmatprep.subr.bf16.mxu0 0
  %1055 = vmatpush1.bf16.msra.mxu0 %v905
  %1056 = vmatprep.subr.bf16.mxu0 0
  %1057 = vmatpush1.bf16.msra.mxu0 %v904
  %1058 = vmatprep.subr.bf16.mxu0 0
  %1059 = vmatpush1.bf16.msra.mxu0 %v903
  %1060 = vmatprep.subr.bf16.mxu0 0
  %1061 = vmatpush1.bf16.msra.mxu0 %v902
  %1062 = vmatprep.subr.bf16.mxu0 0
  %1063 = vmatpush2.bf16.msra.mxu0 %v917
  %1064 = vmatprep.subr.bf16.mxu0 0
  %1065 = vmatpush2.bf16.msra.mxu0 %v916
  %1066 = vmatprep.subr.bf16.mxu0 0
  %1067 = vmatpush2.bf16.msra.mxu0 %v915
  %1068 = vmatprep.subr.bf16.mxu0 0
  %1069 = vmatpush2.bf16.msra.mxu0 %v914
  %1070 = vmatprep.subr.bf16.mxu0 0
  %1071 = vmatpush2.bf16.msra.mxu0 %v913
  %1072 = vmatprep.subr.bf16.mxu0 0
  %1073 = vmatpush2.bf16.msra.mxu0 %v912
  %1074 = vmatprep.subr.bf16.mxu0 0
  %1075 = vmatpush2.bf16.msra.mxu0 %v911
  %1076 = vmatprep.subr.bf16.mxu0 0
  %1077 = vmatpush2.bf16.msra.mxu0 %v910
  %1078 = vmatprep.mubr.bf16.mxu0 %v471
  %1079 = vmatmul.mubr.bf16.gmra.mxu0 %v470
  %v1080 = vpop.f32.mrf.mxu0
  %v1081 = vadd.f32 %v244, %v1080
  %v1082 = vpop.f32.mrf.mxu0
  %v1083 = vpop.f32.mrf.mxu0
  %v1084 = vadd.f32 %v244, %v1083
  %v1085 = vpop.f32.mrf.mxu0
  %1086 = vmatprep.mubr.bf16.mxu0 %v480
  %1087 = vmatmul.mubr.bf16.gmra.mxu0 %v479
  %v1088 = vpop.f32.mrf.mxu0
  %v1089 = vadd.f32 %v244, %v1088
  %v1090 = vpop.f32.mrf.mxu0
  %v1091 = vpop.f32.mrf.mxu0
  %v1092 = vadd.f32 %v244, %v1091
  %v1093 = vpop.f32.mrf.mxu0
  %1094 = vmatprep.mubr.bf16.mxu0 %v489
  %1095 = vmatmul.mubr.bf16.gmra.mxu0 %v488
  %v1096 = vpop.f32.mrf.mxu0
  %v1097 = vadd.f32 %v244, %v1096
  %v1098 = vpop.f32.mrf.mxu0
  %v1099 = vpop.f32.mrf.mxu0
  %v1100 = vadd.f32 %v244, %v1099
  %v1101 = vpop.f32.mrf.mxu0
  %1102 = vmatprep.mubr.bf16.mxu0 %v498
  %1103 = vmatmul.mubr.bf16.gmra.mxu0 %v497
  %v1104 = vpop.f32.mrf.mxu0
  %v1105 = vadd.f32 %v244, %v1104
  %v1106 = vpop.f32.mrf.mxu0
  %v1107 = vpop.f32.mrf.mxu0
  %v1108 = vadd.f32 %v244, %v1107
  %v1109 = vpop.f32.mrf.mxu0
  %1110 = vmatprep.mubr.bf16.mxu0 %v507
  %1111 = vmatmul.mubr.bf16.gmra.mxu0 %v506
  %v1112 = vpop.f32.mrf.mxu0
  %v1113 = vadd.f32 %v244, %v1112
  %v1114 = vpop.f32.mrf.mxu0
  %v1115 = vpop.f32.mrf.mxu0
  %v1116 = vadd.f32 %v244, %v1115
  %v1117 = vpop.f32.mrf.mxu0
  %1118 = vmatprep.mubr.bf16.mxu0 %v516
  %1119 = vmatmul.mubr.bf16.gmra.mxu0 %v515
  %v1120 = vpop.f32.mrf.mxu0
  %v1121 = vadd.f32 %v244, %v1120
  %v1122 = vpop.f32.mrf.mxu0
  %v1123 = vpop.f32.mrf.mxu0
  %v1124 = vadd.f32 %v244, %v1123
  %v1125 = vpop.f32.mrf.mxu0
  %1126 = vmatprep.mubr.bf16.mxu0 %v525
  %1127 = vmatmul.mubr.bf16.gmra.mxu0 %v524
  %v1128 = vpop.f32.mrf.mxu0
  %v1129 = vadd.f32 %v244, %v1128
  %v1130 = vpop.f32.mrf.mxu0
  %v1131 = vpop.f32.mrf.mxu0
  %v1132 = vadd.f32 %v244, %v1131
  %v1133 = vpop.f32.mrf.mxu0
  %1134 = vmatprep.mubr.bf16.mxu0 %v534
  %1135 = vmatmul.mubr.bf16.gmra.mxu0 %v533
  %v1136 = vpop.f32.mrf.mxu0
  %v1137 = vadd.f32 %v244, %v1136
  %v1138 = vpop.f32.mrf.mxu0
  %v1139 = vpop.f32.mrf.mxu0
  %v1140 = vadd.f32 %v244, %v1139
  %v1141 = vpop.f32.mrf.mxu0
  %1142 = vdwg.mxu0
  %1143 = vmatprep.subr.bf16.mxu0 0
  %1144 = vmatpush1.bf16.msra.mxu0 %v925
  %1145 = vmatprep.subr.bf16.mxu0 0
  %1146 = vmatpush1.bf16.msra.mxu0 %v924
  %1147 = vmatprep.subr.bf16.mxu0 0
  %1148 = vmatpush1.bf16.msra.mxu0 %v923
  %1149 = vmatprep.subr.bf16.mxu0 0
  %1150 = vmatpush1.bf16.msra.mxu0 %v922
  %1151 = vmatprep.subr.bf16.mxu0 0
  %1152 = vmatpush1.bf16.msra.mxu0 %v921
  %1153 = vmatprep.subr.bf16.mxu0 0
  %1154 = vmatpush1.bf16.msra.mxu0 %v920
  %1155 = vmatprep.subr.bf16.mxu0 0
  %1156 = vmatpush1.bf16.msra.mxu0 %v919
  %1157 = vmatprep.subr.bf16.mxu0 0
  %1158 = vmatpush1.bf16.msra.mxu0 %v918
  %1159 = vmatprep.subr.bf16.mxu0 0
  %1160 = vmatpush2.bf16.msra.mxu0 %v933
  %1161 = vmatprep.subr.bf16.mxu0 0
  %1162 = vmatpush2.bf16.msra.mxu0 %v932
  %1163 = vmatprep.subr.bf16.mxu0 0
  %1164 = vmatpush2.bf16.msra.mxu0 %v931
  %1165 = vmatprep.subr.bf16.mxu0 0
  %1166 = vmatpush2.bf16.msra.mxu0 %v930
  %1167 = vmatprep.subr.bf16.mxu0 0
  %1168 = vmatpush2.bf16.msra.mxu0 %v929
  %1169 = vmatprep.subr.bf16.mxu0 0
  %1170 = vmatpush2.bf16.msra.mxu0 %v928
  %1171 = vmatprep.subr.bf16.mxu0 0
  %1172 = vmatpush2.bf16.msra.mxu0 %v927
  %1173 = vmatprep.subr.bf16.mxu0 0
  %1174 = vmatpush2.bf16.msra.mxu0 %v926
  %1175 = vmatprep.mubr.bf16.mxu0 %v473
  %1176 = vmatmul.mubr.bf16.gmra.mxu0 %v472
  %v1177 = vpop.f32.mrf.mxu0
  %v1178 = vadd.f32 %v1081, %v1177
  %v1179 = vpop.f32.mrf.mxu0
  %v1180 = vpop.f32.mrf.mxu0
  %v1181 = vadd.f32 %v1084, %v1180
  %v1182 = vpop.f32.mrf.mxu0
  %1183 = vmatprep.mubr.bf16.mxu0 %v482
  %1184 = vmatmul.mubr.bf16.gmra.mxu0 %v481
  %v1185 = vpop.f32.mrf.mxu0
  %v1186 = vadd.f32 %v1089, %v1185
  %v1187 = vpop.f32.mrf.mxu0
  %v1188 = vpop.f32.mrf.mxu0
  %v1189 = vadd.f32 %v1092, %v1188
  %v1190 = vpop.f32.mrf.mxu0
  %1191 = vmatprep.mubr.bf16.mxu0 %v491
  %1192 = vmatmul.mubr.bf16.gmra.mxu0 %v490
  %v1193 = vpop.f32.mrf.mxu0
  %v1194 = vadd.f32 %v1097, %v1193
  %v1195 = vpop.f32.mrf.mxu0
  %v1196 = vpop.f32.mrf.mxu0
  %v1197 = vadd.f32 %v1100, %v1196
  %v1198 = vpop.f32.mrf.mxu0
  %1199 = vmatprep.mubr.bf16.mxu0 %v500
  %1200 = vmatmul.mubr.bf16.gmra.mxu0 %v499
  %v1201 = vpop.f32.mrf.mxu0
  %v1202 = vadd.f32 %v1105, %v1201
  %v1203 = vpop.f32.mrf.mxu0
  %v1204 = vpop.f32.mrf.mxu0
  %v1205 = vadd.f32 %v1108, %v1204
  %v1206 = vpop.f32.mrf.mxu0
  %1207 = vmatprep.mubr.bf16.mxu0 %v509
  %1208 = vmatmul.mubr.bf16.gmra.mxu0 %v508
  %v1209 = vpop.f32.mrf.mxu0
  %v1210 = vadd.f32 %v1113, %v1209
  %v1211 = vpop.f32.mrf.mxu0
  %v1212 = vpop.f32.mrf.mxu0
  %v1213 = vadd.f32 %v1116, %v1212
  %v1214 = vpop.f32.mrf.mxu0
  %1215 = vmatprep.mubr.bf16.mxu0 %v518
  %1216 = vmatmul.mubr.bf16.gmra.mxu0 %v517
  %v1217 = vpop.f32.mrf.mxu0
  %v1218 = vadd.f32 %v1121, %v1217
  %v1219 = vpop.f32.mrf.mxu0
  %v1220 = vpop.f32.mrf.mxu0
  %v1221 = vadd.f32 %v1124, %v1220
  %v1222 = vpop.f32.mrf.mxu0
  %1223 = vmatprep.mubr.bf16.mxu0 %v527
  %1224 = vmatmul.mubr.bf16.gmra.mxu0 %v526
  %v1225 = vpop.f32.mrf.mxu0
  %v1226 = vadd.f32 %v1129, %v1225
  %v1227 = vpop.f32.mrf.mxu0
  %v1228 = vpop.f32.mrf.mxu0
  %v1229 = vadd.f32 %v1132, %v1228
  %v1230 = vpop.f32.mrf.mxu0
  %1231 = vmatprep.mubr.bf16.mxu0 %v536
  %1232 = vmatmul.mubr.bf16.gmra.mxu0 %v535
  %v1233 = vpop.f32.mrf.mxu0
  %v1234 = vadd.f32 %v1137, %v1233
  %v1235 = vpop.f32.mrf.mxu0
  %v1236 = vpop.f32.mrf.mxu0
  %v1237 = vadd.f32 %v1140, %v1236
  %v1238 = vpop.f32.mrf.mxu0
  %1239 = vdwg.mxu0
  %1240 = vmatprep.subr.bf16.mxu0 0
  %1241 = vmatpush1.bf16.msra.mxu0 %v941
  %1242 = vmatprep.subr.bf16.mxu0 0
  %1243 = vmatpush1.bf16.msra.mxu0 %v940
  %1244 = vmatprep.subr.bf16.mxu0 0
  %1245 = vmatpush1.bf16.msra.mxu0 %v939
  %1246 = vmatprep.subr.bf16.mxu0 0
  %1247 = vmatpush1.bf16.msra.mxu0 %v938
  %1248 = vmatprep.subr.bf16.mxu0 0
  %1249 = vmatpush1.bf16.msra.mxu0 %v937
  %1250 = vmatprep.subr.bf16.mxu0 0
  %1251 = vmatpush1.bf16.msra.mxu0 %v936
  %1252 = vmatprep.subr.bf16.mxu0 0
  %1253 = vmatpush1.bf16.msra.mxu0 %v935
  %1254 = vmatprep.subr.bf16.mxu0 0
  %1255 = vmatpush1.bf16.msra.mxu0 %v934
  %1256 = vmatprep.subr.bf16.mxu0 0
  %1257 = vmatpush2.bf16.msra.mxu0 %v949
  %1258 = vmatprep.subr.bf16.mxu0 0
  %1259 = vmatpush2.bf16.msra.mxu0 %v948
  %1260 = vmatprep.subr.bf16.mxu0 0
  %1261 = vmatpush2.bf16.msra.mxu0 %v947
  %1262 = vmatprep.subr.bf16.mxu0 0
  %1263 = vmatpush2.bf16.msra.mxu0 %v946
  %1264 = vmatprep.subr.bf16.mxu0 0
  %1265 = vmatpush2.bf16.msra.mxu0 %v945
  %1266 = vmatprep.subr.bf16.mxu0 0
  %1267 = vmatpush2.bf16.msra.mxu0 %v944
  %1268 = vmatprep.subr.bf16.mxu0 0
  %1269 = vmatpush2.bf16.msra.mxu0 %v943
  %1270 = vmatprep.subr.bf16.mxu0 0
  %1271 = vmatpush2.bf16.msra.mxu0 %v942
  %1272 = vmatprep.mubr.bf16.mxu0 %v475
  %1273 = vmatmul.mubr.bf16.gmra.mxu0 %v474
  %v1274 = vpop.f32.mrf.mxu0
  %v1275 = vadd.f32 %v1178, %v1274
  %v1276 = vpop.f32.mrf.mxu0
  %v1277 = vpop.f32.mrf.mxu0
  %v1278 = vadd.f32 %v1181, %v1277
  %v1279 = vpop.f32.mrf.mxu0
  %1280 = vmatprep.mubr.bf16.mxu0 %v484
  %1281 = vmatmul.mubr.bf16.gmra.mxu0 %v483
  %v1282 = vpop.f32.mrf.mxu0
  %v1283 = vadd.f32 %v1186, %v1282
  %v1284 = vpop.f32.mrf.mxu0
  %v1285 = vpop.f32.mrf.mxu0
  %v1286 = vadd.f32 %v1189, %v1285
  %v1287 = vpop.f32.mrf.mxu0
  %1288 = vmatprep.mubr.bf16.mxu0 %v493
  %1289 = vmatmul.mubr.bf16.gmra.mxu0 %v492
  %v1290 = vpop.f32.mrf.mxu0
  %v1291 = vadd.f32 %v1194, %v1290
  %v1292 = vpop.f32.mrf.mxu0
  %v1293 = vpop.f32.mrf.mxu0
  %v1294 = vadd.f32 %v1197, %v1293
  %v1295 = vpop.f32.mrf.mxu0
  %1296 = vmatprep.mubr.bf16.mxu0 %v502
  %1297 = vmatmul.mubr.bf16.gmra.mxu0 %v501
  %v1298 = vpop.f32.mrf.mxu0
  %v1299 = vadd.f32 %v1202, %v1298
  %v1300 = vpop.f32.mrf.mxu0
  %v1301 = vpop.f32.mrf.mxu0
  %v1302 = vadd.f32 %v1205, %v1301
  %v1303 = vpop.f32.mrf.mxu0
  %1304 = vmatprep.mubr.bf16.mxu0 %v511
  %1305 = vmatmul.mubr.bf16.gmra.mxu0 %v510
  %v1306 = vpop.f32.mrf.mxu0
  %v1307 = vadd.f32 %v1210, %v1306
  %v1308 = vpop.f32.mrf.mxu0
  %v1309 = vpop.f32.mrf.mxu0
  %v1310 = vadd.f32 %v1213, %v1309
  %v1311 = vpop.f32.mrf.mxu0
  %1312 = vmatprep.mubr.bf16.mxu0 %v520
  %1313 = vmatmul.mubr.bf16.gmra.mxu0 %v519
  %v1314 = vpop.f32.mrf.mxu0
  %v1315 = vadd.f32 %v1218, %v1314
  %v1316 = vpop.f32.mrf.mxu0
  %v1317 = vpop.f32.mrf.mxu0
  %v1318 = vadd.f32 %v1221, %v1317
  %v1319 = vpop.f32.mrf.mxu0
  %1320 = vmatprep.mubr.bf16.mxu0 %v529
  %1321 = vmatmul.mubr.bf16.gmra.mxu0 %v528
  %v1322 = vpop.f32.mrf.mxu0
  %v1323 = vadd.f32 %v1226, %v1322
  %v1324 = vpop.f32.mrf.mxu0
  %v1325 = vpop.f32.mrf.mxu0
  %v1326 = vadd.f32 %v1229, %v1325
  %v1327 = vpop.f32.mrf.mxu0
  %1328 = vmatprep.mubr.bf16.mxu0 %v538
  %1329 = vmatmul.mubr.bf16.gmra.mxu0 %v537
  %v1330 = vpop.f32.mrf.mxu0
  %v1331 = vadd.f32 %v1234, %v1330
  %v1332 = vpop.f32.mrf.mxu0
  %v1333 = vpop.f32.mrf.mxu0
  %v1334 = vadd.f32 %v1237, %v1333
  %v1335 = vpop.f32.mrf.mxu0
  %1336 = vdwg.mxu0
  %1337 = vmatprep.subr.bf16.mxu0 0
  %1338 = vmatpush1.bf16.msra.mxu0 %v957
  %1339 = vmatprep.subr.bf16.mxu0 0
  %1340 = vmatpush1.bf16.msra.mxu0 %v956
  %1341 = vmatprep.subr.bf16.mxu0 0
  %1342 = vmatpush1.bf16.msra.mxu0 %v955
  %1343 = vmatprep.subr.bf16.mxu0 0
  %1344 = vmatpush1.bf16.msra.mxu0 %v954
  %1345 = vmatprep.subr.bf16.mxu0 0
  %1346 = vmatpush1.bf16.msra.mxu0 %v953
  %1347 = vmatprep.subr.bf16.mxu0 0
  %1348 = vmatpush1.bf16.msra.mxu0 %v952
  %1349 = vmatprep.subr.bf16.mxu0 0
  %1350 = vmatpush1.bf16.msra.mxu0 %v951
  %1351 = vmatprep.subr.bf16.mxu0 0
  %1352 = vmatpush1.bf16.msra.mxu0 %v950
  %1353 = vmatprep.subr.bf16.mxu0 0
  %1354 = vmatpush2.bf16.msra.mxu0 %v965
  %1355 = vmatprep.subr.bf16.mxu0 0
  %1356 = vmatpush2.bf16.msra.mxu0 %v964
  %1357 = vmatprep.subr.bf16.mxu0 0
  %1358 = vmatpush2.bf16.msra.mxu0 %v963
  %1359 = vmatprep.subr.bf16.mxu0 0
  %1360 = vmatpush2.bf16.msra.mxu0 %v962
  %1361 = vmatprep.subr.bf16.mxu0 0
  %1362 = vmatpush2.bf16.msra.mxu0 %v961
  %1363 = vmatprep.subr.bf16.mxu0 0
  %1364 = vmatpush2.bf16.msra.mxu0 %v960
  %1365 = vmatprep.subr.bf16.mxu0 0
  %1366 = vmatpush2.bf16.msra.mxu0 %v959
  %1367 = vmatprep.subr.bf16.mxu0 0
  %1368 = vmatpush2.bf16.msra.mxu0 %v958
  %1369 = vmatprep.mubr.bf16.mxu0 %v477
  %1370 = vmatmul.mubr.bf16.gmra.mxu0 %v476
  %v1371 = vpop.f32.mrf.mxu0
  %v1372 = vadd.f32 %v1275, %v1371
  %v1373 = vpop.f32.mrf.mxu0
  %v1374 = vpop.f32.mrf.mxu0
  %v1375 = vadd.f32 %v1278, %v1374
  %v1376 = vpop.f32.mrf.mxu0
  %1377 = vmatprep.mubr.bf16.mxu0 %v486
  %1378 = vmatmul.mubr.bf16.gmra.mxu0 %v485
  %v1379 = vpop.f32.mrf.mxu0
  %v1380 = vadd.f32 %v1283, %v1379
  %v1381 = vpop.f32.mrf.mxu0
  %v1382 = vpop.f32.mrf.mxu0
  %v1383 = vadd.f32 %v1286, %v1382
  %v1384 = vpop.f32.mrf.mxu0
  %1385 = vmatprep.mubr.bf16.mxu0 %v495
  %1386 = vmatmul.mubr.bf16.gmra.mxu0 %v494
  %v1387 = vpop.f32.mrf.mxu0
  %v1388 = vadd.f32 %v1291, %v1387
  %v1389 = vpop.f32.mrf.mxu0
  %v1390 = vpop.f32.mrf.mxu0
  %v1391 = vadd.f32 %v1294, %v1390
  %v1392 = vpop.f32.mrf.mxu0
  %1393 = vmatprep.mubr.bf16.mxu0 %v504
  %1394 = vmatmul.mubr.bf16.gmra.mxu0 %v503
  %v1395 = vpop.f32.mrf.mxu0
  %v1396 = vadd.f32 %v1299, %v1395
  %v1397 = vpop.f32.mrf.mxu0
  %v1398 = vpop.f32.mrf.mxu0
  %v1399 = vadd.f32 %v1302, %v1398
  %v1400 = vpop.f32.mrf.mxu0
  %1401 = vmatprep.mubr.bf16.mxu0 %v513
  %1402 = vmatmul.mubr.bf16.gmra.mxu0 %v512
  %v1403 = vpop.f32.mrf.mxu0
  %v1404 = vadd.f32 %v1307, %v1403
  %v1405 = vpop.f32.mrf.mxu0
  %v1406 = vpop.f32.mrf.mxu0
  %v1407 = vadd.f32 %v1310, %v1406
  %v1408 = vpop.f32.mrf.mxu0
  %1409 = vmatprep.mubr.bf16.mxu0 %v522
  %1410 = vmatmul.mubr.bf16.gmra.mxu0 %v521
  %v1411 = vpop.f32.mrf.mxu0
  %v1412 = vadd.f32 %v1315, %v1411
  %v1413 = vpop.f32.mrf.mxu0
  %v1414 = vpop.f32.mrf.mxu0
  %v1415 = vadd.f32 %v1318, %v1414
  %v1416 = vpop.f32.mrf.mxu0
  %1417 = vmatprep.mubr.bf16.mxu0 %v531
  %1418 = vmatmul.mubr.bf16.gmra.mxu0 %v530
  %v1419 = vpop.f32.mrf.mxu0
  %v1420 = vadd.f32 %v1323, %v1419
  %v1421 = vpop.f32.mrf.mxu0
  %v1422 = vpop.f32.mrf.mxu0
  %v1423 = vadd.f32 %v1326, %v1422
  %v1424 = vpop.f32.mrf.mxu0
  %1425 = vmatprep.mubr.bf16.mxu0 %v540
  %1426 = vmatmul.mubr.bf16.gmra.mxu0 %v539
  %v1427 = vpop.f32.mrf.mxu0
  %v1428 = vadd.f32 %v1331, %v1427
  %v1429 = vpop.f32.mrf.mxu0
  %v1430 = vpop.f32.mrf.mxu0
  %v1431 = vadd.f32 %v1334, %v1430
  %v1432 = vpop.f32.mrf.mxu0
  %1433 = vdwg.mxu0
  %1434 = vmatprep.subr.bf16.mxu0 0
  %1435 = vmatpush1.bf16.msra.mxu0 %v973
  %1436 = vmatprep.subr.bf16.mxu0 0
  %1437 = vmatpush1.bf16.msra.mxu0 %v972
  %1438 = vmatprep.subr.bf16.mxu0 0
  %1439 = vmatpush1.bf16.msra.mxu0 %v971
  %1440 = vmatprep.subr.bf16.mxu0 0
  %1441 = vmatpush1.bf16.msra.mxu0 %v970
  %1442 = vmatprep.subr.bf16.mxu0 0
  %1443 = vmatpush1.bf16.msra.mxu0 %v969
  %1444 = vmatprep.subr.bf16.mxu0 0
  %1445 = vmatpush1.bf16.msra.mxu0 %v968
  %1446 = vmatprep.subr.bf16.mxu0 0
  %1447 = vmatpush1.bf16.msra.mxu0 %v967
  %1448 = vmatprep.subr.bf16.mxu0 0
  %1449 = vmatpush1.bf16.msra.mxu0 %v966
  %1450 = vmatprep.subr.bf16.mxu0 0
  %1451 = vmatpush2.bf16.msra.mxu0 0
  %1452 = vmatprep.subr.bf16.mxu0 0
  %1453 = vmatpush2.bf16.msra.mxu0 0
  %1454 = vmatprep.subr.bf16.mxu0 0
  %1455 = vmatpush2.bf16.msra.mxu0 0
  %1456 = vmatprep.subr.bf16.mxu0 0
  %1457 = vmatpush2.bf16.msra.mxu0 0
  %1458 = vmatprep.subr.bf16.mxu0 0
  %1459 = vmatpush2.bf16.msra.mxu0 0
  %1460 = vmatprep.subr.bf16.mxu0 0
  %1461 = vmatpush2.bf16.msra.mxu0 0
  %1462 = vmatprep.subr.bf16.mxu0 0
  %1463 = vmatpush2.bf16.msra.mxu0 0
  %1464 = vmatprep.subr.bf16.mxu0 0
  %1465 = vmatpush2.bf16.msra.mxu0 0
  %1466 = vmatprep.mubr.bf16.mxu0 0
  %1467 = vmatmul.mubr.bf16.gmra.mxu0 %v478
  %v1468 = vpop.f32.mrf.mxu0
  %v1469 = vadd.f32 %v1372, %v1468
  %v1470 = vpop.f32.mrf.mxu0
  %v1471 = vpop.f32.mrf.mxu0
  %v1472 = vadd.f32 %v1375, %v1471
  %v1473 = vpop.f32.mrf.mxu0
  %1474 = vmatprep.mubr.bf16.mxu0 0
  %1475 = vmatmul.mubr.bf16.gmra.mxu0 %v487
  %v1476 = vpop.f32.mrf.mxu0
  %v1477 = vadd.f32 %v1380, %v1476
  %v1478 = vpop.f32.mrf.mxu0
  %v1479 = vpop.f32.mrf.mxu0
  %v1480 = vadd.f32 %v1383, %v1479
  %v1481 = vpop.f32.mrf.mxu0
  %1482 = vmatprep.mubr.bf16.mxu0 0
  %1483 = vmatmul.mubr.bf16.gmra.mxu0 %v496
  %v1484 = vpop.f32.mrf.mxu0
  %v1485 = vadd.f32 %v1388, %v1484
  %v1486 = vpop.f32.mrf.mxu0
  %v1487 = vpop.f32.mrf.mxu0
  %v1488 = vadd.f32 %v1391, %v1487
  %v1489 = vpop.f32.mrf.mxu0
  %1490 = vmatprep.mubr.bf16.mxu0 0
  %1491 = vmatmul.mubr.bf16.gmra.mxu0 %v505
  %v1492 = vpop.f32.mrf.mxu0
  %v1493 = vadd.f32 %v1396, %v1492
  %v1494 = vpop.f32.mrf.mxu0
  %v1495 = vpop.f32.mrf.mxu0
  %v1496 = vadd.f32 %v1399, %v1495
  %v1497 = vpop.f32.mrf.mxu0
  %1498 = vmatprep.mubr.bf16.mxu0 0
  %1499 = vmatmul.mubr.bf16.gmra.mxu0 %v514
  %v1500 = vpop.f32.mrf.mxu0
  %v1501 = vadd.f32 %v1404, %v1500
  %v1502 = vpop.f32.mrf.mxu0
  %v1503 = vpop.f32.mrf.mxu0
  %v1504 = vadd.f32 %v1407, %v1503
  %v1505 = vpop.f32.mrf.mxu0
  %1506 = vmatprep.mubr.bf16.mxu0 0
  %1507 = vmatmul.mubr.bf16.gmra.mxu0 %v523
  %v1508 = vpop.f32.mrf.mxu0
  %v1509 = vadd.f32 %v1412, %v1508
  %v1510 = vpop.f32.mrf.mxu0
  %v1511 = vpop.f32.mrf.mxu0
  %v1512 = vadd.f32 %v1415, %v1511
  %v1513 = vpop.f32.mrf.mxu0
  %1514 = vmatprep.mubr.bf16.mxu0 0
  %1515 = vmatmul.mubr.bf16.gmra.mxu0 %v532
  %v1516 = vpop.f32.mrf.mxu0
  %v1517 = vadd.f32 %v1420, %v1516
  %v1518 = vpop.f32.mrf.mxu0
  %v1519 = vpop.f32.mrf.mxu0
  %v1520 = vadd.f32 %v1423, %v1519
  %v1521 = vpop.f32.mrf.mxu0
  %1522 = vmatprep.mubr.bf16.mxu0 0
  %1523 = vmatmul.mubr.bf16.gmra.mxu0 %v541
  %v1524 = vpop.f32.mrf.mxu0
  %v1525 = vadd.f32 %v1428, %v1524
  %v1526 = vpop.f32.mrf.mxu0
  %v1527 = vpop.f32.mrf.mxu0
  %v1528 = vadd.f32 %v1431, %v1527
  %v1529 = vpop.f32.mrf.mxu0
  %1530 = vdwg.mxu0
  %v1531 = vmax.f32 %v1469, 0.0
  %v1532 = vmax.f32 %v1472, 0.0
  %v1533 = vmax.f32 %v1477, 0.0
  %v1534 = vmax.f32 %v1480, 0.0
  %v1535 = vmax.f32 %v1485, 0.0
  %v1536 = vmax.f32 %v1488, 0.0
  %v1537 = vmax.f32 %v1493, 0.0
  %v1538 = vmax.f32 %v1496, 0.0
  %v1539 = vmax.f32 %v1501, 0.0
  %v1540 = vmax.f32 %v1504, 0.0
  %v1541 = vmax.f32 %v1509, 0.0
  %v1542 = vmax.f32 %v1512, 0.0
  %v1543 = vmax.f32 %v1517, 0.0
  %v1544 = vmax.f32 %v1520, 0.0
  %v1545 = vmax.f32 %v1525, 0.0
  %v1546 = vmax.f32 %v1528, 0.0
  %1547 = vst [vmem:[%s3] sm:$0xff] %v1531
  %1548 = vst [vmem:[%s3 + $0x8] sm:$0xff] %v1532
  %1549 = vst [vmem:[%s3 + $0x10] sm:$0xff] %v1533
  %1550 = vst [vmem:[%s3 + $0x18] sm:$0xff] %v1534
  %1551 = vst [vmem:[%s3 + $0x20] sm:$0xff] %v1535
  %1552 = vst [vmem:[%s3 + $0x28] sm:$0xff] %v1536
  %1553 = vst [vmem:[%s3 + $0x30] sm:$0xff] %v1537
  %1554 = vst [vmem:[%s3 + $0x38] sm:$0xff] %v1538
  %1555 = vst [vmem:[%s3 + $0x40] sm:$0xff] %v1539
  %1556 = vst [vmem:[%s3 + $0x48] sm:$0xff] %v1540
  %1557 = vst [vmem:[%s3 + $0x50] sm:$0xff] %v1541
  %1558 = vst [vmem:[%s3 + $0x58] sm:$0xff] %v1542
  %1559 = vst [vmem:[%s3 + $0x60] sm:$0xff] %v1543
  %1560 = vst [vmem:[%s3 + $0x68] sm:$0xff] %v1544
  %1561 = vst [vmem:[%s3 + $0x70] sm:$0xff] %v1545
  %1562 = vst [vmem:[%s3 + $0x78] sm:$0xff] %v1546
  // Predicated region
  $region14: #{_lambda_.16} parent=0 // pred_check
    _
  $region15: #{_lambda_.16} parent=0 // pred_check_branch
    %1564 = sbr.rel (0) target = $region17
  $region16: #{_lambda_.16} parent=0 // pred_region
    _
  $region17: #{_lambda_.16} parent=0 // pred_fallthru
    _
  // Predicated region
  $region18: #{_lambda_.16} parent=0 // pred_check
    _
  $region19: #{_lambda_.16} parent=0 // pred_check_branch
    %1566 = sbr.rel (0) target = $region21
  $region20: #{_lambda_.16} parent=0 // pred_region
    _
  $region21: #{_lambda_.16} parent=0 // pred_fallthru
    _

// kernel: _lambda_.17
$region0: #{_lambda_.17}
  #allocation0 [shape = 'u32[]', space=smem, size = 0x4, offset = 0x4, fixed_abs, tag = 'smem constant byte address 0x4 - core index']
  #allocation1 [shape = 'u32[144,128]{1,0:T(1,128)}', space=vmem, size = 0x12000, scoped, tag = 'internal scratch']
  %s0 = inlined_call_operand.vmem [shape: bf16[128,1152], index: 0, kind: input, shape index: {}]
  %s1 = inlined_call_operand.vmem [shape: bf16[1152,128], index: 1, kind: input, shape index: {}]
  %s2 = inlined_call_operand.vmem [shape: f32[1,128], index: 2, kind: input, shape index: {}]
  %s3 = inlined_call_operand.vmem [shape: f32[128,128], index: 3, kind: input, shape index: {}]
  %s4 = inlined_call_operand.vmem [shape: f32[128,128], index: 4, kind: output, shape index: {}]
  %s5 = sld [smem:[#allocation0]]
  $region26: #{_lambda_.17} parent=0
    _
  %s7 = ssub.s32 1, %s5
  %s8 = scalar_select 0, %s7, %s5
  // Predicated region
  $region2: #{_lambda_.17} parent=0 // pred_check
    _
  $region3: #{_lambda_.17} parent=0 // pred_check_branch
    %10 = sbr.rel (0) target = $region5
  $region4: #{_lambda_.17} parent=0 // pred_region
    _
  $region5: #{_lambda_.17} parent=0 // pred_fallthru
    _
  // Predicated region
  $region6: #{_lambda_.17} parent=0 // pred_check
    _
  $region7: #{_lambda_.17} parent=0 // pred_check_branch
    %12 = sbr.rel (0) target = $region9
  $region8: #{_lambda_.17} parent=0 // pred_region
    _
  $region9: #{_lambda_.17} parent=0 // pred_fallthru
    _
  // Predicated region
  $region10: #{_lambda_.17} parent=0 // pred_check
    _
  $region11: #{_lambda_.17} parent=0 // pred_check_branch
    %14 = sbr.rel (0) target = $region13
  $region12: #{_lambda_.17} parent=0 // pred_region
    _
  $region13: #{_lambda_.17} parent=0 // pred_fallthru
    _
  // Predicated region
  $region14: #{_lambda_.17} parent=0 // pred_check
    _
  $region15: #{_lambda_.17} parent=0 // pred_check_branch
    %16 = sbr.rel (0) target = $region17
  $region16: #{_lambda_.17} parent=0 // pred_region
    _
  $region17: #{_lambda_.17} parent=0 // pred_fallthru
    _
  %v18 = vld [vmem:[%s0] sm:$0xff]
  %v19 = vld [vmem:[%s0 + $0x8] sm:$0xff]
  %v20 = vld [vmem:[%s0 + $0x10] sm:$0xff]
  %v21 = vld [vmem:[%s0 + $0x18] sm:$0xff]
  %v22 = vld [vmem:[%s0 + $0x20] sm:$0xf]
  %v23 = vld [vmem:[%s0 + $0x24] sm:$0xff]
  %v24 = vld [vmem:[%s0 + $0x2c] sm:$0xff]
  %v25 = vld [vmem:[%s0 + $0x34] sm:$0xff]
  %v26 = vld [vmem:[%s0 + $0x3c] sm:$0xff]
  %v27 = vld [vmem:[%s0 + $0x44] sm:$0xf]
  %v28 = vld [vmem:[%s0 + $0x48] sm:$0xff]
  %v29 = vld [vmem:[%s0 + $0x50] sm:$0xff]
  %v30 = vld [vmem:[%s0 + $0x58] sm:$0xff]
  %v31 = vld [vmem:[%s0 + $0x60] sm:$0xff]
  %v32 = vld [vmem:[%s0 + $0x68] sm:$0xf]
  %v33 = vld [vmem:[%s0 + $0x6c] sm:$0xff]
  %v34 = vld [vmem:[%s0 + $0x74] sm:$0xff]
  %v35 = vld [vmem:[%s0 + $0x7c] sm:$0xff]
  %v36 = vld [vmem:[%s0 + $0x84] sm:$0xff]
  %v37 = vld [vmem:[%s0 + $0x8c] sm:$0xf]
  %v38 = vld [vmem:[%s0 + $0x90] sm:$0xff]
  %v39 = vld [vmem:[%s0 + $0x98] sm:$0xff]
  %v40 = vld [vmem:[%s0 + $0xa0] sm:$0xff]
  %v41 = vld [vmem:[%s0 + $0xa8] sm:$0xff]
  %v42 = vld [vmem:[%s0 + $0xb0] sm:$0xf]
  %v43 = vld [vmem:[%s0 + $0xb4] sm:$0xff]
  %v44 = vld [vmem:[%s0 + $0xbc] sm:$0xff]
  %v45 = vld [vmem:[%s0 + $0xc4] sm:$0xff]
  %v46 = vld [vmem:[%s0 + $0xcc] sm:$0xff]
  %v47 = vld [vmem:[%s0 + $0xd4] sm:$0xf]
  %v48 = vld [vmem:[%s0 + $0xd8] sm:$0xff]
  %v49 = vld [vmem:[%s0 + $0xe0] sm:$0xff]
  %v50 = vld [vmem:[%s0 + $0xe8] sm:$0xff]
  %v51 = vld [vmem:[%s0 + $0xf0] sm:$0xff]
  %v52 = vld [vmem:[%s0 + $0xf8] sm:$0xf]
  %v53 = vld [vmem:[%s0 + $0xfc] sm:$0xff]
  %v54 = vld [vmem:[%s0 + $0x104] sm:$0xff]
  %v55 = vld [vmem:[%s0 + $0x10c] sm:$0xff]
  %v56 = vld [vmem:[%s0 + $0x114] sm:$0xff]
  %v57 = vld [vmem:[%s0 + $0x11c] sm:$0xf]
  %v58 = vld [vmem:[%s0 + $0x120] sm:$0xff]
  %v59 = vld [vmem:[%s0 + $0x128] sm:$0xff]
  %v60 = vld [vmem:[%s0 + $0x130] sm:$0xff]
  %v61 = vld [vmem:[%s0 + $0x138] sm:$0xff]
  %v62 = vld [vmem:[%s0 + $0x140] sm:$0xf]
  %v63 = vld [vmem:[%s0 + $0x144] sm:$0xff]
  %v64 = vld [vmem:[%s0 + $0x14c] sm:$0xff]
  %v65 = vld [vmem:[%s0 + $0x154] sm:$0xff]
  %v66 = vld [vmem:[%s0 + $0x15c] sm:$0xff]
  %v67 = vld [vmem:[%s0 + $0x164] sm:$0xf]
  %v68 = vld [vmem:[%s0 + $0x168] sm:$0xff]
  %v69 = vld [vmem:[%s0 + $0x170] sm:$0xff]
  %v70 = vld [vmem:[%s0 + $0x178] sm:$0xff]
  %v71 = vld [vmem:[%s0 + $0x180] sm:$0xff]
  %v72 = vld [vmem:[%s0 + $0x188] sm:$0xf]
  %v73 = vld [vmem:[%s0 + $0x18c] sm:$0xff]
  %v74 = vld [vmem:[%s0 + $0x194] sm:$0xff]
  %v75 = vld [vmem:[%s0 + $0x19c] sm:$0xff]
  %v76 = vld [vmem:[%s0 + $0x1a4] sm:$0xff]
  %v77 = vld [vmem:[%s0 + $0x1ac] sm:$0xf]
  %v78 = vld [vmem:[%s0 + $0x1b0] sm:$0xff]
  %v79 = vld [vmem:[%s0 + $0x1b8] sm:$0xff]
  %v80 = vld [vmem:[%s0 + $0x1c0] sm:$0xff]
  %v81 = vld [vmem:[%s0 + $0x1c8] sm:$0xff]
  %v82 = vld [vmem:[%s0 + $0x1d0] sm:$0xf]
  %v83 = vld [vmem:[%s0 + $0x1d4] sm:$0xff]
  %v84 = vld [vmem:[%s0 + $0x1dc] sm:$0xff]
  %v85 = vld [vmem:[%s0 + $0x1e4] sm:$0xff]
  %v86 = vld [vmem:[%s0 + $0x1ec] sm:$0xff]
  %v87 = vld [vmem:[%s0 + $0x1f4] sm:$0xf]
  %v88 = vld [vmem:[%s0 + $0x1f8] sm:$0xff]
  %v89 = vld [vmem:[%s0 + $0x200] sm:$0xff]
  %v90 = vld [vmem:[%s0 + $0x208] sm:$0xff]
  %v91 = vld [vmem:[%s0 + $0x210] sm:$0xff]
  %v92 = vld [vmem:[%s0 + $0x218] sm:$0xf]
  %v93 = vld [vmem:[%s0 + $0x21c] sm:$0xff]
  %v94 = vld [vmem:[%s0 + $0x224] sm:$0xff]
  %v95 = vld [vmem:[%s0 + $0x22c] sm:$0xff]
  %v96 = vld [vmem:[%s0 + $0x234] sm:$0xff]
  %v97 = vld [vmem:[%s0 + $0x23c] sm:$0xf]
  %v98 = vld [vmem:[%s1] sm:$0xf]
  %v99 = vld [vmem:[%s1 + $0x4] sm:$0xf]
  %v100 = vld [vmem:[%s1 + $0x8] sm:$0xf]
  %v101 = vld [vmem:[%s1 + $0xc] sm:$0xf]
  %v102 = vld [vmem:[%s1 + $0x10] sm:$0xf]
  %v103 = vld [vmem:[%s1 + $0x14] sm:$0xf]
  %v104 = vld [vmem:[%s1 + $0x18] sm:$0xf]
  %v105 = vld [vmem:[%s1 + $0x1c] sm:$0xf]
  %v106 = vld [vmem:[%s1 + $0x20] sm:$0xf]
  %v107 = vld [vmem:[%s1 + $0x24] sm:$0xf]
  %v108 = vld [vmem:[%s1 + $0x28] sm:$0xf]
  %v109 = vld [vmem:[%s1 + $0x2c] sm:$0xf]
  %v110 = vld [vmem:[%s1 + $0x30] sm:$0xf]
  %v111 = vld [vmem:[%s1 + $0x34] sm:$0xf]
  %v112 = vld [vmem:[%s1 + $0x38] sm:$0xf]
  %v113 = vld [vmem:[%s1 + $0x3c] sm:$0xf]
  %v114 = vld [vmem:[%s1 + $0x40] sm:$0xf]
  %v115 = vld [vmem:[%s1 + $0x44] sm:$0xf]
  %v116 = vld [vmem:[%s1 + $0x48] sm:$0xf]
  %v117 = vld [vmem:[%s1 + $0x4c] sm:$0xf]
  %v118 = vld [vmem:[%s1 + $0x50] sm:$0xf]
  %v119 = vld [vmem:[%s1 + $0x54] sm:$0xf]
  %v120 = vld [vmem:[%s1 + $0x58] sm:$0xf]
  %v121 = vld [vmem:[%s1 + $0x5c] sm:$0xf]
  %v122 = vld [vmem:[%s1 + $0x60] sm:$0xf]
  %v123 = vld [vmem:[%s1 + $0x64] sm:$0xf]
  %v124 = vld [vmem:[%s1 + $0x68] sm:$0xf]
  %v125 = vld [vmem:[%s1 + $0x6c] sm:$0xf]
  %v126 = vld [vmem:[%s1 + $0x70] sm:$0xf]
  %v127 = vld [vmem:[%s1 + $0x74] sm:$0xf]
  %v128 = vld [vmem:[%s1 + $0x78] sm:$0xf]
  %v129 = vld [vmem:[%s1 + $0x7c] sm:$0xf]
  %v130 = vld [vmem:[%s1 + $0x80] sm:$0xf]
  %v131 = vld [vmem:[%s1 + $0x84] sm:$0xf]
  %v132 = vld [vmem:[%s1 + $0x88] sm:$0xf]
  %v133 = vld [vmem:[%s1 + $0x8c] sm:$0xf]
  %v134 = vld [vmem:[%s1 + $0x90] sm:$0xf]
  %v135 = vld [vmem:[%s1 + $0x94] sm:$0xf]
  %v136 = vld [vmem:[%s1 + $0x98] sm:$0xf]
  %v137 = vld [vmem:[%s1 + $0x9c] sm:$0xf]
  %v138 = vld [vmem:[%s1 + $0xa0] sm:$0xf]
  %v139 = vld [vmem:[%s1 + $0xa4] sm:$0xf]
  %v140 = vld [vmem:[%s1 + $0xa8] sm:$0xf]
  %v141 = vld [vmem:[%s1 + $0xac] sm:$0xf]
  %v142 = vld [vmem:[%s1 + $0xb0] sm:$0xf]
  %v143 = vld [vmem:[%s1 + $0xb4] sm:$0xf]
  %v144 = vld [vmem:[%s1 + $0xb8] sm:$0xf]
  %v145 = vld [vmem:[%s1 + $0xbc] sm:$0xf]
  %v146 = vld [vmem:[%s1 + $0xc0] sm:$0xf]
  %v147 = vld [vmem:[%s1 + $0xc4] sm:$0xf]
  %v148 = vld [vmem:[%s1 + $0xc8] sm:$0xf]
  %v149 = vld [vmem:[%s1 + $0xcc] sm:$0xf]
  %v150 = vld [vmem:[%s1 + $0xd0] sm:$0xf]
  %v151 = vld [vmem:[%s1 + $0xd4] sm:$0xf]
  %v152 = vld [vmem:[%s1 + $0xd8] sm:$0xf]
  %v153 = vld [vmem:[%s1 + $0xdc] sm:$0xf]
  %v154 = vld [vmem:[%s1 + $0xe0] sm:$0xf]
  %v155 = vld [vmem:[%s1 + $0xe4] sm:$0xf]
  %v156 = vld [vmem:[%s1 + $0xe8] sm:$0xf]
  %v157 = vld [vmem:[%s1 + $0xec] sm:$0xf]
  %v158 = vld [vmem:[%s1 + $0xf0] sm:$0xf]
  %v159 = vld [vmem:[%s1 + $0xf4] sm:$0xf]
  %v160 = vld [vmem:[%s1 + $0xf8] sm:$0xf]
  %v161 = vld [vmem:[%s1 + $0xfc] sm:$0xf]
  %v162 = vld [vmem:[%s1 + $0x100] sm:$0xf]
  %v163 = vld [vmem:[%s1 + $0x104] sm:$0xf]
  %v164 = vld [vmem:[%s1 + $0x108] sm:$0xf]
  %v165 = vld [vmem:[%s1 + $0x10c] sm:$0xf]
  %v166 = vld [vmem:[%s1 + $0x110] sm:$0xf]
  %v167 = vld [vmem:[%s1 + $0x114] sm:$0xf]
  %v168 = vld [vmem:[%s1 + $0x118] sm:$0xf]
  %v169 = vld [vmem:[%s1 + $0x11c] sm:$0xf]
  %v170 = vld [vmem:[%s1 + $0x120] sm:$0xf]
  %v171 = vld [vmem:[%s1 + $0x124] sm:$0xf]
  %v172 = vld [vmem:[%s1 + $0x128] sm:$0xf]
  %v173 = vld [vmem:[%s1 + $0x12c] sm:$0xf]
  %v174 = vld [vmem:[%s1 + $0x130] sm:$0xf]
  %v175 = vld [vmem:[%s1 + $0x134] sm:$0xf]
  %v176 = vld [vmem:[%s1 + $0x138] sm:$0xf]
  %v177 = vld [vmem:[%s1 + $0x13c] sm:$0xf]
  %v178 = vld [vmem:[%s1 + $0x140] sm:$0xf]
  %v179 = vld [vmem:[%s1 + $0x144] sm:$0xf]
  %v180 = vld [vmem:[%s1 + $0x148] sm:$0xf]
  %v181 = vld [vmem:[%s1 + $0x14c] sm:$0xf]
  %v182 = vld [vmem:[%s1 + $0x150] sm:$0xf]
  %v183 = vld [vmem:[%s1 + $0x154] sm:$0xf]
  %v184 = vld [vmem:[%s1 + $0x158] sm:$0xf]
  %v185 = vld [vmem:[%s1 + $0x15c] sm:$0xf]
  %v186 = vld [vmem:[%s1 + $0x160] sm:$0xf]
  %v187 = vld [vmem:[%s1 + $0x164] sm:$0xf]
  %v188 = vld [vmem:[%s1 + $0x168] sm:$0xf]
  %v189 = vld [vmem:[%s1 + $0x16c] sm:$0xf]
  %v190 = vld [vmem:[%s1 + $0x170] sm:$0xf]
  %v191 = vld [vmem:[%s1 + $0x174] sm:$0xf]
  %v192 = vld [vmem:[%s1 + $0x178] sm:$0xf]
  %v193 = vld [vmem:[%s1 + $0x17c] sm:$0xf]
  %v194 = vld [vmem:[%s1 + $0x180] sm:$0xf]
  %v195 = vld [vmem:[%s1 + $0x184] sm:$0xf]
  %v196 = vld [vmem:[%s1 + $0x188] sm:$0xf]
  %v197 = vld [vmem:[%s1 + $0x18c] sm:$0xf]
  %v198 = vld [vmem:[%s1 + $0x190] sm:$0xf]
  %v199 = vld [vmem:[%s1 + $0x194] sm:$0xf]
  %v200 = vld [vmem:[%s1 + $0x198] sm:$0xf]
  %v201 = vld [vmem:[%s1 + $0x19c] sm:$0xf]
  %v202 = vld [vmem:[%s1 + $0x1a0] sm:$0xf]
  %v203 = vld [vmem:[%s1 + $0x1a4] sm:$0xf]
  %v204 = vld [vmem:[%s1 + $0x1a8] sm:$0xf]
  %v205 = vld [vmem:[%s1 + $0x1ac] sm:$0xf]
  %v206 = vld [vmem:[%s1 + $0x1b0] sm:$0xf]
  %v207 = vld [vmem:[%s1 + $0x1b4] sm:$0xf]
  %v208 = vld [vmem:[%s1 + $0x1b8] sm:$0xf]
  %v209 = vld [vmem:[%s1 + $0x1bc] sm:$0xf]
  %v210 = vld [vmem:[%s1 + $0x1c0] sm:$0xf]
  %v211 = vld [vmem:[%s1 + $0x1c4] sm:$0xf]
  %v212 = vld [vmem:[%s1 + $0x1c8] sm:$0xf]
  %v213 = vld [vmem:[%s1 + $0x1cc] sm:$0xf]
  %v214 = vld [vmem:[%s1 + $0x1d0] sm:$0xf]
  %v215 = vld [vmem:[%s1 + $0x1d4] sm:$0xf]
  %v216 = vld [vmem:[%s1 + $0x1d8] sm:$0xf]
  %v217 = vld [vmem:[%s1 + $0x1dc] sm:$0xf]
  %v218 = vld [vmem:[%s1 + $0x1e0] sm:$0xf]
  %v219 = vld [vmem:[%s1 + $0x1e4] sm:$0xf]
  %v220 = vld [vmem:[%s1 + $0x1e8] sm:$0xf]
  %v221 = vld [vmem:[%s1 + $0x1ec] sm:$0xf]
  %v222 = vld [vmem:[%s1 + $0x1f0] sm:$0xf]
  %v223 = vld [vmem:[%s1 + $0x1f4] sm:$0xf]
  %v224 = vld [vmem:[%s1 + $0x1f8] sm:$0xf]
  %v225 = vld [vmem:[%s1 + $0x1fc] sm:$0xf]
  %v226 = vld [vmem:[%s1 + $0x200] sm:$0xf]
  %v227 = vld [vmem:[%s1 + $0x204] sm:$0xf]
  %v228 = vld [vmem:[%s1 + $0x208] sm:$0xf]
  %v229 = vld [vmem:[%s1 + $0x20c] sm:$0xf]
  %v230 = vld [vmem:[%s1 + $0x210] sm:$0xf]
  %v231 = vld [vmem:[%s1 + $0x214] sm:$0xf]
  %v232 = vld [vmem:[%s1 + $0x218] sm:$0xf]
  %v233 = vld [vmem:[%s1 + $0x21c] sm:$0xf]
  %v234 = vld [vmem:[%s1 + $0x220] sm:$0xf]
  %v235 = vld [vmem:[%s1 + $0x224] sm:$0xf]
  %v236 = vld [vmem:[%s1 + $0x228] sm:$0xf]
  %v237 = vld [vmem:[%s1 + $0x22c] sm:$0xf]
  %v238 = vld [vmem:[%s1 + $0x230] sm:$0xf]
  %v239 = vld [vmem:[%s1 + $0x234] sm:$0xf]
  %v240 = vld [vmem:[%s1 + $0x238] sm:$0xf]
  %v241 = vld [vmem:[%s1 + $0x23c] sm:$0xf]
  %v242 = vld [vmem:[%s2] sm:$0x1]
  %v244 = vlaneseq
  %v245 = vshrl.u32 %v244, 7
  %v246 = vsub.s32 0, %v245
  %v247 = vrot.slane %v242, %v246
  %v329 = vunpack.c.l.b16 %v18
  %v330 = vunpack.c.h.b16 %v18
  %v331 = vunpack.c.l.b16 %v19
  %v332 = vunpack.c.h.b16 %v19
  %v333 = vunpack.c.l.b16 %v20
  %v334 = vunpack.c.h.b16 %v20
  %v335 = vunpack.c.l.b16 %v21
  %v336 = vunpack.c.h.b16 %v21
  %v337 = vunpack.c.l.b16 %v22
  %v338 = vunpack.c.l.b16 %v23
  %v339 = vunpack.c.h.b16 %v23
  %v340 = vunpack.c.l.b16 %v24
  %v341 = vunpack.c.h.b16 %v24
  %v342 = vunpack.c.l.b16 %v25
  %v343 = vunpack.c.h.b16 %v25
  %v344 = vunpack.c.l.b16 %v26
  %v345 = vunpack.c.h.b16 %v26
  %v346 = vunpack.c.l.b16 %v27
  %v347 = vunpack.c.l.b16 %v28
  %v348 = vunpack.c.h.b16 %v28
  %v349 = vunpack.c.l.b16 %v29
  %v350 = vunpack.c.h.b16 %v29
  %v351 = vunpack.c.l.b16 %v30
  %v352 = vunpack.c.h.b16 %v30
  %v353 = vunpack.c.l.b16 %v31
  %v354 = vunpack.c.h.b16 %v31
  %v355 = vunpack.c.l.b16 %v32
  %v356 = vunpack.c.l.b16 %v33
  %v357 = vunpack.c.h.b16 %v33
  %v358 = vunpack.c.l.b16 %v34
  %v359 = vunpack.c.h.b16 %v34
  %v360 = vunpack.c.l.b16 %v35
  %v361 = vunpack.c.h.b16 %v35
  %v362 = vunpack.c.l.b16 %v36
  %v363 = vunpack.c.h.b16 %v36
  %v364 = vunpack.c.l.b16 %v37
  %v365 = vunpack.c.l.b16 %v38
  %v366 = vunpack.c.h.b16 %v38
  %v367 = vunpack.c.l.b16 %v39
  %v368 = vunpack.c.h.b16 %v39
  %v369 = vunpack.c.l.b16 %v40
  %v370 = vunpack.c.h.b16 %v40
  %v371 = vunpack.c.l.b16 %v41
  %v372 = vunpack.c.h.b16 %v41
  %v373 = vunpack.c.l.b16 %v42
  %v374 = vunpack.c.l.b16 %v43
  %v375 = vunpack.c.h.b16 %v43
  %v376 = vunpack.c.l.b16 %v44
  %v377 = vunpack.c.h.b16 %v44
  %v378 = vunpack.c.l.b16 %v45
  %v379 = vunpack.c.h.b16 %v45
  %v380 = vunpack.c.l.b16 %v46
  %v381 = vunpack.c.h.b16 %v46
  %v382 = vunpack.c.l.b16 %v47
  %v383 = vunpack.c.l.b16 %v48
  %v384 = vunpack.c.h.b16 %v48
  %v385 = vunpack.c.l.b16 %v49
  %v386 = vunpack.c.h.b16 %v49
  %v387 = vunpack.c.l.b16 %v50
  %v388 = vunpack.c.h.b16 %v50
  %v389 = vunpack.c.l.b16 %v51
  %v390 = vunpack.c.h.b16 %v51
  %v391 = vunpack.c.l.b16 %v52
  %v392 = vunpack.c.l.b16 %v53
  %v393 = vunpack.c.h.b16 %v53
  %v394 = vunpack.c.l.b16 %v54
  %v395 = vunpack.c.h.b16 %v54
  %v396 = vunpack.c.l.b16 %v55
  %v397 = vunpack.c.h.b16 %v55
  %v398 = vunpack.c.l.b16 %v56
  %v399 = vunpack.c.h.b16 %v56
  %v400 = vunpack.c.l.b16 %v57
  %v401 = vunpack.c.l.b16 %v58
  %v402 = vunpack.c.h.b16 %v58
  %v403 = vunpack.c.l.b16 %v59
  %v404 = vunpack.c.h.b16 %v59
  %v405 = vunpack.c.l.b16 %v60
  %v406 = vunpack.c.h.b16 %v60
  %v407 = vunpack.c.l.b16 %v61
  %v408 = vunpack.c.h.b16 %v61
  %v409 = vunpack.c.l.b16 %v62
  %v410 = vunpack.c.l.b16 %v63
  %v411 = vunpack.c.h.b16 %v63
  %v412 = vunpack.c.l.b16 %v64
  %v413 = vunpack.c.h.b16 %v64
  %v414 = vunpack.c.l.b16 %v65
  %v415 = vunpack.c.h.b16 %v65
  %v416 = vunpack.c.l.b16 %v66
  %v417 = vunpack.c.h.b16 %v66
  %v418 = vunpack.c.l.b16 %v67
  %v419 = vunpack.c.l.b16 %v68
  %v420 = vunpack.c.h.b16 %v68
  %v421 = vunpack.c.l.b16 %v69
  %v422 = vunpack.c.h.b16 %v69
  %v423 = vunpack.c.l.b16 %v70
  %v424 = vunpack.c.h.b16 %v70
  %v425 = vunpack.c.l.b16 %v71
  %v426 = vunpack.c.h.b16 %v71
  %v427 = vunpack.c.l.b16 %v72
  %v428 = vunpack.c.l.b16 %v73
  %v429 = vunpack.c.h.b16 %v73
  %v430 = vunpack.c.l.b16 %v74
  %v431 = vunpack.c.h.b16 %v74
  %v432 = vunpack.c.l.b16 %v75
  %v433 = vunpack.c.h.b16 %v75
  %v434 = vunpack.c.l.b16 %v76
  %v435 = vunpack.c.h.b16 %v76
  %v436 = vunpack.c.l.b16 %v77
  %v437 = vunpack.c.l.b16 %v78
  %v438 = vunpack.c.h.b16 %v78
  %v439 = vunpack.c.l.b16 %v79
  %v440 = vunpack.c.h.b16 %v79
  %v441 = vunpack.c.l.b16 %v80
  %v442 = vunpack.c.h.b16 %v80
  %v443 = vunpack.c.l.b16 %v81
  %v444 = vunpack.c.h.b16 %v81
  %v445 = vunpack.c.l.b16 %v82
  %v446 = vunpack.c.l.b16 %v83
  %v447 = vunpack.c.h.b16 %v83
  %v448 = vunpack.c.l.b16 %v84
  %v449 = vunpack.c.h.b16 %v84
  %v450 = vunpack.c.l.b16 %v85
  %v451 = vunpack.c.h.b16 %v85
  %v452 = vunpack.c.l.b16 %v86
  %v453 = vunpack.c.h.b16 %v86
  %v454 = vunpack.c.l.b16 %v87
  %v455 = vunpack.c.l.b16 %v88
  %v456 = vunpack.c.h.b16 %v88
  %v457 = vunpack.c.l.b16 %v89
  %v458 = vunpack.c.h.b16 %v89
  %v459 = vunpack.c.l.b16 %v90
  %v460 = vunpack.c.h.b16 %v90
  %v461 = vunpack.c.l.b16 %v91
  %v462 = vunpack.c.h.b16 %v91
  %v463 = vunpack.c.l.b16 %v92
  %v464 = vunpack.c.l.b16 %v93
  %v465 = vunpack.c.h.b16 %v93
  %v466 = vunpack.c.l.b16 %v94
  %v467 = vunpack.c.h.b16 %v94
  %v468 = vunpack.c.l.b16 %v95
  %v469 = vunpack.c.h.b16 %v95
  %v470 = vunpack.c.l.b16 %v96
  %v471 = vunpack.c.h.b16 %v96
  %v472 = vunpack.c.l.b16 %v97
  %v473 = vpack.c.b16 %v338, %v329
  %v474 = vpack.c.b16 %v339, %v330
  %v475 = vpack.c.b16 %v340, %v331
  %v476 = vpack.c.b16 %v341, %v332
  %v477 = vpack.c.b16 %v342, %v333
  %v478 = vpack.c.b16 %v343, %v334
  %v479 = vpack.c.b16 %v344, %v335
  %v480 = vpack.c.b16 %v345, %v336
  %v481 = vpack.c.b16 %v346, %v337
  %v482 = vpack.c.b16 %v356, %v347
  %v483 = vpack.c.b16 %v357, %v348
  %v484 = vpack.c.b16 %v358, %v349
  %v485 = vpack.c.b16 %v359, %v350
  %v486 = vpack.c.b16 %v360, %v351
  %v487 = vpack.c.b16 %v361, %v352
  %v488 = vpack.c.b16 %v362, %v353
  %v489 = vpack.c.b16 %v363, %v354
  %v490 = vpack.c.b16 %v364, %v355
  %v491 = vpack.c.b16 %v374, %v365
  %v492 = vpack.c.b16 %v375, %v366
  %v493 = vpack.c.b16 %v376, %v367
  %v494 = vpack.c.b16 %v377, %v368
  %v495 = vpack.c.b16 %v378, %v369
  %v496 = vpack.c.b16 %v379, %v370
  %v497 = vpack.c.b16 %v380, %v371
  %v498 = vpack.c.b16 %v381, %v372
  %v499 = vpack.c.b16 %v382, %v373
  %v500 = vpack.c.b16 %v392, %v383
  %v501 = vpack.c.b16 %v393, %v384
  %v502 = vpack.c.b16 %v394, %v385
  %v503 = vpack.c.b16 %v395, %v386
  %v504 = vpack.c.b16 %v396, %v387
  %v505 = vpack.c.b16 %v397, %v388
  %v506 = vpack.c.b16 %v398, %v389
  %v507 = vpack.c.b16 %v399, %v390
  %v508 = vpack.c.b16 %v400, %v391
  %v509 = vpack.c.b16 %v410, %v401
  %v510 = vpack.c.b16 %v411, %v402
  %v511 = vpack.c.b16 %v412, %v403
  %v512 = vpack.c.b16 %v413, %v404
  %v513 = vpack.c.b16 %v414, %v405
  %v514 = vpack.c.b16 %v415, %v406
  %v515 = vpack.c.b16 %v416, %v407
  %v516 = vpack.c.b16 %v417, %v408
  %v517 = vpack.c.b16 %v418, %v409
  %v518 = vpack.c.b16 %v428, %v419
  %v519 = vpack.c.b16 %v429, %v420
  %v520 = vpack.c.b16 %v430, %v421
  %v521 = vpack.c.b16 %v431, %v422
  %v522 = vpack.c.b16 %v432, %v423
  %v523 = vpack.c.b16 %v433, %v424
  %v524 = vpack.c.b16 %v434, %v425
  %v525 = vpack.c.b16 %v435, %v426
  %v526 = vpack.c.b16 %v436, %v427
  %v527 = vpack.c.b16 %v446, %v437
  %v528 = vpack.c.b16 %v447, %v438
  %v529 = vpack.c.b16 %v448, %v439
  %v530 = vpack.c.b16 %v449, %v440
  %v531 = vpack.c.b16 %v450, %v441
  %v532 = vpack.c.b16 %v451, %v442
  %v533 = vpack.c.b16 %v452, %v443
  %v534 = vpack.c.b16 %v453, %v444
  %v535 = vpack.c.b16 %v454, %v445
  %v536 = vpack.c.b16 %v464, %v455
  %v537 = vpack.c.b16 %v465, %v456
  %v538 = vpack.c.b16 %v466, %v457
  %v539 = vpack.c.b16 %v467, %v458
  %v540 = vpack.c.b16 %v468, %v459
  %v541 = vpack.c.b16 %v469, %v460
  %v542 = vpack.c.b16 %v470, %v461
  %v543 = vpack.c.b16 %v471, %v462
  %v544 = vpack.c.b16 %v472, %v463
  %v761 = vunpack.c.l.b16 %v98
  %v762 = vunpack.c.l.b16 %v99
  %v763 = vunpack.c.l.b16 %v100
  %v764 = vunpack.c.l.b16 %v101
  %v765 = vunpack.c.l.b16 %v102
  %v766 = vunpack.c.l.b16 %v103
  %v767 = vunpack.c.l.b16 %v104
  %v768 = vunpack.c.l.b16 %v105
  %v769 = vunpack.c.l.b16 %v106
  %v770 = vunpack.c.l.b16 %v107
  %v771 = vunpack.c.l.b16 %v108
  %v772 = vunpack.c.l.b16 %v109
  %v773 = vunpack.c.l.b16 %v110
  %v774 = vunpack.c.l.b16 %v111
  %v775 = vunpack.c.l.b16 %v112
  %v776 = vunpack.c.l.b16 %v113
  %v777 = vunpack.c.l.b16 %v114
  %v778 = vunpack.c.l.b16 %v115
  %v779 = vunpack.c.l.b16 %v116
  %v780 = vunpack.c.l.b16 %v117
  %v781 = vunpack.c.l.b16 %v118
  %v782 = vunpack.c.l.b16 %v119
  %v783 = vunpack.c.l.b16 %v120
  %v784 = vunpack.c.l.b16 %v121
  %v785 = vunpack.c.l.b16 %v122
  %v786 = vunpack.c.l.b16 %v123
  %v787 = vunpack.c.l.b16 %v124
  %v788 = vunpack.c.l.b16 %v125
  %v789 = vunpack.c.l.b16 %v126
  %v790 = vunpack.c.l.b16 %v127
  %v791 = vunpack.c.l.b16 %v128
  %v792 = vunpack.c.l.b16 %v129
  %v793 = vunpack.c.l.b16 %v130
  %v794 = vunpack.c.l.b16 %v131
  %v795 = vunpack.c.l.b16 %v132
  %v796 = vunpack.c.l.b16 %v133
  %v797 = vunpack.c.l.b16 %v134
  %v798 = vunpack.c.l.b16 %v135
  %v799 = vunpack.c.l.b16 %v136
  %v800 = vunpack.c.l.b16 %v137
  %v801 = vunpack.c.l.b16 %v138
  %v802 = vunpack.c.l.b16 %v139
  %v803 = vunpack.c.l.b16 %v140
  %v804 = vunpack.c.l.b16 %v141
  %v805 = vunpack.c.l.b16 %v142
  %v806 = vunpack.c.l.b16 %v143
  %v807 = vunpack.c.l.b16 %v144
  %v808 = vunpack.c.l.b16 %v145
  %v809 = vunpack.c.l.b16 %v146
  %v810 = vunpack.c.l.b16 %v147
  %v811 = vunpack.c.l.b16 %v148
  %v812 = vunpack.c.l.b16 %v149
  %v813 = vunpack.c.l.b16 %v150
  %v814 = vunpack.c.l.b16 %v151
  %v815 = vunpack.c.l.b16 %v152
  %v816 = vunpack.c.l.b16 %v153
  %v817 = vunpack.c.l.b16 %v154
  %v818 = vunpack.c.l.b16 %v155
  %v819 = vunpack.c.l.b16 %v156
  %v820 = vunpack.c.l.b16 %v157
  %v821 = vunpack.c.l.b16 %v158
  %v822 = vunpack.c.l.b16 %v159
  %v823 = vunpack.c.l.b16 %v160
  %v824 = vunpack.c.l.b16 %v161
  %v825 = vunpack.c.l.b16 %v162
  %v826 = vunpack.c.l.b16 %v163
  %v827 = vunpack.c.l.b16 %v164
  %v828 = vunpack.c.l.b16 %v165
  %v829 = vunpack.c.l.b16 %v166
  %v830 = vunpack.c.l.b16 %v167
  %v831 = vunpack.c.l.b16 %v168
  %v832 = vunpack.c.l.b16 %v169
  %v833 = vunpack.c.l.b16 %v170
  %v834 = vunpack.c.l.b16 %v171
  %v835 = vunpack.c.l.b16 %v172
  %v836 = vunpack.c.l.b16 %v173
  %v837 = vunpack.c.l.b16 %v174
  %v838 = vunpack.c.l.b16 %v175
  %v839 = vunpack.c.l.b16 %v176
  %v840 = vunpack.c.l.b16 %v177
  %v841 = vunpack.c.l.b16 %v178
  %v842 = vunpack.c.l.b16 %v179
  %v843 = vunpack.c.l.b16 %v180
  %v844 = vunpack.c.l.b16 %v181
  %v845 = vunpack.c.l.b16 %v182
  %v846 = vunpack.c.l.b16 %v183
  %v847 = vunpack.c.l.b16 %v184
  %v848 = vunpack.c.l.b16 %v185
  %v849 = vunpack.c.l.b16 %v186
  %v850 = vunpack.c.l.b16 %v187
  %v851 = vunpack.c.l.b16 %v188
  %v852 = vunpack.c.l.b16 %v189
  %v853 = vunpack.c.l.b16 %v190
  %v854 = vunpack.c.l.b16 %v191
  %v855 = vunpack.c.l.b16 %v192
  %v856 = vunpack.c.l.b16 %v193
  %v857 = vunpack.c.l.b16 %v194
  %v858 = vunpack.c.l.b16 %v195
  %v859 = vunpack.c.l.b16 %v196
  %v860 = vunpack.c.l.b16 %v197
  %v861 = vunpack.c.l.b16 %v198
  %v862 = vunpack.c.l.b16 %v199
  %v863 = vunpack.c.l.b16 %v200
  %v864 = vunpack.c.l.b16 %v201
  %v865 = vunpack.c.l.b16 %v202
  %v866 = vunpack.c.l.b16 %v203
  %v867 = vunpack.c.l.b16 %v204
  %v868 = vunpack.c.l.b16 %v205
  %v869 = vunpack.c.l.b16 %v206
  %v870 = vunpack.c.l.b16 %v207
  %v871 = vunpack.c.l.b16 %v208
  %v872 = vunpack.c.l.b16 %v209
  %v873 = vunpack.c.l.b16 %v210
  %v874 = vunpack.c.l.b16 %v211
  %v875 = vunpack.c.l.b16 %v212
  %v876 = vunpack.c.l.b16 %v213
  %v877 = vunpack.c.l.b16 %v214
  %v878 = vunpack.c.l.b16 %v215
  %v879 = vunpack.c.l.b16 %v216
  %v880 = vunpack.c.l.b16 %v217
  %v881 = vunpack.c.l.b16 %v218
  %v882 = vunpack.c.l.b16 %v219
  %v883 = vunpack.c.l.b16 %v220
  %v884 = vunpack.c.l.b16 %v221
  %v885 = vunpack.c.l.b16 %v222
  %v886 = vunpack.c.l.b16 %v223
  %v887 = vunpack.c.l.b16 %v224
  %v888 = vunpack.c.l.b16 %v225
  %v889 = vunpack.c.l.b16 %v226
  %v890 = vunpack.c.l.b16 %v227
  %v891 = vunpack.c.l.b16 %v228
  %v892 = vunpack.c.l.b16 %v229
  %v893 = vunpack.c.l.b16 %v230
  %v894 = vunpack.c.l.b16 %v231
  %v895 = vunpack.c.l.b16 %v232
  %v896 = vunpack.c.l.b16 %v233
  %v897 = vunpack.c.l.b16 %v234
  %v898 = vunpack.c.l.b16 %v235
  %v899 = vunpack.c.l.b16 %v236
  %v900 = vunpack.c.l.b16 %v237
  %v901 = vunpack.c.l.b16 %v238
  %v902 = vunpack.c.l.b16 %v239
  %v903 = vunpack.c.l.b16 %v240
  %v904 = vunpack.c.l.b16 %v241
  %v905 = vpack.c.b16 %v762, %v761
  %v906 = vpack.c.b16 %v764, %v763
  %v907 = vpack.c.b16 %v766, %v765
  %v908 = vpack.c.b16 %v768, %v767
  %v909 = vpack.c.b16 %v770, %v769
  %v910 = vpack.c.b16 %v772, %v771
  %v911 = vpack.c.b16 %v774, %v773
  %v912 = vpack.c.b16 %v776, %v775
  %v913 = vpack.c.b16 %v778, %v777
  %v914 = vpack.c.b16 %v780, %v779
  %v915 = vpack.c.b16 %v782, %v781
  %v916 = vpack.c.b16 %v784, %v783
  %v917 = vpack.c.b16 %v786, %v785
  %v918 = vpack.c.b16 %v788, %v787
  %v919 = vpack.c.b16 %v790, %v789
  %v920 = vpack.c.b16 %v792, %v791
  %v921 = vpack.c.b16 %v794, %v793
  %v922 = vpack.c.b16 %v796, %v795
  %v923 = vpack.c.b16 %v798, %v797
  %v924 = vpack.c.b16 %v800, %v799
  %v925 = vpack.c.b16 %v802, %v801
  %v926 = vpack.c.b16 %v804, %v803
  %v927 = vpack.c.b16 %v806, %v805
  %v928 = vpack.c.b16 %v808, %v807
  %v929 = vpack.c.b16 %v810, %v809
  %v930 = vpack.c.b16 %v812, %v811
  %v931 = vpack.c.b16 %v814, %v813
  %v932 = vpack.c.b16 %v816, %v815
  %v933 = vpack.c.b16 %v818, %v817
  %v934 = vpack.c.b16 %v820, %v819
  %v935 = vpack.c.b16 %v822, %v821
  %v936 = vpack.c.b16 %v824, %v823
  %v937 = vpack.c.b16 %v826, %v825
  %v938 = vpack.c.b16 %v828, %v827
  %v939 = vpack.c.b16 %v830, %v829
  %v940 = vpack.c.b16 %v832, %v831
  %v941 = vpack.c.b16 %v834, %v833
  %v942 = vpack.c.b16 %v836, %v835
  %v943 = vpack.c.b16 %v838, %v837
  %v944 = vpack.c.b16 %v840, %v839
  %v945 = vpack.c.b16 %v842, %v841
  %v946 = vpack.c.b16 %v844, %v843
  %v947 = vpack.c.b16 %v846, %v845
  %v948 = vpack.c.b16 %v848, %v847
  %v949 = vpack.c.b16 %v850, %v849
  %v950 = vpack.c.b16 %v852, %v851
  %v951 = vpack.c.b16 %v854, %v853
  %v952 = vpack.c.b16 %v856, %v855
  %v953 = vpack.c.b16 %v858, %v857
  %v954 = vpack.c.b16 %v860, %v859
  %v955 = vpack.c.b16 %v862, %v861
  %v956 = vpack.c.b16 %v864, %v863
  %v957 = vpack.c.b16 %v866, %v865
  %v958 = vpack.c.b16 %v868, %v867
  %v959 = vpack.c.b16 %v870, %v869
  %v960 = vpack.c.b16 %v872, %v871
  %v961 = vpack.c.b16 %v874, %v873
  %v962 = vpack.c.b16 %v876, %v875
  %v963 = vpack.c.b16 %v878, %v877
  %v964 = vpack.c.b16 %v880, %v879
  %v965 = vpack.c.b16 %v882, %v881
  %v966 = vpack.c.b16 %v884, %v883
  %v967 = vpack.c.b16 %v886, %v885
  %v968 = vpack.c.b16 %v888, %v887
  %v969 = vpack.c.b16 %v890, %v889
  %v970 = vpack.c.b16 %v892, %v891
  %v971 = vpack.c.b16 %v894, %v893
  %v972 = vpack.c.b16 %v896, %v895
  %v973 = vpack.c.b16 %v898, %v897
  %v974 = vpack.c.b16 %v900, %v899
  %v975 = vpack.c.b16 %v902, %v901
  %v976 = vpack.c.b16 %v904, %v903
  %1049 = vmatprep.subr.bf16.mxu0 0
  %1050 = vmatpush1.bf16.msra.mxu0 %v912
  %1051 = vmatprep.subr.bf16.mxu0 0
  %1052 = vmatpush1.bf16.msra.mxu0 %v911
  %1053 = vmatprep.subr.bf16.mxu0 0
  %1054 = vmatpush1.bf16.msra.mxu0 %v910
  %1055 = vmatprep.subr.bf16.mxu0 0
  %1056 = vmatpush1.bf16.msra.mxu0 %v909
  %1057 = vmatprep.subr.bf16.mxu0 0
  %1058 = vmatpush1.bf16.msra.mxu0 %v908
  %1059 = vmatprep.subr.bf16.mxu0 0
  %1060 = vmatpush1.bf16.msra.mxu0 %v907
  %1061 = vmatprep.subr.bf16.mxu0 0
  %1062 = vmatpush1.bf16.msra.mxu0 %v906
  %1063 = vmatprep.subr.bf16.mxu0 0
  %1064 = vmatpush1.bf16.msra.mxu0 %v905
  %1065 = vmatprep.subr.bf16.mxu0 0
  %1066 = vmatpush2.bf16.msra.mxu0 %v920
  %1067 = vmatprep.subr.bf16.mxu0 0
  %1068 = vmatpush2.bf16.msra.mxu0 %v919
  %1069 = vmatprep.subr.bf16.mxu0 0
  %1070 = vmatpush2.bf16.msra.mxu0 %v918
  %1071 = vmatprep.subr.bf16.mxu0 0
  %1072 = vmatpush2.bf16.msra.mxu0 %v917
  %1073 = vmatprep.subr.bf16.mxu0 0
  %1074 = vmatpush2.bf16.msra.mxu0 %v916
  %1075 = vmatprep.subr.bf16.mxu0 0
  %1076 = vmatpush2.bf16.msra.mxu0 %v915
  %1077 = vmatprep.subr.bf16.mxu0 0
  %1078 = vmatpush2.bf16.msra.mxu0 %v914
  %1079 = vmatprep.subr.bf16.mxu0 0
  %1080 = vmatpush2.bf16.msra.mxu0 %v913
  %1081 = vmatprep.mubr.bf16.mxu0 %v474
  %1082 = vmatmul.mubr.bf16.gmra.mxu0 %v473
  %v1083 = vpop.f32.mrf.mxu0
  %v1084 = vadd.f32 %v247, %v1083
  %v1085 = vpop.f32.mrf.mxu0
  %v1086 = vpop.f32.mrf.mxu0
  %v1087 = vadd.f32 %v247, %v1086
  %v1088 = vpop.f32.mrf.mxu0
  %1089 = vmatprep.mubr.bf16.mxu0 %v483
  %1090 = vmatmul.mubr.bf16.gmra.mxu0 %v482
  %v1091 = vpop.f32.mrf.mxu0
  %v1092 = vadd.f32 %v247, %v1091
  %v1093 = vpop.f32.mrf.mxu0
  %v1094 = vpop.f32.mrf.mxu0
  %v1095 = vadd.f32 %v247, %v1094
  %v1096 = vpop.f32.mrf.mxu0
  %1097 = vmatprep.mubr.bf16.mxu0 %v492
  %1098 = vmatmul.mubr.bf16.gmra.mxu0 %v491
  %v1099 = vpop.f32.mrf.mxu0
  %v1100 = vadd.f32 %v247, %v1099
  %v1101 = vpop.f32.mrf.mxu0
  %v1102 = vpop.f32.mrf.mxu0
  %v1103 = vadd.f32 %v247, %v1102
  %v1104 = vpop.f32.mrf.mxu0
  %1105 = vmatprep.mubr.bf16.mxu0 %v501
  %1106 = vmatmul.mubr.bf16.gmra.mxu0 %v500
  %v1107 = vpop.f32.mrf.mxu0
  %v1108 = vadd.f32 %v247, %v1107
  %v1109 = vpop.f32.mrf.mxu0
  %v1110 = vpop.f32.mrf.mxu0
  %v1111 = vadd.f32 %v247, %v1110
  %v1112 = vpop.f32.mrf.mxu0
  %1113 = vmatprep.mubr.bf16.mxu0 %v510
  %1114 = vmatmul.mubr.bf16.gmra.mxu0 %v509
  %v1115 = vpop.f32.mrf.mxu0
  %v1116 = vadd.f32 %v247, %v1115
  %v1117 = vpop.f32.mrf.mxu0
  %v1118 = vpop.f32.mrf.mxu0
  %v1119 = vadd.f32 %v247, %v1118
  %v1120 = vpop.f32.mrf.mxu0
  %1121 = vmatprep.mubr.bf16.mxu0 %v519
  %1122 = vmatmul.mubr.bf16.gmra.mxu0 %v518
  %v1123 = vpop.f32.mrf.mxu0
  %v1124 = vadd.f32 %v247, %v1123
  %v1125 = vpop.f32.mrf.mxu0
  %v1126 = vpop.f32.mrf.mxu0
  %v1127 = vadd.f32 %v247, %v1126
  %v1128 = vpop.f32.mrf.mxu0
  %1129 = vmatprep.mubr.bf16.mxu0 %v528
  %1130 = vmatmul.mubr.bf16.gmra.mxu0 %v527
  %v1131 = vpop.f32.mrf.mxu0
  %v1132 = vadd.f32 %v247, %v1131
  %v1133 = vpop.f32.mrf.mxu0
  %v1134 = vpop.f32.mrf.mxu0
  %v1135 = vadd.f32 %v247, %v1134
  %v1136 = vpop.f32.mrf.mxu0
  %1137 = vmatprep.mubr.bf16.mxu0 %v537
  %1138 = vmatmul.mubr.bf16.gmra.mxu0 %v536
  %v1139 = vpop.f32.mrf.mxu0
  %v1140 = vadd.f32 %v247, %v1139
  %v1141 = vpop.f32.mrf.mxu0
  %v1142 = vpop.f32.mrf.mxu0
  %v1143 = vadd.f32 %v247, %v1142
  %v1144 = vpop.f32.mrf.mxu0
  %1145 = vdwg.mxu0
  %1146 = vmatprep.subr.bf16.mxu0 0
  %1147 = vmatpush1.bf16.msra.mxu0 %v928
  %1148 = vmatprep.subr.bf16.mxu0 0
  %1149 = vmatpush1.bf16.msra.mxu0 %v927
  %1150 = vmatprep.subr.bf16.mxu0 0
  %1151 = vmatpush1.bf16.msra.mxu0 %v926
  %1152 = vmatprep.subr.bf16.mxu0 0
  %1153 = vmatpush1.bf16.msra.mxu0 %v925
  %1154 = vmatprep.subr.bf16.mxu0 0
  %1155 = vmatpush1.bf16.msra.mxu0 %v924
  %1156 = vmatprep.subr.bf16.mxu0 0
  %1157 = vmatpush1.bf16.msra.mxu0 %v923
  %1158 = vmatprep.subr.bf16.mxu0 0
  %1159 = vmatpush1.bf16.msra.mxu0 %v922
  %1160 = vmatprep.subr.bf16.mxu0 0
  %1161 = vmatpush1.bf16.msra.mxu0 %v921
  %1162 = vmatprep.subr.bf16.mxu0 0
  %1163 = vmatpush2.bf16.msra.mxu0 %v936
  %1164 = vmatprep.subr.bf16.mxu0 0
  %1165 = vmatpush2.bf16.msra.mxu0 %v935
  %1166 = vmatprep.subr.bf16.mxu0 0
  %1167 = vmatpush2.bf16.msra.mxu0 %v934
  %1168 = vmatprep.subr.bf16.mxu0 0
  %1169 = vmatpush2.bf16.msra.mxu0 %v933
  %1170 = vmatprep.subr.bf16.mxu0 0
  %1171 = vmatpush2.bf16.msra.mxu0 %v932
  %1172 = vmatprep.subr.bf16.mxu0 0
  %1173 = vmatpush2.bf16.msra.mxu0 %v931
  %1174 = vmatprep.subr.bf16.mxu0 0
  %1175 = vmatpush2.bf16.msra.mxu0 %v930
  %1176 = vmatprep.subr.bf16.mxu0 0
  %1177 = vmatpush2.bf16.msra.mxu0 %v929
  %1178 = vmatprep.mubr.bf16.mxu0 %v476
  %1179 = vmatmul.mubr.bf16.gmra.mxu0 %v475
  %v1180 = vpop.f32.mrf.mxu0
  %v1181 = vadd.f32 %v1084, %v1180
  %v1182 = vpop.f32.mrf.mxu0
  %v1183 = vpop.f32.mrf.mxu0
  %v1184 = vadd.f32 %v1087, %v1183
  %v1185 = vpop.f32.mrf.mxu0
  %1186 = vmatprep.mubr.bf16.mxu0 %v485
  %1187 = vmatmul.mubr.bf16.gmra.mxu0 %v484
  %v1188 = vpop.f32.mrf.mxu0
  %v1189 = vadd.f32 %v1092, %v1188
  %v1190 = vpop.f32.mrf.mxu0
  %v1191 = vpop.f32.mrf.mxu0
  %v1192 = vadd.f32 %v1095, %v1191
  %v1193 = vpop.f32.mrf.mxu0
  %1194 = vmatprep.mubr.bf16.mxu0 %v494
  %1195 = vmatmul.mubr.bf16.gmra.mxu0 %v493
  %v1196 = vpop.f32.mrf.mxu0
  %v1197 = vadd.f32 %v1100, %v1196
  %v1198 = vpop.f32.mrf.mxu0
  %v1199 = vpop.f32.mrf.mxu0
  %v1200 = vadd.f32 %v1103, %v1199
  %v1201 = vpop.f32.mrf.mxu0
  %1202 = vmatprep.mubr.bf16.mxu0 %v503
  %1203 = vmatmul.mubr.bf16.gmra.mxu0 %v502
  %v1204 = vpop.f32.mrf.mxu0
  %v1205 = vadd.f32 %v1108, %v1204
  %v1206 = vpop.f32.mrf.mxu0
  %v1207 = vpop.f32.mrf.mxu0
  %v1208 = vadd.f32 %v1111, %v1207
  %v1209 = vpop.f32.mrf.mxu0
  %1210 = vmatprep.mubr.bf16.mxu0 %v512
  %1211 = vmatmul.mubr.bf16.gmra.mxu0 %v511
  %v1212 = vpop.f32.mrf.mxu0
  %v1213 = vadd.f32 %v1116, %v1212
  %v1214 = vpop.f32.mrf.mxu0
  %v1215 = vpop.f32.mrf.mxu0
  %v1216 = vadd.f32 %v1119, %v1215
  %v1217 = vpop.f32.mrf.mxu0
  %1218 = vmatprep.mubr.bf16.mxu0 %v521
  %1219 = vmatmul.mubr.bf16.gmra.mxu0 %v520
  %v1220 = vpop.f32.mrf.mxu0
  %v1221 = vadd.f32 %v1124, %v1220
  %v1222 = vpop.f32.mrf.mxu0
  %v1223 = vpop.f32.mrf.mxu0
  %v1224 = vadd.f32 %v1127, %v1223
  %v1225 = vpop.f32.mrf.mxu0
  %1226 = vmatprep.mubr.bf16.mxu0 %v530
  %1227 = vmatmul.mubr.bf16.gmra.mxu0 %v529
  %v1228 = vpop.f32.mrf.mxu0
  %v1229 = vadd.f32 %v1132, %v1228
  %v1230 = vpop.f32.mrf.mxu0
  %v1231 = vpop.f32.mrf.mxu0
  %v1232 = vadd.f32 %v1135, %v1231
  %v1233 = vpop.f32.mrf.mxu0
  %1234 = vmatprep.mubr.bf16.mxu0 %v539
  %1235 = vmatmul.mubr.bf16.gmra.mxu0 %v538
  %v1236 = vpop.f32.mrf.mxu0
  %v1237 = vadd.f32 %v1140, %v1236
  %v1238 = vpop.f32.mrf.mxu0
  %v1239 = vpop.f32.mrf.mxu0
  %v1240 = vadd.f32 %v1143, %v1239
  %v1241 = vpop.f32.mrf.mxu0
  %1242 = vdwg.mxu0
  %1243 = vmatprep.subr.bf16.mxu0 0
  %1244 = vmatpush1.bf16.msra.mxu0 %v944
  %1245 = vmatprep.subr.bf16.mxu0 0
  %1246 = vmatpush1.bf16.msra.mxu0 %v943
  %1247 = vmatprep.subr.bf16.mxu0 0
  %1248 = vmatpush1.bf16.msra.mxu0 %v942
  %1249 = vmatprep.subr.bf16.mxu0 0
  %1250 = vmatpush1.bf16.msra.mxu0 %v941
  %1251 = vmatprep.subr.bf16.mxu0 0
  %1252 = vmatpush1.bf16.msra.mxu0 %v940
  %1253 = vmatprep.subr.bf16.mxu0 0
  %1254 = vmatpush1.bf16.msra.mxu0 %v939
  %1255 = vmatprep.subr.bf16.mxu0 0
  %1256 = vmatpush1.bf16.msra.mxu0 %v938
  %1257 = vmatprep.subr.bf16.mxu0 0
  %1258 = vmatpush1.bf16.msra.mxu0 %v937
  %1259 = vmatprep.subr.bf16.mxu0 0
  %1260 = vmatpush2.bf16.msra.mxu0 %v952
  %1261 = vmatprep.subr.bf16.mxu0 0
  %1262 = vmatpush2.bf16.msra.mxu0 %v951
  %1263 = vmatprep.subr.bf16.mxu0 0
  %1264 = vmatpush2.bf16.msra.mxu0 %v950
  %1265 = vmatprep.subr.bf16.mxu0 0
  %1266 = vmatpush2.bf16.msra.mxu0 %v949
  %1267 = vmatprep.subr.bf16.mxu0 0
  %1268 = vmatpush2.bf16.msra.mxu0 %v948
  %1269 = vmatprep.subr.bf16.mxu0 0
  %1270 = vmatpush2.bf16.msra.mxu0 %v947
  %1271 = vmatprep.subr.bf16.mxu0 0
  %1272 = vmatpush2.bf16.msra.mxu0 %v946
  %1273 = vmatprep.subr.bf16.mxu0 0
  %1274 = vmatpush2.bf16.msra.mxu0 %v945
  %1275 = vmatprep.mubr.bf16.mxu0 %v478
  %1276 = vmatmul.mubr.bf16.gmra.mxu0 %v477
  %v1277 = vpop.f32.mrf.mxu0
  %v1278 = vadd.f32 %v1181, %v1277
  %v1279 = vpop.f32.mrf.mxu0
  %v1280 = vpop.f32.mrf.mxu0
  %v1281 = vadd.f32 %v1184, %v1280
  %v1282 = vpop.f32.mrf.mxu0
  %1283 = vmatprep.mubr.bf16.mxu0 %v487
  %1284 = vmatmul.mubr.bf16.gmra.mxu0 %v486
  %v1285 = vpop.f32.mrf.mxu0
  %v1286 = vadd.f32 %v1189, %v1285
  %v1287 = vpop.f32.mrf.mxu0
  %v1288 = vpop.f32.mrf.mxu0
  %v1289 = vadd.f32 %v1192, %v1288
  %v1290 = vpop.f32.mrf.mxu0
  %1291 = vmatprep.mubr.bf16.mxu0 %v496
  %1292 = vmatmul.mubr.bf16.gmra.mxu0 %v495
  %v1293 = vpop.f32.mrf.mxu0
  %v1294 = vadd.f32 %v1197, %v1293
  %v1295 = vpop.f32.mrf.mxu0
  %v1296 = vpop.f32.mrf.mxu0
  %v1297 = vadd.f32 %v1200, %v1296
  %v1298 = vpop.f32.mrf.mxu0
  %1299 = vmatprep.mubr.bf16.mxu0 %v505
  %1300 = vmatmul.mubr.bf16.gmra.mxu0 %v504
  %v1301 = vpop.f32.mrf.mxu0
  %v1302 = vadd.f32 %v1205, %v1301
  %v1303 = vpop.f32.mrf.mxu0
  %v1304 = vpop.f32.mrf.mxu0
  %v1305 = vadd.f32 %v1208, %v1304
  %v1306 = vpop.f32.mrf.mxu0
  %1307 = vmatprep.mubr.bf16.mxu0 %v514
  %1308 = vmatmul.mubr.bf16.gmra.mxu0 %v513
  %v1309 = vpop.f32.mrf.mxu0
  %v1310 = vadd.f32 %v1213, %v1309
  %v1311 = vpop.f32.mrf.mxu0
  %v1312 = vpop.f32.mrf.mxu0
  %v1313 = vadd.f32 %v1216, %v1312
  %v1314 = vpop.f32.mrf.mxu0
  %1315 = vmatprep.mubr.bf16.mxu0 %v523
  %1316 = vmatmul.mubr.bf16.gmra.mxu0 %v522
  %v1317 = vpop.f32.mrf.mxu0
  %v1318 = vadd.f32 %v1221, %v1317
  %v1319 = vpop.f32.mrf.mxu0
  %v1320 = vpop.f32.mrf.mxu0
  %v1321 = vadd.f32 %v1224, %v1320
  %v1322 = vpop.f32.mrf.mxu0
  %1323 = vmatprep.mubr.bf16.mxu0 %v532
  %1324 = vmatmul.mubr.bf16.gmra.mxu0 %v531
  %v1325 = vpop.f32.mrf.mxu0
  %v1326 = vadd.f32 %v1229, %v1325
  %v1327 = vpop.f32.mrf.mxu0
  %v1328 = vpop.f32.mrf.mxu0
  %v1329 = vadd.f32 %v1232, %v1328
  %v1330 = vpop.f32.mrf.mxu0
  %1331 = vmatprep.mubr.bf16.mxu0 %v541
  %1332 = vmatmul.mubr.bf16.gmra.mxu0 %v540
  %v1333 = vpop.f32.mrf.mxu0
  %v1334 = vadd.f32 %v1237, %v1333
  %v1335 = vpop.f32.mrf.mxu0
  %v1336 = vpop.f32.mrf.mxu0
  %v1337 = vadd.f32 %v1240, %v1336
  %v1338 = vpop.f32.mrf.mxu0
  %1339 = vdwg.mxu0
  %1340 = vmatprep.subr.bf16.mxu0 0
  %1341 = vmatpush1.bf16.msra.mxu0 %v960
  %1342 = vmatprep.subr.bf16.mxu0 0
  %1343 = vmatpush1.bf16.msra.mxu0 %v959
  %1344 = vmatprep.subr.bf16.mxu0 0
  %1345 = vmatpush1.bf16.msra.mxu0 %v958
  %1346 = vmatprep.subr.bf16.mxu0 0
  %1347 = vmatpush1.bf16.msra.mxu0 %v957
  %1348 = vmatprep.subr.bf16.mxu0 0
  %1349 = vmatpush1.bf16.msra.mxu0 %v956
  %1350 = vmatprep.subr.bf16.mxu0 0
  %1351 = vmatpush1.bf16.msra.mxu0 %v955
  %1352 = vmatprep.subr.bf16.mxu0 0
  %1353 = vmatpush1.bf16.msra.mxu0 %v954
  %1354 = vmatprep.subr.bf16.mxu0 0
  %1355 = vmatpush1.bf16.msra.mxu0 %v953
  %1356 = vmatprep.subr.bf16.mxu0 0
  %1357 = vmatpush2.bf16.msra.mxu0 %v968
  %1358 = vmatprep.subr.bf16.mxu0 0
  %1359 = vmatpush2.bf16.msra.mxu0 %v967
  %1360 = vmatprep.subr.bf16.mxu0 0
  %1361 = vmatpush2.bf16.msra.mxu0 %v966
  %1362 = vmatprep.subr.bf16.mxu0 0
  %1363 = vmatpush2.bf16.msra.mxu0 %v965
  %1364 = vmatprep.subr.bf16.mxu0 0
  %1365 = vmatpush2.bf16.msra.mxu0 %v964
  %1366 = vmatprep.subr.bf16.mxu0 0
  %1367 = vmatpush2.bf16.msra.mxu0 %v963
  %1368 = vmatprep.subr.bf16.mxu0 0
  %1369 = vmatpush2.bf16.msra.mxu0 %v962
  %1370 = vmatprep.subr.bf16.mxu0 0
  %1371 = vmatpush2.bf16.msra.mxu0 %v961
  %1372 = vmatprep.mubr.bf16.mxu0 %v480
  %1373 = vmatmul.mubr.bf16.gmra.mxu0 %v479
  %v1374 = vpop.f32.mrf.mxu0
  %v1375 = vadd.f32 %v1278, %v1374
  %v1376 = vpop.f32.mrf.mxu0
  %v1377 = vpop.f32.mrf.mxu0
  %v1378 = vadd.f32 %v1281, %v1377
  %v1379 = vpop.f32.mrf.mxu0
  %1380 = vmatprep.mubr.bf16.mxu0 %v489
  %1381 = vmatmul.mubr.bf16.gmra.mxu0 %v488
  %v1382 = vpop.f32.mrf.mxu0
  %v1383 = vadd.f32 %v1286, %v1382
  %v1384 = vpop.f32.mrf.mxu0
  %v1385 = vpop.f32.mrf.mxu0
  %v1386 = vadd.f32 %v1289, %v1385
  %v1387 = vpop.f32.mrf.mxu0
  %1388 = vmatprep.mubr.bf16.mxu0 %v498
  %1389 = vmatmul.mubr.bf16.gmra.mxu0 %v497
  %v1390 = vpop.f32.mrf.mxu0
  %v1391 = vadd.f32 %v1294, %v1390
  %v1392 = vpop.f32.mrf.mxu0
  %v1393 = vpop.f32.mrf.mxu0
  %v1394 = vadd.f32 %v1297, %v1393
  %v1395 = vpop.f32.mrf.mxu0
  %1396 = vmatprep.mubr.bf16.mxu0 %v507
  %1397 = vmatmul.mubr.bf16.gmra.mxu0 %v506
  %v1398 = vpop.f32.mrf.mxu0
  %v1399 = vadd.f32 %v1302, %v1398
  %v1400 = vpop.f32.mrf.mxu0
  %v1401 = vpop.f32.mrf.mxu0
  %v1402 = vadd.f32 %v1305, %v1401
  %v1403 = vpop.f32.mrf.mxu0
  %1404 = vmatprep.mubr.bf16.mxu0 %v516
  %1405 = vmatmul.mubr.bf16.gmra.mxu0 %v515
  %v1406 = vpop.f32.mrf.mxu0
  %v1407 = vadd.f32 %v1310, %v1406
  %v1408 = vpop.f32.mrf.mxu0
  %v1409 = vpop.f32.mrf.mxu0
  %v1410 = vadd.f32 %v1313, %v1409
  %v1411 = vpop.f32.mrf.mxu0
  %1412 = vmatprep.mubr.bf16.mxu0 %v525
  %1413 = vmatmul.mubr.bf16.gmra.mxu0 %v524
  %v1414 = vpop.f32.mrf.mxu0
  %v1415 = vadd.f32 %v1318, %v1414
  %v1416 = vpop.f32.mrf.mxu0
  %v1417 = vpop.f32.mrf.mxu0
  %v1418 = vadd.f32 %v1321, %v1417
  %v1419 = vpop.f32.mrf.mxu0
  %1420 = vmatprep.mubr.bf16.mxu0 %v534
  %1421 = vmatmul.mubr.bf16.gmra.mxu0 %v533
  %v1422 = vpop.f32.mrf.mxu0
  %v1423 = vadd.f32 %v1326, %v1422
  %v1424 = vpop.f32.mrf.mxu0
  %v1425 = vpop.f32.mrf.mxu0
  %v1426 = vadd.f32 %v1329, %v1425
  %v1427 = vpop.f32.mrf.mxu0
  %1428 = vmatprep.mubr.bf16.mxu0 %v543
  %1429 = vmatmul.mubr.bf16.gmra.mxu0 %v542
  %v1430 = vpop.f32.mrf.mxu0
  %v1431 = vadd.f32 %v1334, %v1430
  %v1432 = vpop.f32.mrf.mxu0
  %v1433 = vpop.f32.mrf.mxu0
  %v1434 = vadd.f32 %v1337, %v1433
  %v1435 = vpop.f32.mrf.mxu0
  %1436 = vdwg.mxu0
  %1437 = vmatprep.subr.bf16.mxu0 0
  %1438 = vmatpush1.bf16.msra.mxu0 %v976
  %1439 = vmatprep.subr.bf16.mxu0 0
  %1440 = vmatpush1.bf16.msra.mxu0 %v975
  %1441 = vmatprep.subr.bf16.mxu0 0
  %1442 = vmatpush1.bf16.msra.mxu0 %v974
  %1443 = vmatprep.subr.bf16.mxu0 0
  %1444 = vmatpush1.bf16.msra.mxu0 %v973
  %1445 = vmatprep.subr.bf16.mxu0 0
  %1446 = vmatpush1.bf16.msra.mxu0 %v972
  %1447 = vmatprep.subr.bf16.mxu0 0
  %1448 = vmatpush1.bf16.msra.mxu0 %v971
  %1449 = vmatprep.subr.bf16.mxu0 0
  %1450 = vmatpush1.bf16.msra.mxu0 %v970
  %1451 = vmatprep.subr.bf16.mxu0 0
  %1452 = vmatpush1.bf16.msra.mxu0 %v969
  %1453 = vmatprep.subr.bf16.mxu0 0
  %1454 = vmatpush2.bf16.msra.mxu0 0
  %1455 = vmatprep.subr.bf16.mxu0 0
  %1456 = vmatpush2.bf16.msra.mxu0 0
  %1457 = vmatprep.subr.bf16.mxu0 0
  %1458 = vmatpush2.bf16.msra.mxu0 0
  %1459 = vmatprep.subr.bf16.mxu0 0
  %1460 = vmatpush2.bf16.msra.mxu0 0
  %1461 = vmatprep.subr.bf16.mxu0 0
  %1462 = vmatpush2.bf16.msra.mxu0 0
  %1463 = vmatprep.subr.bf16.mxu0 0
  %1464 = vmatpush2.bf16.msra.mxu0 0
  %1465 = vmatprep.subr.bf16.mxu0 0
  %1466 = vmatpush2.bf16.msra.mxu0 0
  %1467 = vmatprep.subr.bf16.mxu0 0
  %1468 = vmatpush2.bf16.msra.mxu0 0
  %1469 = vmatprep.mubr.bf16.mxu0 0
  %1470 = vmatmul.mubr.bf16.gmra.mxu0 %v481
  %v1471 = vpop.f32.mrf.mxu0
  %v1472 = vadd.f32 %v1375, %v1471
  %v1473 = vpop.f32.mrf.mxu0
  %v1474 = vpop.f32.mrf.mxu0
  %v1475 = vadd.f32 %v1378, %v1474
  %v1476 = vpop.f32.mrf.mxu0
  %1477 = vmatprep.mubr.bf16.mxu0 0
  %1478 = vmatmul.mubr.bf16.gmra.mxu0 %v490
  %v1479 = vpop.f32.mrf.mxu0
  %v1480 = vadd.f32 %v1383, %v1479
  %v1481 = vpop.f32.mrf.mxu0
  %v1482 = vpop.f32.mrf.mxu0
  %v1483 = vadd.f32 %v1386, %v1482
  %v1484 = vpop.f32.mrf.mxu0
  %1485 = vmatprep.mubr.bf16.mxu0 0
  %1486 = vmatmul.mubr.bf16.gmra.mxu0 %v499
  %v1487 = vpop.f32.mrf.mxu0
  %v1488 = vadd.f32 %v1391, %v1487
  %v1489 = vpop.f32.mrf.mxu0
  %v1490 = vpop.f32.mrf.mxu0
  %v1491 = vadd.f32 %v1394, %v1490
  %v1492 = vpop.f32.mrf.mxu0
  %1493 = vmatprep.mubr.bf16.mxu0 0
  %1494 = vmatmul.mubr.bf16.gmra.mxu0 %v508
  %v1495 = vpop.f32.mrf.mxu0
  %v1496 = vadd.f32 %v1399, %v1495
  %v1497 = vpop.f32.mrf.mxu0
  %v1498 = vpop.f32.mrf.mxu0
  %v1499 = vadd.f32 %v1402, %v1498
  %v1500 = vpop.f32.mrf.mxu0
  %1501 = vmatprep.mubr.bf16.mxu0 0
  %1502 = vmatmul.mubr.bf16.gmra.mxu0 %v517
  %v1503 = vpop.f32.mrf.mxu0
  %v1504 = vadd.f32 %v1407, %v1503
  %v1505 = vpop.f32.mrf.mxu0
  %v1506 = vpop.f32.mrf.mxu0
  %v1507 = vadd.f32 %v1410, %v1506
  %v1508 = vpop.f32.mrf.mxu0
  %1509 = vmatprep.mubr.bf16.mxu0 0
  %1510 = vmatmul.mubr.bf16.gmra.mxu0 %v526
  %v1511 = vpop.f32.mrf.mxu0
  %v1512 = vadd.f32 %v1415, %v1511
  %v1513 = vpop.f32.mrf.mxu0
  %v1514 = vpop.f32.mrf.mxu0
  %v1515 = vadd.f32 %v1418, %v1514
  %v1516 = vpop.f32.mrf.mxu0
  %1517 = vmatprep.mubr.bf16.mxu0 0
  %1518 = vmatmul.mubr.bf16.gmra.mxu0 %v535
  %v1519 = vpop.f32.mrf.mxu0
  %v1520 = vadd.f32 %v1423, %v1519
  %v1521 = vpop.f32.mrf.mxu0
  %v1522 = vpop.f32.mrf.mxu0
  %v1523 = vadd.f32 %v1426, %v1522
  %v1524 = vpop.f32.mrf.mxu0
  %1525 = vmatprep.mubr.bf16.mxu0 0
  %1526 = vmatmul.mubr.bf16.gmra.mxu0 %v544
  %v1527 = vpop.f32.mrf.mxu0
  %v1528 = vadd.f32 %v1431, %v1527
  %v1529 = vpop.f32.mrf.mxu0
  %v1530 = vpop.f32.mrf.mxu0
  %v1531 = vadd.f32 %v1434, %v1530
  %v1532 = vpop.f32.mrf.mxu0
  %1533 = vdwg.mxu0
  %v1534 = vld [vmem:[%s3] sm:$0xff]
  %v1535 = vld [vmem:[%s3 + $0x8] sm:$0xff]
  %v1536 = vld [vmem:[%s3 + $0x10] sm:$0xff]
  %v1537 = vld [vmem:[%s3 + $0x18] sm:$0xff]
  %v1538 = vld [vmem:[%s3 + $0x20] sm:$0xff]
  %v1539 = vld [vmem:[%s3 + $0x28] sm:$0xff]
  %v1540 = vld [vmem:[%s3 + $0x30] sm:$0xff]
  %v1541 = vld [vmem:[%s3 + $0x38] sm:$0xff]
  %v1542 = vld [vmem:[%s3 + $0x40] sm:$0xff]
  %v1543 = vld [vmem:[%s3 + $0x48] sm:$0xff]
  %v1544 = vld [vmem:[%s3 + $0x50] sm:$0xff]
  %v1545 = vld [vmem:[%s3 + $0x58] sm:$0xff]
  %v1546 = vld [vmem:[%s3 + $0x60] sm:$0xff]
  %v1547 = vld [vmem:[%s3 + $0x68] sm:$0xff]
  %v1548 = vld [vmem:[%s3 + $0x70] sm:$0xff]
  %v1549 = vld [vmem:[%s3 + $0x78] sm:$0xff]
  %v1550 = vadd.f32 %v1472, %v1534
  %v1551 = vadd.f32 %v1475, %v1535
  %v1552 = vadd.f32 %v1480, %v1536
  %v1553 = vadd.f32 %v1483, %v1537
  %v1554 = vadd.f32 %v1488, %v1538
  %v1555 = vadd.f32 %v1491, %v1539
  %v1556 = vadd.f32 %v1496, %v1540
  %v1557 = vadd.f32 %v1499, %v1541
  %v1558 = vadd.f32 %v1504, %v1542
  %v1559 = vadd.f32 %v1507, %v1543
  %v1560 = vadd.f32 %v1512, %v1544
  %v1561 = vadd.f32 %v1515, %v1545
  %v1562 = vadd.f32 %v1520, %v1546
  %v1563 = vadd.f32 %v1523, %v1547
  %v1564 = vadd.f32 %v1528, %v1548
  %v1565 = vadd.f32 %v1531, %v1549
  %v1566 = vmax.f32 %v1550, 0.0
  %v1567 = vmax.f32 %v1551, 0.0
  %v1568 = vmax.f32 %v1552, 0.0
  %v1569 = vmax.f32 %v1553, 0.0
  %v1570 = vmax.f32 %v1554, 0.0
  %v1571 = vmax.f32 %v1555, 0.0
  %v1572 = vmax.f32 %v1556, 0.0
  %v1573 = vmax.f32 %v1557, 0.0
  %v1574 = vmax.f32 %v1558, 0.0
  %v1575 = vmax.f32 %v1559, 0.0
  %v1576 = vmax.f32 %v1560, 0.0
  %v1577 = vmax.f32 %v1561, 0.0
  %v1578 = vmax.f32 %v1562, 0.0
  %v1579 = vmax.f32 %v1563, 0.0
  %v1580 = vmax.f32 %v1564, 0.0
  %v1581 = vmax.f32 %v1565, 0.0
  %1582 = vst [vmem:[%s4] sm:$0xff] %v1566
  %1583 = vst [vmem:[%s4 + $0x8] sm:$0xff] %v1567
  %1584 = vst [vmem:[%s4 + $0x10] sm:$0xff] %v1568
  %1585 = vst [vmem:[%s4 + $0x18] sm:$0xff] %v1569
  %1586 = vst [vmem:[%s4 + $0x20] sm:$0xff] %v1570
  %1587 = vst [vmem:[%s4 + $0x28] sm:$0xff] %v1571
  %1588 = vst [vmem:[%s4 + $0x30] sm:$0xff] %v1572
  %1589 = vst [vmem:[%s4 + $0x38] sm:$0xff] %v1573
  %1590 = vst [vmem:[%s4 + $0x40] sm:$0xff] %v1574
  %1591 = vst [vmem:[%s4 + $0x48] sm:$0xff] %v1575
  %1592 = vst [vmem:[%s4 + $0x50] sm:$0xff] %v1576
  %1593 = vst [vmem:[%s4 + $0x58] sm:$0xff] %v1577
  %1594 = vst [vmem:[%s4 + $0x60] sm:$0xff] %v1578
  %1595 = vst [vmem:[%s4 + $0x68] sm:$0xff] %v1579
  %1596 = vst [vmem:[%s4 + $0x70] sm:$0xff] %v1580
  %1597 = vst [vmem:[%s4 + $0x78] sm:$0xff] %v1581
  // Predicated region
  $region18: #{_lambda_.17} parent=0 // pred_check
    _
  $region19: #{_lambda_.17} parent=0 // pred_check_branch
    %1599 = sbr.rel (0) target = $region21
  $region20: #{_lambda_.17} parent=0 // pred_region
    _
  $region21: #{_lambda_.17} parent=0 // pred_fallthru
    _
  // Predicated region
  $region22: #{_lambda_.17} parent=0 // pred_check
    _
  $region23: #{_lambda_.17} parent=0 // pred_check_branch
    %1601 = sbr.rel (0) target = $region25
  $region24: #{_lambda_.17} parent=0 // pred_region
    _
  $region25: #{_lambda_.17} parent=0 // pred_fallthru
    _

</llo_original>
